<compile_context>
chip_gen: v5e
topology: v5e:2x2
jax: 0.10.0
libtpu: 0.0.40
codegen_flags: <defaults>
</compile_context>

<pallas_src>
import functools
import math

import jax
import jax.numpy as jnp
from jax import lax
from jax.experimental import pallas as pl
from jax.experimental.pallas import tpu as pltpu

EPS = 1e-5                      # torch.nn.LayerNorm default eps
_SQRT_HALF = 0.7071067811865476


def _gelu(x):
    # exact erf-based GELU == torch.nn.GELU() default
    return 0.5 * x * (1.0 + lax.erf(x * _SQRT_HALF))


def _layernorm(x, g, b):
    mu = jnp.mean(x, axis=-1, keepdims=True)
    var = jnp.mean((x - mu) ** 2, axis=-1, keepdims=True)
    return (x - mu) * lax.rsqrt(var + EPS) * g + b


# ---------------------------------------------------------------------------
# Fused ExpertBlock kernel: one batch TILE (Bt rows) per grid step.
#   x_ref   : (Bt, L, D)   activations (bf16 or f32)
#   w_in    : (D, 3D)      in_proj_weight.T, columns [Q | K | V], Q pre-scaled, bf16
#   b_in    : (1, 3D)      in_proj_bias (Q part pre-scaled), f32
#   w_out   : (D, D)       out_proj.weight.T, bf16
#   w1 / w2 : (D,4D)/(4D,D) FFN weights, bf16
#   LN params, biases      f32
# ---------------------------------------------------------------------------
def expert_block_kernel(x_ref,
                        ln1_g_ref, ln1_b_ref,
                        w_in_ref, b_in_ref, w_out_ref, b_out_ref,
                        ln2_g_ref, ln2_b_ref,
                        w1_ref, b1_ref, w2_ref, b2_ref,
                        o_ref, *, num_heads, causal):
    Bt, L, D = x_ref.shape
    H = num_heads
    hd = D // H
    M = Bt * L
    cdt = w_in_ref.dtype                              # matmul compute dtype (bf16)

    # ---- flatten the batch tile: all projections / FFN see M = Bt*L rows ----
    x = x_ref[...].reshape(M, D).astype(jnp.float32)

    # ---- pre-norm 1 (f32 statistics) ----
    xn = _layernorm(x, ln1_g_ref[...].astype(jnp.float32),
                    ln1_b_ref[...].astype(jnp.float32))

    # ---- fused QKV projection: one wide (M, D) @ (D, 3D) matmul ----
    qkv = jnp.dot(xn.astype(cdt), w_in_ref[...],
                  preferred_element_type=jnp.float32) \
        + b_in_ref[...].astype(jnp.float32)           # (M, 3D); Q already scaled

    q = qkv[:, 0 * D:1 * D].reshape(Bt, L, D)
    k = qkv[:, 1 * D:2 * D].reshape(Bt, L, D)
    v = qkv[:, 2 * D:3 * D].reshape(Bt, L, D)

    if causal:
        row = lax.broadcasted_iota(jnp.int32, (L, L), 0)
        col = lax.broadcasted_iota(jnp.int32, (L, L), 1)
        keep = (row >= col)[None]                      # (1, L, L), broadcast over Bt

    # ---- per-(batch, head) attention; negligible FLOPs vs the projections ----
    # TODO(synk): switch to a flash-style (q-tile, kv-tile) online-softmax loop
    #             before scaling to long L (dense scores are L^2 per head).
    ctx_parts = []
    for h in range(H):                                 # H is small & static
        sl = slice(h * hd, (h + 1) * hd)
        qh, kh, vh = q[:, :, sl], k[:, :, sl], v[:, :, sl]   # (Bt, L, hd)
        s = jnp.einsum('bqd,bkd->bqk', qh.astype(cdt), kh.astype(cdt),
                       preferred_element_type=jnp.float32)   # (Bt, L, L) f32
        if causal:
            s = jnp.where(keep, s, -1e30)
        m = jnp.max(s, axis=-1, keepdims=True)
        p = jnp.exp(s - m)
        p = p * pl.reciprocal(jnp.sum(p, axis=-1, keepdims=True), approx=True)
        ctx_parts.append(
            jnp.einsum('bqk,bkd->bqd', p.astype(cdt), vh.astype(cdt),
                       preferred_element_type=jnp.float32))  # (Bt, L, hd)

    # heads back onto the lane axis -> full-depth (D) out-proj contraction
    ctx = jnp.concatenate(ctx_parts, axis=-1).reshape(M, D)  # (M, D) f32

    attn = jnp.dot(ctx.astype(cdt), w_out_ref[...],
                   preferred_element_type=jnp.float32) \
         + b_out_ref[...].astype(jnp.float32)                # (M, D)

    x1 = x + attn                                            # residual (f32)

    # ---- pre-norm FFN: full-width MXU matmuls on M rows ----
    x1n = _layernorm(x1, ln2_g_ref[...].astype(jnp.float32),
                     ln2_b_ref[...].astype(jnp.float32))
    hid = _gelu(jnp.dot(x1n.astype(cdt), w1_ref[...],
                        preferred_element_type=jnp.float32)
                + b1_ref[...].astype(jnp.float32))           # (M, 4D)
    y = jnp.dot(hid.astype(cdt), w2_ref[...],
                preferred_element_type=jnp.float32) \
      + b2_ref[...].astype(jnp.float32)                      # (M, D)

    o_ref[...] = (x1 + y).reshape(Bt, L, D).astype(o_ref.dtype)


def _pick_block_batch(B, L):
    # Enough rows per step to fill the MXU M dim (>=128) ...
    bt = min(B, max(1, 128 // max(L, 1)))
    while B % bt:
        bt -= 1
    # ... but keep >= 2 grid steps when possible so v7x's 2nd TensorCore gets work.
    if bt > 1 and B // bt < 2:
        half = bt // 2
        while half > 1 and B % half:
            half -= 1
        bt = max(half, 1)
    return bt


def expert_block(params, x, *, num_heads, causal=True, block_batch=None):
    B, L, D = x.shape
    assert D % num_heads == 0
    Bt = block_batch if block_batch is not None else _pick_block_batch(B, L)
    assert B % Bt == 0

    names = ('ln1_g', 'ln1_b', 'w_in', 'b_in', 'w_out', 'b_out',
             'ln2_g', 'ln2_b', 'w1', 'b1', 'w2', 'b2')
    args = [x] + [params[n] for n in names]

    def _rep_spec(shape):
        r = len(shape)
        # Grid-invariant weights: constant index_map -> fetched once, reused.
        # TODO(synk): for large D on v7x (64 MiB VMEM), add
        #             pipeline_mode=pl.Buffered(1) and tile the 4D FFN hidden dim.
        return pl.BlockSpec(shape, lambda b, _r=r: (0,) * _r)

    in_specs = [pl.BlockSpec((Bt, L, D), lambda b: (b, 0, 0))]
    in_specs += [_rep_spec(params[n].shape) for n in names]

    # advisory cost hint so XLA schedules/overlaps around the custom call
    H = num_heads
    hd = D // H
    dff = params['w1'].shape[1]
    Mtot = B * L
    flops = (2 * Mtot * D * (3 * D)        # QKV projection
             + 2 * Mtot * D * D            # output projection
             + 4 * Mtot * D * dff          # FFN (two matmuls)
             + 4 * B * H * L * L * hd)     # QK^T + PV
    transcendentals = B * H * L * L + Mtot * dff     # softmax exp + GELU erf
    bytes_accessed = (2 * x.size * x.dtype.itemsize
                      + sum(int(v.size) * v.dtype.itemsize for v in params.values()))

    return pl.pallas_call(
        functools.partial(expert_block_kernel, num_heads=num_heads, causal=causal),
        out_shape=jax.ShapeDtypeStruct((B, L, D), x.dtype),
        grid=(B // Bt,),
        in_specs=in_specs,
        out_specs=pl.BlockSpec((Bt, L, D), lambda b: (b, 0, 0)),
        compiler_params=pltpu.CompilerParams(
            dimension_semantics=("parallel",),          # megacore / v7x 2nd TC
            vmem_limit_bytes=48 * 1024 * 1024),         # > v5e 16 MiB default, < v7x 64 MiB
        cost_estimate=pl.CostEstimate(
            flops=int(flops),
            transcendentals=int(transcendentals),
            bytes_accessed=int(bytes_accessed)),
    )(*args)


# ---------------------------------------------------------------------------
# Deterministic parameter init in the kernel layout (standard nn.MultiheadAttention
# weights pre-transposed ONCE on the host; 1/sqrt(hd) folded into Q columns).
# Matmul weights in bf16; biases / LayerNorm params in f32.
# ---------------------------------------------------------------------------
def init_params(key, embed_dim, num_heads, ffn_mult=4, dtype=jnp.bfloat16):
    D, H = embed_dim, num_heads
    assert D % H == 0
    hd = D // H
    ks = jax.random.split(key, 4)

    def nrm(k, shape, std=0.02):
        return jax.random.normal(k, shape, jnp.float32) * std

    # Standard layout: qkv = x @ in_proj_weight.T + in_proj_bias (cols [Q|K|V]),
    #                  out = concat_heads(ctx) @ out_proj.weight.T + out_proj.bias
    w_in = nrm(ks[0], (D, 3 * D))          # == in_proj_weight.T
    b_in = jnp.zeros((3 * D,), jnp.float32)
    w_out = nrm(ks[1], (D, D))             # == out_proj.weight.T
    b_out = jnp.zeros((D,), jnp.float32)

    # Fold the 1/sqrt(hd) attention scale into the Q columns (zero in-kernel work).
    scale = 1.0 / math.sqrt(hd)
    w_in = w_in.at[:, :D].multiply(scale)
    b_in = b_in.at[:D].multiply(scale)

    return dict(
        ln1_g=jnp.ones((1, D), jnp.float32), ln1_b=jnp.zeros((1, D), jnp.float32),
        w_in=w_in.astype(dtype), b_in=b_in.reshape(1, 3 * D),
        w_out=w_out.astype(dtype), b_out=b_out.reshape(1, D),
        ln2_g=jnp.ones((1, D), jnp.float32), ln2_b=jnp.zeros((1, D), jnp.float32),
        w1=nrm(ks[2], (D, ffn_mult * D)).astype(dtype),
        b1=jnp.zeros((1, ffn_mult * D), jnp.float32),
        w2=nrm(ks[3], (ffn_mult * D, D)).astype(dtype),
        b2=jnp.zeros((1, D), jnp.float32),
    )


if __name__ == "__main__":
    # Lane-dense D (multiple of 128); Bt=4 -> 128 rows per grid step, 2 grid steps.
    B, L, D, H = 8, 32, 128, 4

    key = jax.random.PRNGKey(0)
    pkey, xkey = jax.random.split(key)
    params = init_params(pkey, D, H, dtype=jnp.bfloat16)
    x = (jax.random.normal(xkey, (B, L, D), jnp.float32) * 0.02).astype(jnp.bfloat16)

    fwd = jax.jit(functools.partial(expert_block, num_heads=H, causal=True))
    y = jax.block_until_ready(fwd(params, x))

    assert y.shape == (B, L, D)
    assert bool(jnp.all(jnp.isfinite(y.astype(jnp.float32))))
    print("KERNEL_OK")
</pallas_src>

<mosaic_0001>
module attributes {stable_mosaic.version = 11 : i64} {
  func.func @expert_block_kernel(%arg0: i32, %arg1: memref<4x32x128xbf16, #tpu.memory_space<vmem>>, %arg2: memref<1x128xf32, #tpu.memory_space<vmem>>, %arg3: memref<1x128xf32, #tpu.memory_space<vmem>>, %arg4: memref<128x384xbf16, #tpu.memory_space<vmem>>, %arg5: memref<1x384xf32, #tpu.memory_space<vmem>>, %arg6: memref<128x128xbf16, #tpu.memory_space<vmem>>, %arg7: memref<1x128xf32, #tpu.memory_space<vmem>>, %arg8: memref<1x128xf32, #tpu.memory_space<vmem>>, %arg9: memref<1x128xf32, #tpu.memory_space<vmem>>, %arg10: memref<128x512xbf16, #tpu.memory_space<vmem>>, %arg11: memref<1x512xf32, #tpu.memory_space<vmem>>, %arg12: memref<512x128xbf16, #tpu.memory_space<vmem>>, %arg13: memref<1x128xf32, #tpu.memory_space<vmem>>, %arg14: memref<4x32x128xbf16, #tpu.memory_space<vmem>>) attributes {dimension_semantics = [#tpu.dimension_semantics<parallel>], iteration_bounds = array<i64: 2>, scalar_prefetch = 0 : i64, scratch_operands = 0 : i64, tpu.core_type = #tpu.core_type<tc>, window_params = [{transform_indices = @transform_0, window_bounds = array<i64: 4, 32, 128>}, {pipeline_mode = #tpu.pipeline_mode<synchronous>, transform_indices = @transform_1, window_bounds = array<i64: 1, 128>}, {pipeline_mode = #tpu.pipeline_mode<synchronous>, transform_indices = @transform_2, window_bounds = array<i64: 1, 128>}, {pipeline_mode = #tpu.pipeline_mode<synchronous>, transform_indices = @transform_3, window_bounds = array<i64: 128, 384>}, {pipeline_mode = #tpu.pipeline_mode<synchronous>, transform_indices = @transform_4, window_bounds = array<i64: 1, 384>}, {pipeline_mode = #tpu.pipeline_mode<synchronous>, transform_indices = @transform_5, window_bounds = array<i64: 128, 128>}, {pipeline_mode = #tpu.pipeline_mode<synchronous>, transform_indices = @transform_6, window_bounds = array<i64: 1, 128>}, {pipeline_mode = #tpu.pipeline_mode<synchronous>, transform_indices = @transform_7, window_bounds = array<i64: 1, 128>}, {pipeline_mode = #tpu.pipeline_mode<synchronous>, transform_indices = @transform_8, window_bounds = array<i64: 1, 128>}, {pipeline_mode = #tpu.pipeline_mode<synchronous>, transform_indices = @transform_9, window_bounds = array<i64: 128, 512>}, {pipeline_mode = #tpu.pipeline_mode<synchronous>, transform_indices = @transform_10, window_bounds = array<i64: 1, 512>}, {pipeline_mode = #tpu.pipeline_mode<synchronous>, transform_indices = @transform_11, window_bounds = array<i64: 512, 128>}, {pipeline_mode = #tpu.pipeline_mode<synchronous>, transform_indices = @transform_12, window_bounds = array<i64: 1, 128>}, {transform_indices = @transform_13, window_bounds = array<i64: 4, 32, 128>}]} {
    %c0 = arith.constant 0 : index
    %c0_0 = arith.constant 0 : index
    %c0_1 = arith.constant 0 : index
    %0 = vector.load %arg1[%c0, %c0_0, %c0_1] : memref<4x32x128xbf16, #tpu.memory_space<vmem>>, vector<4x32x128xbf16>
    %1 = vector.shape_cast %0 : vector<4x32x128xbf16> to vector<128x128xbf16>
    %2 = arith.extf %1 : vector<128x128xbf16> to vector<128x128xf32>
    %c0_2 = arith.constant 0 : index
    %c0_3 = arith.constant 0 : index
    %3 = vector.load %arg2[%c0_2, %c0_3] : memref<1x128xf32, #tpu.memory_space<vmem>>, vector<1x128xf32>
    %c0_4 = arith.constant 0 : index
    %c0_5 = arith.constant 0 : index
    %4 = vector.load %arg3[%c0_4, %c0_5] : memref<1x128xf32, #tpu.memory_space<vmem>>, vector<1x128xf32>
    %cst = arith.constant dense<0.000000e+00> : vector<128xf32>
    %5 = vector.multi_reduction <add>, %2, %cst [1] : vector<128x128xf32> to vector<128xf32>
    %6 = vector.shape_cast %5 : vector<128xf32> to vector<128x1xf32>
    %cst_6 = arith.constant 1.280000e+02 : f32
    %7 = vector.broadcast %cst_6 : f32 to vector<128x1xf32>
    %8 = arith.divf %6, %7 : vector<128x1xf32>
    %9 = vector.broadcast %8 : vector<128x1xf32> to vector<128x128xf32>
    %10 = arith.subf %2, %9 : vector<128x128xf32>
    %11 = arith.mulf %10, %10 : vector<128x128xf32>
    %cst_7 = arith.constant dense<0.000000e+00> : vector<128xf32>
    %12 = vector.multi_reduction <add>, %11, %cst_7 [1] : vector<128x128xf32> to vector<128xf32>
    %13 = vector.shape_cast %12 : vector<128xf32> to vector<128x1xf32>
    %cst_8 = arith.constant 1.280000e+02 : f32
    %14 = vector.broadcast %cst_8 : f32 to vector<128x1xf32>
    %15 = arith.divf %13, %14 : vector<128x1xf32>
    %16 = vector.broadcast %8 : vector<128x1xf32> to vector<128x128xf32>
    %17 = arith.subf %2, %16 : vector<128x128xf32>
    %cst_9 = arith.constant 9.99999974E-6 : f32
    %18 = vector.broadcast %cst_9 : f32 to vector<128x1xf32>
    %19 = arith.addf %15, %18 : vector<128x1xf32>
    %20 = math.rsqrt %19 : vector<128x1xf32>
    %21 = vector.broadcast %20 : vector<128x1xf32> to vector<128x128xf32>
    %22 = arith.mulf %17, %21 : vector<128x128xf32>
    %23 = vector.broadcast %3 : vector<1x128xf32> to vector<128x128xf32>
    %24 = arith.mulf %22, %23 : vector<128x128xf32>
    %25 = vector.broadcast %4 : vector<1x128xf32> to vector<128x128xf32>
    %26 = arith.addf %24, %25 : vector<128x128xf32>
    %27 = arith.truncf %26 : vector<128x128xf32> to vector<128x128xbf16>
    %c0_10 = arith.constant 0 : index
    %c0_11 = arith.constant 0 : index
    %28 = vector.load %arg4[%c0_10, %c0_11] : memref<128x384xbf16, #tpu.memory_space<vmem>>, vector<128x384xbf16>
    %cst_12 = arith.constant dense<0.000000e+00> : vector<128x384xf32>
    %29 = tpu.matmul %27, %28, %cst_12 {dimension_numbers = #tpu.dot_dimension_numbers<[1], [0], [0], [1], [0, 0, 1, 1], [], []>} : vector<128x128xbf16>, vector<128x384xbf16>, vector<128x384xf32> -> vector<128x384xf32>
    %c0_13 = arith.constant 0 : index
    %c0_14 = arith.constant 0 : index
    %30 = vector.load %arg5[%c0_13, %c0_14] : memref<1x384xf32, #tpu.memory_space<vmem>>, vector<1x384xf32>
    %31 = vector.broadcast %30 : vector<1x384xf32> to vector<128x384xf32>
    %32 = arith.addf %29, %31 : vector<128x384xf32>
    %33 = vector.extract_strided_slice %32 {offsets = [0, 0], sizes = [128, 128], strides = [1, 1]} : vector<128x384xf32> to vector<128x128xf32>
    %34 = vector.shape_cast %33 : vector<128x128xf32> to vector<4x32x128xf32>
    %35 = vector.extract_strided_slice %32 {offsets = [0, 128], sizes = [128, 128], strides = [1, 1]} : vector<128x384xf32> to vector<128x128xf32>
    %36 = vector.shape_cast %35 : vector<128x128xf32> to vector<4x32x128xf32>
    %37 = vector.extract_strided_slice %32 {offsets = [0, 256], sizes = [128, 128], strides = [1, 1]} : vector<128x384xf32> to vector<128x128xf32>
    %38 = vector.shape_cast %37 : vector<128x128xf32> to vector<4x32x128xf32>
    %39 = tpu.iota {dimensions = array<i32: 0>} : vector<32x32xi32>
    %40 = tpu.iota {dimensions = array<i32: 1>} : vector<32x32xi32>
    %41 = arith.cmpi sge, %39, %40 : vector<32x32xi32>
    %42 = vector.shape_cast %41 : vector<32x32xi1> to vector<1x32x32xi1>
    %43 = vector.extract_strided_slice %34 {offsets = [0, 0, 0], sizes = [4, 32, 32], strides = [1, 1, 1]} : vector<4x32x128xf32> to vector<4x32x32xf32>
    %44 = vector.extract_strided_slice %36 {offsets = [0, 0, 0], sizes = [4, 32, 32], strides = [1, 1, 1]} : vector<4x32x128xf32> to vector<4x32x32xf32>
    %45 = vector.extract_strided_slice %38 {offsets = [0, 0, 0], sizes = [4, 32, 32], strides = [1, 1, 1]} : vector<4x32x128xf32> to vector<4x32x32xf32>
    %46 = arith.truncf %43 : vector<4x32x32xf32> to vector<4x32x32xbf16>
    %47 = arith.truncf %44 : vector<4x32x32xf32> to vector<4x32x32xbf16>
    "tpu.trace_start"() <{level = 10 : i32, message = "bqd,bkd->bqk"}> : () -> ()
    %cst_15 = arith.constant dense<0.000000e+00> : vector<4x32x32xf32>
    %48 = tpu.matmul %46, %47, %cst_15 {dimension_numbers = #tpu.dot_dimension_numbers<[2], [2], [1], [1], [0, 0, 0, 1, 1, 1], [0], [0]>} : vector<4x32x32xbf16>, vector<4x32x32xbf16>, vector<4x32x32xf32> -> vector<4x32x32xf32>
    %cst_16 = arith.constant -1.000000e+30 : f32
    "tpu.trace_stop"() : () -> ()
    %49 = vector.shape_cast %42 : vector<1x32x32xi1> to vector<1x32x32xi1>
    %50 = vector.broadcast %49 : vector<1x32x32xi1> to vector<4x32x32xi1>
    %51 = vector.broadcast %cst_16 : f32 to vector<4x32x32xf32>
    %52 = arith.select %50, %48, %51 : vector<4x32x32xi1>, vector<4x32x32xf32>
    %cst_17 = arith.constant dense<0xFF800000> : vector<4x32xf32>
    %53 = vector.multi_reduction <maximumf>, %52, %cst_17 [2] : vector<4x32x32xf32> to vector<4x32xf32>
    %54 = vector.shape_cast %53 : vector<4x32xf32> to vector<4x32x1xf32>
    %55 = vector.broadcast %54 : vector<4x32x1xf32> to vector<4x32x32xf32>
    %56 = arith.subf %52, %55 : vector<4x32x32xf32>
    %57 = math.exp %56 : vector<4x32x32xf32>
    %cst_18 = arith.constant dense<0.000000e+00> : vector<4x32xf32>
    %58 = vector.multi_reduction <add>, %57, %cst_18 [2] : vector<4x32x32xf32> to vector<4x32xf32>
    %59 = vector.shape_cast %58 : vector<4x32xf32> to vector<4x32x1xf32>
    %60 = tpu.reciprocal %59 {approx = true} : vector<4x32x1xf32> -> vector<4x32x1xf32>
    %61 = vector.broadcast %60 : vector<4x32x1xf32> to vector<4x32x32xf32>
    %62 = arith.mulf %57, %61 : vector<4x32x32xf32>
    %63 = arith.truncf %62 : vector<4x32x32xf32> to vector<4x32x32xbf16>
    %64 = arith.truncf %45 : vector<4x32x32xf32> to vector<4x32x32xbf16>
    "tpu.trace_start"() <{level = 10 : i32, message = "bqk,bkd->bqd"}> : () -> ()
    %cst_19 = arith.constant dense<0.000000e+00> : vector<4x32x32xf32>
    %65 = tpu.matmul %63, %64, %cst_19 {dimension_numbers = #tpu.dot_dimension_numbers<[2], [1], [1], [2], [0, 0, 0, 1, 1, 2], [0], [0]>} : vector<4x32x32xbf16>, vector<4x32x32xbf16>, vector<4x32x32xf32> -> vector<4x32x32xf32>
    "tpu.trace_stop"() : () -> ()
    %66 = vector.extract_strided_slice %34 {offsets = [0, 0, 32], sizes = [4, 32, 32], strides = [1, 1, 1]} : vector<4x32x128xf32> to vector<4x32x32xf32>
    %67 = vector.extract_strided_slice %36 {offsets = [0, 0, 32], sizes = [4, 32, 32], strides = [1, 1, 1]} : vector<4x32x128xf32> to vector<4x32x32xf32>
    %68 = vector.extract_strided_slice %38 {offsets = [0, 0, 32], sizes = [4, 32, 32], strides = [1, 1, 1]} : vector<4x32x128xf32> to vector<4x32x32xf32>
    %69 = arith.truncf %66 : vector<4x32x32xf32> to vector<4x32x32xbf16>
    %70 = arith.truncf %67 : vector<4x32x32xf32> to vector<4x32x32xbf16>
    "tpu.trace_start"() <{level = 10 : i32, message = "bqd,bkd->bqk"}> : () -> ()
    %cst_20 = arith.constant dense<0.000000e+00> : vector<4x32x32xf32>
    %71 = tpu.matmul %69, %70, %cst_20 {dimension_numbers = #tpu.dot_dimension_numbers<[2], [2], [1], [1], [0, 0, 0, 1, 1, 1], [0], [0]>} : vector<4x32x32xbf16>, vector<4x32x32xbf16>, vector<4x32x32xf32> -> vector<4x32x32xf32>
    %cst_21 = arith.constant -1.000000e+30 : f32
    "tpu.trace_stop"() : () -> ()
    %72 = vector.shape_cast %42 : vector<1x32x32xi1> to vector<1x32x32xi1>
    %73 = vector.broadcast %72 : vector<1x32x32xi1> to vector<4x32x32xi1>
    %74 = vector.broadcast %cst_21 : f32 to vector<4x32x32xf32>
    %75 = arith.select %73, %71, %74 : vector<4x32x32xi1>, vector<4x32x32xf32>
    %cst_22 = arith.constant dense<0xFF800000> : vector<4x32xf32>
    %76 = vector.multi_reduction <maximumf>, %75, %cst_22 [2] : vector<4x32x32xf32> to vector<4x32xf32>
    %77 = vector.shape_cast %76 : vector<4x32xf32> to vector<4x32x1xf32>
    %78 = vector.broadcast %77 : vector<4x32x1xf32> to vector<4x32x32xf32>
    %79 = arith.subf %75, %78 : vector<4x32x32xf32>
    %80 = math.exp %79 : vector<4x32x32xf32>
    %cst_23 = arith.constant dense<0.000000e+00> : vector<4x32xf32>
    %81 = vector.multi_reduction <add>, %80, %cst_23 [2] : vector<4x32x32xf32> to vector<4x32xf32>
    %82 = vector.shape_cast %81 : vector<4x32xf32> to vector<4x32x1xf32>
    %83 = tpu.reciprocal %82 {approx = true} : vector<4x32x1xf32> -> vector<4x32x1xf32>
    %84 = vector.broadcast %83 : vector<4x32x1xf32> to vector<4x32x32xf32>
    %85 = arith.mulf %80, %84 : vector<4x32x32xf32>
    %86 = arith.truncf %85 : vector<4x32x32xf32> to vector<4x32x32xbf16>
    %87 = arith.truncf %68 : vector<4x32x32xf32> to vector<4x32x32xbf16>
    "tpu.trace_start"() <{level = 10 : i32, message = "bqk,bkd->bqd"}> : () -> ()
    %cst_24 = arith.constant dense<0.000000e+00> : vector<4x32x32xf32>
    %88 = tpu.matmul %86, %87, %cst_24 {dimension_numbers = #tpu.dot_dimension_numbers<[2], [1], [1], [2], [0, 0, 0, 1, 1, 2], [0], [0]>} : vector<4x32x32xbf16>, vector<4x32x32xbf16>, vector<4x32x32xf32> -> vector<4x32x32xf32>
    "tpu.trace_stop"() : () -> ()
    %89 = vector.extract_strided_slice %34 {offsets = [0, 0, 64], sizes = [4, 32, 32], strides = [1, 1, 1]} : vector<4x32x128xf32> to vector<4x32x32xf32>
    %90 = vector.extract_strided_slice %36 {offsets = [0, 0, 64], sizes = [4, 32, 32], strides = [1, 1, 1]} : vector<4x32x128xf32> to vector<4x32x32xf32>
    %91 = vector.extract_strided_slice %38 {offsets = [0, 0, 64], sizes = [4, 32, 32], strides = [1, 1, 1]} : vector<4x32x128xf32> to vector<4x32x32xf32>
    %92 = arith.truncf %89 : vector<4x32x32xf32> to vector<4x32x32xbf16>
    %93 = arith.truncf %90 : vector<4x32x32xf32> to vector<4x32x32xbf16>
    "tpu.trace_start"() <{level = 10 : i32, message = "bqd,bkd->bqk"}> : () -> ()
    %cst_25 = arith.constant dense<0.000000e+00> : vector<4x32x32xf32>
    %94 = tpu.matmul %92, %93, %cst_25 {dimension_numbers = #tpu.dot_dimension_numbers<[2], [2], [1], [1], [0, 0, 0, 1, 1, 1], [0], [0]>} : vector<4x32x32xbf16>, vector<4x32x32xbf16>, vector<4x32x32xf32> -> vector<4x32x32xf32>
    %cst_26 = arith.constant -1.000000e+30 : f32
    "tpu.trace_stop"() : () -> ()
    %95 = vector.shape_cast %42 : vector<1x32x32xi1> to vector<1x32x32xi1>
    %96 = vector.broadcast %95 : vector<1x32x32xi1> to vector<4x32x32xi1>
    %97 = vector.broadcast %cst_26 : f32 to vector<4x32x32xf32>
    %98 = arith.select %96, %94, %97 : vector<4x32x32xi1>, vector<4x32x32xf32>
    %cst_27 = arith.constant dense<0xFF800000> : vector<4x32xf32>
    %99 = vector.multi_reduction <maximumf>, %98, %cst_27 [2] : vector<4x32x32xf32> to vector<4x32xf32>
    %100 = vector.shape_cast %99 : vector<4x32xf32> to vector<4x32x1xf32>
    %101 = vector.broadcast %100 : vector<4x32x1xf32> to vector<4x32x32xf32>
    %102 = arith.subf %98, %101 : vector<4x32x32xf32>
    %103 = math.exp %102 : vector<4x32x32xf32>
    %cst_28 = arith.constant dense<0.000000e+00> : vector<4x32xf32>
    %104 = vector.multi_reduction <add>, %103, %cst_28 [2] : vector<4x32x32xf32> to vector<4x32xf32>
    %105 = vector.shape_cast %104 : vector<4x32xf32> to vector<4x32x1xf32>
    %106 = tpu.reciprocal %105 {approx = true} : vector<4x32x1xf32> -> vector<4x32x1xf32>
    %107 = vector.broadcast %106 : vector<4x32x1xf32> to vector<4x32x32xf32>
    %108 = arith.mulf %103, %107 : vector<4x32x32xf32>
    %109 = arith.truncf %108 : vector<4x32x32xf32> to vector<4x32x32xbf16>
    %110 = arith.truncf %91 : vector<4x32x32xf32> to vector<4x32x32xbf16>
    "tpu.trace_start"() <{level = 10 : i32, message = "bqk,bkd->bqd"}> : () -> ()
    %cst_29 = arith.constant dense<0.000000e+00> : vector<4x32x32xf32>
    %111 = tpu.matmul %109, %110, %cst_29 {dimension_numbers = #tpu.dot_dimension_numbers<[2], [1], [1], [2], [0, 0, 0, 1, 1, 2], [0], [0]>} : vector<4x32x32xbf16>, vector<4x32x32xbf16>, vector<4x32x32xf32> -> vector<4x32x32xf32>
    "tpu.trace_stop"() : () -> ()
    %112 = vector.extract_strided_slice %34 {offsets = [0, 0, 96], sizes = [4, 32, 32], strides = [1, 1, 1]} : vector<4x32x128xf32> to vector<4x32x32xf32>
    %113 = vector.extract_strided_slice %36 {offsets = [0, 0, 96], sizes = [4, 32, 32], strides = [1, 1, 1]} : vector<4x32x128xf32> to vector<4x32x32xf32>
    %114 = vector.extract_strided_slice %38 {offsets = [0, 0, 96], sizes = [4, 32, 32], strides = [1, 1, 1]} : vector<4x32x128xf32> to vector<4x32x32xf32>
    %115 = arith.truncf %112 : vector<4x32x32xf32> to vector<4x32x32xbf16>
    %116 = arith.truncf %113 : vector<4x32x32xf32> to vector<4x32x32xbf16>
    "tpu.trace_start"() <{level = 10 : i32, message = "bqd,bkd->bqk"}> : () -> ()
    %cst_30 = arith.constant dense<0.000000e+00> : vector<4x32x32xf32>
    %117 = tpu.matmul %115, %116, %cst_30 {dimension_numbers = #tpu.dot_dimension_numbers<[2], [2], [1], [1], [0, 0, 0, 1, 1, 1], [0], [0]>} : vector<4x32x32xbf16>, vector<4x32x32xbf16>, vector<4x32x32xf32> -> vector<4x32x32xf32>
    %cst_31 = arith.constant -1.000000e+30 : f32
    "tpu.trace_stop"() : () -> ()
    %118 = vector.shape_cast %42 : vector<1x32x32xi1> to vector<1x32x32xi1>
    %119 = vector.broadcast %118 : vector<1x32x32xi1> to vector<4x32x32xi1>
    %120 = vector.broadcast %cst_31 : f32 to vector<4x32x32xf32>
    %121 = arith.select %119, %117, %120 : vector<4x32x32xi1>, vector<4x32x32xf32>
    %cst_32 = arith.constant dense<0xFF800000> : vector<4x32xf32>
    %122 = vector.multi_reduction <maximumf>, %121, %cst_32 [2] : vector<4x32x32xf32> to vector<4x32xf32>
    %123 = vector.shape_cast %122 : vector<4x32xf32> to vector<4x32x1xf32>
    %124 = vector.broadcast %123 : vector<4x32x1xf32> to vector<4x32x32xf32>
    %125 = arith.subf %121, %124 : vector<4x32x32xf32>
    %126 = math.exp %125 : vector<4x32x32xf32>
    %cst_33 = arith.constant dense<0.000000e+00> : vector<4x32xf32>
    %127 = vector.multi_reduction <add>, %126, %cst_33 [2] : vector<4x32x32xf32> to vector<4x32xf32>
    %128 = vector.shape_cast %127 : vector<4x32xf32> to vector<4x32x1xf32>
    %129 = tpu.reciprocal %128 {approx = true} : vector<4x32x1xf32> -> vector<4x32x1xf32>
    %130 = vector.broadcast %129 : vector<4x32x1xf32> to vector<4x32x32xf32>
    %131 = arith.mulf %126, %130 : vector<4x32x32xf32>
    %132 = arith.truncf %131 : vector<4x32x32xf32> to vector<4x32x32xbf16>
    %133 = arith.truncf %114 : vector<4x32x32xf32> to vector<4x32x32xbf16>
    "tpu.trace_start"() <{level = 10 : i32, message = "bqk,bkd->bqd"}> : () -> ()
    %cst_34 = arith.constant dense<0.000000e+00> : vector<4x32x32xf32>
    %134 = tpu.matmul %132, %133, %cst_34 {dimension_numbers = #tpu.dot_dimension_numbers<[2], [1], [1], [2], [0, 0, 0, 1, 1, 2], [0], [0]>} : vector<4x32x32xbf16>, vector<4x32x32xbf16>, vector<4x32x32xf32> -> vector<4x32x32xf32>
    "tpu.trace_stop"() : () -> ()
    %135 = tpu.concatenate %65, %88, %111, %134 in 2 : vector<4x32x32xf32>, vector<4x32x32xf32>, vector<4x32x32xf32>, vector<4x32x32xf32> -> vector<4x32x128xf32>
    %136 = vector.shape_cast %135 : vector<4x32x128xf32> to vector<128x128xf32>
    %137 = arith.truncf %136 : vector<128x128xf32> to vector<128x128xbf16>
    %c0_35 = arith.constant 0 : index
    %c0_36 = arith.constant 0 : index
    %138 = vector.load %arg6[%c0_35, %c0_36] : memref<128x128xbf16, #tpu.memory_space<vmem>>, vector<128x128xbf16>
    %cst_37 = arith.constant dense<0.000000e+00> : vector<128x128xf32>
    %139 = tpu.matmul %137, %138, %cst_37 {dimension_numbers = #tpu.dot_dimension_numbers<[1], [0], [0], [1], [0, 0, 1, 1], [], []>} : vector<128x128xbf16>, vector<128x128xbf16>, vector<128x128xf32> -> vector<128x128xf32>
    %c0_38 = arith.constant 0 : index
    %c0_39 = arith.constant 0 : index
    %140 = vector.load %arg7[%c0_38, %c0_39] : memref<1x128xf32, #tpu.memory_space<vmem>>, vector<1x128xf32>
    %141 = vector.broadcast %140 : vector<1x128xf32> to vector<128x128xf32>
    %142 = arith.addf %139, %141 : vector<128x128xf32>
    %143 = arith.addf %2, %142 : vector<128x128xf32>
    %c0_40 = arith.constant 0 : index
    %c0_41 = arith.constant 0 : index
    %144 = vector.load %arg8[%c0_40, %c0_41] : memref<1x128xf32, #tpu.memory_space<vmem>>, vector<1x128xf32>
    %c0_42 = arith.constant 0 : index
    %c0_43 = arith.constant 0 : index
    %145 = vector.load %arg9[%c0_42, %c0_43] : memref<1x128xf32, #tpu.memory_space<vmem>>, vector<1x128xf32>
    %cst_44 = arith.constant dense<0.000000e+00> : vector<128xf32>
    %146 = vector.multi_reduction <add>, %143, %cst_44 [1] : vector<128x128xf32> to vector<128xf32>
    %147 = vector.shape_cast %146 : vector<128xf32> to vector<128x1xf32>
    %cst_45 = arith.constant 1.280000e+02 : f32
    %148 = vector.broadcast %cst_45 : f32 to vector<128x1xf32>
    %149 = arith.divf %147, %148 : vector<128x1xf32>
    %150 = vector.broadcast %149 : vector<128x1xf32> to vector<128x128xf32>
    %151 = arith.subf %143, %150 : vector<128x128xf32>
    %152 = arith.mulf %151, %151 : vector<128x128xf32>
    %cst_46 = arith.constant dense<0.000000e+00> : vector<128xf32>
    %153 = vector.multi_reduction <add>, %152, %cst_46 [1] : vector<128x128xf32> to vector<128xf32>
    %154 = vector.shape_cast %153 : vector<128xf32> to vector<128x1xf32>
    %cst_47 = arith.constant 1.280000e+02 : f32
    %155 = vector.broadcast %cst_47 : f32 to vector<128x1xf32>
    %156 = arith.divf %154, %155 : vector<128x1xf32>
    %157 = vector.broadcast %149 : vector<128x1xf32> to vector<128x128xf32>
    %158 = arith.subf %143, %157 : vector<128x128xf32>
    %cst_48 = arith.constant 9.99999974E-6 : f32
    %159 = vector.broadcast %cst_48 : f32 to vector<128x1xf32>
    %160 = arith.addf %156, %159 : vector<128x1xf32>
    %161 = math.rsqrt %160 : vector<128x1xf32>
    %162 = vector.broadcast %161 : vector<128x1xf32> to vector<128x128xf32>
    %163 = arith.mulf %158, %162 : vector<128x128xf32>
    %164 = vector.broadcast %144 : vector<1x128xf32> to vector<128x128xf32>
    %165 = arith.mulf %163, %164 : vector<128x128xf32>
    %166 = vector.broadcast %145 : vector<1x128xf32> to vector<128x128xf32>
    %167 = arith.addf %165, %166 : vector<128x128xf32>
    %168 = arith.truncf %167 : vector<128x128xf32> to vector<128x128xbf16>
    %c0_49 = arith.constant 0 : index
    %c0_50 = arith.constant 0 : index
    %169 = vector.load %arg10[%c0_49, %c0_50] : memref<128x512xbf16, #tpu.memory_space<vmem>>, vector<128x512xbf16>
    %cst_51 = arith.constant dense<0.000000e+00> : vector<128x512xf32>
    %170 = tpu.matmul %168, %169, %cst_51 {dimension_numbers = #tpu.dot_dimension_numbers<[1], [0], [0], [1], [0, 0, 1, 1], [], []>} : vector<128x128xbf16>, vector<128x512xbf16>, vector<128x512xf32> -> vector<128x512xf32>
    %c0_52 = arith.constant 0 : index
    %c0_53 = arith.constant 0 : index
    %171 = vector.load %arg11[%c0_52, %c0_53] : memref<1x512xf32, #tpu.memory_space<vmem>>, vector<1x512xf32>
    %172 = vector.broadcast %171 : vector<1x512xf32> to vector<128x512xf32>
    %173 = arith.addf %170, %172 : vector<128x512xf32>
    %cst_54 = arith.constant 5.000000e-01 : f32
    %174 = vector.broadcast %cst_54 : f32 to vector<128x512xf32>
    %175 = arith.mulf %174, %173 : vector<128x512xf32>
    %cst_55 = arith.constant 0.707106769 : f32
    %176 = vector.broadcast %cst_55 : f32 to vector<128x512xf32>
    %177 = arith.mulf %173, %176 : vector<128x512xf32>
    %178 = math.erf %177 : vector<128x512xf32>
    %cst_56 = arith.constant 1.000000e+00 : f32
    %179 = vector.broadcast %cst_56 : f32 to vector<128x512xf32>
    %180 = arith.addf %179, %178 : vector<128x512xf32>
    %181 = arith.mulf %175, %180 : vector<128x512xf32>
    %182 = arith.truncf %181 : vector<128x512xf32> to vector<128x512xbf16>
    %c0_57 = arith.constant 0 : index
    %c0_58 = arith.constant 0 : index
    %183 = vector.load %arg12[%c0_57, %c0_58] : memref<512x128xbf16, #tpu.memory_space<vmem>>, vector<512x128xbf16>
    %cst_59 = arith.constant dense<0.000000e+00> : vector<128x128xf32>
    %184 = tpu.matmul %182, %183, %cst_59 {dimension_numbers = #tpu.dot_dimension_numbers<[1], [0], [0], [1], [0, 0, 1, 1], [], []>} : vector<128x512xbf16>, vector<512x128xbf16>, vector<128x128xf32> -> vector<128x128xf32>
    %c0_60 = arith.constant 0 : index
    %c0_61 = arith.constant 0 : index
    %185 = vector.load %arg13[%c0_60, %c0_61] : memref<1x128xf32, #tpu.memory_space<vmem>>, vector<1x128xf32>
    %186 = vector.broadcast %185 : vector<1x128xf32> to vector<128x128xf32>
    %187 = arith.addf %184, %186 : vector<128x128xf32>
    %188 = arith.addf %143, %187 : vector<128x128xf32>
    %189 = vector.shape_cast %188 : vector<128x128xf32> to vector<4x32x128xf32>
    %190 = arith.truncf %189 : vector<4x32x128xf32> to vector<4x32x128xbf16>
    %c0_62 = arith.constant 0 : index
    %c0_63 = arith.constant 0 : index
    %c0_64 = arith.constant 0 : index
    %191 = vector.load %arg14[%c0_62, %c0_63, %c0_64] : memref<4x32x128xbf16, #tpu.memory_space<vmem>>, vector<4x32x128xbf16>
    tpu.vector_store %arg14[%c0_62, %c0_63, %c0_64], %190 {strides = array<i32>} : memref<4x32x128xbf16, #tpu.memory_space<vmem>>, vector<4x32x128xbf16>,
    return
  }
  func.func @transform_0(%arg0: i32) -> (i32, i32, i32) {
    %c0_i32 = arith.constant 0 : i32
    %c0_i32_0 = arith.constant 0 : i32
    %c0_i32_1 = arith.constant 0 : i32
    return %arg0, %c0_i32, %c0_i32_0 : i32, i32, i32
  }
  func.func @transform_1(%arg0: i32) -> (i32, i32) {
    %c0_i32 = arith.constant 0 : i32
    %c0_i32_0 = arith.constant 0 : i32
    %c0_i32_1 = arith.constant 0 : i32
    return %c0_i32, %c0_i32_0 : i32, i32
  }
  func.func @transform_2(%arg0: i32) -> (i32, i32) {
    %c0_i32 = arith.constant 0 : i32
    %c0_i32_0 = arith.constant 0 : i32
    %c0_i32_1 = arith.constant 0 : i32
    return %c0_i32, %c0_i32_0 : i32, i32
  }
  func.func @transform_3(%arg0: i32) -> (i32, i32) {
    %c0_i32 = arith.constant 0 : i32
    %c0_i32_0 = arith.constant 0 : i32
    %c0_i32_1 = arith.constant 0 : i32
    return %c0_i32, %c0_i32_0 : i32, i32
  }
  func.func @transform_4(%arg0: i32) -> (i32, i32) {
    %c0_i32 = arith.constant 0 : i32
    %c0_i32_0 = arith.constant 0 : i32
    %c0_i32_1 = arith.constant 0 : i32
    return %c0_i32, %c0_i32_0 : i32, i32
  }
  func.func @transform_5(%arg0: i32) -> (i32, i32) {
    %c0_i32 = arith.constant 0 : i32
    %c0_i32_0 = arith.constant 0 : i32
    %c0_i32_1 = arith.constant 0 : i32
    return %c0_i32, %c0_i32_0 : i32, i32
  }
  func.func @transform_6(%arg0: i32) -> (i32, i32) {
    %c0_i32 = arith.constant 0 : i32
    %c0_i32_0 = arith.constant 0 : i32
    %c0_i32_1 = arith.constant 0 : i32
    return %c0_i32, %c0_i32_0 : i32, i32
  }
  func.func @transform_7(%arg0: i32) -> (i32, i32) {
    %c0_i32 = arith.constant 0 : i32
    %c0_i32_0 = arith.constant 0 : i32
    %c0_i32_1 = arith.constant 0 : i32
    return %c0_i32, %c0_i32_0 : i32, i32
  }
  func.func @transform_8(%arg0: i32) -> (i32, i32) {
    %c0_i32 = arith.constant 0 : i32
    %c0_i32_0 = arith.constant 0 : i32
    %c0_i32_1 = arith.constant 0 : i32
    return %c0_i32, %c0_i32_0 : i32, i32
  }
  func.func @transform_9(%arg0: i32) -> (i32, i32) {
    %c0_i32 = arith.constant 0 : i32
    %c0_i32_0 = arith.constant 0 : i32
    %c0_i32_1 = arith.constant 0 : i32
    return %c0_i32, %c0_i32_0 : i32, i32
  }
  func.func @transform_10(%arg0: i32) -> (i32, i32) {
    %c0_i32 = arith.constant 0 : i32
    %c0_i32_0 = arith.constant 0 : i32
    %c0_i32_1 = arith.constant 0 : i32
    return %c0_i32, %c0_i32_0 : i32, i32
  }
  func.func @transform_11(%arg0: i32) -> (i32, i32) {
    %c0_i32 = arith.constant 0 : i32
    %c0_i32_0 = arith.constant 0 : i32
    %c0_i32_1 = arith.constant 0 : i32
    return %c0_i32, %c0_i32_0 : i32, i32
  }
  func.func @transform_12(%arg0: i32) -> (i32, i32) {
    %c0_i32 = arith.constant 0 : i32
    %c0_i32_0 = arith.constant 0 : i32
    %c0_i32_1 = arith.constant 0 : i32
    return %c0_i32, %c0_i32_0 : i32, i32
  }
  func.func @transform_13(%arg0: i32) -> (i32, i32, i32) {
    %c0_i32 = arith.constant 0 : i32
    %c0_i32_0 = arith.constant 0 : i32
    %c0_i32_1 = arith.constant 0 : i32
    return %arg0, %c0_i32, %c0_i32_0 : i32, i32, i32
  }
}

</mosaic_0001>

<llo_original>
// kernel: expert_block.1
$region0: #{expert_block.1}
  #allocation0 [shape = 'u32[]', space=smem, size = 0x4, offset = 0x4, fixed_abs, tag = 'smem constant byte address 0x4 - core index']
  #allocation1 [shape = 'u32[72,128]{1,0:T(1,128)}', space=vmem, size = 0x9000, scoped, tag = 'internal scratch']
  %s0 = inlined_call_operand.hbm [shape: bf16[8,32,128], index: 0, kind: input, shape index: {}]
  %s1 = inlined_call_operand.vmem [shape: f32[1,128], index: 1, kind: input, shape index: {}]
  %s2 = inlined_call_operand.vmem [shape: f32[1,128], index: 2, kind: input, shape index: {}]
  %s3 = inlined_call_operand.hbm [shape: bf16[128,384], index: 3, kind: input, shape index: {}]
  %s4 = inlined_call_operand.hbm [shape: f32[1,384], index: 4, kind: input, shape index: {}]
  %s5 = inlined_call_operand.hbm [shape: bf16[128,128], index: 5, kind: input, shape index: {}]
  %s6 = inlined_call_operand.hbm [shape: f32[1,128], index: 6, kind: input, shape index: {}]
  %s7 = inlined_call_operand.vmem [shape: f32[1,128], index: 7, kind: input, shape index: {}]
  %s8 = inlined_call_operand.vmem [shape: f32[1,128], index: 8, kind: input, shape index: {}]
  %s9 = inlined_call_operand.hbm [shape: bf16[128,512], index: 9, kind: input, shape index: {}]
  %s10 = inlined_call_operand.hbm [shape: f32[1,512], index: 10, kind: input, shape index: {}]
  %s11 = inlined_call_operand.hbm [shape: bf16[512,128], index: 11, kind: input, shape index: {}]
  %s12 = inlined_call_operand.hbm [shape: f32[1,128], index: 12, kind: input, shape index: {}]
  %s13 = inlined_call_operand.hbm [shape: bf16[8,32,128], index: 13, kind: output, shape index: {}]
  %s14 = sld [smem:[#allocation0]]
  $region121: #{expert_block.1} parent=0
    _
  %s16 = ssub.s32 1, %s14
  %s17 = scalar_select 0, %s16, %s14
  $region1: #{expert_block.1} parent=0
    #allocation2 [shape = 'u8[65536]{0}', space=vmem, size = 0x10000, scoped, tag = 'input window, operand 0']
    #allocation3 [shape = 's32[2]{0}', space=sflag, size = 0x8, scoped, tag = 'scoped memory for expert_block.1']
    #allocation4 [shape = 's32[2]{0}', space=sflag, size = 0x8, scoped, tag = 'scoped memory for expert_block.1']
    #allocation5 [shape = 'u8[98304]{0}', space=vmem, size = 0x18000, scoped, tag = 'input window, operand 3, single buffered']
    #allocation6 [shape = 's32[1]{0}', space=sflag, size = 0x4, scoped, tag = 'scoped memory for expert_block.1']
    #allocation7 [shape = 'u8[1536]{0}', space=vmem, size = 0x800, scoped, tag = 'input window, operand 4, single buffered']
    #allocation8 [shape = 'u8[32768]{0}', space=vmem, size = 0x8000, scoped, tag = 'input window, operand 5, single buffered']
    #allocation9 [shape = 's32[1]{0}', space=sflag, size = 0x4, scoped, tag = 'scoped memory for expert_block.1']
    #allocation10 [shape = 'u8[512]{0}', space=vmem, size = 0x400, scoped, tag = 'input window, operand 6, single buffered']
    #allocation11 [shape = 'u8[131072]{0}', space=vmem, size = 0x20000, scoped, tag = 'input window, operand 9, single buffered']
    #allocation12 [shape = 's32[1]{0}', space=sflag, size = 0x4, scoped, tag = 'scoped memory for expert_block.1']
    #allocation13 [shape = 'u8[2048]{0}', space=vmem, size = 0x800, scoped, tag = 'input window, operand 10, single buffered']
    #allocation14 [shape = 'u8[131072]{0}', space=vmem, size = 0x20000, scoped, tag = 'input window, operand 11, single buffered']
    #allocation15 [shape = 's32[1]{0}', space=sflag, size = 0x4, scoped, tag = 'scoped memory for expert_block.1']
    #allocation16 [shape = 'u8[512]{0}', space=vmem, size = 0x400, scoped, tag = 'input window, operand 12, single buffered']
    #allocation17 [shape = 'u8[65536]{0}', space=vmem, size = 0x10000, scoped, tag = 'output window, operand 0']
    %18 = vsyncpa [#allocation3], 0
    %s19 = scalar_lea.sflag [#allocation3], 1
    %20 = vsyncpa %s19, 0
    %21 = vsyncpa [#allocation6], 0
    %22 = vsyncpa [#allocation9], 0
    %23 = vsyncpa [#allocation12], 0
    %24 = vsyncpa [#allocation15], 0
    %25 = vsyncpa [#allocation4], 0
    %s26 = scalar_lea.sflag [#allocation4], 1
    %27 = vsyncpa %s26, 0
    loop: start=0, step=1, limit=4
    $region2: #{expert_block.1} parent=1 // loop_pre_header
      _
    $region3: #{expert_block.1} parent=1 // loop_header
      %s29 = sphi 0, %s33
      %p30 = scmp.ge.s32.totalorder %s29, 4
      %s39 = sphi 0, %s41
      %s42 = sphi 0, %s39
      %s43 = sphi 0, %s42
      %s59 = sphi 0, %s43
      %s63 = sphi 0, %s63
      %s65 = sphi 0, %s63
      %s66 = sphi 0, %s65
      %s80 = sphi 0, %s66
      %s84 = sphi 0, %s84
      %s86 = sphi 0, %s84
      %s87 = sphi 0, %s86
      %s101 = sphi 0, %s87
      %s105 = sphi 0, %s105
      %s107 = sphi 0, %s105
      %s108 = sphi 0, %s107
      %s122 = sphi 0, %s108
      %s126 = sphi 0, %s126
      %s128 = sphi 0, %s126
      %s129 = sphi 0, %s128
      %s143 = sphi 0, %s129
      %s147 = sphi 0, %s147
      %s149 = sphi 0, %s147
      %s150 = sphi 0, %s149
      %s164 = sphi 0, %s150
      %s168 = sphi 0, %s168
      %s170 = sphi 0, %s168
      %s171 = sphi 0, %s170
      %s185 = sphi 0, %s171
      %s189 = sphi 0, %s189
      %s191 = sphi 0, %s189
      %s192 = sphi 0, %s191
      %s206 = sphi 0, %s192
      %s210 = sphi 0, %s210
      %s212 = sphi 0, %s210
      %s213 = sphi 0, %s212
      %s227 = sphi 0, %s213
      %s231 = sphi 0, %s231
      %s233 = sphi 0, %s231
      %s234 = sphi 0, %s233
      %s248 = sphi 0, %s234
      %s252 = sphi 0, %s252
      %s254 = sphi 0, %s252
      %s255 = sphi 0, %s254
      %s269 = sphi 0, %s255
      %s273 = sphi 0, %s273
      %s275 = sphi 0, %s273
      %s276 = sphi 0, %s275
      %s290 = sphi 0, %s276
      %s294 = sphi 0, %s294
      %s296 = sphi 0, %s294
      %s297 = sphi 0, %s296
      %s311 = sphi 0, %s297
      %s317 = sphi 0, %s319
      %s320 = sphi 0, %s317
      %s321 = sphi 0, %s320
      %s337 = sphi 0, %s321
    $region4: #{expert_block.1} parent=1 // loop_header_branch
      %32 = sbr.rel (%p30) target = $region8
    $region5: #{expert_block.1} parent=1 // loop_body
      %s34 = ssub.s32 %s29, 1
      %s35 = ssub.s32 %s29, 2
      %s36 = sadd.s32 %s29, 1
      %s37 = ssub.s32 %s29, %s36
      %p38 = scmp.eq.s32.totalorder %s37, 0
      %s40 = sadd.s32 %s39, 1
      %s41 = scalar_select %p38, %s39, %s40
      %p44 = pneg %p38
      %p45 = scmp.eq.s32.totalorder %s29, 1
      %p46 = por %p44, %p45
      %p47 = scmp.ne.s32.totalorder %s39, %s42
      %p48 = scmp.eq.s32.totalorder %s29, 0
      %p49 = por %p47, %p48
      %p50 = scmp.ne.s32.totalorder %s39, %s42
      %p51 = scmp.eq.s32.totalorder %s34, 1
      %p52 = por %p50, %p51
      %p53 = scmp.ne.s32.totalorder %s42, %s43
      %p54 = scmp.eq.s32.totalorder %s34, 0
      %p55 = por %p53, %p54
      %p56 = scmp.ne.s32.totalorder %s42, %s43
      %p57 = scmp.eq.s32.totalorder %s35, 1
      %p58 = por %p56, %p57
      %p60 = scmp.ne.s32.totalorder %s43, %s59
      %p61 = scmp.eq.s32.totalorder %s35, 0
      %p62 = por %p60, %p61
      %s64 = sadd.s32 %s63, 1
      %p67 = scmp.eq.s32.totalorder %s29, 1
      %p68 = scmp.ne.s32.totalorder %s63, %s65
      %p69 = scmp.eq.s32.totalorder %s29, 0
      %p70 = por %p68, %p69
      %p71 = scmp.ne.s32.totalorder %s63, %s65
      %p72 = scmp.eq.s32.totalorder %s34, 1
      %p73 = por %p71, %p72
      %p74 = scmp.ne.s32.totalorder %s65, %s66
      %p75 = scmp.eq.s32.totalorder %s34, 0
      %p76 = por %p74, %p75
      %p77 = scmp.ne.s32.totalorder %s65, %s66
      %p78 = scmp.eq.s32.totalorder %s35, 1
      %p79 = por %p77, %p78
      %p81 = scmp.ne.s32.totalorder %s66, %s80
      %p82 = scmp.eq.s32.totalorder %s35, 0
      %p83 = por %p81, %p82
      %s85 = sadd.s32 %s84, 1
      %p88 = scmp.eq.s32.totalorder %s29, 1
      %p89 = scmp.ne.s32.totalorder %s84, %s86
      %p90 = scmp.eq.s32.totalorder %s29, 0
      %p91 = por %p89, %p90
      %p92 = scmp.ne.s32.totalorder %s84, %s86
      %p93 = scmp.eq.s32.totalorder %s34, 1
      %p94 = por %p92, %p93
      %p95 = scmp.ne.s32.totalorder %s86, %s87
      %p96 = scmp.eq.s32.totalorder %s34, 0
      %p97 = por %p95, %p96
      %p98 = scmp.ne.s32.totalorder %s86, %s87
      %p99 = scmp.eq.s32.totalorder %s35, 1
      %p100 = por %p98, %p99
      %p102 = scmp.ne.s32.totalorder %s87, %s101
      %p103 = scmp.eq.s32.totalorder %s35, 0
      %p104 = por %p102, %p103
      %s106 = sadd.s32 %s105, 1
      %p109 = scmp.eq.s32.totalorder %s29, 1
      %p110 = scmp.ne.s32.totalorder %s105, %s107
      %p111 = scmp.eq.s32.totalorder %s29, 0
      %p112 = por %p110, %p111
      %p113 = scmp.ne.s32.totalorder %s105, %s107
      %p114 = scmp.eq.s32.totalorder %s34, 1
      %p115 = por %p113, %p114
      %p116 = scmp.ne.s32.totalorder %s107, %s108
      %p117 = scmp.eq.s32.totalorder %s34, 0
      %p118 = por %p116, %p117
      %p119 = scmp.ne.s32.totalorder %s107, %s108
      %p120 = scmp.eq.s32.totalorder %s35, 1
      %p121 = por %p119, %p120
      %p123 = scmp.ne.s32.totalorder %s108, %s122
      %p124 = scmp.eq.s32.totalorder %s35, 0
      %p125 = por %p123, %p124
      %s127 = sadd.s32 %s126, 1
      %p130 = scmp.eq.s32.totalorder %s29, 1
      %p131 = scmp.ne.s32.totalorder %s126, %s128
      %p132 = scmp.eq.s32.totalorder %s29, 0
      %p133 = por %p131, %p132
      %p134 = scmp.ne.s32.totalorder %s126, %s128
      %p135 = scmp.eq.s32.totalorder %s34, 1
      %p136 = por %p134, %p135
      %p137 = scmp.ne.s32.totalorder %s128, %s129
      %p138 = scmp.eq.s32.totalorder %s34, 0
      %p139 = por %p137, %p138
      %p140 = scmp.ne.s32.totalorder %s128, %s129
      %p141 = scmp.eq.s32.totalorder %s35, 1
      %p142 = por %p140, %p141
      %p144 = scmp.ne.s32.totalorder %s129, %s143
      %p145 = scmp.eq.s32.totalorder %s35, 0
      %p146 = por %p144, %p145
      %s148 = sadd.s32 %s147, 1
      %p151 = scmp.eq.s32.totalorder %s29, 1
      %p152 = scmp.ne.s32.totalorder %s147, %s149
      %p153 = scmp.eq.s32.totalorder %s29, 0
      %p154 = por %p152, %p153
      %p155 = scmp.ne.s32.totalorder %s147, %s149
      %p156 = scmp.eq.s32.totalorder %s34, 1
      %p157 = por %p155, %p156
      %p158 = scmp.ne.s32.totalorder %s149, %s150
      %p159 = scmp.eq.s32.totalorder %s34, 0
      %p160 = por %p158, %p159
      %p161 = scmp.ne.s32.totalorder %s149, %s150
      %p162 = scmp.eq.s32.totalorder %s35, 1
      %p163 = por %p161, %p162
      %p165 = scmp.ne.s32.totalorder %s150, %s164
      %p166 = scmp.eq.s32.totalorder %s35, 0
      %p167 = por %p165, %p166
      %s169 = sadd.s32 %s168, 1
      %p172 = scmp.eq.s32.totalorder %s29, 1
      %p173 = scmp.ne.s32.totalorder %s168, %s170
      %p174 = scmp.eq.s32.totalorder %s29, 0
      %p175 = por %p173, %p174
      %p176 = scmp.ne.s32.totalorder %s168, %s170
      %p177 = scmp.eq.s32.totalorder %s34, 1
      %p178 = por %p176, %p177
      %p179 = scmp.ne.s32.totalorder %s170, %s171
      %p180 = scmp.eq.s32.totalorder %s34, 0
      %p181 = por %p179, %p180
      %p182 = scmp.ne.s32.totalorder %s170, %s171
      %p183 = scmp.eq.s32.totalorder %s35, 1
      %p184 = por %p182, %p183
      %p186 = scmp.ne.s32.totalorder %s171, %s185
      %p187 = scmp.eq.s32.totalorder %s35, 0
      %p188 = por %p186, %p187
      %s190 = sadd.s32 %s189, 1
      %p193 = scmp.eq.s32.totalorder %s29, 1
      %p194 = scmp.ne.s32.totalorder %s189, %s191
      %p195 = scmp.eq.s32.totalorder %s29, 0
      %p196 = por %p194, %p195
      %p197 = scmp.ne.s32.totalorder %s189, %s191
      %p198 = scmp.eq.s32.totalorder %s34, 1
      %p199 = por %p197, %p198
      %p200 = scmp.ne.s32.totalorder %s191, %s192
      %p201 = scmp.eq.s32.totalorder %s34, 0
      %p202 = por %p200, %p201
      %p203 = scmp.ne.s32.totalorder %s191, %s192
      %p204 = scmp.eq.s32.totalorder %s35, 1
      %p205 = por %p203, %p204
      %p207 = scmp.ne.s32.totalorder %s192, %s206
      %p208 = scmp.eq.s32.totalorder %s35, 0
      %p209 = por %p207, %p208
      %s211 = sadd.s32 %s210, 1
      %p214 = scmp.eq.s32.totalorder %s29, 1
      %p215 = scmp.ne.s32.totalorder %s210, %s212
      %p216 = scmp.eq.s32.totalorder %s29, 0
      %p217 = por %p215, %p216
      %p218 = scmp.ne.s32.totalorder %s210, %s212
      %p219 = scmp.eq.s32.totalorder %s34, 1
      %p220 = por %p218, %p219
      %p221 = scmp.ne.s32.totalorder %s212, %s213
      %p222 = scmp.eq.s32.totalorder %s34, 0
      %p223 = por %p221, %p222
      %p224 = scmp.ne.s32.totalorder %s212, %s213
      %p225 = scmp.eq.s32.totalorder %s35, 1
      %p226 = por %p224, %p225
      %p228 = scmp.ne.s32.totalorder %s213, %s227
      %p229 = scmp.eq.s32.totalorder %s35, 0
      %p230 = por %p228, %p229
      %s232 = sadd.s32 %s231, 1
      %p235 = scmp.eq.s32.totalorder %s29, 1
      %p236 = scmp.ne.s32.totalorder %s231, %s233
      %p237 = scmp.eq.s32.totalorder %s29, 0
      %p238 = por %p236, %p237
      %p239 = scmp.ne.s32.totalorder %s231, %s233
      %p240 = scmp.eq.s32.totalorder %s34, 1
      %p241 = por %p239, %p240
      %p242 = scmp.ne.s32.totalorder %s233, %s234
      %p243 = scmp.eq.s32.totalorder %s34, 0
      %p244 = por %p242, %p243
      %p245 = scmp.ne.s32.totalorder %s233, %s234
      %p246 = scmp.eq.s32.totalorder %s35, 1
      %p247 = por %p245, %p246
      %p249 = scmp.ne.s32.totalorder %s234, %s248
      %p250 = scmp.eq.s32.totalorder %s35, 0
      %p251 = por %p249, %p250
      %s253 = sadd.s32 %s252, 1
      %p256 = scmp.eq.s32.totalorder %s29, 1
      %p257 = scmp.ne.s32.totalorder %s252, %s254
      %p258 = scmp.eq.s32.totalorder %s29, 0
      %p259 = por %p257, %p258
      %p260 = scmp.ne.s32.totalorder %s252, %s254
      %p261 = scmp.eq.s32.totalorder %s34, 1
      %p262 = por %p260, %p261
      %p263 = scmp.ne.s32.totalorder %s254, %s255
      %p264 = scmp.eq.s32.totalorder %s34, 0
      %p265 = por %p263, %p264
      %p266 = scmp.ne.s32.totalorder %s254, %s255
      %p267 = scmp.eq.s32.totalorder %s35, 1
      %p268 = por %p266, %p267
      %p270 = scmp.ne.s32.totalorder %s255, %s269
      %p271 = scmp.eq.s32.totalorder %s35, 0
      %p272 = por %p270, %p271
      %s274 = sadd.s32 %s273, 1
      %p277 = scmp.eq.s32.totalorder %s29, 1
      %p278 = scmp.ne.s32.totalorder %s273, %s275
      %p279 = scmp.eq.s32.totalorder %s29, 0
      %p280 = por %p278, %p279
      %p281 = scmp.ne.s32.totalorder %s273, %s275
      %p282 = scmp.eq.s32.totalorder %s34, 1
      %p283 = por %p281, %p282
      %p284 = scmp.ne.s32.totalorder %s275, %s276
      %p285 = scmp.eq.s32.totalorder %s34, 0
      %p286 = por %p284, %p285
      %p287 = scmp.ne.s32.totalorder %s275, %s276
      %p288 = scmp.eq.s32.totalorder %s35, 1
      %p289 = por %p287, %p288
      %p291 = scmp.ne.s32.totalorder %s276, %s290
      %p292 = scmp.eq.s32.totalorder %s35, 0
      %p293 = por %p291, %p292
      %s295 = sadd.s32 %s294, 1
      %p298 = scmp.eq.s32.totalorder %s29, 1
      %p299 = scmp.ne.s32.totalorder %s294, %s296
      %p300 = scmp.eq.s32.totalorder %s29, 0
      %p301 = por %p299, %p300
      %p302 = scmp.ne.s32.totalorder %s294, %s296
      %p303 = scmp.eq.s32.totalorder %s34, 1
      %p304 = por %p302, %p303
      %p305 = scmp.ne.s32.totalorder %s296, %s297
      %p306 = scmp.eq.s32.totalorder %s34, 0
      %p307 = por %p305, %p306
      %p308 = scmp.ne.s32.totalorder %s296, %s297
      %p309 = scmp.eq.s32.totalorder %s35, 1
      %p310 = por %p308, %p309
      %p312 = scmp.ne.s32.totalorder %s297, %s311
      %p313 = scmp.eq.s32.totalorder %s35, 0
      %p314 = por %p312, %p313
      %s315 = ssub.s32 %s29, %s36
      %p316 = scmp.eq.s32.totalorder %s315, 0
      %s318 = sadd.s32 %s317, 1
      %s319 = scalar_select %p316, %s317, %s318
      %p322 = pneg %p316
      %p323 = scmp.eq.s32.totalorder %s29, 1
      %p324 = por %p322, %p323
      %p325 = scmp.ne.s32.totalorder %s317, %s320
      %p326 = scmp.eq.s32.totalorder %s29, 0
      %p327 = por %p325, %p326
      %p328 = scmp.ne.s32.totalorder %s317, %s320
      %p329 = scmp.eq.s32.totalorder %s34, 1
      %p330 = por %p328, %p329
      %p331 = scmp.ne.s32.totalorder %s320, %s321
      %p332 = scmp.eq.s32.totalorder %s34, 0
      %p333 = por %p331, %p332
      %p334 = scmp.ne.s32.totalorder %s320, %s321
      %p335 = scmp.eq.s32.totalorder %s35, 1
      %p336 = por %p334, %p335
      %p338 = scmp.ne.s32.totalorder %s321, %s337
      %p339 = scmp.eq.s32.totalorder %s35, 0
      %p340 = por %p338, %p339
      %p341 = scmp.le.s32.totalorder 1, %s29
      %p342 = scmp.lt.s32.totalorder %s29, 3
      %p343 = pnand %p341, %p342
      %p344 = pneg %p343
      // Predicated region
      $region9: #{expert_block.1} parent=5 // pred_check
        _
      $region10: #{expert_block.1} parent=5 // pred_check_branch
        %346 = sbr.rel (%p343) target = $region12
      $region11: #{expert_block.1} parent=5 // pred_region
        %s347 = ssub.s32 %s29, 1
        // Predicated region
        $region13: #{expert_block.1} parent=11 // pred_check
          %p348 = pneg %p76
        $region14: #{expert_block.1} parent=11 // pred_check_branch
          %350 = sbr.rel (%p348) target = $region16
        $region15: #{expert_block.1} parent=11 // pred_region
          _
        $region16: #{expert_block.1} parent=11 // pred_fallthru
          _
        // Predicated region
        $region17: #{expert_block.1} parent=11 // pred_check
          %p351 = pneg %p97
        $region18: #{expert_block.1} parent=11 // pred_check_branch
          %353 = sbr.rel (%p351) target = $region20
        $region19: #{expert_block.1} parent=11 // pred_region
          _
        $region20: #{expert_block.1} parent=11 // pred_fallthru
          _
        // Predicated region
        $region21: #{expert_block.1} parent=11 // pred_check
          %p354 = pneg %p118
        $region22: #{expert_block.1} parent=11 // pred_check_branch
          %356 = sbr.rel (%p354) target = $region24
        $region23: #{expert_block.1} parent=11 // pred_region
          %358 = vsyncadd [#allocation6], 0
          %s359 = sshll.u32 %s3, 4
          %s360 = int_to_ptr.hbm [resolvable:$true] %s359
          %s361 = sshll.u32 [#allocation5], 4
          %s362 = int_to_ptr.vmem [resolvable:$true] %s361
          %367 = dma.hbm_to_vmem [thread:$0]  %s360, 3072, %s362, [#allocation6], 192, 192, 12
        $region24: #{expert_block.1} parent=11 // pred_fallthru
          _
        // Predicated region
        $region25: #{expert_block.1} parent=11 // pred_check
          %p368 = pneg %p139
        $region26: #{expert_block.1} parent=11 // pred_check_branch
          %370 = sbr.rel (%p368) target = $region28
        $region27: #{expert_block.1} parent=11 // pred_region
          %372 = vsyncadd [#allocation6], 0
          %s374 = sshll.u32 %s4, 4
          %s375 = int_to_ptr.hbm [resolvable:$true] %s374
          %s376 = sshll.u32 [#allocation7], 4
          %s377 = int_to_ptr.vmem [resolvable:$true] %s376
          %379 = dma.hbm_to_vmem [thread:$0]  %s375, 48, %s377, [#allocation6]
        $region28: #{expert_block.1} parent=11 // pred_fallthru
          _
        // Predicated region
        $region29: #{expert_block.1} parent=11 // pred_check
          %p380 = pneg %p160
        $region30: #{expert_block.1} parent=11 // pred_check_branch
          %382 = sbr.rel (%p380) target = $region32
        $region31: #{expert_block.1} parent=11 // pred_region
          %384 = vsyncadd [#allocation9], 0
          %s385 = sshll.u32 %s5, 4
          %s386 = int_to_ptr.hbm [resolvable:$true] %s385
          %s387 = sshll.u32 [#allocation8], 4
          %s388 = int_to_ptr.vmem [resolvable:$true] %s387
          %393 = dma.hbm_to_vmem [thread:$0]  %s386, 1024, %s388, [#allocation9], 64, 64, 4
        $region32: #{expert_block.1} parent=11 // pred_fallthru
          _
        // Predicated region
        $region33: #{expert_block.1} parent=11 // pred_check
          %p394 = pneg %p181
        $region34: #{expert_block.1} parent=11 // pred_check_branch
          %396 = sbr.rel (%p394) target = $region36
        $region35: #{expert_block.1} parent=11 // pred_region
          %398 = vsyncadd [#allocation9], 0
          %s400 = sshll.u32 %s6, 4
          %s401 = int_to_ptr.hbm [resolvable:$true] %s400
          %s402 = sshll.u32 [#allocation10], 4
          %s403 = int_to_ptr.vmem [resolvable:$true] %s402
          %405 = dma.hbm_to_vmem [thread:$0]  %s401, 16, %s403, [#allocation9]
        $region36: #{expert_block.1} parent=11 // pred_fallthru
          _
        // Predicated region
        $region37: #{expert_block.1} parent=11 // pred_check
          %p406 = pneg %p202
        $region38: #{expert_block.1} parent=11 // pred_check_branch
          %408 = sbr.rel (%p406) target = $region40
        $region39: #{expert_block.1} parent=11 // pred_region
          _
        $region40: #{expert_block.1} parent=11 // pred_fallthru
          _
        // Predicated region
        $region41: #{expert_block.1} parent=11 // pred_check
          %p409 = pneg %p223
        $region42: #{expert_block.1} parent=11 // pred_check_branch
          %411 = sbr.rel (%p409) target = $region44
        $region43: #{expert_block.1} parent=11 // pred_region
          _
        $region44: #{expert_block.1} parent=11 // pred_fallthru
          _
        // Predicated region
        $region45: #{expert_block.1} parent=11 // pred_check
          %p412 = pneg %p244
        $region46: #{expert_block.1} parent=11 // pred_check_branch
          %414 = sbr.rel (%p412) target = $region48
        $region47: #{expert_block.1} parent=11 // pred_region
          %416 = vsyncadd [#allocation12], 0
          %s417 = sshll.u32 %s9, 4
          %s418 = int_to_ptr.hbm [resolvable:$true] %s417
          %s419 = sshll.u32 [#allocation11], 4
          %s420 = int_to_ptr.vmem [resolvable:$true] %s419
          %425 = dma.hbm_to_vmem [thread:$0]  %s418, 4096, %s420, [#allocation12], 256, 256, 16
        $region48: #{expert_block.1} parent=11 // pred_fallthru
          _
        // Predicated region
        $region49: #{expert_block.1} parent=11 // pred_check
          %p426 = pneg %p265
        $region50: #{expert_block.1} parent=11 // pred_check_branch
          %428 = sbr.rel (%p426) target = $region52
        $region51: #{expert_block.1} parent=11 // pred_region
          %430 = vsyncadd [#allocation12], 0
          %s432 = sshll.u32 %s10, 4
          %s433 = int_to_ptr.hbm [resolvable:$true] %s432
          %s434 = sshll.u32 [#allocation13], 4
          %s435 = int_to_ptr.vmem [resolvable:$true] %s434
          %437 = dma.hbm_to_vmem [thread:$0]  %s433, 64, %s435, [#allocation12]
        $region52: #{expert_block.1} parent=11 // pred_fallthru
          _
        // Predicated region
        $region53: #{expert_block.1} parent=11 // pred_check
          %p438 = pneg %p286
        $region54: #{expert_block.1} parent=11 // pred_check_branch
          %440 = sbr.rel (%p438) target = $region56
        $region55: #{expert_block.1} parent=11 // pred_region
          %442 = vsyncadd [#allocation15], 0
          %s443 = sshll.u32 %s11, 4
          %s444 = int_to_ptr.hbm [resolvable:$true] %s443
          %s445 = sshll.u32 [#allocation14], 4
          %s446 = int_to_ptr.vmem [resolvable:$true] %s445
          %451 = dma.hbm_to_vmem [thread:$0]  %s444, 4096, %s446, [#allocation15], 64, 64, 4
        $region56: #{expert_block.1} parent=11 // pred_fallthru
          _
        // Predicated region
        $region57: #{expert_block.1} parent=11 // pred_check
          %p452 = pneg %p307
        $region58: #{expert_block.1} parent=11 // pred_check_branch
          %454 = sbr.rel (%p452) target = $region60
        $region59: #{expert_block.1} parent=11 // pred_region
          %456 = vsyncadd [#allocation15], 0
          %s458 = sshll.u32 %s12, 4
          %s459 = int_to_ptr.hbm [resolvable:$true] %s458
          %s460 = sshll.u32 [#allocation16], 4
          %s461 = int_to_ptr.vmem [resolvable:$true] %s460
          %463 = dma.hbm_to_vmem [thread:$0]  %s459, 16, %s461, [#allocation15]
        $region60: #{expert_block.1} parent=11 // pred_fallthru
          _
      $region12: #{expert_block.1} parent=5 // pred_fallthru
        _
      %p464 = scmp.lt.s32.totalorder %s29, 2
      // Predicated region
      $region61: #{expert_block.1} parent=5 // pred_check
        %p465 = pneg %p464
      $region62: #{expert_block.1} parent=5 // pred_check_branch
        %467 = sbr.rel (%p465) target = $region64
      $region63: #{expert_block.1} parent=5 // pred_region
        // Predicated region
        $region65: #{expert_block.1} parent=63 // pred_check
          %p468 = pneg %p49
        $region66: #{expert_block.1} parent=63 // pred_check_branch
          %470 = sbr.rel (%p468) target = $region68
        $region67: #{expert_block.1} parent=63 // pred_region
          %s471 = sand.u32 %s39, 1
          %s472 = scalar_lea.sflag [#allocation3], %s471
          %s473 = sand.u32 %s39, 1
          %s474 = smul.addr %s473, 64
          %s475 = scalar_lea.vmem [#allocation2], %s474
          %s476 = smul.u32 4, %s29
          %478 = vsyncadd %s472, 0
          %s479 = smul.addr %s476, 4
          %s480 = smul.addr %s479, 4
          %s481 = scalar_lea.hbm %s0, %s480
          %s482 = sshll.u32 %s481, 4
          %s483 = int_to_ptr.hbm [resolvable:$true] %s482
          %s484 = sshll.u32 %s475, 4
          %s485 = int_to_ptr.vmem [resolvable:$true] %s484
          %490 = dma.hbm_to_vmem [thread:$0]  %s483, 1024, %s485, %s472, 64, 64, 4
        $region68: #{expert_block.1} parent=63 // pred_fallthru
          _
      $region64: #{expert_block.1} parent=5 // pred_fallthru
        _
      %p491 = scmp.le.s32.totalorder 1, %s29
      %p492 = scmp.lt.s32.totalorder %s29, 3
      %p493 = pnand %p491, %p492
      %p494 = pneg %p493
      // Predicated region
      $region69: #{expert_block.1} parent=5 // pred_check
        _
      $region70: #{expert_block.1} parent=5 // pred_check_branch
        %496 = sbr.rel (%p493) target = $region72
      $region71: #{expert_block.1} parent=5 // pred_region
        %s497 = ssub.s32 %s29, 1
        %s498 = sand.u32 %s42, 1
        %s499 = scalar_lea.sflag [#allocation3], %s498
        %s500 = sand.u32 %s42, 1
        %s501 = smul.addr %s500, 64
        %s502 = scalar_lea.vmem [#allocation2], %s501
        // Predicated region
        $region73: #{expert_block.1} parent=71 // pred_check
          %p503 = pneg %p55
        $region74: #{expert_block.1} parent=71 // pred_check_branch
          %505 = sbr.rel (%p503) target = $region76
        $region75: #{expert_block.1} parent=71 // pred_region
          %507 = dma.done %s499, 1024
        $region76: #{expert_block.1} parent=71 // pred_fallthru
          _
        // Predicated region
        $region77: #{expert_block.1} parent=71 // pred_check
          %p508 = pneg %p118
        $region78: #{expert_block.1} parent=71 // pred_check_branch
          %510 = sbr.rel (%p508) target = $region80
        $region79: #{expert_block.1} parent=71 // pred_region
          %512 = dma.done [#allocation6], 3072
        $region80: #{expert_block.1} parent=71 // pred_fallthru
          _
        // Predicated region
        $region81: #{expert_block.1} parent=71 // pred_check
          %p513 = pneg %p139
        $region82: #{expert_block.1} parent=71 // pred_check_branch
          %515 = sbr.rel (%p513) target = $region84
        $region83: #{expert_block.1} parent=71 // pred_region
          %517 = dma.done [#allocation6], 48
        $region84: #{expert_block.1} parent=71 // pred_fallthru
          _
        // Predicated region
        $region85: #{expert_block.1} parent=71 // pred_check
          %p518 = pneg %p160
        $region86: #{expert_block.1} parent=71 // pred_check_branch
          %520 = sbr.rel (%p518) target = $region88
        $region87: #{expert_block.1} parent=71 // pred_region
          %522 = dma.done [#allocation9], 1024
        $region88: #{expert_block.1} parent=71 // pred_fallthru
          _
        // Predicated region
        $region89: #{expert_block.1} parent=71 // pred_check
          %p523 = pneg %p181
        $region90: #{expert_block.1} parent=71 // pred_check_branch
          %525 = sbr.rel (%p523) target = $region92
        $region91: #{expert_block.1} parent=71 // pred_region
          %527 = dma.done [#allocation9], 16
        $region92: #{expert_block.1} parent=71 // pred_fallthru
          _
        // Predicated region
        $region93: #{expert_block.1} parent=71 // pred_check
          %p528 = pneg %p244
        $region94: #{expert_block.1} parent=71 // pred_check_branch
          %530 = sbr.rel (%p528) target = $region96
        $region95: #{expert_block.1} parent=71 // pred_region
          %532 = dma.done [#allocation12], 4096
        $region96: #{expert_block.1} parent=71 // pred_fallthru
          _
        // Predicated region
        $region97: #{expert_block.1} parent=71 // pred_check
          %p533 = pneg %p265
        $region98: #{expert_block.1} parent=71 // pred_check_branch
          %535 = sbr.rel (%p533) target = $region100
        $region99: #{expert_block.1} parent=71 // pred_region
          %537 = dma.done [#allocation12], 64
        $region100: #{expert_block.1} parent=71 // pred_fallthru
          _
        // Predicated region
        $region101: #{expert_block.1} parent=71 // pred_check
          %p538 = pneg %p286
        $region102: #{expert_block.1} parent=71 // pred_check_branch
          %540 = sbr.rel (%p538) target = $region104
        $region103: #{expert_block.1} parent=71 // pred_region
          %542 = dma.done [#allocation15], 4096
        $region104: #{expert_block.1} parent=71 // pred_fallthru
          _
        // Predicated region
        $region105: #{expert_block.1} parent=71 // pred_check
          %p543 = pneg %p307
        $region106: #{expert_block.1} parent=71 // pred_check_branch
          %545 = sbr.rel (%p543) target = $region108
        $region107: #{expert_block.1} parent=71 // pred_region
          %547 = dma.done [#allocation15], 16
        $region108: #{expert_block.1} parent=71 // pred_fallthru
          _
        %s548 = sand.u32 %s42, 1
        %s549 = scalar_lea.sflag [#allocation3], %s548
        %s550 = sand.u32 %s42, 1
        %s551 = smul.addr %s550, 64
        %s552 = scalar_lea.vmem [#allocation2], %s551
        %p553 = pneg %p55
        %p554 = pneg %p52
        %p555 = pneg %p76
        %p556 = pneg %p73
        %p557 = pneg %p97
        %p558 = pneg %p94
        %p559 = pneg %p118
        %p560 = pneg %p115
        %p561 = pneg %p139
        %p562 = pneg %p136
        %p563 = pneg %p160
        %p564 = pneg %p157
        %p565 = pneg %p181
        %p566 = pneg %p178
        %p567 = pneg %p202
        %p568 = pneg %p199
        %p569 = pneg %p223
        %p570 = pneg %p220
        %p571 = pneg %p244
        %p572 = pneg %p241
        %p573 = pneg %p265
        %p574 = pneg %p262
        %p575 = pneg %p286
        %p576 = pneg %p283
        %p577 = pneg %p307
        %p578 = pneg %p304
        %p579 = pneg %p333
        %p580 = pneg %p330
        %s581 = sand.u32 %s320, 1
        %s582 = scalar_lea.sflag [#allocation4], %s581
        %s583 = sand.u32 %s320, 1
        %s584 = smul.addr %s583, 64
        %s585 = scalar_lea.vmem [#allocation17], %s584
        %s586 = smul.u32 4, %s34
        %s587 = smul.u32 4, %s34
        %v589 = vld [vmem:[%s502] sm:$0xf]
        %v590 = vld [vmem:[%s502 + $0x4] sm:$0xf]
        %v591 = vld [vmem:[%s502 + $0x8] sm:$0xf]
        %v592 = vld [vmem:[%s502 + $0xc] sm:$0xf]
        %v593 = vld [vmem:[%s502 + $0x10] sm:$0xf]
        %v594 = vld [vmem:[%s502 + $0x14] sm:$0xf]
        %v595 = vld [vmem:[%s502 + $0x18] sm:$0xf]
        %v596 = vld [vmem:[%s502 + $0x1c] sm:$0xf]
        %v597 = vld [vmem:[%s502 + $0x20] sm:$0xf]
        %v598 = vld [vmem:[%s502 + $0x24] sm:$0xf]
        %v599 = vld [vmem:[%s502 + $0x28] sm:$0xf]
        %v600 = vld [vmem:[%s502 + $0x2c] sm:$0xf]
        %v601 = vld [vmem:[%s502 + $0x30] sm:$0xf]
        %v602 = vld [vmem:[%s502 + $0x34] sm:$0xf]
        %v603 = vld [vmem:[%s502 + $0x38] sm:$0xf]
        %v604 = vld [vmem:[%s502 + $0x3c] sm:$0xf]
        %v605 = vunpack.c.l.bf16 %v589
        %v606 = vunpack.c.l.bf16 %v590
        %v607 = vunpack.c.l.bf16 %v591
        %v608 = vunpack.c.l.bf16 %v592
        %v609 = vunpack.c.l.bf16 %v593
        %v610 = vunpack.c.l.bf16 %v594
        %v611 = vunpack.c.l.bf16 %v595
        %v612 = vunpack.c.l.bf16 %v596
        %v613 = vunpack.c.l.bf16 %v597
        %v614 = vunpack.c.l.bf16 %v598
        %v615 = vunpack.c.l.bf16 %v599
        %v616 = vunpack.c.l.bf16 %v600
        %v617 = vunpack.c.l.bf16 %v601
        %v618 = vunpack.c.l.bf16 %v602
        %v619 = vunpack.c.l.bf16 %v603
        %v620 = vunpack.c.l.bf16 %v604
        %v621 = vld [vmem:[%s1] sm:$0x1]
        %v622 = vld [vmem:[%s2] sm:$0x1]
        %623 = vadd.xlane.f32.xlu0 %v605
        %v624 = vpop.xlane.xlu0 %623
        %625 = vadd.xlane.f32.xlu0 %v606
        %v626 = vpop.xlane.xlu0 %625
        %627 = vadd.xlane.f32.xlu0 %v607
        %v628 = vpop.xlane.xlu0 %627
        %629 = vadd.xlane.f32.xlu0 %v608
        %v630 = vpop.xlane.xlu0 %629
        %631 = vadd.xlane.f32.xlu0 %v609
        %v632 = vpop.xlane.xlu0 %631
        %633 = vadd.xlane.f32.xlu0 %v610
        %v634 = vpop.xlane.xlu0 %633
        %635 = vadd.xlane.f32.xlu0 %v611
        %v636 = vpop.xlane.xlu0 %635
        %637 = vadd.xlane.f32.xlu0 %v612
        %v638 = vpop.xlane.xlu0 %637
        %639 = vadd.xlane.f32.xlu0 %v613
        %v640 = vpop.xlane.xlu0 %639
        %641 = vadd.xlane.f32.xlu0 %v614
        %v642 = vpop.xlane.xlu0 %641
        %643 = vadd.xlane.f32.xlu0 %v615
        %v644 = vpop.xlane.xlu0 %643
        %645 = vadd.xlane.f32.xlu0 %v616
        %v646 = vpop.xlane.xlu0 %645
        %647 = vadd.xlane.f32.xlu0 %v617
        %v648 = vpop.xlane.xlu0 %647
        %649 = vadd.xlane.f32.xlu0 %v618
        %v650 = vpop.xlane.xlu0 %649
        %651 = vadd.xlane.f32.xlu0 %v619
        %v652 = vpop.xlane.xlu0 %651
        %653 = vadd.xlane.f32.xlu0 %v620
        %v654 = vpop.xlane.xlu0 %653
        %v655 = vrcp.pop 128.0
        %v656 = vmul.f32 128.0, %v655
        %v657 = vsub.f32 1.0, %v656
        %v658 = vmul.f32 %v655, %v657
        %v659 = vadd.f32 %v655, %v658
        %vm660 = vweird.f32 %v655
        %v661 = vsel %vm660, %v655, %v659
        %v662 = vmul.f32 %v624, %v661
        %v663 = vmul.f32 %v626, %v661
        %v664 = vmul.f32 %v628, %v661
        %v665 = vmul.f32 %v630, %v661
        %v666 = vmul.f32 %v632, %v661
        %v667 = vmul.f32 %v634, %v661
        %v668 = vmul.f32 %v636, %v661
        %v669 = vmul.f32 %v638, %v661
        %v670 = vmul.f32 %v640, %v661
        %v671 = vmul.f32 %v642, %v661
        %v672 = vmul.f32 %v644, %v661
        %v673 = vmul.f32 %v646, %v661
        %v674 = vmul.f32 %v648, %v661
        %v675 = vmul.f32 %v650, %v661
        %v676 = vmul.f32 %v652, %v661
        %v677 = vmul.f32 %v654, %v661
        %v678 = vsub.f32 %v605, %v662
        %v679 = vsub.f32 %v606, %v663
        %v680 = vsub.f32 %v607, %v664
        %v681 = vsub.f32 %v608, %v665
        %v682 = vsub.f32 %v609, %v666
        %v683 = vsub.f32 %v610, %v667
        %v684 = vsub.f32 %v611, %v668
        %v685 = vsub.f32 %v612, %v669
        %v686 = vsub.f32 %v613, %v670
        %v687 = vsub.f32 %v614, %v671
        %v688 = vsub.f32 %v615, %v672
        %v689 = vsub.f32 %v616, %v673
        %v690 = vsub.f32 %v617, %v674
        %v691 = vsub.f32 %v618, %v675
        %v692 = vsub.f32 %v619, %v676
        %v693 = vsub.f32 %v620, %v677
        %v694 = vmul.f32 %v678, %v678
        %v695 = vmul.f32 %v679, %v679
        %v696 = vmul.f32 %v680, %v680
        %v697 = vmul.f32 %v681, %v681
        %v698 = vmul.f32 %v682, %v682
        %v699 = vmul.f32 %v683, %v683
        %v700 = vmul.f32 %v684, %v684
        %v701 = vmul.f32 %v685, %v685
        %v702 = vmul.f32 %v686, %v686
        %v703 = vmul.f32 %v687, %v687
        %v704 = vmul.f32 %v688, %v688
        %v705 = vmul.f32 %v689, %v689
        %v706 = vmul.f32 %v690, %v690
        %v707 = vmul.f32 %v691, %v691
        %v708 = vmul.f32 %v692, %v692
        %v709 = vmul.f32 %v693, %v693
        %710 = vadd.xlane.f32.xlu0 %v694
        %v711 = vpop.xlane.xlu0 %710
        %712 = vadd.xlane.f32.xlu0 %v695
        %v713 = vpop.xlane.xlu0 %712
        %714 = vadd.xlane.f32.xlu0 %v696
        %v715 = vpop.xlane.xlu0 %714
        %716 = vadd.xlane.f32.xlu0 %v697
        %v717 = vpop.xlane.xlu0 %716
        %718 = vadd.xlane.f32.xlu0 %v698
        %v719 = vpop.xlane.xlu0 %718
        %720 = vadd.xlane.f32.xlu0 %v699
        %v721 = vpop.xlane.xlu0 %720
        %722 = vadd.xlane.f32.xlu0 %v700
        %v723 = vpop.xlane.xlu0 %722
        %724 = vadd.xlane.f32.xlu0 %v701
        %v725 = vpop.xlane.xlu0 %724
        %726 = vadd.xlane.f32.xlu0 %v702
        %v727 = vpop.xlane.xlu0 %726
        %728 = vadd.xlane.f32.xlu0 %v703
        %v729 = vpop.xlane.xlu0 %728
        %730 = vadd.xlane.f32.xlu0 %v704
        %v731 = vpop.xlane.xlu0 %730
        %732 = vadd.xlane.f32.xlu0 %v705
        %v733 = vpop.xlane.xlu0 %732
        %734 = vadd.xlane.f32.xlu0 %v706
        %v735 = vpop.xlane.xlu0 %734
        %736 = vadd.xlane.f32.xlu0 %v707
        %v737 = vpop.xlane.xlu0 %736
        %738 = vadd.xlane.f32.xlu0 %v708
        %v739 = vpop.xlane.xlu0 %738
        %740 = vadd.xlane.f32.xlu0 %v709
        %v741 = vpop.xlane.xlu0 %740
        %v742 = vmul.f32 %v711, %v661
        %v743 = vmul.f32 %v713, %v661
        %v744 = vmul.f32 %v715, %v661
        %v745 = vmul.f32 %v717, %v661
        %v746 = vmul.f32 %v719, %v661
        %v747 = vmul.f32 %v721, %v661
        %v748 = vmul.f32 %v723, %v661
        %v749 = vmul.f32 %v725, %v661
        %v750 = vmul.f32 %v727, %v661
        %v751 = vmul.f32 %v729, %v661
        %v752 = vmul.f32 %v731, %v661
        %v753 = vmul.f32 %v733, %v661
        %v754 = vmul.f32 %v735, %v661
        %v755 = vmul.f32 %v737, %v661
        %v756 = vmul.f32 %v739, %v661
        %v757 = vmul.f32 %v741, %v661
        %v758 = vadd.f32 %v742, 1e-05
        %v759 = vadd.f32 %v743, 1e-05
        %v760 = vadd.f32 %v744, 1e-05
        %v761 = vadd.f32 %v745, 1e-05
        %v762 = vadd.f32 %v746, 1e-05
        %v763 = vadd.f32 %v747, 1e-05
        %v764 = vadd.f32 %v748, 1e-05
        %v765 = vadd.f32 %v749, 1e-05
        %v766 = vadd.f32 %v750, 1e-05
        %v767 = vadd.f32 %v751, 1e-05
        %v768 = vadd.f32 %v752, 1e-05
        %v769 = vadd.f32 %v753, 1e-05
        %v770 = vadd.f32 %v754, 1e-05
        %v771 = vadd.f32 %v755, 1e-05
        %v772 = vadd.f32 %v756, 1e-05
        %v773 = vadd.f32 %v757, 1e-05
        %v774 = vrsqrt.pop %v758
        %v775 = vmul.f32 %v774, %v758
        %v776 = vmul.f32 %v775, %v774
        %v777 = vmul.f32 0.5, %v776
        %v778 = vsub.f32 1.5, %v777
        %v779 = vmul.f32 %v774, %v778
        %vm780 = vweird.f32 %v758
        %vm781 = vweird.f32 %v774
        %vm782 = vmor %vm780, %vm781
        %v783 = vsel %vm782, %v774, %v779
        %v784 = vrsqrt.pop %v759
        %v785 = vmul.f32 %v784, %v759
        %v786 = vmul.f32 %v785, %v784
        %v787 = vmul.f32 0.5, %v786
        %v788 = vsub.f32 1.5, %v787
        %v789 = vmul.f32 %v784, %v788
        %vm790 = vweird.f32 %v759
        %vm791 = vweird.f32 %v784
        %vm792 = vmor %vm790, %vm791
        %v793 = vsel %vm792, %v784, %v789
        %v794 = vrsqrt.pop %v760
        %v795 = vmul.f32 %v794, %v760
        %v796 = vmul.f32 %v795, %v794
        %v797 = vmul.f32 0.5, %v796
        %v798 = vsub.f32 1.5, %v797
        %v799 = vmul.f32 %v794, %v798
        %vm800 = vweird.f32 %v760
        %vm801 = vweird.f32 %v794
        %vm802 = vmor %vm800, %vm801
        %v803 = vsel %vm802, %v794, %v799
        %v804 = vrsqrt.pop %v761
        %v805 = vmul.f32 %v804, %v761
        %v806 = vmul.f32 %v805, %v804
        %v807 = vmul.f32 0.5, %v806
        %v808 = vsub.f32 1.5, %v807
        %v809 = vmul.f32 %v804, %v808
        %vm810 = vweird.f32 %v761
        %vm811 = vweird.f32 %v804
        %vm812 = vmor %vm810, %vm811
        %v813 = vsel %vm812, %v804, %v809
        %v814 = vrsqrt.pop %v762
        %v815 = vmul.f32 %v814, %v762
        %v816 = vmul.f32 %v815, %v814
        %v817 = vmul.f32 0.5, %v816
        %v818 = vsub.f32 1.5, %v817
        %v819 = vmul.f32 %v814, %v818
        %vm820 = vweird.f32 %v762
        %vm821 = vweird.f32 %v814
        %vm822 = vmor %vm820, %vm821
        %v823 = vsel %vm822, %v814, %v819
        %v824 = vrsqrt.pop %v763
        %v825 = vmul.f32 %v824, %v763
        %v826 = vmul.f32 %v825, %v824
        %v827 = vmul.f32 0.5, %v826
        %v828 = vsub.f32 1.5, %v827
        %v829 = vmul.f32 %v824, %v828
        %vm830 = vweird.f32 %v763
        %vm831 = vweird.f32 %v824
        %vm832 = vmor %vm830, %vm831
        %v833 = vsel %vm832, %v824, %v829
        %v834 = vrsqrt.pop %v764
        %v835 = vmul.f32 %v834, %v764
        %v836 = vmul.f32 %v835, %v834
        %v837 = vmul.f32 0.5, %v836
        %v838 = vsub.f32 1.5, %v837
        %v839 = vmul.f32 %v834, %v838
        %vm840 = vweird.f32 %v764
        %vm841 = vweird.f32 %v834
        %vm842 = vmor %vm840, %vm841
        %v843 = vsel %vm842, %v834, %v839
        %v844 = vrsqrt.pop %v765
        %v845 = vmul.f32 %v844, %v765
        %v846 = vmul.f32 %v845, %v844
        %v847 = vmul.f32 0.5, %v846
        %v848 = vsub.f32 1.5, %v847
        %v849 = vmul.f32 %v844, %v848
        %vm850 = vweird.f32 %v765
        %vm851 = vweird.f32 %v844
        %vm852 = vmor %vm850, %vm851
        %v853 = vsel %vm852, %v844, %v849
        %v854 = vrsqrt.pop %v766
        %v855 = vmul.f32 %v854, %v766
        %v856 = vmul.f32 %v855, %v854
        %v857 = vmul.f32 0.5, %v856
        %v858 = vsub.f32 1.5, %v857
        %v859 = vmul.f32 %v854, %v858
        %vm860 = vweird.f32 %v766
        %vm861 = vweird.f32 %v854
        %vm862 = vmor %vm860, %vm861
        %v863 = vsel %vm862, %v854, %v859
        %v864 = vrsqrt.pop %v767
        %v865 = vmul.f32 %v864, %v767
        %v866 = vmul.f32 %v865, %v864
        %v867 = vmul.f32 0.5, %v866
        %v868 = vsub.f32 1.5, %v867
        %v869 = vmul.f32 %v864, %v868
        %vm870 = vweird.f32 %v767
        %vm871 = vweird.f32 %v864
        %vm872 = vmor %vm870, %vm871
        %v873 = vsel %vm872, %v864, %v869
        %v874 = vrsqrt.pop %v768
        %v875 = vmul.f32 %v874, %v768
        %v876 = vmul.f32 %v875, %v874
        %v877 = vmul.f32 0.5, %v876
        %v878 = vsub.f32 1.5, %v877
        %v879 = vmul.f32 %v874, %v878
        %vm880 = vweird.f32 %v768
        %vm881 = vweird.f32 %v874
        %vm882 = vmor %vm880, %vm881
        %v883 = vsel %vm882, %v874, %v879
        %v884 = vrsqrt.pop %v769
        %v885 = vmul.f32 %v884, %v769
        %v886 = vmul.f32 %v885, %v884
        %v887 = vmul.f32 0.5, %v886
        %v888 = vsub.f32 1.5, %v887
        %v889 = vmul.f32 %v884, %v888
        %vm890 = vweird.f32 %v769
        %vm891 = vweird.f32 %v884
        %vm892 = vmor %vm890, %vm891
        %v893 = vsel %vm892, %v884, %v889
        %v894 = vrsqrt.pop %v770
        %v895 = vmul.f32 %v894, %v770
        %v896 = vmul.f32 %v895, %v894
        %v897 = vmul.f32 0.5, %v896
        %v898 = vsub.f32 1.5, %v897
        %v899 = vmul.f32 %v894, %v898
        %vm900 = vweird.f32 %v770
        %vm901 = vweird.f32 %v894
        %vm902 = vmor %vm900, %vm901
        %v903 = vsel %vm902, %v894, %v899
        %v904 = vrsqrt.pop %v771
        %v905 = vmul.f32 %v904, %v771
        %v906 = vmul.f32 %v905, %v904
        %v907 = vmul.f32 0.5, %v906
        %v908 = vsub.f32 1.5, %v907
        %v909 = vmul.f32 %v904, %v908
        %vm910 = vweird.f32 %v771
        %vm911 = vweird.f32 %v904
        %vm912 = vmor %vm910, %vm911
        %v913 = vsel %vm912, %v904, %v909
        %v914 = vrsqrt.pop %v772
        %v915 = vmul.f32 %v914, %v772
        %v916 = vmul.f32 %v915, %v914
        %v917 = vmul.f32 0.5, %v916
        %v918 = vsub.f32 1.5, %v917
        %v919 = vmul.f32 %v914, %v918
        %vm920 = vweird.f32 %v772
        %vm921 = vweird.f32 %v914
        %vm922 = vmor %vm920, %vm921
        %v923 = vsel %vm922, %v914, %v919
        %v924 = vrsqrt.pop %v773
        %v925 = vmul.f32 %v924, %v773
        %v926 = vmul.f32 %v925, %v924
        %v927 = vmul.f32 0.5, %v926
        %v928 = vsub.f32 1.5, %v927
        %v929 = vmul.f32 %v924, %v928
        %vm930 = vweird.f32 %v773
        %vm931 = vweird.f32 %v924
        %vm932 = vmor %vm930, %vm931
        %v933 = vsel %vm932, %v924, %v929
        %v934 = vmul.f32 %v678, %v783
        %v935 = vmul.f32 %v679, %v793
        %v936 = vmul.f32 %v680, %v803
        %v937 = vmul.f32 %v681, %v813
        %v938 = vmul.f32 %v682, %v823
        %v939 = vmul.f32 %v683, %v833
        %v940 = vmul.f32 %v684, %v843
        %v941 = vmul.f32 %v685, %v853
        %v942 = vmul.f32 %v686, %v863
        %v943 = vmul.f32 %v687, %v873
        %v944 = vmul.f32 %v688, %v883
        %v945 = vmul.f32 %v689, %v893
        %v946 = vmul.f32 %v690, %v903
        %v947 = vmul.f32 %v691, %v913
        %v948 = vmul.f32 %v692, %v923
        %v949 = vmul.f32 %v693, %v933
        %v951 = vperm.slane %v621, 0
        %v953 = vmul.f32 %v934, %v951
        %v954 = vmul.f32 %v935, %v951
        %v955 = vmul.f32 %v936, %v951
        %v956 = vmul.f32 %v937, %v951
        %v957 = vmul.f32 %v938, %v951
        %v958 = vmul.f32 %v939, %v951
        %v959 = vmul.f32 %v940, %v951
        %v960 = vmul.f32 %v941, %v951
        %v961 = vmul.f32 %v942, %v951
        %v962 = vmul.f32 %v943, %v951
        %v963 = vmul.f32 %v944, %v951
        %v964 = vmul.f32 %v945, %v951
        %v965 = vmul.f32 %v946, %v951
        %v966 = vmul.f32 %v947, %v951
        %v967 = vmul.f32 %v948, %v951
        %v968 = vmul.f32 %v949, %v951
        %v970 = vperm.slane %v622, 0
        %v972 = vadd.f32 %v953, %v970
        %v973 = vadd.f32 %v954, %v970
        %v974 = vadd.f32 %v955, %v970
        %v975 = vadd.f32 %v956, %v970
        %v976 = vadd.f32 %v957, %v970
        %v977 = vadd.f32 %v958, %v970
        %v978 = vadd.f32 %v959, %v970
        %v979 = vadd.f32 %v960, %v970
        %v980 = vadd.f32 %v961, %v970
        %v981 = vadd.f32 %v962, %v970
        %v982 = vadd.f32 %v963, %v970
        %v983 = vadd.f32 %v964, %v970
        %v984 = vadd.f32 %v965, %v970
        %v985 = vadd.f32 %v966, %v970
        %v986 = vadd.f32 %v967, %v970
        %v987 = vadd.f32 %v968, %v970
        %v988 = vpack.c.bf16 %v973, %v972
        %v989 = vpack.c.bf16 %v975, %v974
        %v990 = vpack.c.bf16 %v977, %v976
        %v991 = vpack.c.bf16 %v979, %v978
        %v992 = vpack.c.bf16 %v981, %v980
        %v993 = vpack.c.bf16 %v983, %v982
        %v994 = vpack.c.bf16 %v985, %v984
        %v995 = vpack.c.bf16 %v987, %v986
        %v996 = vld [vmem:[#allocation5] sm:$0xff]
        %v997 = vld [vmem:[#allocation5 + $0x8] sm:$0xf]
        %v998 = vld [vmem:[#allocation5 + $0xc] sm:$0xff]
        %v999 = vld [vmem:[#allocation5 + $0x14] sm:$0xf]
        %v1000 = vld [vmem:[#allocation5 + $0x18] sm:$0xff]
        %v1001 = vld [vmem:[#allocation5 + $0x20] sm:$0xf]
        %v1002 = vld [vmem:[#allocation5 + $0x24] sm:$0xff]
        %v1003 = vld [vmem:[#allocation5 + $0x2c] sm:$0xf]
        %v1004 = vld [vmem:[#allocation5 + $0x30] sm:$0xff]
        %v1005 = vld [vmem:[#allocation5 + $0x38] sm:$0xf]
        %v1006 = vld [vmem:[#allocation5 + $0x3c] sm:$0xff]
        %v1007 = vld [vmem:[#allocation5 + $0x44] sm:$0xf]
        %v1008 = vld [vmem:[#allocation5 + $0x48] sm:$0xff]
        %v1009 = vld [vmem:[#allocation5 + $0x50] sm:$0xf]
        %v1010 = vld [vmem:[#allocation5 + $0x54] sm:$0xff]
        %v1011 = vld [vmem:[#allocation5 + $0x5c] sm:$0xf]
        %v1012 = vld [vmem:[#allocation5 + $0x60] sm:$0xff]
        %v1013 = vld [vmem:[#allocation5 + $0x68] sm:$0xf]
        %v1014 = vld [vmem:[#allocation5 + $0x6c] sm:$0xff]
        %v1015 = vld [vmem:[#allocation5 + $0x74] sm:$0xf]
        %v1016 = vld [vmem:[#allocation5 + $0x78] sm:$0xff]
        %v1017 = vld [vmem:[#allocation5 + $0x80] sm:$0xf]
        %v1018 = vld [vmem:[#allocation5 + $0x84] sm:$0xff]
        %v1019 = vld [vmem:[#allocation5 + $0x8c] sm:$0xf]
        %v1020 = vld [vmem:[#allocation5 + $0x90] sm:$0xff]
        %v1021 = vld [vmem:[#allocation5 + $0x98] sm:$0xf]
        %v1022 = vld [vmem:[#allocation5 + $0x9c] sm:$0xff]
        %v1023 = vld [vmem:[#allocation5 + $0xa4] sm:$0xf]
        %v1024 = vld [vmem:[#allocation5 + $0xa8] sm:$0xff]
        %v1025 = vld [vmem:[#allocation5 + $0xb0] sm:$0xf]
        %v1026 = vld [vmem:[#allocation5 + $0xb4] sm:$0xff]
        %v1027 = vld [vmem:[#allocation5 + $0xbc] sm:$0xf]
        %v1028 = vld [vmem:[#allocation7] sm:$0x7]
        %v1030 = vperm.slane %v1028, 0
        %v1031 = vperm.slane %v1028, 1
        %v1032 = vperm.slane %v1028, 2
        %v1068 = vunpack.c.l.b16 %v996
        %v1069 = vunpack.c.h.b16 %v996
        %v1070 = vunpack.c.l.b16 %v997
        %v1071 = vunpack.c.l.b16 %v998
        %v1072 = vunpack.c.h.b16 %v998
        %v1073 = vunpack.c.l.b16 %v999
        %v1074 = vunpack.c.l.b16 %v1000
        %v1075 = vunpack.c.h.b16 %v1000
        %v1076 = vunpack.c.l.b16 %v1001
        %v1077 = vunpack.c.l.b16 %v1002
        %v1078 = vunpack.c.h.b16 %v1002
        %v1079 = vunpack.c.l.b16 %v1003
        %v1080 = vunpack.c.l.b16 %v1004
        %v1081 = vunpack.c.h.b16 %v1004
        %v1082 = vunpack.c.l.b16 %v1005
        %v1083 = vunpack.c.l.b16 %v1006
        %v1084 = vunpack.c.h.b16 %v1006
        %v1085 = vunpack.c.l.b16 %v1007
        %v1086 = vunpack.c.l.b16 %v1008
        %v1087 = vunpack.c.h.b16 %v1008
        %v1088 = vunpack.c.l.b16 %v1009
        %v1089 = vunpack.c.l.b16 %v1010
        %v1090 = vunpack.c.h.b16 %v1010
        %v1091 = vunpack.c.l.b16 %v1011
        %v1092 = vunpack.c.l.b16 %v1012
        %v1093 = vunpack.c.h.b16 %v1012
        %v1094 = vunpack.c.l.b16 %v1013
        %v1095 = vunpack.c.l.b16 %v1014
        %v1096 = vunpack.c.h.b16 %v1014
        %v1097 = vunpack.c.l.b16 %v1015
        %v1098 = vunpack.c.l.b16 %v1016
        %v1099 = vunpack.c.h.b16 %v1016
        %v1100 = vunpack.c.l.b16 %v1017
        %v1101 = vunpack.c.l.b16 %v1018
        %v1102 = vunpack.c.h.b16 %v1018
        %v1103 = vunpack.c.l.b16 %v1019
        %v1104 = vunpack.c.l.b16 %v1020
        %v1105 = vunpack.c.h.b16 %v1020
        %v1106 = vunpack.c.l.b16 %v1021
        %v1107 = vunpack.c.l.b16 %v1022
        %v1108 = vunpack.c.h.b16 %v1022
        %v1109 = vunpack.c.l.b16 %v1023
        %v1110 = vunpack.c.l.b16 %v1024
        %v1111 = vunpack.c.h.b16 %v1024
        %v1112 = vunpack.c.l.b16 %v1025
        %v1113 = vunpack.c.l.b16 %v1026
        %v1114 = vunpack.c.h.b16 %v1026
        %v1115 = vunpack.c.l.b16 %v1027
        %v1116 = vpack.c.b16 %v1071, %v1068
        %v1117 = vpack.c.b16 %v1072, %v1069
        %v1118 = vpack.c.b16 %v1073, %v1070
        %v1119 = vpack.c.b16 %v1077, %v1074
        %v1120 = vpack.c.b16 %v1078, %v1075
        %v1121 = vpack.c.b16 %v1079, %v1076
        %v1122 = vpack.c.b16 %v1083, %v1080
        %v1123 = vpack.c.b16 %v1084, %v1081
        %v1124 = vpack.c.b16 %v1085, %v1082
        %v1125 = vpack.c.b16 %v1089, %v1086
        %v1126 = vpack.c.b16 %v1090, %v1087
        %v1127 = vpack.c.b16 %v1091, %v1088
        %v1128 = vpack.c.b16 %v1095, %v1092
        %v1129 = vpack.c.b16 %v1096, %v1093
        %v1130 = vpack.c.b16 %v1097, %v1094
        %v1131 = vpack.c.b16 %v1101, %v1098
        %v1132 = vpack.c.b16 %v1102, %v1099
        %v1133 = vpack.c.b16 %v1103, %v1100
        %v1134 = vpack.c.b16 %v1107, %v1104
        %v1135 = vpack.c.b16 %v1108, %v1105
        %v1136 = vpack.c.b16 %v1109, %v1106
        %v1137 = vpack.c.b16 %v1113, %v1110
        %v1138 = vpack.c.b16 %v1114, %v1111
        %v1139 = vpack.c.b16 %v1115, %v1112
        %1164 = vmatpush.bf16.msra.mxu0 %v1137
        %1165 = vmatpush.bf16.msra.mxu0 %v1134
        %1166 = vmatpush.bf16.msra.mxu0 %v1131
        %1167 = vmatpush.bf16.msra.mxu0 %v1128
        %1168 = vmatpush.bf16.msra.mxu0 %v1125
        %1169 = vmatpush.bf16.msra.mxu0 %v1122
        %1170 = vmatpush.bf16.msra.mxu0 %v1119
        %1171 = vmatpush.bf16.msra.mxu0 %v1116
        %1172 = vmatmul.bf16.gmra.mxu0 %v988
        %v1173 = vpop.f32.mrf.mxu0
        %v1174 = vadd.f32 %v1030, %v1173
        %v1175 = vpop.f32.mrf.mxu0
        %v1176 = vadd.f32 %v1030, %v1175
        %1177 = vmatmul.bf16.gmra.mxu0 %v989
        %v1178 = vpop.f32.mrf.mxu0
        %v1179 = vadd.f32 %v1030, %v1178
        %v1180 = vpop.f32.mrf.mxu0
        %v1181 = vadd.f32 %v1030, %v1180
        %1182 = vmatmul.bf16.gmra.mxu0 %v990
        %v1183 = vpop.f32.mrf.mxu0
        %v1184 = vadd.f32 %v1030, %v1183
        %v1185 = vpop.f32.mrf.mxu0
        %v1186 = vadd.f32 %v1030, %v1185
        %1187 = vmatmul.bf16.gmra.mxu0 %v991
        %v1188 = vpop.f32.mrf.mxu0
        %v1189 = vadd.f32 %v1030, %v1188
        %v1190 = vpop.f32.mrf.mxu0
        %v1191 = vadd.f32 %v1030, %v1190
        %1192 = vmatmul.bf16.gmra.mxu0 %v992
        %v1193 = vpop.f32.mrf.mxu0
        %v1194 = vadd.f32 %v1030, %v1193
        %v1195 = vpop.f32.mrf.mxu0
        %v1196 = vadd.f32 %v1030, %v1195
        %1197 = vmatmul.bf16.gmra.mxu0 %v993
        %v1198 = vpop.f32.mrf.mxu0
        %v1199 = vadd.f32 %v1030, %v1198
        %v1200 = vpop.f32.mrf.mxu0
        %v1201 = vadd.f32 %v1030, %v1200
        %1202 = vmatmul.bf16.gmra.mxu0 %v994
        %v1203 = vpop.f32.mrf.mxu0
        %v1204 = vadd.f32 %v1030, %v1203
        %v1205 = vpop.f32.mrf.mxu0
        %v1206 = vadd.f32 %v1030, %v1205
        %1207 = vmatmul.bf16.gmra.mxu0 %v995
        %v1208 = vpop.f32.mrf.mxu0
        %v1209 = vadd.f32 %v1030, %v1208
        %v1210 = vpop.f32.mrf.mxu0
        %v1211 = vadd.f32 %v1030, %v1210
        %1212 = vdwg.mxu0
        %1213 = vmatpush.bf16.msra.mxu0 %v1138
        %1214 = vmatpush.bf16.msra.mxu0 %v1135
        %1215 = vmatpush.bf16.msra.mxu0 %v1132
        %1216 = vmatpush.bf16.msra.mxu0 %v1129
        %1217 = vmatpush.bf16.msra.mxu0 %v1126
        %1218 = vmatpush.bf16.msra.mxu0 %v1123
        %1219 = vmatpush.bf16.msra.mxu0 %v1120
        %1220 = vmatpush.bf16.msra.mxu0 %v1117
        %1221 = vmatmul.bf16.gmra.mxu0 %v988
        %v1222 = vpop.f32.mrf.mxu0
        %v1223 = vadd.f32 %v1031, %v1222
        %v1224 = vpop.f32.mrf.mxu0
        %v1225 = vadd.f32 %v1031, %v1224
        %1226 = vmatmul.bf16.gmra.mxu0 %v989
        %v1227 = vpop.f32.mrf.mxu0
        %v1228 = vadd.f32 %v1031, %v1227
        %v1229 = vpop.f32.mrf.mxu0
        %v1230 = vadd.f32 %v1031, %v1229
        %1231 = vmatmul.bf16.gmra.mxu0 %v990
        %v1232 = vpop.f32.mrf.mxu0
        %v1233 = vadd.f32 %v1031, %v1232
        %v1234 = vpop.f32.mrf.mxu0
        %v1235 = vadd.f32 %v1031, %v1234
        %1236 = vmatmul.bf16.gmra.mxu0 %v991
        %v1237 = vpop.f32.mrf.mxu0
        %v1238 = vadd.f32 %v1031, %v1237
        %v1239 = vpop.f32.mrf.mxu0
        %v1240 = vadd.f32 %v1031, %v1239
        %1241 = vmatmul.bf16.gmra.mxu0 %v992
        %v1242 = vpop.f32.mrf.mxu0
        %v1243 = vadd.f32 %v1031, %v1242
        %v1244 = vpop.f32.mrf.mxu0
        %v1245 = vadd.f32 %v1031, %v1244
        %1246 = vmatmul.bf16.gmra.mxu0 %v993
        %v1247 = vpop.f32.mrf.mxu0
        %v1248 = vadd.f32 %v1031, %v1247
        %v1249 = vpop.f32.mrf.mxu0
        %v1250 = vadd.f32 %v1031, %v1249
        %1251 = vmatmul.bf16.gmra.mxu0 %v994
        %v1252 = vpop.f32.mrf.mxu0
        %v1253 = vadd.f32 %v1031, %v1252
        %v1254 = vpop.f32.mrf.mxu0
        %v1255 = vadd.f32 %v1031, %v1254
        %1256 = vmatmul.bf16.gmra.mxu0 %v995
        %v1257 = vpop.f32.mrf.mxu0
        %v1258 = vadd.f32 %v1031, %v1257
        %v1259 = vpop.f32.mrf.mxu0
        %v1260 = vadd.f32 %v1031, %v1259
        %1261 = vdwg.mxu0
        %1262 = vmatpush.bf16.msra.mxu0 %v1139
        %1263 = vmatpush.bf16.msra.mxu0 %v1136
        %1264 = vmatpush.bf16.msra.mxu0 %v1133
        %1265 = vmatpush.bf16.msra.mxu0 %v1130
        %1266 = vmatpush.bf16.msra.mxu0 %v1127
        %1267 = vmatpush.bf16.msra.mxu0 %v1124
        %1268 = vmatpush.bf16.msra.mxu0 %v1121
        %1269 = vmatpush.bf16.msra.mxu0 %v1118
        %1270 = vmatmul.bf16.gmra.mxu0 %v988
        %v1271 = vpop.f32.mrf.mxu0
        %v1272 = vadd.f32 %v1032, %v1271
        %v1273 = vpop.f32.mrf.mxu0
        %v1274 = vadd.f32 %v1032, %v1273
        %1275 = vmatmul.bf16.gmra.mxu0 %v989
        %v1276 = vpop.f32.mrf.mxu0
        %v1277 = vadd.f32 %v1032, %v1276
        %v1278 = vpop.f32.mrf.mxu0
        %v1279 = vadd.f32 %v1032, %v1278
        %1280 = vmatmul.bf16.gmra.mxu0 %v990
        %v1281 = vpop.f32.mrf.mxu0
        %v1282 = vadd.f32 %v1032, %v1281
        %v1283 = vpop.f32.mrf.mxu0
        %v1284 = vadd.f32 %v1032, %v1283
        %1285 = vmatmul.bf16.gmra.mxu0 %v991
        %v1286 = vpop.f32.mrf.mxu0
        %v1287 = vadd.f32 %v1032, %v1286
        %v1288 = vpop.f32.mrf.mxu0
        %v1289 = vadd.f32 %v1032, %v1288
        %1290 = vmatmul.bf16.gmra.mxu0 %v992
        %v1291 = vpop.f32.mrf.mxu0
        %v1292 = vadd.f32 %v1032, %v1291
        %v1293 = vpop.f32.mrf.mxu0
        %v1294 = vadd.f32 %v1032, %v1293
        %1295 = vmatmul.bf16.gmra.mxu0 %v993
        %v1296 = vpop.f32.mrf.mxu0
        %v1297 = vadd.f32 %v1032, %v1296
        %v1298 = vpop.f32.mrf.mxu0
        %v1299 = vadd.f32 %v1032, %v1298
        %1300 = vmatmul.bf16.gmra.mxu0 %v994
        %v1301 = vpop.f32.mrf.mxu0
        %v1302 = vadd.f32 %v1032, %v1301
        %v1303 = vpop.f32.mrf.mxu0
        %v1304 = vadd.f32 %v1032, %v1303
        %1305 = vmatmul.bf16.gmra.mxu0 %v995
        %v1306 = vpop.f32.mrf.mxu0
        %v1307 = vadd.f32 %v1032, %v1306
        %v1308 = vpop.f32.mrf.mxu0
        %v1309 = vadd.f32 %v1032, %v1308
        %1310 = vdwg.mxu0
        %v1311 = vlaneseq
        %v1312 = vshrl.u32 %v1311, 7
        %v1313 = vadd.s32 %v1312, 8
        %v1314 = vadd.s32 %v1312, 16
        %v1315 = vadd.s32 %v1312, 24
        %v1316 = vlaneseq
        %v1317 = vand.u32 %v1316, 127
        %vm1318 = vcmp.ge.s32.totalorder %v1312, %v1317
        %vm1319 = vcmp.ge.s32.totalorder %v1313, %v1317
        %vm1320 = vcmp.ge.s32.totalorder %v1314, %v1317
        %vm1321 = vcmp.ge.s32.totalorder %v1315, %v1317
        %v1322 = vpack.c.bf16 %v1174, %v1174
        %v1323 = vpack.c.bf16 %v1176, %v1176
        %v1324 = vpack.c.bf16 %v1179, %v1179
        %v1325 = vpack.c.bf16 %v1181, %v1181
        %v1326 = vpack.c.bf16 %v1184, %v1184
        %v1327 = vpack.c.bf16 %v1186, %v1186
        %v1328 = vpack.c.bf16 %v1189, %v1189
        %v1329 = vpack.c.bf16 %v1191, %v1191
        %v1330 = vpack.c.bf16 %v1194, %v1194
        %v1331 = vpack.c.bf16 %v1196, %v1196
        %v1332 = vpack.c.bf16 %v1199, %v1199
        %v1333 = vpack.c.bf16 %v1201, %v1201
        %v1334 = vpack.c.bf16 %v1204, %v1204
        %v1335 = vpack.c.bf16 %v1206, %v1206
        %v1336 = vpack.c.bf16 %v1209, %v1209
        %v1337 = vpack.c.bf16 %v1211, %v1211
        %v1338 = vpack.c.bf16 %v1223, %v1223
        %v1339 = vpack.c.bf16 %v1225, %v1225
        %v1340 = vpack.c.bf16 %v1228, %v1228
        %v1341 = vpack.c.bf16 %v1230, %v1230
        %v1342 = vpack.c.bf16 %v1233, %v1233
        %v1343 = vpack.c.bf16 %v1235, %v1235
        %v1344 = vpack.c.bf16 %v1238, %v1238
        %v1345 = vpack.c.bf16 %v1240, %v1240
        %v1346 = vpack.c.bf16 %v1243, %v1243
        %v1347 = vpack.c.bf16 %v1245, %v1245
        %v1348 = vpack.c.bf16 %v1248, %v1248
        %v1349 = vpack.c.bf16 %v1250, %v1250
        %v1350 = vpack.c.bf16 %v1253, %v1253
        %v1351 = vpack.c.bf16 %v1255, %v1255
        %v1352 = vpack.c.bf16 %v1258, %v1258
        %v1353 = vpack.c.bf16 %v1260, %v1260
        %v1358 = vunpack.c.l.b16 %v1322
        %v1359 = vunpack.c.l.b16 %v1323
        %v1360 = vunpack.c.l.b16 %v1324
        %v1361 = vunpack.c.l.b16 %v1325
        %v1362 = vpack.c.b16 %v1359, %v1358
        %v1363 = vpack.c.b16 %v1361, %v1360
        %v1368 = vunpack.c.l.b16 %v1338
        %v1369 = vunpack.c.l.b16 %v1339
        %v1370 = vunpack.c.l.b16 %v1340
        %v1371 = vunpack.c.l.b16 %v1341
        %v1372 = vpack.c.b16 %v1369, %v1368
        %v1373 = vpack.c.b16 %v1371, %v1370
        %vm1374 = vcmask 261120
        %v1376 = vsel %vm1374, %v1362, 0
        %v1379 = vsel %vm1374, %v1363, 0
        %v1382 = vsel %vm1374, %v1372, 0
        %v1385 = vsel %vm1374, %v1373, 0
        %1387 = vmatpush.bf16.xpose.msra.mxu0 0
        %1388 = vmatpush.bf16.xpose.msra.mxu0 0
        %1389 = vmatpush.bf16.xpose.msra.mxu0 0
        %1390 = vmatpush.bf16.xpose.msra.mxu0 0
        %1391 = vmatpush.bf16.xpose.msra.mxu0 0
        %1392 = vmatpush.bf16.xpose.msra.mxu0 0
        %1393 = vmatpush.bf16.xpose.msra.mxu0 %v1385
        %1394 = vmatpush.bf16.xpose.msra.mxu0 %v1382
        %1395 = vmatmul.bf16.gmra.mxu0 %v1376
        %v1396 = vpop.f32.mrf.mxu0
        %v1397 = vadd.f32 0.0, %v1396
        %v1398 = vpop.f32.mrf.mxu0
        %v1399 = vadd.f32 0.0, %v1398
        %1400 = vmatmul.bf16.gmra.mxu0 %v1379
        %v1401 = vpop.f32.mrf.mxu0
        %v1402 = vadd.f32 0.0, %v1401
        %v1403 = vpop.f32.mrf.mxu0
        %v1404 = vadd.f32 0.0, %v1403
        %1405 = vdwg.mxu0
        %v1410 = vunpack.c.l.b16 %v1326
        %v1411 = vunpack.c.l.b16 %v1327
        %v1412 = vunpack.c.l.b16 %v1328
        %v1413 = vunpack.c.l.b16 %v1329
        %v1414 = vpack.c.b16 %v1411, %v1410
        %v1415 = vpack.c.b16 %v1413, %v1412
        %v1420 = vunpack.c.l.b16 %v1342
        %v1421 = vunpack.c.l.b16 %v1343
        %v1422 = vunpack.c.l.b16 %v1344
        %v1423 = vunpack.c.l.b16 %v1345
        %v1424 = vpack.c.b16 %v1421, %v1420
        %v1425 = vpack.c.b16 %v1423, %v1422
        %v1427 = vsel %vm1374, %v1414, 0
        %v1430 = vsel %vm1374, %v1415, 0
        %v1433 = vsel %vm1374, %v1424, 0
        %v1436 = vsel %vm1374, %v1425, 0
        %1438 = vmatpush.bf16.xpose.msra.mxu0 0
        %1439 = vmatpush.bf16.xpose.msra.mxu0 0
        %1440 = vmatpush.bf16.xpose.msra.mxu0 0
        %1441 = vmatpush.bf16.xpose.msra.mxu0 0
        %1442 = vmatpush.bf16.xpose.msra.mxu0 0
        %1443 = vmatpush.bf16.xpose.msra.mxu0 0
        %1444 = vmatpush.bf16.xpose.msra.mxu0 %v1436
        %1445 = vmatpush.bf16.xpose.msra.mxu0 %v1433
        %1446 = vmatmul.bf16.gmra.mxu0 %v1427
        %v1447 = vpop.f32.mrf.mxu0
        %v1448 = vadd.f32 0.0, %v1447
        %v1449 = vpop.f32.mrf.mxu0
        %v1450 = vadd.f32 0.0, %v1449
        %1451 = vmatmul.bf16.gmra.mxu0 %v1430
        %v1452 = vpop.f32.mrf.mxu0
        %v1453 = vadd.f32 0.0, %v1452
        %v1454 = vpop.f32.mrf.mxu0
        %v1455 = vadd.f32 0.0, %v1454
        %1456 = vdwg.mxu0
        %v1461 = vunpack.c.l.b16 %v1330
        %v1462 = vunpack.c.l.b16 %v1331
        %v1463 = vunpack.c.l.b16 %v1332
        %v1464 = vunpack.c.l.b16 %v1333
        %v1465 = vpack.c.b16 %v1462, %v1461
        %v1466 = vpack.c.b16 %v1464, %v1463
        %v1471 = vunpack.c.l.b16 %v1346
        %v1472 = vunpack.c.l.b16 %v1347
        %v1473 = vunpack.c.l.b16 %v1348
        %v1474 = vunpack.c.l.b16 %v1349
        %v1475 = vpack.c.b16 %v1472, %v1471
        %v1476 = vpack.c.b16 %v1474, %v1473
        %v1478 = vsel %vm1374, %v1465, 0
        %v1481 = vsel %vm1374, %v1466, 0
        %v1484 = vsel %vm1374, %v1475, 0
        %v1487 = vsel %vm1374, %v1476, 0
        %1489 = vmatpush.bf16.xpose.msra.mxu0 0
        %1490 = vmatpush.bf16.xpose.msra.mxu0 0
        %1491 = vmatpush.bf16.xpose.msra.mxu0 0
        %1492 = vmatpush.bf16.xpose.msra.mxu0 0
        %1493 = vmatpush.bf16.xpose.msra.mxu0 0
        %1494 = vmatpush.bf16.xpose.msra.mxu0 0
        %1495 = vmatpush.bf16.xpose.msra.mxu0 %v1487
        %1496 = vmatpush.bf16.xpose.msra.mxu0 %v1484
        %1497 = vmatmul.bf16.gmra.mxu0 %v1478
        %v1498 = vpop.f32.mrf.mxu0
        %v1499 = vadd.f32 0.0, %v1498
        %v1500 = vpop.f32.mrf.mxu0
        %v1501 = vadd.f32 0.0, %v1500
        %1502 = vmatmul.bf16.gmra.mxu0 %v1481
        %v1503 = vpop.f32.mrf.mxu0
        %v1504 = vadd.f32 0.0, %v1503
        %v1505 = vpop.f32.mrf.mxu0
        %v1506 = vadd.f32 0.0, %v1505
        %1507 = vdwg.mxu0
        %v1512 = vunpack.c.l.b16 %v1334
        %v1513 = vunpack.c.l.b16 %v1335
        %v1514 = vunpack.c.l.b16 %v1336
        %v1515 = vunpack.c.l.b16 %v1337
        %v1516 = vpack.c.b16 %v1513, %v1512
        %v1517 = vpack.c.b16 %v1515, %v1514
        %v1522 = vunpack.c.l.b16 %v1350
        %v1523 = vunpack.c.l.b16 %v1351
        %v1524 = vunpack.c.l.b16 %v1352
        %v1525 = vunpack.c.l.b16 %v1353
        %v1526 = vpack.c.b16 %v1523, %v1522
        %v1527 = vpack.c.b16 %v1525, %v1524
        %v1529 = vsel %vm1374, %v1516, 0
        %v1532 = vsel %vm1374, %v1517, 0
        %v1535 = vsel %vm1374, %v1526, 0
        %v1538 = vsel %vm1374, %v1527, 0
        %1540 = vmatpush.bf16.xpose.msra.mxu0 0
        %1541 = vmatpush.bf16.xpose.msra.mxu0 0
        %1542 = vmatpush.bf16.xpose.msra.mxu0 0
        %1543 = vmatpush.bf16.xpose.msra.mxu0 0
        %1544 = vmatpush.bf16.xpose.msra.mxu0 0
        %1545 = vmatpush.bf16.xpose.msra.mxu0 0
        %1546 = vmatpush.bf16.xpose.msra.mxu0 %v1538
        %1547 = vmatpush.bf16.xpose.msra.mxu0 %v1535
        %1548 = vmatmul.bf16.gmra.mxu0 %v1529
        %v1549 = vpop.f32.mrf.mxu0
        %v1550 = vadd.f32 0.0, %v1549
        %v1551 = vpop.f32.mrf.mxu0
        %v1552 = vadd.f32 0.0, %v1551
        %1553 = vmatmul.bf16.gmra.mxu0 %v1532
        %v1554 = vpop.f32.mrf.mxu0
        %v1555 = vadd.f32 0.0, %v1554
        %v1556 = vpop.f32.mrf.mxu0
        %v1557 = vadd.f32 0.0, %v1556
        %1558 = vdwg.mxu0
        %v1559 = vsel %vm1318, 1, 0
        %v1560 = vsel %vm1319, 1, 0
        %v1561 = vsel %vm1320, 1, 0
        %v1562 = vsel %vm1321, 1, 0
        %vm1563 = vcmp.eq.s32.totalorder %v1559, 1
        %vm1564 = vcmp.eq.s32.totalorder %v1560, 1
        %vm1565 = vcmp.eq.s32.totalorder %v1561, 1
        %vm1566 = vcmp.eq.s32.totalorder %v1562, 1
        %v1567 = vsel %vm1563, %v1397, -1e+30
        %v1568 = vsel %vm1564, %v1399, -1e+30
        %v1569 = vsel %vm1565, %v1402, -1e+30
        %v1570 = vsel %vm1566, %v1404, -1e+30
        %v1571 = vsel %vm1563, %v1448, -1e+30
        %v1572 = vsel %vm1564, %v1450, -1e+30
        %v1573 = vsel %vm1565, %v1453, -1e+30
        %v1574 = vsel %vm1566, %v1455, -1e+30
        %v1575 = vsel %vm1563, %v1499, -1e+30
        %v1576 = vsel %vm1564, %v1501, -1e+30
        %v1577 = vsel %vm1565, %v1504, -1e+30
        %v1578 = vsel %vm1566, %v1506, -1e+30
        %v1579 = vsel %vm1563, %v1550, -1e+30
        %v1580 = vsel %vm1564, %v1552, -1e+30
        %v1581 = vsel %vm1565, %v1555, -1e+30
        %v1582 = vsel %vm1566, %v1557, -1e+30
        %v1583 = vsel %vm1374, %v1567, -inf
        %1584 = vmax.xlane.f32.xlu0 %v1583
        %v1585 = vpop.xlane.xlu0 %1584
        %v1586 = vsel %vm1374, %v1568, -inf
        %1587 = vmax.xlane.f32.xlu0 %v1586
        %v1588 = vpop.xlane.xlu0 %1587
        %v1589 = vsel %vm1374, %v1569, -inf
        %1590 = vmax.xlane.f32.xlu0 %v1589
        %v1591 = vpop.xlane.xlu0 %1590
        %v1592 = vsel %vm1374, %v1570, -inf
        %1593 = vmax.xlane.f32.xlu0 %v1592
        %v1594 = vpop.xlane.xlu0 %1593
        %v1595 = vsel %vm1374, %v1571, -inf
        %1596 = vmax.xlane.f32.xlu0 %v1595
        %v1597 = vpop.xlane.xlu0 %1596
        %v1598 = vsel %vm1374, %v1572, -inf
        %1599 = vmax.xlane.f32.xlu0 %v1598
        %v1600 = vpop.xlane.xlu0 %1599
        %v1601 = vsel %vm1374, %v1573, -inf
        %1602 = vmax.xlane.f32.xlu0 %v1601
        %v1603 = vpop.xlane.xlu0 %1602
        %v1604 = vsel %vm1374, %v1574, -inf
        %1605 = vmax.xlane.f32.xlu0 %v1604
        %v1606 = vpop.xlane.xlu0 %1605
        %v1607 = vsel %vm1374, %v1575, -inf
        %1608 = vmax.xlane.f32.xlu0 %v1607
        %v1609 = vpop.xlane.xlu0 %1608
        %v1610 = vsel %vm1374, %v1576, -inf
        %1611 = vmax.xlane.f32.xlu0 %v1610
        %v1612 = vpop.xlane.xlu0 %1611
        %v1613 = vsel %vm1374, %v1577, -inf
        %1614 = vmax.xlane.f32.xlu0 %v1613
        %v1615 = vpop.xlane.xlu0 %1614
        %v1616 = vsel %vm1374, %v1578, -inf
        %1617 = vmax.xlane.f32.xlu0 %v1616
        %v1618 = vpop.xlane.xlu0 %1617
        %v1619 = vsel %vm1374, %v1579, -inf
        %1620 = vmax.xlane.f32.xlu0 %v1619
        %v1621 = vpop.xlane.xlu0 %1620
        %v1622 = vsel %vm1374, %v1580, -inf
        %1623 = vmax.xlane.f32.xlu0 %v1622
        %v1624 = vpop.xlane.xlu0 %1623
        %v1625 = vsel %vm1374, %v1581, -inf
        %1626 = vmax.xlane.f32.xlu0 %v1625
        %v1627 = vpop.xlane.xlu0 %1626
        %v1628 = vsel %vm1374, %v1582, -inf
        %1629 = vmax.xlane.f32.xlu0 %v1628
        %v1630 = vpop.xlane.xlu0 %1629
        %v1631 = vsub.f32 %v1567, %v1585
        %v1632 = vsub.f32 %v1568, %v1588
        %v1633 = vsub.f32 %v1569, %v1591
        %v1634 = vsub.f32 %v1570, %v1594
        %v1635 = vsub.f32 %v1571, %v1597
        %v1636 = vsub.f32 %v1572, %v1600
        %v1637 = vsub.f32 %v1573, %v1603
        %v1638 = vsub.f32 %v1574, %v1606
        %v1639 = vsub.f32 %v1575, %v1609
        %v1640 = vsub.f32 %v1576, %v1612
        %v1641 = vsub.f32 %v1577, %v1615
        %v1642 = vsub.f32 %v1578, %v1618
        %v1643 = vsub.f32 %v1579, %v1621
        %v1644 = vsub.f32 %v1580, %v1624
        %v1645 = vsub.f32 %v1581, %v1627
        %v1646 = vsub.f32 %v1582, %v1630
        %v1647 = vmul.f32 %v1631, 1.442695
        %v1648 = vpow.pop %v1647
        %v1649 = vmul.f32 %v1632, 1.442695
        %v1650 = vpow.pop %v1649
        %v1651 = vmul.f32 %v1633, 1.442695
        %v1652 = vpow.pop %v1651
        %v1653 = vmul.f32 %v1634, 1.442695
        %v1654 = vpow.pop %v1653
        %v1655 = vmul.f32 %v1635, 1.442695
        %v1656 = vpow.pop %v1655
        %v1657 = vmul.f32 %v1636, 1.442695
        %v1658 = vpow.pop %v1657
        %v1659 = vmul.f32 %v1637, 1.442695
        %v1660 = vpow.pop %v1659
        %v1661 = vmul.f32 %v1638, 1.442695
        %v1662 = vpow.pop %v1661
        %v1663 = vmul.f32 %v1639, 1.442695
        %v1664 = vpow.pop %v1663
        %v1665 = vmul.f32 %v1640, 1.442695
        %v1666 = vpow.pop %v1665
        %v1667 = vmul.f32 %v1641, 1.442695
        %v1668 = vpow.pop %v1667
        %v1669 = vmul.f32 %v1642, 1.442695
        %v1670 = vpow.pop %v1669
        %v1671 = vmul.f32 %v1643, 1.442695
        %v1672 = vpow.pop %v1671
        %v1673 = vmul.f32 %v1644, 1.442695
        %v1674 = vpow.pop %v1673
        %v1675 = vmul.f32 %v1645, 1.442695
        %v1676 = vpow.pop %v1675
        %v1677 = vmul.f32 %v1646, 1.442695
        %v1678 = vpow.pop %v1677
        %v1679 = vsel %vm1374, %v1648, 0.0
        %1680 = vadd.xlane.f32.xlu0 %v1679
        %v1681 = vpop.xlane.xlu0 %1680
        %v1682 = vsel %vm1374, %v1650, 0.0
        %1683 = vadd.xlane.f32.xlu0 %v1682
        %v1684 = vpop.xlane.xlu0 %1683
        %v1685 = vsel %vm1374, %v1652, 0.0
        %1686 = vadd.xlane.f32.xlu0 %v1685
        %v1687 = vpop.xlane.xlu0 %1686
        %v1688 = vsel %vm1374, %v1654, 0.0
        %1689 = vadd.xlane.f32.xlu0 %v1688
        %v1690 = vpop.xlane.xlu0 %1689
        %v1691 = vsel %vm1374, %v1656, 0.0
        %1692 = vadd.xlane.f32.xlu0 %v1691
        %v1693 = vpop.xlane.xlu0 %1692
        %v1694 = vsel %vm1374, %v1658, 0.0
        %1695 = vadd.xlane.f32.xlu0 %v1694
        %v1696 = vpop.xlane.xlu0 %1695
        %v1697 = vsel %vm1374, %v1660, 0.0
        %1698 = vadd.xlane.f32.xlu0 %v1697
        %v1699 = vpop.xlane.xlu0 %1698
        %v1700 = vsel %vm1374, %v1662, 0.0
        %1701 = vadd.xlane.f32.xlu0 %v1700
        %v1702 = vpop.xlane.xlu0 %1701
        %v1703 = vsel %vm1374, %v1664, 0.0
        %1704 = vadd.xlane.f32.xlu0 %v1703
        %v1705 = vpop.xlane.xlu0 %1704
        %v1706 = vsel %vm1374, %v1666, 0.0
        %1707 = vadd.xlane.f32.xlu0 %v1706
        %v1708 = vpop.xlane.xlu0 %1707
        %v1709 = vsel %vm1374, %v1668, 0.0
        %1710 = vadd.xlane.f32.xlu0 %v1709
        %v1711 = vpop.xlane.xlu0 %1710
        %v1712 = vsel %vm1374, %v1670, 0.0
        %1713 = vadd.xlane.f32.xlu0 %v1712
        %v1714 = vpop.xlane.xlu0 %1713
        %v1715 = vsel %vm1374, %v1672, 0.0
        %1716 = vadd.xlane.f32.xlu0 %v1715
        %v1717 = vpop.xlane.xlu0 %1716
        %v1718 = vsel %vm1374, %v1674, 0.0
        %1719 = vadd.xlane.f32.xlu0 %v1718
        %v1720 = vpop.xlane.xlu0 %1719
        %v1721 = vsel %vm1374, %v1676, 0.0
        %1722 = vadd.xlane.f32.xlu0 %v1721
        %v1723 = vpop.xlane.xlu0 %1722
        %v1724 = vsel %vm1374, %v1678, 0.0
        %1725 = vadd.xlane.f32.xlu0 %v1724
        %v1726 = vpop.xlane.xlu0 %1725
        %v1727 = vrcp.pop %v1681
        %v1728 = vrcp.pop %v1684
        %v1729 = vrcp.pop %v1687
        %v1730 = vrcp.pop %v1690
        %v1731 = vrcp.pop %v1693
        %v1732 = vrcp.pop %v1696
        %v1733 = vrcp.pop %v1699
        %v1734 = vrcp.pop %v1702
        %v1735 = vrcp.pop %v1705
        %v1736 = vrcp.pop %v1708
        %v1737 = vrcp.pop %v1711
        %v1738 = vrcp.pop %v1714
        %v1739 = vrcp.pop %v1717
        %v1740 = vrcp.pop %v1720
        %v1741 = vrcp.pop %v1723
        %v1742 = vrcp.pop %v1726
        %v1743 = vmul.f32 %v1648, %v1727
        %v1744 = vmul.f32 %v1650, %v1728
        %v1745 = vmul.f32 %v1652, %v1729
        %v1746 = vmul.f32 %v1654, %v1730
        %v1747 = vmul.f32 %v1656, %v1731
        %v1748 = vmul.f32 %v1658, %v1732
        %v1749 = vmul.f32 %v1660, %v1733
        %v1750 = vmul.f32 %v1662, %v1734
        %v1751 = vmul.f32 %v1664, %v1735
        %v1752 = vmul.f32 %v1666, %v1736
        %v1753 = vmul.f32 %v1668, %v1737
        %v1754 = vmul.f32 %v1670, %v1738
        %v1755 = vmul.f32 %v1672, %v1739
        %v1756 = vmul.f32 %v1674, %v1740
        %v1757 = vmul.f32 %v1676, %v1741
        %v1758 = vmul.f32 %v1678, %v1742
        %v1759 = vpack.c.bf16 %v1743, %v1743
        %v1760 = vpack.c.bf16 %v1744, %v1744
        %v1761 = vpack.c.bf16 %v1745, %v1745
        %v1762 = vpack.c.bf16 %v1746, %v1746
        %v1763 = vpack.c.bf16 %v1747, %v1747
        %v1764 = vpack.c.bf16 %v1748, %v1748
        %v1765 = vpack.c.bf16 %v1749, %v1749
        %v1766 = vpack.c.bf16 %v1750, %v1750
        %v1767 = vpack.c.bf16 %v1751, %v1751
        %v1768 = vpack.c.bf16 %v1752, %v1752
        %v1769 = vpack.c.bf16 %v1753, %v1753
        %v1770 = vpack.c.bf16 %v1754, %v1754
        %v1771 = vpack.c.bf16 %v1755, %v1755
        %v1772 = vpack.c.bf16 %v1756, %v1756
        %v1773 = vpack.c.bf16 %v1757, %v1757
        %v1774 = vpack.c.bf16 %v1758, %v1758
        %v1775 = vpack.c.bf16 %v1272, %v1272
        %v1776 = vpack.c.bf16 %v1274, %v1274
        %v1777 = vpack.c.bf16 %v1277, %v1277
        %v1778 = vpack.c.bf16 %v1279, %v1279
        %v1779 = vpack.c.bf16 %v1282, %v1282
        %v1780 = vpack.c.bf16 %v1284, %v1284
        %v1781 = vpack.c.bf16 %v1287, %v1287
        %v1782 = vpack.c.bf16 %v1289, %v1289
        %v1783 = vpack.c.bf16 %v1292, %v1292
        %v1784 = vpack.c.bf16 %v1294, %v1294
        %v1785 = vpack.c.bf16 %v1297, %v1297
        %v1786 = vpack.c.bf16 %v1299, %v1299
        %v1787 = vpack.c.bf16 %v1302, %v1302
        %v1788 = vpack.c.bf16 %v1304, %v1304
        %v1789 = vpack.c.bf16 %v1307, %v1307
        %v1790 = vpack.c.bf16 %v1309, %v1309
        %v1795 = vunpack.c.l.b16 %v1759
        %v1796 = vunpack.c.l.b16 %v1760
        %v1797 = vunpack.c.l.b16 %v1761
        %v1798 = vunpack.c.l.b16 %v1762
        %v1799 = vpack.c.b16 %v1796, %v1795
        %v1800 = vpack.c.b16 %v1798, %v1797
        %v1805 = vunpack.c.l.b16 %v1775
        %v1806 = vunpack.c.l.b16 %v1776
        %v1807 = vunpack.c.l.b16 %v1777
        %v1808 = vunpack.c.l.b16 %v1778
        %v1809 = vpack.c.b16 %v1806, %v1805
        %v1810 = vpack.c.b16 %v1808, %v1807
        %v1814 = vsel %vm1374, %v1799, 0
        %v1817 = vsel %vm1374, %v1800, 0
        %1819 = vmatpush.bf16.msra.mxu0 0
        %1820 = vmatpush.bf16.msra.mxu0 0
        %1821 = vmatpush.bf16.msra.mxu0 0
        %1822 = vmatpush.bf16.msra.mxu0 0
        %1823 = vmatpush.bf16.msra.mxu0 0
        %1824 = vmatpush.bf16.msra.mxu0 0
        %1825 = vmatpush.bf16.msra.mxu0 %v1810
        %1826 = vmatpush.bf16.msra.mxu0 %v1809
        %1827 = vmatmul.bf16.gmra.mxu0 %v1814
        %v1828 = vpop.f32.mrf.mxu0
        %v1829 = vadd.f32 0.0, %v1828
        %v1830 = vpop.f32.mrf.mxu0
        %v1831 = vadd.f32 0.0, %v1830
        %1832 = vmatmul.bf16.gmra.mxu0 %v1817
        %v1833 = vpop.f32.mrf.mxu0
        %v1834 = vadd.f32 0.0, %v1833
        %v1835 = vpop.f32.mrf.mxu0
        %v1836 = vadd.f32 0.0, %v1835
        %1837 = vdwg.mxu0
        %v1842 = vunpack.c.l.b16 %v1763
        %v1843 = vunpack.c.l.b16 %v1764
        %v1844 = vunpack.c.l.b16 %v1765
        %v1845 = vunpack.c.l.b16 %v1766
        %v1846 = vpack.c.b16 %v1843, %v1842
        %v1847 = vpack.c.b16 %v1845, %v1844
        %v1852 = vunpack.c.l.b16 %v1779
        %v1853 = vunpack.c.l.b16 %v1780
        %v1854 = vunpack.c.l.b16 %v1781
        %v1855 = vunpack.c.l.b16 %v1782
        %v1856 = vpack.c.b16 %v1853, %v1852
        %v1857 = vpack.c.b16 %v1855, %v1854
        %v1861 = vsel %vm1374, %v1846, 0
        %v1864 = vsel %vm1374, %v1847, 0
        %1866 = vmatpush.bf16.msra.mxu0 0
        %1867 = vmatpush.bf16.msra.mxu0 0
        %1868 = vmatpush.bf16.msra.mxu0 0
        %1869 = vmatpush.bf16.msra.mxu0 0
        %1870 = vmatpush.bf16.msra.mxu0 0
        %1871 = vmatpush.bf16.msra.mxu0 0
        %1872 = vmatpush.bf16.msra.mxu0 %v1857
        %1873 = vmatpush.bf16.msra.mxu0 %v1856
        %1874 = vmatmul.bf16.gmra.mxu0 %v1861
        %v1875 = vpop.f32.mrf.mxu0
        %v1876 = vadd.f32 0.0, %v1875
        %v1877 = vpop.f32.mrf.mxu0
        %v1878 = vadd.f32 0.0, %v1877
        %1879 = vmatmul.bf16.gmra.mxu0 %v1864
        %v1880 = vpop.f32.mrf.mxu0
        %v1881 = vadd.f32 0.0, %v1880
        %v1882 = vpop.f32.mrf.mxu0
        %v1883 = vadd.f32 0.0, %v1882
        %1884 = vdwg.mxu0
        %v1889 = vunpack.c.l.b16 %v1767
        %v1890 = vunpack.c.l.b16 %v1768
        %v1891 = vunpack.c.l.b16 %v1769
        %v1892 = vunpack.c.l.b16 %v1770
        %v1893 = vpack.c.b16 %v1890, %v1889
        %v1894 = vpack.c.b16 %v1892, %v1891
        %v1899 = vunpack.c.l.b16 %v1783
        %v1900 = vunpack.c.l.b16 %v1784
        %v1901 = vunpack.c.l.b16 %v1785
        %v1902 = vunpack.c.l.b16 %v1786
        %v1903 = vpack.c.b16 %v1900, %v1899
        %v1904 = vpack.c.b16 %v1902, %v1901
        %v1908 = vsel %vm1374, %v1893, 0
        %v1911 = vsel %vm1374, %v1894, 0
        %1913 = vmatpush.bf16.msra.mxu0 0
        %1914 = vmatpush.bf16.msra.mxu0 0
        %1915 = vmatpush.bf16.msra.mxu0 0
        %1916 = vmatpush.bf16.msra.mxu0 0
        %1917 = vmatpush.bf16.msra.mxu0 0
        %1918 = vmatpush.bf16.msra.mxu0 0
        %1919 = vmatpush.bf16.msra.mxu0 %v1904
        %1920 = vmatpush.bf16.msra.mxu0 %v1903
        %1921 = vmatmul.bf16.gmra.mxu0 %v1908
        %v1922 = vpop.f32.mrf.mxu0
        %v1923 = vadd.f32 0.0, %v1922
        %v1924 = vpop.f32.mrf.mxu0
        %v1925 = vadd.f32 0.0, %v1924
        %1926 = vmatmul.bf16.gmra.mxu0 %v1911
        %v1927 = vpop.f32.mrf.mxu0
        %v1928 = vadd.f32 0.0, %v1927
        %v1929 = vpop.f32.mrf.mxu0
        %v1930 = vadd.f32 0.0, %v1929
        %1931 = vdwg.mxu0
        %v1936 = vunpack.c.l.b16 %v1771
        %v1937 = vunpack.c.l.b16 %v1772
        %v1938 = vunpack.c.l.b16 %v1773
        %v1939 = vunpack.c.l.b16 %v1774
        %v1940 = vpack.c.b16 %v1937, %v1936
        %v1941 = vpack.c.b16 %v1939, %v1938
        %v1946 = vunpack.c.l.b16 %v1787
        %v1947 = vunpack.c.l.b16 %v1788
        %v1948 = vunpack.c.l.b16 %v1789
        %v1949 = vunpack.c.l.b16 %v1790
        %v1950 = vpack.c.b16 %v1947, %v1946
        %v1951 = vpack.c.b16 %v1949, %v1948
        %v1955 = vsel %vm1374, %v1940, 0
        %v1958 = vsel %vm1374, %v1941, 0
        %1960 = vmatpush.bf16.msra.mxu0 0
        %1961 = vmatpush.bf16.msra.mxu0 0
        %1962 = vmatpush.bf16.msra.mxu0 0
        %1963 = vmatpush.bf16.msra.mxu0 0
        %1964 = vmatpush.bf16.msra.mxu0 0
        %1965 = vmatpush.bf16.msra.mxu0 0
        %1966 = vmatpush.bf16.msra.mxu0 %v1951
        %1967 = vmatpush.bf16.msra.mxu0 %v1950
        %1968 = vmatmul.bf16.gmra.mxu0 %v1955
        %v1969 = vpop.f32.mrf.mxu0
        %v1970 = vadd.f32 0.0, %v1969
        %v1971 = vpop.f32.mrf.mxu0
        %v1972 = vadd.f32 0.0, %v1971
        %1973 = vmatmul.bf16.gmra.mxu0 %v1958
        %v1974 = vpop.f32.mrf.mxu0
        %v1975 = vadd.f32 0.0, %v1974
        %v1976 = vpop.f32.mrf.mxu0
        %v1977 = vadd.f32 0.0, %v1976
        %1978 = vdwg.mxu0
        %1979 = vrot.lane.b32.xlu0 %v1362, 96
        %v1980 = vpop.permute.xlu0 %1979
        %1981 = vrot.lane.b32.xlu0 %v1363, 96
        %v1982 = vpop.permute.xlu0 %1981
        %1983 = vrot.lane.b32.xlu0 %v1372, 96
        %v1984 = vpop.permute.xlu0 %1983
        %1985 = vrot.lane.b32.xlu0 %v1373, 96
        %v1986 = vpop.permute.xlu0 %1985
        %v1988 = vsel %vm1374, %v1980, 0
        %v1991 = vsel %vm1374, %v1982, 0
        %v1994 = vsel %vm1374, %v1984, 0
        %v1997 = vsel %vm1374, %v1986, 0
        %1999 = vmatpush.bf16.xpose.msra.mxu0 0
        %2000 = vmatpush.bf16.xpose.msra.mxu0 0
        %2001 = vmatpush.bf16.xpose.msra.mxu0 0
        %2002 = vmatpush.bf16.xpose.msra.mxu0 0
        %2003 = vmatpush.bf16.xpose.msra.mxu0 0
        %2004 = vmatpush.bf16.xpose.msra.mxu0 0
        %2005 = vmatpush.bf16.xpose.msra.mxu0 %v1997
        %2006 = vmatpush.bf16.xpose.msra.mxu0 %v1994
        %2007 = vmatmul.bf16.gmra.mxu0 %v1988
        %v2008 = vpop.f32.mrf.mxu0
        %v2009 = vadd.f32 0.0, %v2008
        %v2010 = vpop.f32.mrf.mxu0
        %v2011 = vadd.f32 0.0, %v2010
        %2012 = vmatmul.bf16.gmra.mxu0 %v1991
        %v2013 = vpop.f32.mrf.mxu0
        %v2014 = vadd.f32 0.0, %v2013
        %v2015 = vpop.f32.mrf.mxu0
        %v2016 = vadd.f32 0.0, %v2015
        %2017 = vdwg.mxu0
        %2018 = vrot.lane.b32.xlu0 %v1414, 96
        %v2019 = vpop.permute.xlu0 %2018
        %2020 = vrot.lane.b32.xlu0 %v1415, 96
        %v2021 = vpop.permute.xlu0 %2020
        %2022 = vrot.lane.b32.xlu0 %v1424, 96
        %v2023 = vpop.permute.xlu0 %2022
        %2024 = vrot.lane.b32.xlu0 %v1425, 96
        %v2025 = vpop.permute.xlu0 %2024
        %v2027 = vsel %vm1374, %v2019, 0
        %v2030 = vsel %vm1374, %v2021, 0
        %v2033 = vsel %vm1374, %v2023, 0
        %v2036 = vsel %vm1374, %v2025, 0
        %2038 = vmatpush.bf16.xpose.msra.mxu0 0
        %2039 = vmatpush.bf16.xpose.msra.mxu0 0
        %2040 = vmatpush.bf16.xpose.msra.mxu0 0
        %2041 = vmatpush.bf16.xpose.msra.mxu0 0
        %2042 = vmatpush.bf16.xpose.msra.mxu0 0
        %2043 = vmatpush.bf16.xpose.msra.mxu0 0
        %2044 = vmatpush.bf16.xpose.msra.mxu0 %v2036
        %2045 = vmatpush.bf16.xpose.msra.mxu0 %v2033
        %2046 = vmatmul.bf16.gmra.mxu0 %v2027
        %v2047 = vpop.f32.mrf.mxu0
        %v2048 = vadd.f32 0.0, %v2047
        %v2049 = vpop.f32.mrf.mxu0
        %v2050 = vadd.f32 0.0, %v2049
        %2051 = vmatmul.bf16.gmra.mxu0 %v2030
        %v2052 = vpop.f32.mrf.mxu0
        %v2053 = vadd.f32 0.0, %v2052
        %v2054 = vpop.f32.mrf.mxu0
        %v2055 = vadd.f32 0.0, %v2054
        %2056 = vdwg.mxu0
        %2057 = vrot.lane.b32.xlu0 %v1465, 96
        %v2058 = vpop.permute.xlu0 %2057
        %2059 = vrot.lane.b32.xlu0 %v1466, 96
        %v2060 = vpop.permute.xlu0 %2059
        %2061 = vrot.lane.b32.xlu0 %v1475, 96
        %v2062 = vpop.permute.xlu0 %2061
        %2063 = vrot.lane.b32.xlu0 %v1476, 96
        %v2064 = vpop.permute.xlu0 %2063
        %v2066 = vsel %vm1374, %v2058, 0
        %v2069 = vsel %vm1374, %v2060, 0
        %v2072 = vsel %vm1374, %v2062, 0
        %v2075 = vsel %vm1374, %v2064, 0
        %2077 = vmatpush.bf16.xpose.msra.mxu0 0
        %2078 = vmatpush.bf16.xpose.msra.mxu0 0
        %2079 = vmatpush.bf16.xpose.msra.mxu0 0
        %2080 = vmatpush.bf16.xpose.msra.mxu0 0
        %2081 = vmatpush.bf16.xpose.msra.mxu0 0
        %2082 = vmatpush.bf16.xpose.msra.mxu0 0
        %2083 = vmatpush.bf16.xpose.msra.mxu0 %v2075
        %2084 = vmatpush.bf16.xpose.msra.mxu0 %v2072
        %2085 = vmatmul.bf16.gmra.mxu0 %v2066
        %v2086 = vpop.f32.mrf.mxu0
        %v2087 = vadd.f32 0.0, %v2086
        %v2088 = vpop.f32.mrf.mxu0
        %v2089 = vadd.f32 0.0, %v2088
        %2090 = vmatmul.bf16.gmra.mxu0 %v2069
        %v2091 = vpop.f32.mrf.mxu0
        %v2092 = vadd.f32 0.0, %v2091
        %v2093 = vpop.f32.mrf.mxu0
        %v2094 = vadd.f32 0.0, %v2093
        %2095 = vdwg.mxu0
        %2096 = vrot.lane.b32.xlu0 %v1516, 96
        %v2097 = vpop.permute.xlu0 %2096
        %2098 = vrot.lane.b32.xlu0 %v1517, 96
        %v2099 = vpop.permute.xlu0 %2098
        %2100 = vrot.lane.b32.xlu0 %v1526, 96
        %v2101 = vpop.permute.xlu0 %2100
        %2102 = vrot.lane.b32.xlu0 %v1527, 96
        %v2103 = vpop.permute.xlu0 %2102
        %v2105 = vsel %vm1374, %v2097, 0
        %v2108 = vsel %vm1374, %v2099, 0
        %v2111 = vsel %vm1374, %v2101, 0
        %v2114 = vsel %vm1374, %v2103, 0
        %2116 = vmatpush.bf16.xpose.msra.mxu0 0
        %2117 = vmatpush.bf16.xpose.msra.mxu0 0
        %2118 = vmatpush.bf16.xpose.msra.mxu0 0
        %2119 = vmatpush.bf16.xpose.msra.mxu0 0
        %2120 = vmatpush.bf16.xpose.msra.mxu0 0
        %2121 = vmatpush.bf16.xpose.msra.mxu0 0
        %2122 = vmatpush.bf16.xpose.msra.mxu0 %v2114
        %2123 = vmatpush.bf16.xpose.msra.mxu0 %v2111
        %2124 = vmatmul.bf16.gmra.mxu0 %v2105
        %v2125 = vpop.f32.mrf.mxu0
        %v2126 = vadd.f32 0.0, %v2125
        %v2127 = vpop.f32.mrf.mxu0
        %v2128 = vadd.f32 0.0, %v2127
        %2129 = vmatmul.bf16.gmra.mxu0 %v2108
        %v2130 = vpop.f32.mrf.mxu0
        %v2131 = vadd.f32 0.0, %v2130
        %v2132 = vpop.f32.mrf.mxu0
        %v2133 = vadd.f32 0.0, %v2132
        %2134 = vdwg.mxu0
        %v2135 = vsel %vm1563, %v2009, -1e+30
        %v2136 = vsel %vm1564, %v2011, -1e+30
        %v2137 = vsel %vm1565, %v2014, -1e+30
        %v2138 = vsel %vm1566, %v2016, -1e+30
        %v2139 = vsel %vm1563, %v2048, -1e+30
        %v2140 = vsel %vm1564, %v2050, -1e+30
        %v2141 = vsel %vm1565, %v2053, -1e+30
        %v2142 = vsel %vm1566, %v2055, -1e+30
        %v2143 = vsel %vm1563, %v2087, -1e+30
        %v2144 = vsel %vm1564, %v2089, -1e+30
        %v2145 = vsel %vm1565, %v2092, -1e+30
        %v2146 = vsel %vm1566, %v2094, -1e+30
        %v2147 = vsel %vm1563, %v2126, -1e+30
        %v2148 = vsel %vm1564, %v2128, -1e+30
        %v2149 = vsel %vm1565, %v2131, -1e+30
        %v2150 = vsel %vm1566, %v2133, -1e+30
        %v2151 = vsel %vm1374, %v2135, -inf
        %2152 = vmax.xlane.f32.xlu0 %v2151
        %v2153 = vpop.xlane.xlu0 %2152
        %v2154 = vsel %vm1374, %v2136, -inf
        %2155 = vmax.xlane.f32.xlu0 %v2154
        %v2156 = vpop.xlane.xlu0 %2155
        %v2157 = vsel %vm1374, %v2137, -inf
        %2158 = vmax.xlane.f32.xlu0 %v2157
        %v2159 = vpop.xlane.xlu0 %2158
        %v2160 = vsel %vm1374, %v2138, -inf
        %2161 = vmax.xlane.f32.xlu0 %v2160
        %v2162 = vpop.xlane.xlu0 %2161
        %v2163 = vsel %vm1374, %v2139, -inf
        %2164 = vmax.xlane.f32.xlu0 %v2163
        %v2165 = vpop.xlane.xlu0 %2164
        %v2166 = vsel %vm1374, %v2140, -inf
        %2167 = vmax.xlane.f32.xlu0 %v2166
        %v2168 = vpop.xlane.xlu0 %2167
        %v2169 = vsel %vm1374, %v2141, -inf
        %2170 = vmax.xlane.f32.xlu0 %v2169
        %v2171 = vpop.xlane.xlu0 %2170
        %v2172 = vsel %vm1374, %v2142, -inf
        %2173 = vmax.xlane.f32.xlu0 %v2172
        %v2174 = vpop.xlane.xlu0 %2173
        %v2175 = vsel %vm1374, %v2143, -inf
        %2176 = vmax.xlane.f32.xlu0 %v2175
        %v2177 = vpop.xlane.xlu0 %2176
        %v2178 = vsel %vm1374, %v2144, -inf
        %2179 = vmax.xlane.f32.xlu0 %v2178
        %v2180 = vpop.xlane.xlu0 %2179
        %v2181 = vsel %vm1374, %v2145, -inf
        %2182 = vmax.xlane.f32.xlu0 %v2181
        %v2183 = vpop.xlane.xlu0 %2182
        %v2184 = vsel %vm1374, %v2146, -inf
        %2185 = vmax.xlane.f32.xlu0 %v2184
        %v2186 = vpop.xlane.xlu0 %2185
        %v2187 = vsel %vm1374, %v2147, -inf
        %2188 = vmax.xlane.f32.xlu0 %v2187
        %v2189 = vpop.xlane.xlu0 %2188
        %v2190 = vsel %vm1374, %v2148, -inf
        %2191 = vmax.xlane.f32.xlu0 %v2190
        %v2192 = vpop.xlane.xlu0 %2191
        %v2193 = vsel %vm1374, %v2149, -inf
        %2194 = vmax.xlane.f32.xlu0 %v2193
        %v2195 = vpop.xlane.xlu0 %2194
        %v2196 = vsel %vm1374, %v2150, -inf
        %2197 = vmax.xlane.f32.xlu0 %v2196
        %v2198 = vpop.xlane.xlu0 %2197
        %v2199 = vsub.f32 %v2135, %v2153
        %v2200 = vsub.f32 %v2136, %v2156
        %v2201 = vsub.f32 %v2137, %v2159
        %v2202 = vsub.f32 %v2138, %v2162
        %v2203 = vsub.f32 %v2139, %v2165
        %v2204 = vsub.f32 %v2140, %v2168
        %v2205 = vsub.f32 %v2141, %v2171
        %v2206 = vsub.f32 %v2142, %v2174
        %v2207 = vsub.f32 %v2143, %v2177
        %v2208 = vsub.f32 %v2144, %v2180
        %v2209 = vsub.f32 %v2145, %v2183
        %v2210 = vsub.f32 %v2146, %v2186
        %v2211 = vsub.f32 %v2147, %v2189
        %v2212 = vsub.f32 %v2148, %v2192
        %v2213 = vsub.f32 %v2149, %v2195
        %v2214 = vsub.f32 %v2150, %v2198
        %v2215 = vmul.f32 %v2199, 1.442695
        %v2216 = vpow.pop %v2215
        %v2217 = vmul.f32 %v2200, 1.442695
        %v2218 = vpow.pop %v2217
        %v2219 = vmul.f32 %v2201, 1.442695
        %v2220 = vpow.pop %v2219
        %v2221 = vmul.f32 %v2202, 1.442695
        %v2222 = vpow.pop %v2221
        %v2223 = vmul.f32 %v2203, 1.442695
        %v2224 = vpow.pop %v2223
        %v2225 = vmul.f32 %v2204, 1.442695
        %v2226 = vpow.pop %v2225
        %v2227 = vmul.f32 %v2205, 1.442695
        %v2228 = vpow.pop %v2227
        %v2229 = vmul.f32 %v2206, 1.442695
        %v2230 = vpow.pop %v2229
        %v2231 = vmul.f32 %v2207, 1.442695
        %v2232 = vpow.pop %v2231
        %v2233 = vmul.f32 %v2208, 1.442695
        %v2234 = vpow.pop %v2233
        %v2235 = vmul.f32 %v2209, 1.442695
        %v2236 = vpow.pop %v2235
        %v2237 = vmul.f32 %v2210, 1.442695
        %v2238 = vpow.pop %v2237
        %v2239 = vmul.f32 %v2211, 1.442695
        %v2240 = vpow.pop %v2239
        %v2241 = vmul.f32 %v2212, 1.442695
        %v2242 = vpow.pop %v2241
        %v2243 = vmul.f32 %v2213, 1.442695
        %v2244 = vpow.pop %v2243
        %v2245 = vmul.f32 %v2214, 1.442695
        %v2246 = vpow.pop %v2245
        %v2247 = vsel %vm1374, %v2216, 0.0
        %2248 = vadd.xlane.f32.xlu0 %v2247
        %v2249 = vpop.xlane.xlu0 %2248
        %v2250 = vsel %vm1374, %v2218, 0.0
        %2251 = vadd.xlane.f32.xlu0 %v2250
        %v2252 = vpop.xlane.xlu0 %2251
        %v2253 = vsel %vm1374, %v2220, 0.0
        %2254 = vadd.xlane.f32.xlu0 %v2253
        %v2255 = vpop.xlane.xlu0 %2254
        %v2256 = vsel %vm1374, %v2222, 0.0
        %2257 = vadd.xlane.f32.xlu0 %v2256
        %v2258 = vpop.xlane.xlu0 %2257
        %v2259 = vsel %vm1374, %v2224, 0.0
        %2260 = vadd.xlane.f32.xlu0 %v2259
        %v2261 = vpop.xlane.xlu0 %2260
        %v2262 = vsel %vm1374, %v2226, 0.0
        %2263 = vadd.xlane.f32.xlu0 %v2262
        %v2264 = vpop.xlane.xlu0 %2263
        %v2265 = vsel %vm1374, %v2228, 0.0
        %2266 = vadd.xlane.f32.xlu0 %v2265
        %v2267 = vpop.xlane.xlu0 %2266
        %v2268 = vsel %vm1374, %v2230, 0.0
        %2269 = vadd.xlane.f32.xlu0 %v2268
        %v2270 = vpop.xlane.xlu0 %2269
        %v2271 = vsel %vm1374, %v2232, 0.0
        %2272 = vadd.xlane.f32.xlu0 %v2271
        %v2273 = vpop.xlane.xlu0 %2272
        %v2274 = vsel %vm1374, %v2234, 0.0
        %2275 = vadd.xlane.f32.xlu0 %v2274
        %v2276 = vpop.xlane.xlu0 %2275
        %v2277 = vsel %vm1374, %v2236, 0.0
        %2278 = vadd.xlane.f32.xlu0 %v2277
        %v2279 = vpop.xlane.xlu0 %2278
        %v2280 = vsel %vm1374, %v2238, 0.0
        %2281 = vadd.xlane.f32.xlu0 %v2280
        %v2282 = vpop.xlane.xlu0 %2281
        %v2283 = vsel %vm1374, %v2240, 0.0
        %2284 = vadd.xlane.f32.xlu0 %v2283
        %v2285 = vpop.xlane.xlu0 %2284
        %v2286 = vsel %vm1374, %v2242, 0.0
        %2287 = vadd.xlane.f32.xlu0 %v2286
        %v2288 = vpop.xlane.xlu0 %2287
        %v2289 = vsel %vm1374, %v2244, 0.0
        %2290 = vadd.xlane.f32.xlu0 %v2289
        %v2291 = vpop.xlane.xlu0 %2290
        %v2292 = vsel %vm1374, %v2246, 0.0
        %2293 = vadd.xlane.f32.xlu0 %v2292
        %v2294 = vpop.xlane.xlu0 %2293
        %v2295 = vrcp.pop %v2249
        %v2296 = vrcp.pop %v2252
        %v2297 = vrcp.pop %v2255
        %v2298 = vrcp.pop %v2258
        %v2299 = vrcp.pop %v2261
        %v2300 = vrcp.pop %v2264
        %v2301 = vrcp.pop %v2267
        %v2302 = vrcp.pop %v2270
        %v2303 = vrcp.pop %v2273
        %v2304 = vrcp.pop %v2276
        %v2305 = vrcp.pop %v2279
        %v2306 = vrcp.pop %v2282
        %v2307 = vrcp.pop %v2285
        %v2308 = vrcp.pop %v2288
        %v2309 = vrcp.pop %v2291
        %v2310 = vrcp.pop %v2294
        %v2311 = vmul.f32 %v2216, %v2295
        %v2312 = vmul.f32 %v2218, %v2296
        %v2313 = vmul.f32 %v2220, %v2297
        %v2314 = vmul.f32 %v2222, %v2298
        %v2315 = vmul.f32 %v2224, %v2299
        %v2316 = vmul.f32 %v2226, %v2300
        %v2317 = vmul.f32 %v2228, %v2301
        %v2318 = vmul.f32 %v2230, %v2302
        %v2319 = vmul.f32 %v2232, %v2303
        %v2320 = vmul.f32 %v2234, %v2304
        %v2321 = vmul.f32 %v2236, %v2305
        %v2322 = vmul.f32 %v2238, %v2306
        %v2323 = vmul.f32 %v2240, %v2307
        %v2324 = vmul.f32 %v2242, %v2308
        %v2325 = vmul.f32 %v2244, %v2309
        %v2326 = vmul.f32 %v2246, %v2310
        %v2327 = vpack.c.bf16 %v2311, %v2311
        %v2328 = vpack.c.bf16 %v2312, %v2312
        %v2329 = vpack.c.bf16 %v2313, %v2313
        %v2330 = vpack.c.bf16 %v2314, %v2314
        %v2331 = vpack.c.bf16 %v2315, %v2315
        %v2332 = vpack.c.bf16 %v2316, %v2316
        %v2333 = vpack.c.bf16 %v2317, %v2317
        %v2334 = vpack.c.bf16 %v2318, %v2318
        %v2335 = vpack.c.bf16 %v2319, %v2319
        %v2336 = vpack.c.bf16 %v2320, %v2320
        %v2337 = vpack.c.bf16 %v2321, %v2321
        %v2338 = vpack.c.bf16 %v2322, %v2322
        %v2339 = vpack.c.bf16 %v2323, %v2323
        %v2340 = vpack.c.bf16 %v2324, %v2324
        %v2341 = vpack.c.bf16 %v2325, %v2325
        %v2342 = vpack.c.bf16 %v2326, %v2326
        %v2347 = vunpack.c.l.b16 %v2327
        %v2348 = vunpack.c.l.b16 %v2328
        %v2349 = vunpack.c.l.b16 %v2329
        %v2350 = vunpack.c.l.b16 %v2330
        %v2351 = vpack.c.b16 %v2348, %v2347
        %v2352 = vpack.c.b16 %v2350, %v2349
        %2353 = vrot.lane.b32.xlu0 %v1809, 96
        %v2354 = vpop.permute.xlu0 %2353
        %2355 = vrot.lane.b32.xlu0 %v1810, 96
        %v2356 = vpop.permute.xlu0 %2355
        %v2360 = vsel %vm1374, %v2351, 0
        %v2363 = vsel %vm1374, %v2352, 0
        %2365 = vmatpush.bf16.msra.mxu0 0
        %2366 = vmatpush.bf16.msra.mxu0 0
        %2367 = vmatpush.bf16.msra.mxu0 0
        %2368 = vmatpush.bf16.msra.mxu0 0
        %2369 = vmatpush.bf16.msra.mxu0 0
        %2370 = vmatpush.bf16.msra.mxu0 0
        %2371 = vmatpush.bf16.msra.mxu0 %v2356
        %2372 = vmatpush.bf16.msra.mxu0 %v2354
        %2373 = vmatmul.bf16.gmra.mxu0 %v2360
        %v2374 = vpop.f32.mrf.mxu0
        %v2375 = vadd.f32 0.0, %v2374
        %v2376 = vpop.f32.mrf.mxu0
        %v2377 = vadd.f32 0.0, %v2376
        %2378 = vmatmul.bf16.gmra.mxu0 %v2363
        %v2379 = vpop.f32.mrf.mxu0
        %v2380 = vadd.f32 0.0, %v2379
        %v2381 = vpop.f32.mrf.mxu0
        %v2382 = vadd.f32 0.0, %v2381
        %2383 = vdwg.mxu0
        %v2388 = vunpack.c.l.b16 %v2331
        %v2389 = vunpack.c.l.b16 %v2332
        %v2390 = vunpack.c.l.b16 %v2333
        %v2391 = vunpack.c.l.b16 %v2334
        %v2392 = vpack.c.b16 %v2389, %v2388
        %v2393 = vpack.c.b16 %v2391, %v2390
        %2394 = vrot.lane.b32.xlu0 %v1856, 96
        %v2395 = vpop.permute.xlu0 %2394
        %2396 = vrot.lane.b32.xlu0 %v1857, 96
        %v2397 = vpop.permute.xlu0 %2396
        %v2401 = vsel %vm1374, %v2392, 0
        %v2404 = vsel %vm1374, %v2393, 0
        %2406 = vmatpush.bf16.msra.mxu0 0
        %2407 = vmatpush.bf16.msra.mxu0 0
        %2408 = vmatpush.bf16.msra.mxu0 0
        %2409 = vmatpush.bf16.msra.mxu0 0
        %2410 = vmatpush.bf16.msra.mxu0 0
        %2411 = vmatpush.bf16.msra.mxu0 0
        %2412 = vmatpush.bf16.msra.mxu0 %v2397
        %2413 = vmatpush.bf16.msra.mxu0 %v2395
        %2414 = vmatmul.bf16.gmra.mxu0 %v2401
        %v2415 = vpop.f32.mrf.mxu0
        %v2416 = vadd.f32 0.0, %v2415
        %v2417 = vpop.f32.mrf.mxu0
        %v2418 = vadd.f32 0.0, %v2417
        %2419 = vmatmul.bf16.gmra.mxu0 %v2404
        %v2420 = vpop.f32.mrf.mxu0
        %v2421 = vadd.f32 0.0, %v2420
        %v2422 = vpop.f32.mrf.mxu0
        %v2423 = vadd.f32 0.0, %v2422
        %2424 = vdwg.mxu0
        %v2429 = vunpack.c.l.b16 %v2335
        %v2430 = vunpack.c.l.b16 %v2336
        %v2431 = vunpack.c.l.b16 %v2337
        %v2432 = vunpack.c.l.b16 %v2338
        %v2433 = vpack.c.b16 %v2430, %v2429
        %v2434 = vpack.c.b16 %v2432, %v2431
        %2435 = vrot.lane.b32.xlu0 %v1903, 96
        %v2436 = vpop.permute.xlu0 %2435
        %2437 = vrot.lane.b32.xlu0 %v1904, 96
        %v2438 = vpop.permute.xlu0 %2437
        %v2442 = vsel %vm1374, %v2433, 0
        %v2445 = vsel %vm1374, %v2434, 0
        %2447 = vmatpush.bf16.msra.mxu0 0
        %2448 = vmatpush.bf16.msra.mxu0 0
        %2449 = vmatpush.bf16.msra.mxu0 0
        %2450 = vmatpush.bf16.msra.mxu0 0
        %2451 = vmatpush.bf16.msra.mxu0 0
        %2452 = vmatpush.bf16.msra.mxu0 0
        %2453 = vmatpush.bf16.msra.mxu0 %v2438
        %2454 = vmatpush.bf16.msra.mxu0 %v2436
        %2455 = vmatmul.bf16.gmra.mxu0 %v2442
        %v2456 = vpop.f32.mrf.mxu0
        %v2457 = vadd.f32 0.0, %v2456
        %v2458 = vpop.f32.mrf.mxu0
        %v2459 = vadd.f32 0.0, %v2458
        %2460 = vmatmul.bf16.gmra.mxu0 %v2445
        %v2461 = vpop.f32.mrf.mxu0
        %v2462 = vadd.f32 0.0, %v2461
        %v2463 = vpop.f32.mrf.mxu0
        %v2464 = vadd.f32 0.0, %v2463
        %2465 = vdwg.mxu0
        %v2470 = vunpack.c.l.b16 %v2339
        %v2471 = vunpack.c.l.b16 %v2340
        %v2472 = vunpack.c.l.b16 %v2341
        %v2473 = vunpack.c.l.b16 %v2342
        %v2474 = vpack.c.b16 %v2471, %v2470
        %v2475 = vpack.c.b16 %v2473, %v2472
        %2476 = vrot.lane.b32.xlu0 %v1950, 96
        %v2477 = vpop.permute.xlu0 %2476
        %2478 = vrot.lane.b32.xlu0 %v1951, 96
        %v2479 = vpop.permute.xlu0 %2478
        %v2483 = vsel %vm1374, %v2474, 0
        %v2486 = vsel %vm1374, %v2475, 0
        %2488 = vmatpush.bf16.msra.mxu0 0
        %2489 = vmatpush.bf16.msra.mxu0 0
        %2490 = vmatpush.bf16.msra.mxu0 0
        %2491 = vmatpush.bf16.msra.mxu0 0
        %2492 = vmatpush.bf16.msra.mxu0 0
        %2493 = vmatpush.bf16.msra.mxu0 0
        %2494 = vmatpush.bf16.msra.mxu0 %v2479
        %2495 = vmatpush.bf16.msra.mxu0 %v2477
        %2496 = vmatmul.bf16.gmra.mxu0 %v2483
        %v2497 = vpop.f32.mrf.mxu0
        %v2498 = vadd.f32 0.0, %v2497
        %v2499 = vpop.f32.mrf.mxu0
        %v2500 = vadd.f32 0.0, %v2499
        %2501 = vmatmul.bf16.gmra.mxu0 %v2486
        %v2502 = vpop.f32.mrf.mxu0
        %v2503 = vadd.f32 0.0, %v2502
        %v2504 = vpop.f32.mrf.mxu0
        %v2505 = vadd.f32 0.0, %v2504
        %2506 = vdwg.mxu0
        %2507 = vrot.lane.b32.xlu0 %v1362, 64
        %v2508 = vpop.permute.xlu0 %2507
        %2509 = vrot.lane.b32.xlu0 %v1363, 64
        %v2510 = vpop.permute.xlu0 %2509
        %2511 = vrot.lane.b32.xlu0 %v1372, 64
        %v2512 = vpop.permute.xlu0 %2511
        %2513 = vrot.lane.b32.xlu0 %v1373, 64
        %v2514 = vpop.permute.xlu0 %2513
        %v2516 = vsel %vm1374, %v2508, 0
        %v2519 = vsel %vm1374, %v2510, 0
        %v2522 = vsel %vm1374, %v2512, 0
        %v2525 = vsel %vm1374, %v2514, 0
        %2527 = vmatpush.bf16.xpose.msra.mxu0 0
        %2528 = vmatpush.bf16.xpose.msra.mxu0 0
        %2529 = vmatpush.bf16.xpose.msra.mxu0 0
        %2530 = vmatpush.bf16.xpose.msra.mxu0 0
        %2531 = vmatpush.bf16.xpose.msra.mxu0 0
        %2532 = vmatpush.bf16.xpose.msra.mxu0 0
        %2533 = vmatpush.bf16.xpose.msra.mxu0 %v2525
        %2534 = vmatpush.bf16.xpose.msra.mxu0 %v2522
        %2535 = vmatmul.bf16.gmra.mxu0 %v2516
        %v2536 = vpop.f32.mrf.mxu0
        %v2537 = vadd.f32 0.0, %v2536
        %v2538 = vpop.f32.mrf.mxu0
        %v2539 = vadd.f32 0.0, %v2538
        %2540 = vmatmul.bf16.gmra.mxu0 %v2519
        %v2541 = vpop.f32.mrf.mxu0
        %v2542 = vadd.f32 0.0, %v2541
        %v2543 = vpop.f32.mrf.mxu0
        %v2544 = vadd.f32 0.0, %v2543
        %2545 = vdwg.mxu0
        %2546 = vrot.lane.b32.xlu0 %v1414, 64
        %v2547 = vpop.permute.xlu0 %2546
        %2548 = vrot.lane.b32.xlu0 %v1415, 64
        %v2549 = vpop.permute.xlu0 %2548
        %2550 = vrot.lane.b32.xlu0 %v1424, 64
        %v2551 = vpop.permute.xlu0 %2550
        %2552 = vrot.lane.b32.xlu0 %v1425, 64
        %v2553 = vpop.permute.xlu0 %2552
        %v2555 = vsel %vm1374, %v2547, 0
        %v2558 = vsel %vm1374, %v2549, 0
        %v2561 = vsel %vm1374, %v2551, 0
        %v2564 = vsel %vm1374, %v2553, 0
        %2566 = vmatpush.bf16.xpose.msra.mxu0 0
        %2567 = vmatpush.bf16.xpose.msra.mxu0 0
        %2568 = vmatpush.bf16.xpose.msra.mxu0 0
        %2569 = vmatpush.bf16.xpose.msra.mxu0 0
        %2570 = vmatpush.bf16.xpose.msra.mxu0 0
        %2571 = vmatpush.bf16.xpose.msra.mxu0 0
        %2572 = vmatpush.bf16.xpose.msra.mxu0 %v2564
        %2573 = vmatpush.bf16.xpose.msra.mxu0 %v2561
        %2574 = vmatmul.bf16.gmra.mxu0 %v2555
        %v2575 = vpop.f32.mrf.mxu0
        %v2576 = vadd.f32 0.0, %v2575
        %v2577 = vpop.f32.mrf.mxu0
        %v2578 = vadd.f32 0.0, %v2577
        %2579 = vmatmul.bf16.gmra.mxu0 %v2558
        %v2580 = vpop.f32.mrf.mxu0
        %v2581 = vadd.f32 0.0, %v2580
        %v2582 = vpop.f32.mrf.mxu0
        %v2583 = vadd.f32 0.0, %v2582
        %2584 = vdwg.mxu0
        %2585 = vrot.lane.b32.xlu0 %v1465, 64
        %v2586 = vpop.permute.xlu0 %2585
        %2587 = vrot.lane.b32.xlu0 %v1466, 64
        %v2588 = vpop.permute.xlu0 %2587
        %2589 = vrot.lane.b32.xlu0 %v1475, 64
        %v2590 = vpop.permute.xlu0 %2589
        %2591 = vrot.lane.b32.xlu0 %v1476, 64
        %v2592 = vpop.permute.xlu0 %2591
        %v2594 = vsel %vm1374, %v2586, 0
        %v2597 = vsel %vm1374, %v2588, 0
        %v2600 = vsel %vm1374, %v2590, 0
        %v2603 = vsel %vm1374, %v2592, 0
        %2605 = vmatpush.bf16.xpose.msra.mxu0 0
        %2606 = vmatpush.bf16.xpose.msra.mxu0 0
        %2607 = vmatpush.bf16.xpose.msra.mxu0 0
        %2608 = vmatpush.bf16.xpose.msra.mxu0 0
        %2609 = vmatpush.bf16.xpose.msra.mxu0 0
        %2610 = vmatpush.bf16.xpose.msra.mxu0 0
        %2611 = vmatpush.bf16.xpose.msra.mxu0 %v2603
        %2612 = vmatpush.bf16.xpose.msra.mxu0 %v2600
        %2613 = vmatmul.bf16.gmra.mxu0 %v2594
        %v2614 = vpop.f32.mrf.mxu0
        %v2615 = vadd.f32 0.0, %v2614
        %v2616 = vpop.f32.mrf.mxu0
        %v2617 = vadd.f32 0.0, %v2616
        %2618 = vmatmul.bf16.gmra.mxu0 %v2597
        %v2619 = vpop.f32.mrf.mxu0
        %v2620 = vadd.f32 0.0, %v2619
        %v2621 = vpop.f32.mrf.mxu0
        %v2622 = vadd.f32 0.0, %v2621
        %2623 = vdwg.mxu0
        %2624 = vrot.lane.b32.xlu0 %v1516, 64
        %v2625 = vpop.permute.xlu0 %2624
        %2626 = vrot.lane.b32.xlu0 %v1517, 64
        %v2627 = vpop.permute.xlu0 %2626
        %2628 = vrot.lane.b32.xlu0 %v1526, 64
        %v2629 = vpop.permute.xlu0 %2628
        %2630 = vrot.lane.b32.xlu0 %v1527, 64
        %v2631 = vpop.permute.xlu0 %2630
        %v2633 = vsel %vm1374, %v2625, 0
        %v2636 = vsel %vm1374, %v2627, 0
        %v2639 = vsel %vm1374, %v2629, 0
        %v2642 = vsel %vm1374, %v2631, 0
        %2644 = vmatpush.bf16.xpose.msra.mxu0 0
        %2645 = vmatpush.bf16.xpose.msra.mxu0 0
        %2646 = vmatpush.bf16.xpose.msra.mxu0 0
        %2647 = vmatpush.bf16.xpose.msra.mxu0 0
        %2648 = vmatpush.bf16.xpose.msra.mxu0 0
        %2649 = vmatpush.bf16.xpose.msra.mxu0 0
        %2650 = vmatpush.bf16.xpose.msra.mxu0 %v2642
        %2651 = vmatpush.bf16.xpose.msra.mxu0 %v2639
        %2652 = vmatmul.bf16.gmra.mxu0 %v2633
        %v2653 = vpop.f32.mrf.mxu0
        %v2654 = vadd.f32 0.0, %v2653
        %v2655 = vpop.f32.mrf.mxu0
        %v2656 = vadd.f32 0.0, %v2655
        %2657 = vmatmul.bf16.gmra.mxu0 %v2636
        %v2658 = vpop.f32.mrf.mxu0
        %v2659 = vadd.f32 0.0, %v2658
        %v2660 = vpop.f32.mrf.mxu0
        %v2661 = vadd.f32 0.0, %v2660
        %2662 = vdwg.mxu0
        %v2663 = vsel %vm1563, %v2537, -1e+30
        %v2664 = vsel %vm1564, %v2539, -1e+30
        %v2665 = vsel %vm1565, %v2542, -1e+30
        %v2666 = vsel %vm1566, %v2544, -1e+30
        %v2667 = vsel %vm1563, %v2576, -1e+30
        %v2668 = vsel %vm1564, %v2578, -1e+30
        %v2669 = vsel %vm1565, %v2581, -1e+30
        %v2670 = vsel %vm1566, %v2583, -1e+30
        %v2671 = vsel %vm1563, %v2615, -1e+30
        %v2672 = vsel %vm1564, %v2617, -1e+30
        %v2673 = vsel %vm1565, %v2620, -1e+30
        %v2674 = vsel %vm1566, %v2622, -1e+30
        %v2675 = vsel %vm1563, %v2654, -1e+30
        %v2676 = vsel %vm1564, %v2656, -1e+30
        %v2677 = vsel %vm1565, %v2659, -1e+30
        %v2678 = vsel %vm1566, %v2661, -1e+30
        %v2679 = vsel %vm1374, %v2663, -inf
        %2680 = vmax.xlane.f32.xlu0 %v2679
        %v2681 = vpop.xlane.xlu0 %2680
        %v2682 = vsel %vm1374, %v2664, -inf
        %2683 = vmax.xlane.f32.xlu0 %v2682
        %v2684 = vpop.xlane.xlu0 %2683
        %v2685 = vsel %vm1374, %v2665, -inf
        %2686 = vmax.xlane.f32.xlu0 %v2685
        %v2687 = vpop.xlane.xlu0 %2686
        %v2688 = vsel %vm1374, %v2666, -inf
        %2689 = vmax.xlane.f32.xlu0 %v2688
        %v2690 = vpop.xlane.xlu0 %2689
        %v2691 = vsel %vm1374, %v2667, -inf
        %2692 = vmax.xlane.f32.xlu0 %v2691
        %v2693 = vpop.xlane.xlu0 %2692
        %v2694 = vsel %vm1374, %v2668, -inf
        %2695 = vmax.xlane.f32.xlu0 %v2694
        %v2696 = vpop.xlane.xlu0 %2695
        %v2697 = vsel %vm1374, %v2669, -inf
        %2698 = vmax.xlane.f32.xlu0 %v2697
        %v2699 = vpop.xlane.xlu0 %2698
        %v2700 = vsel %vm1374, %v2670, -inf
        %2701 = vmax.xlane.f32.xlu0 %v2700
        %v2702 = vpop.xlane.xlu0 %2701
        %v2703 = vsel %vm1374, %v2671, -inf
        %2704 = vmax.xlane.f32.xlu0 %v2703
        %v2705 = vpop.xlane.xlu0 %2704
        %v2706 = vsel %vm1374, %v2672, -inf
        %2707 = vmax.xlane.f32.xlu0 %v2706
        %v2708 = vpop.xlane.xlu0 %2707
        %v2709 = vsel %vm1374, %v2673, -inf
        %2710 = vmax.xlane.f32.xlu0 %v2709
        %v2711 = vpop.xlane.xlu0 %2710
        %v2712 = vsel %vm1374, %v2674, -inf
        %2713 = vmax.xlane.f32.xlu0 %v2712
        %v2714 = vpop.xlane.xlu0 %2713
        %v2715 = vsel %vm1374, %v2675, -inf
        %2716 = vmax.xlane.f32.xlu0 %v2715
        %v2717 = vpop.xlane.xlu0 %2716
        %v2718 = vsel %vm1374, %v2676, -inf
        %2719 = vmax.xlane.f32.xlu0 %v2718
        %v2720 = vpop.xlane.xlu0 %2719
        %v2721 = vsel %vm1374, %v2677, -inf
        %2722 = vmax.xlane.f32.xlu0 %v2721
        %v2723 = vpop.xlane.xlu0 %2722
        %v2724 = vsel %vm1374, %v2678, -inf
        %2725 = vmax.xlane.f32.xlu0 %v2724
        %v2726 = vpop.xlane.xlu0 %2725
        %v2727 = vsub.f32 %v2663, %v2681
        %v2728 = vsub.f32 %v2664, %v2684
        %v2729 = vsub.f32 %v2665, %v2687
        %v2730 = vsub.f32 %v2666, %v2690
        %v2731 = vsub.f32 %v2667, %v2693
        %v2732 = vsub.f32 %v2668, %v2696
        %v2733 = vsub.f32 %v2669, %v2699
        %v2734 = vsub.f32 %v2670, %v2702
        %v2735 = vsub.f32 %v2671, %v2705
        %v2736 = vsub.f32 %v2672, %v2708
        %v2737 = vsub.f32 %v2673, %v2711
        %v2738 = vsub.f32 %v2674, %v2714
        %v2739 = vsub.f32 %v2675, %v2717
        %v2740 = vsub.f32 %v2676, %v2720
        %v2741 = vsub.f32 %v2677, %v2723
        %v2742 = vsub.f32 %v2678, %v2726
        %v2743 = vmul.f32 %v2727, 1.442695
        %v2744 = vpow.pop %v2743
        %v2745 = vmul.f32 %v2728, 1.442695
        %v2746 = vpow.pop %v2745
        %v2747 = vmul.f32 %v2729, 1.442695
        %v2748 = vpow.pop %v2747
        %v2749 = vmul.f32 %v2730, 1.442695
        %v2750 = vpow.pop %v2749
        %v2751 = vmul.f32 %v2731, 1.442695
        %v2752 = vpow.pop %v2751
        %v2753 = vmul.f32 %v2732, 1.442695
        %v2754 = vpow.pop %v2753
        %v2755 = vmul.f32 %v2733, 1.442695
        %v2756 = vpow.pop %v2755
        %v2757 = vmul.f32 %v2734, 1.442695
        %v2758 = vpow.pop %v2757
        %v2759 = vmul.f32 %v2735, 1.442695
        %v2760 = vpow.pop %v2759
        %v2761 = vmul.f32 %v2736, 1.442695
        %v2762 = vpow.pop %v2761
        %v2763 = vmul.f32 %v2737, 1.442695
        %v2764 = vpow.pop %v2763
        %v2765 = vmul.f32 %v2738, 1.442695
        %v2766 = vpow.pop %v2765
        %v2767 = vmul.f32 %v2739, 1.442695
        %v2768 = vpow.pop %v2767
        %v2769 = vmul.f32 %v2740, 1.442695
        %v2770 = vpow.pop %v2769
        %v2771 = vmul.f32 %v2741, 1.442695
        %v2772 = vpow.pop %v2771
        %v2773 = vmul.f32 %v2742, 1.442695
        %v2774 = vpow.pop %v2773
        %v2775 = vsel %vm1374, %v2744, 0.0
        %2776 = vadd.xlane.f32.xlu0 %v2775
        %v2777 = vpop.xlane.xlu0 %2776
        %v2778 = vsel %vm1374, %v2746, 0.0
        %2779 = vadd.xlane.f32.xlu0 %v2778
        %v2780 = vpop.xlane.xlu0 %2779
        %v2781 = vsel %vm1374, %v2748, 0.0
        %2782 = vadd.xlane.f32.xlu0 %v2781
        %v2783 = vpop.xlane.xlu0 %2782
        %v2784 = vsel %vm1374, %v2750, 0.0
        %2785 = vadd.xlane.f32.xlu0 %v2784
        %v2786 = vpop.xlane.xlu0 %2785
        %v2787 = vsel %vm1374, %v2752, 0.0
        %2788 = vadd.xlane.f32.xlu0 %v2787
        %v2789 = vpop.xlane.xlu0 %2788
        %v2790 = vsel %vm1374, %v2754, 0.0
        %2791 = vadd.xlane.f32.xlu0 %v2790
        %v2792 = vpop.xlane.xlu0 %2791
        %v2793 = vsel %vm1374, %v2756, 0.0
        %2794 = vadd.xlane.f32.xlu0 %v2793
        %v2795 = vpop.xlane.xlu0 %2794
        %v2796 = vsel %vm1374, %v2758, 0.0
        %2797 = vadd.xlane.f32.xlu0 %v2796
        %v2798 = vpop.xlane.xlu0 %2797
        %v2799 = vsel %vm1374, %v2760, 0.0
        %2800 = vadd.xlane.f32.xlu0 %v2799
        %v2801 = vpop.xlane.xlu0 %2800
        %v2802 = vsel %vm1374, %v2762, 0.0
        %2803 = vadd.xlane.f32.xlu0 %v2802
        %v2804 = vpop.xlane.xlu0 %2803
        %v2805 = vsel %vm1374, %v2764, 0.0
        %2806 = vadd.xlane.f32.xlu0 %v2805
        %v2807 = vpop.xlane.xlu0 %2806
        %v2808 = vsel %vm1374, %v2766, 0.0
        %2809 = vadd.xlane.f32.xlu0 %v2808
        %v2810 = vpop.xlane.xlu0 %2809
        %v2811 = vsel %vm1374, %v2768, 0.0
        %2812 = vadd.xlane.f32.xlu0 %v2811
        %v2813 = vpop.xlane.xlu0 %2812
        %v2814 = vsel %vm1374, %v2770, 0.0
        %2815 = vadd.xlane.f32.xlu0 %v2814
        %v2816 = vpop.xlane.xlu0 %2815
        %v2817 = vsel %vm1374, %v2772, 0.0
        %2818 = vadd.xlane.f32.xlu0 %v2817
        %v2819 = vpop.xlane.xlu0 %2818
        %v2820 = vsel %vm1374, %v2774, 0.0
        %2821 = vadd.xlane.f32.xlu0 %v2820
        %v2822 = vpop.xlane.xlu0 %2821
        %v2823 = vrcp.pop %v2777
        %v2824 = vrcp.pop %v2780
        %v2825 = vrcp.pop %v2783
        %v2826 = vrcp.pop %v2786
        %v2827 = vrcp.pop %v2789
        %v2828 = vrcp.pop %v2792
        %v2829 = vrcp.pop %v2795
        %v2830 = vrcp.pop %v2798
        %v2831 = vrcp.pop %v2801
        %v2832 = vrcp.pop %v2804
        %v2833 = vrcp.pop %v2807
        %v2834 = vrcp.pop %v2810
        %v2835 = vrcp.pop %v2813
        %v2836 = vrcp.pop %v2816
        %v2837 = vrcp.pop %v2819
        %v2838 = vrcp.pop %v2822
        %v2839 = vmul.f32 %v2744, %v2823
        %v2840 = vmul.f32 %v2746, %v2824
        %v2841 = vmul.f32 %v2748, %v2825
        %v2842 = vmul.f32 %v2750, %v2826
        %v2843 = vmul.f32 %v2752, %v2827
        %v2844 = vmul.f32 %v2754, %v2828
        %v2845 = vmul.f32 %v2756, %v2829
        %v2846 = vmul.f32 %v2758, %v2830
        %v2847 = vmul.f32 %v2760, %v2831
        %v2848 = vmul.f32 %v2762, %v2832
        %v2849 = vmul.f32 %v2764, %v2833
        %v2850 = vmul.f32 %v2766, %v2834
        %v2851 = vmul.f32 %v2768, %v2835
        %v2852 = vmul.f32 %v2770, %v2836
        %v2853 = vmul.f32 %v2772, %v2837
        %v2854 = vmul.f32 %v2774, %v2838
        %v2855 = vpack.c.bf16 %v2839, %v2839
        %v2856 = vpack.c.bf16 %v2840, %v2840
        %v2857 = vpack.c.bf16 %v2841, %v2841
        %v2858 = vpack.c.bf16 %v2842, %v2842
        %v2859 = vpack.c.bf16 %v2843, %v2843
        %v2860 = vpack.c.bf16 %v2844, %v2844
        %v2861 = vpack.c.bf16 %v2845, %v2845
        %v2862 = vpack.c.bf16 %v2846, %v2846
        %v2863 = vpack.c.bf16 %v2847, %v2847
        %v2864 = vpack.c.bf16 %v2848, %v2848
        %v2865 = vpack.c.bf16 %v2849, %v2849
        %v2866 = vpack.c.bf16 %v2850, %v2850
        %v2867 = vpack.c.bf16 %v2851, %v2851
        %v2868 = vpack.c.bf16 %v2852, %v2852
        %v2869 = vpack.c.bf16 %v2853, %v2853
        %v2870 = vpack.c.bf16 %v2854, %v2854
        %v2875 = vunpack.c.l.b16 %v2855
        %v2876 = vunpack.c.l.b16 %v2856
        %v2877 = vunpack.c.l.b16 %v2857
        %v2878 = vunpack.c.l.b16 %v2858
        %v2879 = vpack.c.b16 %v2876, %v2875
        %v2880 = vpack.c.b16 %v2878, %v2877
        %2881 = vrot.lane.b32.xlu0 %v1809, 64
        %v2882 = vpop.permute.xlu0 %2881
        %2883 = vrot.lane.b32.xlu0 %v1810, 64
        %v2884 = vpop.permute.xlu0 %2883
        %v2888 = vsel %vm1374, %v2879, 0
        %v2891 = vsel %vm1374, %v2880, 0
        %2893 = vmatpush.bf16.msra.mxu0 0
        %2894 = vmatpush.bf16.msra.mxu0 0
        %2895 = vmatpush.bf16.msra.mxu0 0
        %2896 = vmatpush.bf16.msra.mxu0 0
        %2897 = vmatpush.bf16.msra.mxu0 0
        %2898 = vmatpush.bf16.msra.mxu0 0
        %2899 = vmatpush.bf16.msra.mxu0 %v2884
        %2900 = vmatpush.bf16.msra.mxu0 %v2882
        %2901 = vmatmul.bf16.gmra.mxu0 %v2888
        %v2902 = vpop.f32.mrf.mxu0
        %v2903 = vadd.f32 0.0, %v2902
        %v2904 = vpop.f32.mrf.mxu0
        %v2905 = vadd.f32 0.0, %v2904
        %2906 = vmatmul.bf16.gmra.mxu0 %v2891
        %v2907 = vpop.f32.mrf.mxu0
        %v2908 = vadd.f32 0.0, %v2907
        %v2909 = vpop.f32.mrf.mxu0
        %v2910 = vadd.f32 0.0, %v2909
        %2911 = vdwg.mxu0
        %v2916 = vunpack.c.l.b16 %v2859
        %v2917 = vunpack.c.l.b16 %v2860
        %v2918 = vunpack.c.l.b16 %v2861
        %v2919 = vunpack.c.l.b16 %v2862
        %v2920 = vpack.c.b16 %v2917, %v2916
        %v2921 = vpack.c.b16 %v2919, %v2918
        %2922 = vrot.lane.b32.xlu0 %v1856, 64
        %v2923 = vpop.permute.xlu0 %2922
        %2924 = vrot.lane.b32.xlu0 %v1857, 64
        %v2925 = vpop.permute.xlu0 %2924
        %v2929 = vsel %vm1374, %v2920, 0
        %v2932 = vsel %vm1374, %v2921, 0
        %2934 = vmatpush.bf16.msra.mxu0 0
        %2935 = vmatpush.bf16.msra.mxu0 0
        %2936 = vmatpush.bf16.msra.mxu0 0
        %2937 = vmatpush.bf16.msra.mxu0 0
        %2938 = vmatpush.bf16.msra.mxu0 0
        %2939 = vmatpush.bf16.msra.mxu0 0
        %2940 = vmatpush.bf16.msra.mxu0 %v2925
        %2941 = vmatpush.bf16.msra.mxu0 %v2923
        %2942 = vmatmul.bf16.gmra.mxu0 %v2929
        %v2943 = vpop.f32.mrf.mxu0
        %v2944 = vadd.f32 0.0, %v2943
        %v2945 = vpop.f32.mrf.mxu0
        %v2946 = vadd.f32 0.0, %v2945
        %2947 = vmatmul.bf16.gmra.mxu0 %v2932
        %v2948 = vpop.f32.mrf.mxu0
        %v2949 = vadd.f32 0.0, %v2948
        %v2950 = vpop.f32.mrf.mxu0
        %v2951 = vadd.f32 0.0, %v2950
        %2952 = vdwg.mxu0
        %v2957 = vunpack.c.l.b16 %v2863
        %v2958 = vunpack.c.l.b16 %v2864
        %v2959 = vunpack.c.l.b16 %v2865
        %v2960 = vunpack.c.l.b16 %v2866
        %v2961 = vpack.c.b16 %v2958, %v2957
        %v2962 = vpack.c.b16 %v2960, %v2959
        %2963 = vrot.lane.b32.xlu0 %v1903, 64
        %v2964 = vpop.permute.xlu0 %2963
        %2965 = vrot.lane.b32.xlu0 %v1904, 64
        %v2966 = vpop.permute.xlu0 %2965
        %v2970 = vsel %vm1374, %v2961, 0
        %v2973 = vsel %vm1374, %v2962, 0
        %2975 = vmatpush.bf16.msra.mxu0 0
        %2976 = vmatpush.bf16.msra.mxu0 0
        %2977 = vmatpush.bf16.msra.mxu0 0
        %2978 = vmatpush.bf16.msra.mxu0 0
        %2979 = vmatpush.bf16.msra.mxu0 0
        %2980 = vmatpush.bf16.msra.mxu0 0
        %2981 = vmatpush.bf16.msra.mxu0 %v2966
        %2982 = vmatpush.bf16.msra.mxu0 %v2964
        %2983 = vmatmul.bf16.gmra.mxu0 %v2970
        %v2984 = vpop.f32.mrf.mxu0
        %v2985 = vadd.f32 0.0, %v2984
        %v2986 = vpop.f32.mrf.mxu0
        %v2987 = vadd.f32 0.0, %v2986
        %2988 = vmatmul.bf16.gmra.mxu0 %v2973
        %v2989 = vpop.f32.mrf.mxu0
        %v2990 = vadd.f32 0.0, %v2989
        %v2991 = vpop.f32.mrf.mxu0
        %v2992 = vadd.f32 0.0, %v2991
        %2993 = vdwg.mxu0
        %v2998 = vunpack.c.l.b16 %v2867
        %v2999 = vunpack.c.l.b16 %v2868
        %v3000 = vunpack.c.l.b16 %v2869
        %v3001 = vunpack.c.l.b16 %v2870
        %v3002 = vpack.c.b16 %v2999, %v2998
        %v3003 = vpack.c.b16 %v3001, %v3000
        %3004 = vrot.lane.b32.xlu0 %v1950, 64
        %v3005 = vpop.permute.xlu0 %3004
        %3006 = vrot.lane.b32.xlu0 %v1951, 64
        %v3007 = vpop.permute.xlu0 %3006
        %v3011 = vsel %vm1374, %v3002, 0
        %v3014 = vsel %vm1374, %v3003, 0
        %3016 = vmatpush.bf16.msra.mxu0 0
        %3017 = vmatpush.bf16.msra.mxu0 0
        %3018 = vmatpush.bf16.msra.mxu0 0
        %3019 = vmatpush.bf16.msra.mxu0 0
        %3020 = vmatpush.bf16.msra.mxu0 0
        %3021 = vmatpush.bf16.msra.mxu0 0
        %3022 = vmatpush.bf16.msra.mxu0 %v3007
        %3023 = vmatpush.bf16.msra.mxu0 %v3005
        %3024 = vmatmul.bf16.gmra.mxu0 %v3011
        %v3025 = vpop.f32.mrf.mxu0
        %v3026 = vadd.f32 0.0, %v3025
        %v3027 = vpop.f32.mrf.mxu0
        %v3028 = vadd.f32 0.0, %v3027
        %3029 = vmatmul.bf16.gmra.mxu0 %v3014
        %v3030 = vpop.f32.mrf.mxu0
        %v3031 = vadd.f32 0.0, %v3030
        %v3032 = vpop.f32.mrf.mxu0
        %v3033 = vadd.f32 0.0, %v3032
        %3034 = vdwg.mxu0
        %3035 = vrot.lane.b32.xlu0 %v1362, 32
        %v3036 = vpop.permute.xlu0 %3035
        %3037 = vrot.lane.b32.xlu0 %v1363, 32
        %v3038 = vpop.permute.xlu0 %3037
        %3039 = vrot.lane.b32.xlu0 %v1372, 32
        %v3040 = vpop.permute.xlu0 %3039
        %3041 = vrot.lane.b32.xlu0 %v1373, 32
        %v3042 = vpop.permute.xlu0 %3041
        %v3044 = vsel %vm1374, %v3036, 0
        %v3047 = vsel %vm1374, %v3038, 0
        %v3050 = vsel %vm1374, %v3040, 0
        %v3053 = vsel %vm1374, %v3042, 0
        %3055 = vmatpush.bf16.xpose.msra.mxu0 0
        %3056 = vmatpush.bf16.xpose.msra.mxu0 0
        %3057 = vmatpush.bf16.xpose.msra.mxu0 0
        %3058 = vmatpush.bf16.xpose.msra.mxu0 0
        %3059 = vmatpush.bf16.xpose.msra.mxu0 0
        %3060 = vmatpush.bf16.xpose.msra.mxu0 0
        %3061 = vmatpush.bf16.xpose.msra.mxu0 %v3053
        %3062 = vmatpush.bf16.xpose.msra.mxu0 %v3050
        %3063 = vmatmul.bf16.gmra.mxu0 %v3044
        %v3064 = vpop.f32.mrf.mxu0
        %v3065 = vadd.f32 0.0, %v3064
        %v3066 = vpop.f32.mrf.mxu0
        %v3067 = vadd.f32 0.0, %v3066
        %3068 = vmatmul.bf16.gmra.mxu0 %v3047
        %v3069 = vpop.f32.mrf.mxu0
        %v3070 = vadd.f32 0.0, %v3069
        %v3071 = vpop.f32.mrf.mxu0
        %v3072 = vadd.f32 0.0, %v3071
        %3073 = vdwg.mxu0
        %3074 = vrot.lane.b32.xlu0 %v1414, 32
        %v3075 = vpop.permute.xlu0 %3074
        %3076 = vrot.lane.b32.xlu0 %v1415, 32
        %v3077 = vpop.permute.xlu0 %3076
        %3078 = vrot.lane.b32.xlu0 %v1424, 32
        %v3079 = vpop.permute.xlu0 %3078
        %3080 = vrot.lane.b32.xlu0 %v1425, 32
        %v3081 = vpop.permute.xlu0 %3080
        %v3083 = vsel %vm1374, %v3075, 0
        %v3086 = vsel %vm1374, %v3077, 0
        %v3089 = vsel %vm1374, %v3079, 0
        %v3092 = vsel %vm1374, %v3081, 0
        %3094 = vmatpush.bf16.xpose.msra.mxu0 0
        %3095 = vmatpush.bf16.xpose.msra.mxu0 0
        %3096 = vmatpush.bf16.xpose.msra.mxu0 0
        %3097 = vmatpush.bf16.xpose.msra.mxu0 0
        %3098 = vmatpush.bf16.xpose.msra.mxu0 0
        %3099 = vmatpush.bf16.xpose.msra.mxu0 0
        %3100 = vmatpush.bf16.xpose.msra.mxu0 %v3092
        %3101 = vmatpush.bf16.xpose.msra.mxu0 %v3089
        %3102 = vmatmul.bf16.gmra.mxu0 %v3083
        %v3103 = vpop.f32.mrf.mxu0
        %v3104 = vadd.f32 0.0, %v3103
        %v3105 = vpop.f32.mrf.mxu0
        %v3106 = vadd.f32 0.0, %v3105
        %3107 = vmatmul.bf16.gmra.mxu0 %v3086
        %v3108 = vpop.f32.mrf.mxu0
        %v3109 = vadd.f32 0.0, %v3108
        %v3110 = vpop.f32.mrf.mxu0
        %v3111 = vadd.f32 0.0, %v3110
        %3112 = vdwg.mxu0
        %3113 = vrot.lane.b32.xlu0 %v1465, 32
        %v3114 = vpop.permute.xlu0 %3113
        %3115 = vrot.lane.b32.xlu0 %v1466, 32
        %v3116 = vpop.permute.xlu0 %3115
        %3117 = vrot.lane.b32.xlu0 %v1475, 32
        %v3118 = vpop.permute.xlu0 %3117
        %3119 = vrot.lane.b32.xlu0 %v1476, 32
        %v3120 = vpop.permute.xlu0 %3119
        %v3122 = vsel %vm1374, %v3114, 0
        %v3125 = vsel %vm1374, %v3116, 0
        %v3128 = vsel %vm1374, %v3118, 0
        %v3131 = vsel %vm1374, %v3120, 0
        %3133 = vmatpush.bf16.xpose.msra.mxu0 0
        %3134 = vmatpush.bf16.xpose.msra.mxu0 0
        %3135 = vmatpush.bf16.xpose.msra.mxu0 0
        %3136 = vmatpush.bf16.xpose.msra.mxu0 0
        %3137 = vmatpush.bf16.xpose.msra.mxu0 0
        %3138 = vmatpush.bf16.xpose.msra.mxu0 0
        %3139 = vmatpush.bf16.xpose.msra.mxu0 %v3131
        %3140 = vmatpush.bf16.xpose.msra.mxu0 %v3128
        %3141 = vmatmul.bf16.gmra.mxu0 %v3122
        %v3142 = vpop.f32.mrf.mxu0
        %v3143 = vadd.f32 0.0, %v3142
        %v3144 = vpop.f32.mrf.mxu0
        %v3145 = vadd.f32 0.0, %v3144
        %3146 = vmatmul.bf16.gmra.mxu0 %v3125
        %v3147 = vpop.f32.mrf.mxu0
        %v3148 = vadd.f32 0.0, %v3147
        %v3149 = vpop.f32.mrf.mxu0
        %v3150 = vadd.f32 0.0, %v3149
        %3151 = vdwg.mxu0
        %3152 = vrot.lane.b32.xlu0 %v1516, 32
        %v3153 = vpop.permute.xlu0 %3152
        %3154 = vrot.lane.b32.xlu0 %v1517, 32
        %v3155 = vpop.permute.xlu0 %3154
        %3156 = vrot.lane.b32.xlu0 %v1526, 32
        %v3157 = vpop.permute.xlu0 %3156
        %3158 = vrot.lane.b32.xlu0 %v1527, 32
        %v3159 = vpop.permute.xlu0 %3158
        %v3161 = vsel %vm1374, %v3153, 0
        %v3164 = vsel %vm1374, %v3155, 0
        %v3167 = vsel %vm1374, %v3157, 0
        %v3170 = vsel %vm1374, %v3159, 0
        %3172 = vmatpush.bf16.xpose.msra.mxu0 0
        %3173 = vmatpush.bf16.xpose.msra.mxu0 0
        %3174 = vmatpush.bf16.xpose.msra.mxu0 0
        %3175 = vmatpush.bf16.xpose.msra.mxu0 0
        %3176 = vmatpush.bf16.xpose.msra.mxu0 0
        %3177 = vmatpush.bf16.xpose.msra.mxu0 0
        %3178 = vmatpush.bf16.xpose.msra.mxu0 %v3170
        %3179 = vmatpush.bf16.xpose.msra.mxu0 %v3167
        %3180 = vmatmul.bf16.gmra.mxu0 %v3161
        %v3181 = vpop.f32.mrf.mxu0
        %v3182 = vadd.f32 0.0, %v3181
        %v3183 = vpop.f32.mrf.mxu0
        %v3184 = vadd.f32 0.0, %v3183
        %3185 = vmatmul.bf16.gmra.mxu0 %v3164
        %v3186 = vpop.f32.mrf.mxu0
        %v3187 = vadd.f32 0.0, %v3186
        %v3188 = vpop.f32.mrf.mxu0
        %v3189 = vadd.f32 0.0, %v3188
        %3190 = vdwg.mxu0
        %v3191 = vsel %vm1563, %v3065, -1e+30
        %v3192 = vsel %vm1564, %v3067, -1e+30
        %v3193 = vsel %vm1565, %v3070, -1e+30
        %v3194 = vsel %vm1566, %v3072, -1e+30
        %v3195 = vsel %vm1563, %v3104, -1e+30
        %v3196 = vsel %vm1564, %v3106, -1e+30
        %v3197 = vsel %vm1565, %v3109, -1e+30
        %v3198 = vsel %vm1566, %v3111, -1e+30
        %v3199 = vsel %vm1563, %v3143, -1e+30
        %v3200 = vsel %vm1564, %v3145, -1e+30
        %v3201 = vsel %vm1565, %v3148, -1e+30
        %v3202 = vsel %vm1566, %v3150, -1e+30
        %v3203 = vsel %vm1563, %v3182, -1e+30
        %v3204 = vsel %vm1564, %v3184, -1e+30
        %v3205 = vsel %vm1565, %v3187, -1e+30
        %v3206 = vsel %vm1566, %v3189, -1e+30
        %v3207 = vsel %vm1374, %v3191, -inf
        %3208 = vmax.xlane.f32.xlu0 %v3207
        %v3209 = vpop.xlane.xlu0 %3208
        %v3210 = vsel %vm1374, %v3192, -inf
        %3211 = vmax.xlane.f32.xlu0 %v3210
        %v3212 = vpop.xlane.xlu0 %3211
        %v3213 = vsel %vm1374, %v3193, -inf
        %3214 = vmax.xlane.f32.xlu0 %v3213
        %v3215 = vpop.xlane.xlu0 %3214
        %v3216 = vsel %vm1374, %v3194, -inf
        %3217 = vmax.xlane.f32.xlu0 %v3216
        %v3218 = vpop.xlane.xlu0 %3217
        %v3219 = vsel %vm1374, %v3195, -inf
        %3220 = vmax.xlane.f32.xlu0 %v3219
        %v3221 = vpop.xlane.xlu0 %3220
        %v3222 = vsel %vm1374, %v3196, -inf
        %3223 = vmax.xlane.f32.xlu0 %v3222
        %v3224 = vpop.xlane.xlu0 %3223
        %v3225 = vsel %vm1374, %v3197, -inf
        %3226 = vmax.xlane.f32.xlu0 %v3225
        %v3227 = vpop.xlane.xlu0 %3226
        %v3228 = vsel %vm1374, %v3198, -inf
        %3229 = vmax.xlane.f32.xlu0 %v3228
        %v3230 = vpop.xlane.xlu0 %3229
        %v3231 = vsel %vm1374, %v3199, -inf
        %3232 = vmax.xlane.f32.xlu0 %v3231
        %v3233 = vpop.xlane.xlu0 %3232
        %v3234 = vsel %vm1374, %v3200, -inf
        %3235 = vmax.xlane.f32.xlu0 %v3234
        %v3236 = vpop.xlane.xlu0 %3235
        %v3237 = vsel %vm1374, %v3201, -inf
        %3238 = vmax.xlane.f32.xlu0 %v3237
        %v3239 = vpop.xlane.xlu0 %3238
        %v3240 = vsel %vm1374, %v3202, -inf
        %3241 = vmax.xlane.f32.xlu0 %v3240
        %v3242 = vpop.xlane.xlu0 %3241
        %v3243 = vsel %vm1374, %v3203, -inf
        %3244 = vmax.xlane.f32.xlu0 %v3243
        %v3245 = vpop.xlane.xlu0 %3244
        %v3246 = vsel %vm1374, %v3204, -inf
        %3247 = vmax.xlane.f32.xlu0 %v3246
        %v3248 = vpop.xlane.xlu0 %3247
        %v3249 = vsel %vm1374, %v3205, -inf
        %3250 = vmax.xlane.f32.xlu0 %v3249
        %v3251 = vpop.xlane.xlu0 %3250
        %v3252 = vsel %vm1374, %v3206, -inf
        %3253 = vmax.xlane.f32.xlu0 %v3252
        %v3254 = vpop.xlane.xlu0 %3253
        %v3255 = vsub.f32 %v3191, %v3209
        %v3256 = vsub.f32 %v3192, %v3212
        %v3257 = vsub.f32 %v3193, %v3215
        %v3258 = vsub.f32 %v3194, %v3218
        %v3259 = vsub.f32 %v3195, %v3221
        %v3260 = vsub.f32 %v3196, %v3224
        %v3261 = vsub.f32 %v3197, %v3227
        %v3262 = vsub.f32 %v3198, %v3230
        %v3263 = vsub.f32 %v3199, %v3233
        %v3264 = vsub.f32 %v3200, %v3236
        %v3265 = vsub.f32 %v3201, %v3239
        %v3266 = vsub.f32 %v3202, %v3242
        %v3267 = vsub.f32 %v3203, %v3245
        %v3268 = vsub.f32 %v3204, %v3248
        %v3269 = vsub.f32 %v3205, %v3251
        %v3270 = vsub.f32 %v3206, %v3254
        %v3271 = vmul.f32 %v3255, 1.442695
        %v3272 = vpow.pop %v3271
        %v3273 = vmul.f32 %v3256, 1.442695
        %v3274 = vpow.pop %v3273
        %v3275 = vmul.f32 %v3257, 1.442695
        %v3276 = vpow.pop %v3275
        %v3277 = vmul.f32 %v3258, 1.442695
        %v3278 = vpow.pop %v3277
        %v3279 = vmul.f32 %v3259, 1.442695
        %v3280 = vpow.pop %v3279
        %v3281 = vmul.f32 %v3260, 1.442695
        %v3282 = vpow.pop %v3281
        %v3283 = vmul.f32 %v3261, 1.442695
        %v3284 = vpow.pop %v3283
        %v3285 = vmul.f32 %v3262, 1.442695
        %v3286 = vpow.pop %v3285
        %v3287 = vmul.f32 %v3263, 1.442695
        %v3288 = vpow.pop %v3287
        %v3289 = vmul.f32 %v3264, 1.442695
        %v3290 = vpow.pop %v3289
        %v3291 = vmul.f32 %v3265, 1.442695
        %v3292 = vpow.pop %v3291
        %v3293 = vmul.f32 %v3266, 1.442695
        %v3294 = vpow.pop %v3293
        %v3295 = vmul.f32 %v3267, 1.442695
        %v3296 = vpow.pop %v3295
        %v3297 = vmul.f32 %v3268, 1.442695
        %v3298 = vpow.pop %v3297
        %v3299 = vmul.f32 %v3269, 1.442695
        %v3300 = vpow.pop %v3299
        %v3301 = vmul.f32 %v3270, 1.442695
        %v3302 = vpow.pop %v3301
        %v3303 = vsel %vm1374, %v3272, 0.0
        %3304 = vadd.xlane.f32.xlu0 %v3303
        %v3305 = vpop.xlane.xlu0 %3304
        %v3306 = vsel %vm1374, %v3274, 0.0
        %3307 = vadd.xlane.f32.xlu0 %v3306
        %v3308 = vpop.xlane.xlu0 %3307
        %v3309 = vsel %vm1374, %v3276, 0.0
        %3310 = vadd.xlane.f32.xlu0 %v3309
        %v3311 = vpop.xlane.xlu0 %3310
        %v3312 = vsel %vm1374, %v3278, 0.0
        %3313 = vadd.xlane.f32.xlu0 %v3312
        %v3314 = vpop.xlane.xlu0 %3313
        %v3315 = vsel %vm1374, %v3280, 0.0
        %3316 = vadd.xlane.f32.xlu0 %v3315
        %v3317 = vpop.xlane.xlu0 %3316
        %v3318 = vsel %vm1374, %v3282, 0.0
        %3319 = vadd.xlane.f32.xlu0 %v3318
        %v3320 = vpop.xlane.xlu0 %3319
        %v3321 = vsel %vm1374, %v3284, 0.0
        %3322 = vadd.xlane.f32.xlu0 %v3321
        %v3323 = vpop.xlane.xlu0 %3322
        %v3324 = vsel %vm1374, %v3286, 0.0
        %3325 = vadd.xlane.f32.xlu0 %v3324
        %v3326 = vpop.xlane.xlu0 %3325
        %v3327 = vsel %vm1374, %v3288, 0.0
        %3328 = vadd.xlane.f32.xlu0 %v3327
        %v3329 = vpop.xlane.xlu0 %3328
        %v3330 = vsel %vm1374, %v3290, 0.0
        %3331 = vadd.xlane.f32.xlu0 %v3330
        %v3332 = vpop.xlane.xlu0 %3331
        %v3333 = vsel %vm1374, %v3292, 0.0
        %3334 = vadd.xlane.f32.xlu0 %v3333
        %v3335 = vpop.xlane.xlu0 %3334
        %v3336 = vsel %vm1374, %v3294, 0.0
        %3337 = vadd.xlane.f32.xlu0 %v3336
        %v3338 = vpop.xlane.xlu0 %3337
        %v3339 = vsel %vm1374, %v3296, 0.0
        %3340 = vadd.xlane.f32.xlu0 %v3339
        %v3341 = vpop.xlane.xlu0 %3340
        %v3342 = vsel %vm1374, %v3298, 0.0
        %3343 = vadd.xlane.f32.xlu0 %v3342
        %v3344 = vpop.xlane.xlu0 %3343
        %v3345 = vsel %vm1374, %v3300, 0.0
        %3346 = vadd.xlane.f32.xlu0 %v3345
        %v3347 = vpop.xlane.xlu0 %3346
        %v3348 = vsel %vm1374, %v3302, 0.0
        %3349 = vadd.xlane.f32.xlu0 %v3348
        %v3350 = vpop.xlane.xlu0 %3349
        %v3351 = vrcp.pop %v3305
        %v3352 = vrcp.pop %v3308
        %v3353 = vrcp.pop %v3311
        %v3354 = vrcp.pop %v3314
        %v3355 = vrcp.pop %v3317
        %v3356 = vrcp.pop %v3320
        %v3357 = vrcp.pop %v3323
        %v3358 = vrcp.pop %v3326
        %v3359 = vrcp.pop %v3329
        %v3360 = vrcp.pop %v3332
        %v3361 = vrcp.pop %v3335
        %v3362 = vrcp.pop %v3338
        %v3363 = vrcp.pop %v3341
        %v3364 = vrcp.pop %v3344
        %v3365 = vrcp.pop %v3347
        %v3366 = vrcp.pop %v3350
        %v3367 = vmul.f32 %v3272, %v3351
        %v3368 = vmul.f32 %v3274, %v3352
        %v3369 = vmul.f32 %v3276, %v3353
        %v3370 = vmul.f32 %v3278, %v3354
        %v3371 = vmul.f32 %v3280, %v3355
        %v3372 = vmul.f32 %v3282, %v3356
        %v3373 = vmul.f32 %v3284, %v3357
        %v3374 = vmul.f32 %v3286, %v3358
        %v3375 = vmul.f32 %v3288, %v3359
        %v3376 = vmul.f32 %v3290, %v3360
        %v3377 = vmul.f32 %v3292, %v3361
        %v3378 = vmul.f32 %v3294, %v3362
        %v3379 = vmul.f32 %v3296, %v3363
        %v3380 = vmul.f32 %v3298, %v3364
        %v3381 = vmul.f32 %v3300, %v3365
        %v3382 = vmul.f32 %v3302, %v3366
        %v3383 = vpack.c.bf16 %v3367, %v3367
        %v3384 = vpack.c.bf16 %v3368, %v3368
        %v3385 = vpack.c.bf16 %v3369, %v3369
        %v3386 = vpack.c.bf16 %v3370, %v3370
        %v3387 = vpack.c.bf16 %v3371, %v3371
        %v3388 = vpack.c.bf16 %v3372, %v3372
        %v3389 = vpack.c.bf16 %v3373, %v3373
        %v3390 = vpack.c.bf16 %v3374, %v3374
        %v3391 = vpack.c.bf16 %v3375, %v3375
        %v3392 = vpack.c.bf16 %v3376, %v3376
        %v3393 = vpack.c.bf16 %v3377, %v3377
        %v3394 = vpack.c.bf16 %v3378, %v3378
        %v3395 = vpack.c.bf16 %v3379, %v3379
        %v3396 = vpack.c.bf16 %v3380, %v3380
        %v3397 = vpack.c.bf16 %v3381, %v3381
        %v3398 = vpack.c.bf16 %v3382, %v3382
        %v3403 = vunpack.c.l.b16 %v3383
        %v3404 = vunpack.c.l.b16 %v3384
        %v3405 = vunpack.c.l.b16 %v3385
        %v3406 = vunpack.c.l.b16 %v3386
        %v3407 = vpack.c.b16 %v3404, %v3403
        %v3408 = vpack.c.b16 %v3406, %v3405
        %3409 = vrot.lane.b32.xlu0 %v1809, 32
        %v3410 = vpop.permute.xlu0 %3409
        %3411 = vrot.lane.b32.xlu0 %v1810, 32
        %v3412 = vpop.permute.xlu0 %3411
        %v3416 = vsel %vm1374, %v3407, 0
        %v3419 = vsel %vm1374, %v3408, 0
        %3421 = vmatpush.bf16.msra.mxu0 0
        %3422 = vmatpush.bf16.msra.mxu0 0
        %3423 = vmatpush.bf16.msra.mxu0 0
        %3424 = vmatpush.bf16.msra.mxu0 0
        %3425 = vmatpush.bf16.msra.mxu0 0
        %3426 = vmatpush.bf16.msra.mxu0 0
        %3427 = vmatpush.bf16.msra.mxu0 %v3412
        %3428 = vmatpush.bf16.msra.mxu0 %v3410
        %3429 = vmatmul.bf16.gmra.mxu0 %v3416
        %v3430 = vpop.f32.mrf.mxu0
        %v3431 = vadd.f32 0.0, %v3430
        %v3432 = vpop.f32.mrf.mxu0
        %v3433 = vadd.f32 0.0, %v3432
        %3434 = vmatmul.bf16.gmra.mxu0 %v3419
        %v3435 = vpop.f32.mrf.mxu0
        %v3436 = vadd.f32 0.0, %v3435
        %v3437 = vpop.f32.mrf.mxu0
        %v3438 = vadd.f32 0.0, %v3437
        %3439 = vdwg.mxu0
        %v3444 = vunpack.c.l.b16 %v3387
        %v3445 = vunpack.c.l.b16 %v3388
        %v3446 = vunpack.c.l.b16 %v3389
        %v3447 = vunpack.c.l.b16 %v3390
        %v3448 = vpack.c.b16 %v3445, %v3444
        %v3449 = vpack.c.b16 %v3447, %v3446
        %3450 = vrot.lane.b32.xlu0 %v1856, 32
        %v3451 = vpop.permute.xlu0 %3450
        %3452 = vrot.lane.b32.xlu0 %v1857, 32
        %v3453 = vpop.permute.xlu0 %3452
        %v3457 = vsel %vm1374, %v3448, 0
        %v3460 = vsel %vm1374, %v3449, 0
        %3462 = vmatpush.bf16.msra.mxu0 0
        %3463 = vmatpush.bf16.msra.mxu0 0
        %3464 = vmatpush.bf16.msra.mxu0 0
        %3465 = vmatpush.bf16.msra.mxu0 0
        %3466 = vmatpush.bf16.msra.mxu0 0
        %3467 = vmatpush.bf16.msra.mxu0 0
        %3468 = vmatpush.bf16.msra.mxu0 %v3453
        %3469 = vmatpush.bf16.msra.mxu0 %v3451
        %3470 = vmatmul.bf16.gmra.mxu0 %v3457
        %v3471 = vpop.f32.mrf.mxu0
        %v3472 = vadd.f32 0.0, %v3471
        %v3473 = vpop.f32.mrf.mxu0
        %v3474 = vadd.f32 0.0, %v3473
        %3475 = vmatmul.bf16.gmra.mxu0 %v3460
        %v3476 = vpop.f32.mrf.mxu0
        %v3477 = vadd.f32 0.0, %v3476
        %v3478 = vpop.f32.mrf.mxu0
        %v3479 = vadd.f32 0.0, %v3478
        %3480 = vdwg.mxu0
        %v3485 = vunpack.c.l.b16 %v3391
        %v3486 = vunpack.c.l.b16 %v3392
        %v3487 = vunpack.c.l.b16 %v3393
        %v3488 = vunpack.c.l.b16 %v3394
        %v3489 = vpack.c.b16 %v3486, %v3485
        %v3490 = vpack.c.b16 %v3488, %v3487
        %3491 = vrot.lane.b32.xlu0 %v1903, 32
        %v3492 = vpop.permute.xlu0 %3491
        %3493 = vrot.lane.b32.xlu0 %v1904, 32
        %v3494 = vpop.permute.xlu0 %3493
        %v3498 = vsel %vm1374, %v3489, 0
        %v3501 = vsel %vm1374, %v3490, 0
        %3503 = vmatpush.bf16.msra.mxu0 0
        %3504 = vmatpush.bf16.msra.mxu0 0
        %3505 = vmatpush.bf16.msra.mxu0 0
        %3506 = vmatpush.bf16.msra.mxu0 0
        %3507 = vmatpush.bf16.msra.mxu0 0
        %3508 = vmatpush.bf16.msra.mxu0 0
        %3509 = vmatpush.bf16.msra.mxu0 %v3494
        %3510 = vmatpush.bf16.msra.mxu0 %v3492
        %3511 = vmatmul.bf16.gmra.mxu0 %v3498
        %v3512 = vpop.f32.mrf.mxu0
        %v3513 = vadd.f32 0.0, %v3512
        %v3514 = vpop.f32.mrf.mxu0
        %v3515 = vadd.f32 0.0, %v3514
        %3516 = vmatmul.bf16.gmra.mxu0 %v3501
        %v3517 = vpop.f32.mrf.mxu0
        %v3518 = vadd.f32 0.0, %v3517
        %v3519 = vpop.f32.mrf.mxu0
        %v3520 = vadd.f32 0.0, %v3519
        %3521 = vdwg.mxu0
        %v3526 = vunpack.c.l.b16 %v3395
        %v3527 = vunpack.c.l.b16 %v3396
        %v3528 = vunpack.c.l.b16 %v3397
        %v3529 = vunpack.c.l.b16 %v3398
        %v3530 = vpack.c.b16 %v3527, %v3526
        %v3531 = vpack.c.b16 %v3529, %v3528
        %3532 = vrot.lane.b32.xlu0 %v1950, 32
        %v3533 = vpop.permute.xlu0 %3532
        %3534 = vrot.lane.b32.xlu0 %v1951, 32
        %v3535 = vpop.permute.xlu0 %3534
        %v3539 = vsel %vm1374, %v3530, 0
        %v3542 = vsel %vm1374, %v3531, 0
        %3544 = vmatpush.bf16.msra.mxu0 0
        %3545 = vmatpush.bf16.msra.mxu0 0
        %3546 = vmatpush.bf16.msra.mxu0 0
        %3547 = vmatpush.bf16.msra.mxu0 0
        %3548 = vmatpush.bf16.msra.mxu0 0
        %3549 = vmatpush.bf16.msra.mxu0 0
        %3550 = vmatpush.bf16.msra.mxu0 %v3535
        %3551 = vmatpush.bf16.msra.mxu0 %v3533
        %3552 = vmatmul.bf16.gmra.mxu0 %v3539
        %v3553 = vpop.f32.mrf.mxu0
        %v3554 = vadd.f32 0.0, %v3553
        %v3555 = vpop.f32.mrf.mxu0
        %v3556 = vadd.f32 0.0, %v3555
        %3557 = vmatmul.bf16.gmra.mxu0 %v3542
        %v3558 = vpop.f32.mrf.mxu0
        %v3559 = vadd.f32 0.0, %v3558
        %v3560 = vpop.f32.mrf.mxu0
        %v3561 = vadd.f32 0.0, %v3560
        %3562 = vdwg.mxu0
        %3579 = vrot.lane.b32.xlu0 %v2375, 32
        %v3580 = vpop.permute.xlu0 %3579
        %3581 = vrot.lane.b32.xlu0 %v2377, 32
        %v3582 = vpop.permute.xlu0 %3581
        %3583 = vrot.lane.b32.xlu0 %v2380, 32
        %v3584 = vpop.permute.xlu0 %3583
        %3585 = vrot.lane.b32.xlu0 %v2382, 32
        %v3586 = vpop.permute.xlu0 %3585
        %3587 = vrot.lane.b32.xlu0 %v2416, 32
        %v3588 = vpop.permute.xlu0 %3587
        %3589 = vrot.lane.b32.xlu0 %v2418, 32
        %v3590 = vpop.permute.xlu0 %3589
        %3591 = vrot.lane.b32.xlu0 %v2421, 32
        %v3592 = vpop.permute.xlu0 %3591
        %3593 = vrot.lane.b32.xlu0 %v2423, 32
        %v3594 = vpop.permute.xlu0 %3593
        %3595 = vrot.lane.b32.xlu0 %v2457, 32
        %v3596 = vpop.permute.xlu0 %3595
        %3597 = vrot.lane.b32.xlu0 %v2459, 32
        %v3598 = vpop.permute.xlu0 %3597
        %3599 = vrot.lane.b32.xlu0 %v2462, 32
        %v3600 = vpop.permute.xlu0 %3599
        %3601 = vrot.lane.b32.xlu0 %v2464, 32
        %v3602 = vpop.permute.xlu0 %3601
        %3603 = vrot.lane.b32.xlu0 %v2498, 32
        %v3604 = vpop.permute.xlu0 %3603
        %3605 = vrot.lane.b32.xlu0 %v2500, 32
        %v3606 = vpop.permute.xlu0 %3605
        %3607 = vrot.lane.b32.xlu0 %v2503, 32
        %v3608 = vpop.permute.xlu0 %3607
        %3609 = vrot.lane.b32.xlu0 %v2505, 32
        %v3610 = vpop.permute.xlu0 %3609
        %3643 = vrot.lane.b32.xlu0 %v2903, 64
        %v3644 = vpop.permute.xlu0 %3643
        %3645 = vrot.lane.b32.xlu0 %v2905, 64
        %v3646 = vpop.permute.xlu0 %3645
        %3647 = vrot.lane.b32.xlu0 %v2908, 64
        %v3648 = vpop.permute.xlu0 %3647
        %3649 = vrot.lane.b32.xlu0 %v2910, 64
        %v3650 = vpop.permute.xlu0 %3649
        %3651 = vrot.lane.b32.xlu0 %v2944, 64
        %v3652 = vpop.permute.xlu0 %3651
        %3653 = vrot.lane.b32.xlu0 %v2946, 64
        %v3654 = vpop.permute.xlu0 %3653
        %3655 = vrot.lane.b32.xlu0 %v2949, 64
        %v3656 = vpop.permute.xlu0 %3655
        %3657 = vrot.lane.b32.xlu0 %v2951, 64
        %v3658 = vpop.permute.xlu0 %3657
        %3659 = vrot.lane.b32.xlu0 %v2985, 64
        %v3660 = vpop.permute.xlu0 %3659
        %3661 = vrot.lane.b32.xlu0 %v2987, 64
        %v3662 = vpop.permute.xlu0 %3661
        %3663 = vrot.lane.b32.xlu0 %v2990, 64
        %v3664 = vpop.permute.xlu0 %3663
        %3665 = vrot.lane.b32.xlu0 %v2992, 64
        %v3666 = vpop.permute.xlu0 %3665
        %3667 = vrot.lane.b32.xlu0 %v3026, 64
        %v3668 = vpop.permute.xlu0 %3667
        %3669 = vrot.lane.b32.xlu0 %v3028, 64
        %v3670 = vpop.permute.xlu0 %3669
        %3671 = vrot.lane.b32.xlu0 %v3031, 64
        %v3672 = vpop.permute.xlu0 %3671
        %3673 = vrot.lane.b32.xlu0 %v3033, 64
        %v3674 = vpop.permute.xlu0 %3673
        %3707 = vrot.lane.b32.xlu0 %v3431, 96
        %v3708 = vpop.permute.xlu0 %3707
        %3709 = vrot.lane.b32.xlu0 %v3433, 96
        %v3710 = vpop.permute.xlu0 %3709
        %3711 = vrot.lane.b32.xlu0 %v3436, 96
        %v3712 = vpop.permute.xlu0 %3711
        %3713 = vrot.lane.b32.xlu0 %v3438, 96
        %v3714 = vpop.permute.xlu0 %3713
        %3715 = vrot.lane.b32.xlu0 %v3472, 96
        %v3716 = vpop.permute.xlu0 %3715
        %3717 = vrot.lane.b32.xlu0 %v3474, 96
        %v3718 = vpop.permute.xlu0 %3717
        %3719 = vrot.lane.b32.xlu0 %v3477, 96
        %v3720 = vpop.permute.xlu0 %3719
        %3721 = vrot.lane.b32.xlu0 %v3479, 96
        %v3722 = vpop.permute.xlu0 %3721
        %3723 = vrot.lane.b32.xlu0 %v3513, 96
        %v3724 = vpop.permute.xlu0 %3723
        %3725 = vrot.lane.b32.xlu0 %v3515, 96
        %v3726 = vpop.permute.xlu0 %3725
        %3727 = vrot.lane.b32.xlu0 %v3518, 96
        %v3728 = vpop.permute.xlu0 %3727
        %3729 = vrot.lane.b32.xlu0 %v3520, 96
        %v3730 = vpop.permute.xlu0 %3729
        %3731 = vrot.lane.b32.xlu0 %v3554, 96
        %v3732 = vpop.permute.xlu0 %3731
        %3733 = vrot.lane.b32.xlu0 %v3556, 96
        %v3734 = vpop.permute.xlu0 %3733
        %3735 = vrot.lane.b32.xlu0 %v3559, 96
        %v3736 = vpop.permute.xlu0 %3735
        %3737 = vrot.lane.b32.xlu0 %v3561, 96
        %v3738 = vpop.permute.xlu0 %3737
        %v3755 = vsel %vm1374, %v1829, %v3580
        %v3756 = vsel %vm1374, %v1831, %v3582
        %v3757 = vsel %vm1374, %v1834, %v3584
        %v3758 = vsel %vm1374, %v1836, %v3586
        %v3759 = vsel %vm1374, %v1876, %v3588
        %v3760 = vsel %vm1374, %v1878, %v3590
        %v3761 = vsel %vm1374, %v1881, %v3592
        %v3762 = vsel %vm1374, %v1883, %v3594
        %v3763 = vsel %vm1374, %v1923, %v3596
        %v3764 = vsel %vm1374, %v1925, %v3598
        %v3765 = vsel %vm1374, %v1928, %v3600
        %v3766 = vsel %vm1374, %v1930, %v3602
        %v3767 = vsel %vm1374, %v1970, %v3604
        %v3768 = vsel %vm1374, %v1972, %v3606
        %v3769 = vsel %vm1374, %v1975, %v3608
        %v3770 = vsel %vm1374, %v1977, %v3610
        %vm3771 = vcmask 523264
        %v3772 = vsel %vm3771, %v3755, %v3644
        %v3773 = vsel %vm3771, %v3756, %v3646
        %v3774 = vsel %vm3771, %v3757, %v3648
        %v3775 = vsel %vm3771, %v3758, %v3650
        %v3776 = vsel %vm3771, %v3759, %v3652
        %v3777 = vsel %vm3771, %v3760, %v3654
        %v3778 = vsel %vm3771, %v3761, %v3656
        %v3779 = vsel %vm3771, %v3762, %v3658
        %v3780 = vsel %vm3771, %v3763, %v3660
        %v3781 = vsel %vm3771, %v3764, %v3662
        %v3782 = vsel %vm3771, %v3765, %v3664
        %v3783 = vsel %vm3771, %v3766, %v3666
        %v3784 = vsel %vm3771, %v3767, %v3668
        %v3785 = vsel %vm3771, %v3768, %v3670
        %v3786 = vsel %vm3771, %v3769, %v3672
        %v3787 = vsel %vm3771, %v3770, %v3674
        %vm3788 = vcmask 785408
        %v3789 = vsel %vm3788, %v3772, %v3708
        %v3790 = vsel %vm3788, %v3773, %v3710
        %v3791 = vsel %vm3788, %v3774, %v3712
        %v3792 = vsel %vm3788, %v3775, %v3714
        %v3793 = vsel %vm3788, %v3776, %v3716
        %v3794 = vsel %vm3788, %v3777, %v3718
        %v3795 = vsel %vm3788, %v3778, %v3720
        %v3796 = vsel %vm3788, %v3779, %v3722
        %v3797 = vsel %vm3788, %v3780, %v3724
        %v3798 = vsel %vm3788, %v3781, %v3726
        %v3799 = vsel %vm3788, %v3782, %v3728
        %v3800 = vsel %vm3788, %v3783, %v3730
        %v3801 = vsel %vm3788, %v3784, %v3732
        %v3802 = vsel %vm3788, %v3785, %v3734
        %v3803 = vsel %vm3788, %v3786, %v3736
        %v3804 = vsel %vm3788, %v3787, %v3738
        %v3805 = vpack.c.bf16 %v3790, %v3789
        %v3806 = vpack.c.bf16 %v3792, %v3791
        %v3807 = vpack.c.bf16 %v3794, %v3793
        %v3808 = vpack.c.bf16 %v3796, %v3795
        %v3809 = vpack.c.bf16 %v3798, %v3797
        %v3810 = vpack.c.bf16 %v3800, %v3799
        %v3811 = vpack.c.bf16 %v3802, %v3801
        %v3812 = vpack.c.bf16 %v3804, %v3803
        %v3813 = vld [vmem:[#allocation8] sm:$0xf]
        %v3814 = vld [vmem:[#allocation8 + $0x4] sm:$0xf]
        %v3815 = vld [vmem:[#allocation8 + $0x8] sm:$0xf]
        %v3816 = vld [vmem:[#allocation8 + $0xc] sm:$0xf]
        %v3817 = vld [vmem:[#allocation8 + $0x10] sm:$0xf]
        %v3818 = vld [vmem:[#allocation8 + $0x14] sm:$0xf]
        %v3819 = vld [vmem:[#allocation8 + $0x18] sm:$0xf]
        %v3820 = vld [vmem:[#allocation8 + $0x1c] sm:$0xf]
        %v3821 = vld [vmem:[#allocation8 + $0x20] sm:$0xf]
        %v3822 = vld [vmem:[#allocation8 + $0x24] sm:$0xf]
        %v3823 = vld [vmem:[#allocation8 + $0x28] sm:$0xf]
        %v3824 = vld [vmem:[#allocation8 + $0x2c] sm:$0xf]
        %v3825 = vld [vmem:[#allocation8 + $0x30] sm:$0xf]
        %v3826 = vld [vmem:[#allocation8 + $0x34] sm:$0xf]
        %v3827 = vld [vmem:[#allocation8 + $0x38] sm:$0xf]
        %v3828 = vld [vmem:[#allocation8 + $0x3c] sm:$0xf]
        %v3829 = vld [vmem:[#allocation10] sm:$0x1]
        %v3831 = vperm.slane %v3829, 0
        %v3849 = vunpack.c.l.b16 %v3813
        %v3850 = vunpack.c.l.b16 %v3814
        %v3851 = vunpack.c.l.b16 %v3815
        %v3852 = vunpack.c.l.b16 %v3816
        %v3853 = vunpack.c.l.b16 %v3817
        %v3854 = vunpack.c.l.b16 %v3818
        %v3855 = vunpack.c.l.b16 %v3819
        %v3856 = vunpack.c.l.b16 %v3820
        %v3857 = vunpack.c.l.b16 %v3821
        %v3858 = vunpack.c.l.b16 %v3822
        %v3859 = vunpack.c.l.b16 %v3823
        %v3860 = vunpack.c.l.b16 %v3824
        %v3861 = vunpack.c.l.b16 %v3825
        %v3862 = vunpack.c.l.b16 %v3826
        %v3863 = vunpack.c.l.b16 %v3827
        %v3864 = vunpack.c.l.b16 %v3828
        %v3865 = vpack.c.b16 %v3850, %v3849
        %v3866 = vpack.c.b16 %v3852, %v3851
        %v3867 = vpack.c.b16 %v3854, %v3853
        %v3868 = vpack.c.b16 %v3856, %v3855
        %v3869 = vpack.c.b16 %v3858, %v3857
        %v3870 = vpack.c.b16 %v3860, %v3859
        %v3871 = vpack.c.b16 %v3862, %v3861
        %v3872 = vpack.c.b16 %v3864, %v3863
        %3881 = vmatpush.bf16.msra.mxu0 %v3872
        %3882 = vmatpush.bf16.msra.mxu0 %v3871
        %3883 = vmatpush.bf16.msra.mxu0 %v3870
        %3884 = vmatpush.bf16.msra.mxu0 %v3869
        %3885 = vmatpush.bf16.msra.mxu0 %v3868
        %3886 = vmatpush.bf16.msra.mxu0 %v3867
        %3887 = vmatpush.bf16.msra.mxu0 %v3866
        %3888 = vmatpush.bf16.msra.mxu0 %v3865
        %3889 = vmatmul.bf16.gmra.mxu0 %v3805
        %v3890 = vpop.f32.mrf.mxu0
        %v3891 = vadd.f32 %v3831, %v3890
        %v3892 = vpop.f32.mrf.mxu0
        %v3893 = vadd.f32 %v3831, %v3892
        %3894 = vmatmul.bf16.gmra.mxu0 %v3806
        %v3895 = vpop.f32.mrf.mxu0
        %v3896 = vadd.f32 %v3831, %v3895
        %v3897 = vpop.f32.mrf.mxu0
        %v3898 = vadd.f32 %v3831, %v3897
        %3899 = vmatmul.bf16.gmra.mxu0 %v3807
        %v3900 = vpop.f32.mrf.mxu0
        %v3901 = vadd.f32 %v3831, %v3900
        %v3902 = vpop.f32.mrf.mxu0
        %v3903 = vadd.f32 %v3831, %v3902
        %3904 = vmatmul.bf16.gmra.mxu0 %v3808
        %v3905 = vpop.f32.mrf.mxu0
        %v3906 = vadd.f32 %v3831, %v3905
        %v3907 = vpop.f32.mrf.mxu0
        %v3908 = vadd.f32 %v3831, %v3907
        %3909 = vmatmul.bf16.gmra.mxu0 %v3809
        %v3910 = vpop.f32.mrf.mxu0
        %v3911 = vadd.f32 %v3831, %v3910
        %v3912 = vpop.f32.mrf.mxu0
        %v3913 = vadd.f32 %v3831, %v3912
        %3914 = vmatmul.bf16.gmra.mxu0 %v3810
        %v3915 = vpop.f32.mrf.mxu0
        %v3916 = vadd.f32 %v3831, %v3915
        %v3917 = vpop.f32.mrf.mxu0
        %v3918 = vadd.f32 %v3831, %v3917
        %3919 = vmatmul.bf16.gmra.mxu0 %v3811
        %v3920 = vpop.f32.mrf.mxu0
        %v3921 = vadd.f32 %v3831, %v3920
        %v3922 = vpop.f32.mrf.mxu0
        %v3923 = vadd.f32 %v3831, %v3922
        %3924 = vmatmul.bf16.gmra.mxu0 %v3812
        %v3925 = vpop.f32.mrf.mxu0
        %v3926 = vadd.f32 %v3831, %v3925
        %v3927 = vpop.f32.mrf.mxu0
        %v3928 = vadd.f32 %v3831, %v3927
        %3929 = vdwg.mxu0
        %v3930 = vadd.f32 %v605, %v3891
        %v3931 = vadd.f32 %v606, %v3893
        %v3932 = vadd.f32 %v607, %v3896
        %v3933 = vadd.f32 %v608, %v3898
        %v3934 = vadd.f32 %v609, %v3901
        %v3935 = vadd.f32 %v610, %v3903
        %v3936 = vadd.f32 %v611, %v3906
        %v3937 = vadd.f32 %v612, %v3908
        %v3938 = vadd.f32 %v613, %v3911
        %v3939 = vadd.f32 %v614, %v3913
        %v3940 = vadd.f32 %v615, %v3916
        %v3941 = vadd.f32 %v616, %v3918
        %v3942 = vadd.f32 %v617, %v3921
        %v3943 = vadd.f32 %v618, %v3923
        %v3944 = vadd.f32 %v619, %v3926
        %v3945 = vadd.f32 %v620, %v3928
        %v3946 = vld [vmem:[%s7] sm:$0x1]
        %v3947 = vld [vmem:[%s8] sm:$0x1]
        %3948 = vadd.xlane.f32.xlu0 %v3930
        %v3949 = vpop.xlane.xlu0 %3948
        %3950 = vadd.xlane.f32.xlu0 %v3931
        %v3951 = vpop.xlane.xlu0 %3950
        %3952 = vadd.xlane.f32.xlu0 %v3932
        %v3953 = vpop.xlane.xlu0 %3952
        %3954 = vadd.xlane.f32.xlu0 %v3933
        %v3955 = vpop.xlane.xlu0 %3954
        %3956 = vadd.xlane.f32.xlu0 %v3934
        %v3957 = vpop.xlane.xlu0 %3956
        %3958 = vadd.xlane.f32.xlu0 %v3935
        %v3959 = vpop.xlane.xlu0 %3958
        %3960 = vadd.xlane.f32.xlu0 %v3936
        %v3961 = vpop.xlane.xlu0 %3960
        %3962 = vadd.xlane.f32.xlu0 %v3937
        %v3963 = vpop.xlane.xlu0 %3962
        %3964 = vadd.xlane.f32.xlu0 %v3938
        %v3965 = vpop.xlane.xlu0 %3964
        %3966 = vadd.xlane.f32.xlu0 %v3939
        %v3967 = vpop.xlane.xlu0 %3966
        %3968 = vadd.xlane.f32.xlu0 %v3940
        %v3969 = vpop.xlane.xlu0 %3968
        %3970 = vadd.xlane.f32.xlu0 %v3941
        %v3971 = vpop.xlane.xlu0 %3970
        %3972 = vadd.xlane.f32.xlu0 %v3942
        %v3973 = vpop.xlane.xlu0 %3972
        %3974 = vadd.xlane.f32.xlu0 %v3943
        %v3975 = vpop.xlane.xlu0 %3974
        %3976 = vadd.xlane.f32.xlu0 %v3944
        %v3977 = vpop.xlane.xlu0 %3976
        %3978 = vadd.xlane.f32.xlu0 %v3945
        %v3979 = vpop.xlane.xlu0 %3978
        %v3980 = vmul.f32 %v3949, %v661
        %v3981 = vmul.f32 %v3951, %v661
        %v3982 = vmul.f32 %v3953, %v661
        %v3983 = vmul.f32 %v3955, %v661
        %v3984 = vmul.f32 %v3957, %v661
        %v3985 = vmul.f32 %v3959, %v661
        %v3986 = vmul.f32 %v3961, %v661
        %v3987 = vmul.f32 %v3963, %v661
        %v3988 = vmul.f32 %v3965, %v661
        %v3989 = vmul.f32 %v3967, %v661
        %v3990 = vmul.f32 %v3969, %v661
        %v3991 = vmul.f32 %v3971, %v661
        %v3992 = vmul.f32 %v3973, %v661
        %v3993 = vmul.f32 %v3975, %v661
        %v3994 = vmul.f32 %v3977, %v661
        %v3995 = vmul.f32 %v3979, %v661
        %v3996 = vsub.f32 %v3930, %v3980
        %v3997 = vsub.f32 %v3931, %v3981
        %v3998 = vsub.f32 %v3932, %v3982
        %v3999 = vsub.f32 %v3933, %v3983
        %v4000 = vsub.f32 %v3934, %v3984
        %v4001 = vsub.f32 %v3935, %v3985
        %v4002 = vsub.f32 %v3936, %v3986
        %v4003 = vsub.f32 %v3937, %v3987
        %v4004 = vsub.f32 %v3938, %v3988
        %v4005 = vsub.f32 %v3939, %v3989
        %v4006 = vsub.f32 %v3940, %v3990
        %v4007 = vsub.f32 %v3941, %v3991
        %v4008 = vsub.f32 %v3942, %v3992
        %v4009 = vsub.f32 %v3943, %v3993
        %v4010 = vsub.f32 %v3944, %v3994
        %v4011 = vsub.f32 %v3945, %v3995
        %v4012 = vmul.f32 %v3996, %v3996
        %v4013 = vmul.f32 %v3997, %v3997
        %v4014 = vmul.f32 %v3998, %v3998
        %v4015 = vmul.f32 %v3999, %v3999
        %v4016 = vmul.f32 %v4000, %v4000
        %v4017 = vmul.f32 %v4001, %v4001
        %v4018 = vmul.f32 %v4002, %v4002
        %v4019 = vmul.f32 %v4003, %v4003
        %v4020 = vmul.f32 %v4004, %v4004
        %v4021 = vmul.f32 %v4005, %v4005
        %v4022 = vmul.f32 %v4006, %v4006
        %v4023 = vmul.f32 %v4007, %v4007
        %v4024 = vmul.f32 %v4008, %v4008
        %v4025 = vmul.f32 %v4009, %v4009
        %v4026 = vmul.f32 %v4010, %v4010
        %v4027 = vmul.f32 %v4011, %v4011
        %4028 = vadd.xlane.f32.xlu0 %v4012
        %v4029 = vpop.xlane.xlu0 %4028
        %4030 = vadd.xlane.f32.xlu0 %v4013
        %v4031 = vpop.xlane.xlu0 %4030
        %4032 = vadd.xlane.f32.xlu0 %v4014
        %v4033 = vpop.xlane.xlu0 %4032
        %4034 = vadd.xlane.f32.xlu0 %v4015
        %v4035 = vpop.xlane.xlu0 %4034
        %4036 = vadd.xlane.f32.xlu0 %v4016
        %v4037 = vpop.xlane.xlu0 %4036
        %4038 = vadd.xlane.f32.xlu0 %v4017
        %v4039 = vpop.xlane.xlu0 %4038
        %4040 = vadd.xlane.f32.xlu0 %v4018
        %v4041 = vpop.xlane.xlu0 %4040
        %4042 = vadd.xlane.f32.xlu0 %v4019
        %v4043 = vpop.xlane.xlu0 %4042
        %4044 = vadd.xlane.f32.xlu0 %v4020
        %v4045 = vpop.xlane.xlu0 %4044
        %4046 = vadd.xlane.f32.xlu0 %v4021
        %v4047 = vpop.xlane.xlu0 %4046
        %4048 = vadd.xlane.f32.xlu0 %v4022
        %v4049 = vpop.xlane.xlu0 %4048
        %4050 = vadd.xlane.f32.xlu0 %v4023
        %v4051 = vpop.xlane.xlu0 %4050
        %4052 = vadd.xlane.f32.xlu0 %v4024
        %v4053 = vpop.xlane.xlu0 %4052
        %4054 = vadd.xlane.f32.xlu0 %v4025
        %v4055 = vpop.xlane.xlu0 %4054
        %4056 = vadd.xlane.f32.xlu0 %v4026
        %v4057 = vpop.xlane.xlu0 %4056
        %4058 = vadd.xlane.f32.xlu0 %v4027
        %v4059 = vpop.xlane.xlu0 %4058
        %v4060 = vmul.f32 %v4029, %v661
        %v4061 = vmul.f32 %v4031, %v661
        %v4062 = vmul.f32 %v4033, %v661
        %v4063 = vmul.f32 %v4035, %v661
        %v4064 = vmul.f32 %v4037, %v661
        %v4065 = vmul.f32 %v4039, %v661
        %v4066 = vmul.f32 %v4041, %v661
        %v4067 = vmul.f32 %v4043, %v661
        %v4068 = vmul.f32 %v4045, %v661
        %v4069 = vmul.f32 %v4047, %v661
        %v4070 = vmul.f32 %v4049, %v661
        %v4071 = vmul.f32 %v4051, %v661
        %v4072 = vmul.f32 %v4053, %v661
        %v4073 = vmul.f32 %v4055, %v661
        %v4074 = vmul.f32 %v4057, %v661
        %v4075 = vmul.f32 %v4059, %v661
        %v4076 = vadd.f32 %v4060, 1e-05
        %v4077 = vadd.f32 %v4061, 1e-05
        %v4078 = vadd.f32 %v4062, 1e-05
        %v4079 = vadd.f32 %v4063, 1e-05
        %v4080 = vadd.f32 %v4064, 1e-05
        %v4081 = vadd.f32 %v4065, 1e-05
        %v4082 = vadd.f32 %v4066, 1e-05
        %v4083 = vadd.f32 %v4067, 1e-05
        %v4084 = vadd.f32 %v4068, 1e-05
        %v4085 = vadd.f32 %v4069, 1e-05
        %v4086 = vadd.f32 %v4070, 1e-05
        %v4087 = vadd.f32 %v4071, 1e-05
        %v4088 = vadd.f32 %v4072, 1e-05
        %v4089 = vadd.f32 %v4073, 1e-05
        %v4090 = vadd.f32 %v4074, 1e-05
        %v4091 = vadd.f32 %v4075, 1e-05
        %v4092 = vrsqrt.pop %v4076
        %v4093 = vmul.f32 %v4092, %v4076
        %v4094 = vmul.f32 %v4093, %v4092
        %v4095 = vmul.f32 0.5, %v4094
        %v4096 = vsub.f32 1.5, %v4095
        %v4097 = vmul.f32 %v4092, %v4096
        %vm4098 = vweird.f32 %v4076
        %vm4099 = vweird.f32 %v4092
        %vm4100 = vmor %vm4098, %vm4099
        %v4101 = vsel %vm4100, %v4092, %v4097
        %v4102 = vrsqrt.pop %v4077
        %v4103 = vmul.f32 %v4102, %v4077
        %v4104 = vmul.f32 %v4103, %v4102
        %v4105 = vmul.f32 0.5, %v4104
        %v4106 = vsub.f32 1.5, %v4105
        %v4107 = vmul.f32 %v4102, %v4106
        %vm4108 = vweird.f32 %v4077
        %vm4109 = vweird.f32 %v4102
        %vm4110 = vmor %vm4108, %vm4109
        %v4111 = vsel %vm4110, %v4102, %v4107
        %v4112 = vrsqrt.pop %v4078
        %v4113 = vmul.f32 %v4112, %v4078
        %v4114 = vmul.f32 %v4113, %v4112
        %v4115 = vmul.f32 0.5, %v4114
        %v4116 = vsub.f32 1.5, %v4115
        %v4117 = vmul.f32 %v4112, %v4116
        %vm4118 = vweird.f32 %v4078
        %vm4119 = vweird.f32 %v4112
        %vm4120 = vmor %vm4118, %vm4119
        %v4121 = vsel %vm4120, %v4112, %v4117
        %v4122 = vrsqrt.pop %v4079
        %v4123 = vmul.f32 %v4122, %v4079
        %v4124 = vmul.f32 %v4123, %v4122
        %v4125 = vmul.f32 0.5, %v4124
        %v4126 = vsub.f32 1.5, %v4125
        %v4127 = vmul.f32 %v4122, %v4126
        %vm4128 = vweird.f32 %v4079
        %vm4129 = vweird.f32 %v4122
        %vm4130 = vmor %vm4128, %vm4129
        %v4131 = vsel %vm4130, %v4122, %v4127
        %v4132 = vrsqrt.pop %v4080
        %v4133 = vmul.f32 %v4132, %v4080
        %v4134 = vmul.f32 %v4133, %v4132
        %v4135 = vmul.f32 0.5, %v4134
        %v4136 = vsub.f32 1.5, %v4135
        %v4137 = vmul.f32 %v4132, %v4136
        %vm4138 = vweird.f32 %v4080
        %vm4139 = vweird.f32 %v4132
        %vm4140 = vmor %vm4138, %vm4139
        %v4141 = vsel %vm4140, %v4132, %v4137
        %v4142 = vrsqrt.pop %v4081
        %v4143 = vmul.f32 %v4142, %v4081
        %v4144 = vmul.f32 %v4143, %v4142
        %v4145 = vmul.f32 0.5, %v4144
        %v4146 = vsub.f32 1.5, %v4145
        %v4147 = vmul.f32 %v4142, %v4146
        %vm4148 = vweird.f32 %v4081
        %vm4149 = vweird.f32 %v4142
        %vm4150 = vmor %vm4148, %vm4149
        %v4151 = vsel %vm4150, %v4142, %v4147
        %v4152 = vrsqrt.pop %v4082
        %v4153 = vmul.f32 %v4152, %v4082
        %v4154 = vmul.f32 %v4153, %v4152
        %v4155 = vmul.f32 0.5, %v4154
        %v4156 = vsub.f32 1.5, %v4155
        %v4157 = vmul.f32 %v4152, %v4156
        %vm4158 = vweird.f32 %v4082
        %vm4159 = vweird.f32 %v4152
        %vm4160 = vmor %vm4158, %vm4159
        %v4161 = vsel %vm4160, %v4152, %v4157
        %v4162 = vrsqrt.pop %v4083
        %v4163 = vmul.f32 %v4162, %v4083
        %v4164 = vmul.f32 %v4163, %v4162
        %v4165 = vmul.f32 0.5, %v4164
        %v4166 = vsub.f32 1.5, %v4165
        %v4167 = vmul.f32 %v4162, %v4166
        %vm4168 = vweird.f32 %v4083
        %vm4169 = vweird.f32 %v4162
        %vm4170 = vmor %vm4168, %vm4169
        %v4171 = vsel %vm4170, %v4162, %v4167
        %v4172 = vrsqrt.pop %v4084
        %v4173 = vmul.f32 %v4172, %v4084
        %v4174 = vmul.f32 %v4173, %v4172
        %v4175 = vmul.f32 0.5, %v4174
        %v4176 = vsub.f32 1.5, %v4175
        %v4177 = vmul.f32 %v4172, %v4176
        %vm4178 = vweird.f32 %v4084
        %vm4179 = vweird.f32 %v4172
        %vm4180 = vmor %vm4178, %vm4179
        %v4181 = vsel %vm4180, %v4172, %v4177
        %v4182 = vrsqrt.pop %v4085
        %v4183 = vmul.f32 %v4182, %v4085
        %v4184 = vmul.f32 %v4183, %v4182
        %v4185 = vmul.f32 0.5, %v4184
        %v4186 = vsub.f32 1.5, %v4185
        %v4187 = vmul.f32 %v4182, %v4186
        %vm4188 = vweird.f32 %v4085
        %vm4189 = vweird.f32 %v4182
        %vm4190 = vmor %vm4188, %vm4189
        %v4191 = vsel %vm4190, %v4182, %v4187
        %v4192 = vrsqrt.pop %v4086
        %v4193 = vmul.f32 %v4192, %v4086
        %v4194 = vmul.f32 %v4193, %v4192
        %v4195 = vmul.f32 0.5, %v4194
        %v4196 = vsub.f32 1.5, %v4195
        %v4197 = vmul.f32 %v4192, %v4196
        %vm4198 = vweird.f32 %v4086
        %vm4199 = vweird.f32 %v4192
        %vm4200 = vmor %vm4198, %vm4199
        %v4201 = vsel %vm4200, %v4192, %v4197
        %v4202 = vrsqrt.pop %v4087
        %v4203 = vmul.f32 %v4202, %v4087
        %v4204 = vmul.f32 %v4203, %v4202
        %v4205 = vmul.f32 0.5, %v4204
        %v4206 = vsub.f32 1.5, %v4205
        %v4207 = vmul.f32 %v4202, %v4206
        %vm4208 = vweird.f32 %v4087
        %vm4209 = vweird.f32 %v4202
        %vm4210 = vmor %vm4208, %vm4209
        %v4211 = vsel %vm4210, %v4202, %v4207
        %v4212 = vrsqrt.pop %v4088
        %v4213 = vmul.f32 %v4212, %v4088
        %v4214 = vmul.f32 %v4213, %v4212
        %v4215 = vmul.f32 0.5, %v4214
        %v4216 = vsub.f32 1.5, %v4215
        %v4217 = vmul.f32 %v4212, %v4216
        %vm4218 = vweird.f32 %v4088
        %vm4219 = vweird.f32 %v4212
        %vm4220 = vmor %vm4218, %vm4219
        %v4221 = vsel %vm4220, %v4212, %v4217
        %v4222 = vrsqrt.pop %v4089
        %v4223 = vmul.f32 %v4222, %v4089
        %v4224 = vmul.f32 %v4223, %v4222
        %v4225 = vmul.f32 0.5, %v4224
        %v4226 = vsub.f32 1.5, %v4225
        %v4227 = vmul.f32 %v4222, %v4226
        %vm4228 = vweird.f32 %v4089
        %vm4229 = vweird.f32 %v4222
        %vm4230 = vmor %vm4228, %vm4229
        %v4231 = vsel %vm4230, %v4222, %v4227
        %v4232 = vrsqrt.pop %v4090
        %v4233 = vmul.f32 %v4232, %v4090
        %v4234 = vmul.f32 %v4233, %v4232
        %v4235 = vmul.f32 0.5, %v4234
        %v4236 = vsub.f32 1.5, %v4235
        %v4237 = vmul.f32 %v4232, %v4236
        %vm4238 = vweird.f32 %v4090
        %vm4239 = vweird.f32 %v4232
        %vm4240 = vmor %vm4238, %vm4239
        %v4241 = vsel %vm4240, %v4232, %v4237
        %v4242 = vrsqrt.pop %v4091
        %v4243 = vmul.f32 %v4242, %v4091
        %v4244 = vmul.f32 %v4243, %v4242
        %v4245 = vmul.f32 0.5, %v4244
        %v4246 = vsub.f32 1.5, %v4245
        %v4247 = vmul.f32 %v4242, %v4246
        %vm4248 = vweird.f32 %v4091
        %vm4249 = vweird.f32 %v4242
        %vm4250 = vmor %vm4248, %vm4249
        %v4251 = vsel %vm4250, %v4242, %v4247
        %v4252 = vmul.f32 %v3996, %v4101
        %v4253 = vmul.f32 %v3997, %v4111
        %v4254 = vmul.f32 %v3998, %v4121
        %v4255 = vmul.f32 %v3999, %v4131
        %v4256 = vmul.f32 %v4000, %v4141
        %v4257 = vmul.f32 %v4001, %v4151
        %v4258 = vmul.f32 %v4002, %v4161
        %v4259 = vmul.f32 %v4003, %v4171
        %v4260 = vmul.f32 %v4004, %v4181
        %v4261 = vmul.f32 %v4005, %v4191
        %v4262 = vmul.f32 %v4006, %v4201
        %v4263 = vmul.f32 %v4007, %v4211
        %v4264 = vmul.f32 %v4008, %v4221
        %v4265 = vmul.f32 %v4009, %v4231
        %v4266 = vmul.f32 %v4010, %v4241
        %v4267 = vmul.f32 %v4011, %v4251
        %v4269 = vperm.slane %v3946, 0
        %v4271 = vmul.f32 %v4252, %v4269
        %v4272 = vmul.f32 %v4253, %v4269
        %v4273 = vmul.f32 %v4254, %v4269
        %v4274 = vmul.f32 %v4255, %v4269
        %v4275 = vmul.f32 %v4256, %v4269
        %v4276 = vmul.f32 %v4257, %v4269
        %v4277 = vmul.f32 %v4258, %v4269
        %v4278 = vmul.f32 %v4259, %v4269
        %v4279 = vmul.f32 %v4260, %v4269
        %v4280 = vmul.f32 %v4261, %v4269
        %v4281 = vmul.f32 %v4262, %v4269
        %v4282 = vmul.f32 %v4263, %v4269
        %v4283 = vmul.f32 %v4264, %v4269
        %v4284 = vmul.f32 %v4265, %v4269
        %v4285 = vmul.f32 %v4266, %v4269
        %v4286 = vmul.f32 %v4267, %v4269
        %v4288 = vperm.slane %v3947, 0
        %v4290 = vadd.f32 %v4271, %v4288
        %v4291 = vadd.f32 %v4272, %v4288
        %v4292 = vadd.f32 %v4273, %v4288
        %v4293 = vadd.f32 %v4274, %v4288
        %v4294 = vadd.f32 %v4275, %v4288
        %v4295 = vadd.f32 %v4276, %v4288
        %v4296 = vadd.f32 %v4277, %v4288
        %v4297 = vadd.f32 %v4278, %v4288
        %v4298 = vadd.f32 %v4279, %v4288
        %v4299 = vadd.f32 %v4280, %v4288
        %v4300 = vadd.f32 %v4281, %v4288
        %v4301 = vadd.f32 %v4282, %v4288
        %v4302 = vadd.f32 %v4283, %v4288
        %v4303 = vadd.f32 %v4284, %v4288
        %v4304 = vadd.f32 %v4285, %v4288
        %v4305 = vadd.f32 %v4286, %v4288
        %v4306 = vpack.c.bf16 %v4291, %v4290
        %v4307 = vpack.c.bf16 %v4293, %v4292
        %v4308 = vpack.c.bf16 %v4295, %v4294
        %v4309 = vpack.c.bf16 %v4297, %v4296
        %v4310 = vpack.c.bf16 %v4299, %v4298
        %v4311 = vpack.c.bf16 %v4301, %v4300
        %v4312 = vpack.c.bf16 %v4303, %v4302
        %v4313 = vpack.c.bf16 %v4305, %v4304
        %v4314 = vld [vmem:[#allocation11] sm:$0xff]
        %v4315 = vld [vmem:[#allocation11 + $0x8] sm:$0xff]
        %v4316 = vld [vmem:[#allocation11 + $0x10] sm:$0xff]
        %v4317 = vld [vmem:[#allocation11 + $0x18] sm:$0xff]
        %v4318 = vld [vmem:[#allocation11 + $0x20] sm:$0xff]
        %v4319 = vld [vmem:[#allocation11 + $0x28] sm:$0xff]
        %v4320 = vld [vmem:[#allocation11 + $0x30] sm:$0xff]
        %v4321 = vld [vmem:[#allocation11 + $0x38] sm:$0xff]
        %v4322 = vld [vmem:[#allocation11 + $0x40] sm:$0xff]
        %v4323 = vld [vmem:[#allocation11 + $0x48] sm:$0xff]
        %v4324 = vld [vmem:[#allocation11 + $0x50] sm:$0xff]
        %v4325 = vld [vmem:[#allocation11 + $0x58] sm:$0xff]
        %v4326 = vld [vmem:[#allocation11 + $0x60] sm:$0xff]
        %v4327 = vld [vmem:[#allocation11 + $0x68] sm:$0xff]
        %v4328 = vld [vmem:[#allocation11 + $0x70] sm:$0xff]
        %v4329 = vld [vmem:[#allocation11 + $0x78] sm:$0xff]
        %v4330 = vld [vmem:[#allocation11 + $0x80] sm:$0xff]
        %v4331 = vld [vmem:[#allocation11 + $0x88] sm:$0xff]
        %v4332 = vld [vmem:[#allocation11 + $0x90] sm:$0xff]
        %v4333 = vld [vmem:[#allocation11 + $0x98] sm:$0xff]
        %v4334 = vld [vmem:[#allocation11 + $0xa0] sm:$0xff]
        %v4335 = vld [vmem:[#allocation11 + $0xa8] sm:$0xff]
        %v4336 = vld [vmem:[#allocation11 + $0xb0] sm:$0xff]
        %v4337 = vld [vmem:[#allocation11 + $0xb8] sm:$0xff]
        %v4338 = vld [vmem:[#allocation11 + $0xc0] sm:$0xff]
        %v4339 = vld [vmem:[#allocation11 + $0xc8] sm:$0xff]
        %v4340 = vld [vmem:[#allocation11 + $0xd0] sm:$0xff]
        %v4341 = vld [vmem:[#allocation11 + $0xd8] sm:$0xff]
        %v4342 = vld [vmem:[#allocation11 + $0xe0] sm:$0xff]
        %v4343 = vld [vmem:[#allocation11 + $0xe8] sm:$0xff]
        %v4344 = vld [vmem:[#allocation11 + $0xf0] sm:$0xff]
        %v4345 = vld [vmem:[#allocation11 + $0xf8] sm:$0xff]
        %v4346 = vld [vmem:[#allocation13] sm:$0xf]
        %v4348 = vperm.slane %v4346, 0
        %v4349 = vperm.slane %v4346, 1
        %v4350 = vperm.slane %v4346, 2
        %v4351 = vperm.slane %v4346, 3
        %v4388 = vunpack.c.l.b16 %v4314
        %v4389 = vunpack.c.h.b16 %v4314
        %v4390 = vunpack.c.l.b16 %v4315
        %v4391 = vunpack.c.h.b16 %v4315
        %v4392 = vunpack.c.l.b16 %v4316
        %v4393 = vunpack.c.h.b16 %v4316
        %v4394 = vunpack.c.l.b16 %v4317
        %v4395 = vunpack.c.h.b16 %v4317
        %v4396 = vunpack.c.l.b16 %v4318
        %v4397 = vunpack.c.h.b16 %v4318
        %v4398 = vunpack.c.l.b16 %v4319
        %v4399 = vunpack.c.h.b16 %v4319
        %v4400 = vunpack.c.l.b16 %v4320
        %v4401 = vunpack.c.h.b16 %v4320
        %v4402 = vunpack.c.l.b16 %v4321
        %v4403 = vunpack.c.h.b16 %v4321
        %v4404 = vunpack.c.l.b16 %v4322
        %v4405 = vunpack.c.h.b16 %v4322
        %v4406 = vunpack.c.l.b16 %v4323
        %v4407 = vunpack.c.h.b16 %v4323
        %v4408 = vunpack.c.l.b16 %v4324
        %v4409 = vunpack.c.h.b16 %v4324
        %v4410 = vunpack.c.l.b16 %v4325
        %v4411 = vunpack.c.h.b16 %v4325
        %v4412 = vunpack.c.l.b16 %v4326
        %v4413 = vunpack.c.h.b16 %v4326
        %v4414 = vunpack.c.l.b16 %v4327
        %v4415 = vunpack.c.h.b16 %v4327
        %v4416 = vunpack.c.l.b16 %v4328
        %v4417 = vunpack.c.h.b16 %v4328
        %v4418 = vunpack.c.l.b16 %v4329
        %v4419 = vunpack.c.h.b16 %v4329
        %v4420 = vunpack.c.l.b16 %v4330
        %v4421 = vunpack.c.h.b16 %v4330
        %v4422 = vunpack.c.l.b16 %v4331
        %v4423 = vunpack.c.h.b16 %v4331
        %v4424 = vunpack.c.l.b16 %v4332
        %v4425 = vunpack.c.h.b16 %v4332
        %v4426 = vunpack.c.l.b16 %v4333
        %v4427 = vunpack.c.h.b16 %v4333
        %v4428 = vunpack.c.l.b16 %v4334
        %v4429 = vunpack.c.h.b16 %v4334
        %v4430 = vunpack.c.l.b16 %v4335
        %v4431 = vunpack.c.h.b16 %v4335
        %v4432 = vunpack.c.l.b16 %v4336
        %v4433 = vunpack.c.h.b16 %v4336
        %v4434 = vunpack.c.l.b16 %v4337
        %v4435 = vunpack.c.h.b16 %v4337
        %v4436 = vunpack.c.l.b16 %v4338
        %v4437 = vunpack.c.h.b16 %v4338
        %v4438 = vunpack.c.l.b16 %v4339
        %v4439 = vunpack.c.h.b16 %v4339
        %v4440 = vunpack.c.l.b16 %v4340
        %v4441 = vunpack.c.h.b16 %v4340
        %v4442 = vunpack.c.l.b16 %v4341
        %v4443 = vunpack.c.h.b16 %v4341
        %v4444 = vunpack.c.l.b16 %v4342
        %v4445 = vunpack.c.h.b16 %v4342
        %v4446 = vunpack.c.l.b16 %v4343
        %v4447 = vunpack.c.h.b16 %v4343
        %v4448 = vunpack.c.l.b16 %v4344
        %v4449 = vunpack.c.h.b16 %v4344
        %v4450 = vunpack.c.l.b16 %v4345
        %v4451 = vunpack.c.h.b16 %v4345
        %v4452 = vpack.c.b16 %v4392, %v4388
        %v4453 = vpack.c.b16 %v4393, %v4389
        %v4454 = vpack.c.b16 %v4394, %v4390
        %v4455 = vpack.c.b16 %v4395, %v4391
        %v4456 = vpack.c.b16 %v4400, %v4396
        %v4457 = vpack.c.b16 %v4401, %v4397
        %v4458 = vpack.c.b16 %v4402, %v4398
        %v4459 = vpack.c.b16 %v4403, %v4399
        %v4460 = vpack.c.b16 %v4408, %v4404
        %v4461 = vpack.c.b16 %v4409, %v4405
        %v4462 = vpack.c.b16 %v4410, %v4406
        %v4463 = vpack.c.b16 %v4411, %v4407
        %v4464 = vpack.c.b16 %v4416, %v4412
        %v4465 = vpack.c.b16 %v4417, %v4413
        %v4466 = vpack.c.b16 %v4418, %v4414
        %v4467 = vpack.c.b16 %v4419, %v4415
        %v4468 = vpack.c.b16 %v4424, %v4420
        %v4469 = vpack.c.b16 %v4425, %v4421
        %v4470 = vpack.c.b16 %v4426, %v4422
        %v4471 = vpack.c.b16 %v4427, %v4423
        %v4472 = vpack.c.b16 %v4432, %v4428
        %v4473 = vpack.c.b16 %v4433, %v4429
        %v4474 = vpack.c.b16 %v4434, %v4430
        %v4475 = vpack.c.b16 %v4435, %v4431
        %v4476 = vpack.c.b16 %v4440, %v4436
        %v4477 = vpack.c.b16 %v4441, %v4437
        %v4478 = vpack.c.b16 %v4442, %v4438
        %v4479 = vpack.c.b16 %v4443, %v4439
        %v4480 = vpack.c.b16 %v4448, %v4444
        %v4481 = vpack.c.b16 %v4449, %v4445
        %v4482 = vpack.c.b16 %v4450, %v4446
        %v4483 = vpack.c.b16 %v4451, %v4447
        %4516 = vmatpush.bf16.msra.mxu0 %v4480
        %4517 = vmatpush.bf16.msra.mxu0 %v4476
        %4518 = vmatpush.bf16.msra.mxu0 %v4472
        %4519 = vmatpush.bf16.msra.mxu0 %v4468
        %4520 = vmatpush.bf16.msra.mxu0 %v4464
        %4521 = vmatpush.bf16.msra.mxu0 %v4460
        %4522 = vmatpush.bf16.msra.mxu0 %v4456
        %4523 = vmatpush.bf16.msra.mxu0 %v4452
        %4524 = vmatmul.bf16.gmra.mxu0 %v4306
        %v4525 = vpop.f32.mrf.mxu0
        %v4526 = vadd.f32 %v4348, %v4525
        %v4527 = vpop.f32.mrf.mxu0
        %v4528 = vadd.f32 %v4348, %v4527
        %4529 = vmatmul.bf16.gmra.mxu0 %v4307
        %v4530 = vpop.f32.mrf.mxu0
        %v4531 = vadd.f32 %v4348, %v4530
        %v4532 = vpop.f32.mrf.mxu0
        %v4533 = vadd.f32 %v4348, %v4532
        %4534 = vmatmul.bf16.gmra.mxu0 %v4308
        %v4535 = vpop.f32.mrf.mxu0
        %v4536 = vadd.f32 %v4348, %v4535
        %v4537 = vpop.f32.mrf.mxu0
        %v4538 = vadd.f32 %v4348, %v4537
        %4539 = vmatmul.bf16.gmra.mxu0 %v4309
        %v4540 = vpop.f32.mrf.mxu0
        %v4541 = vadd.f32 %v4348, %v4540
        %v4542 = vpop.f32.mrf.mxu0
        %v4543 = vadd.f32 %v4348, %v4542
        %4544 = vmatmul.bf16.gmra.mxu0 %v4310
        %v4545 = vpop.f32.mrf.mxu0
        %v4546 = vadd.f32 %v4348, %v4545
        %v4547 = vpop.f32.mrf.mxu0
        %v4548 = vadd.f32 %v4348, %v4547
        %4549 = vmatmul.bf16.gmra.mxu0 %v4311
        %v4550 = vpop.f32.mrf.mxu0
        %v4551 = vadd.f32 %v4348, %v4550
        %v4552 = vpop.f32.mrf.mxu0
        %v4553 = vadd.f32 %v4348, %v4552
        %4554 = vmatmul.bf16.gmra.mxu0 %v4312
        %v4555 = vpop.f32.mrf.mxu0
        %v4556 = vadd.f32 %v4348, %v4555
        %v4557 = vpop.f32.mrf.mxu0
        %v4558 = vadd.f32 %v4348, %v4557
        %4559 = vmatmul.bf16.gmra.mxu0 %v4313
        %v4560 = vpop.f32.mrf.mxu0
        %v4561 = vadd.f32 %v4348, %v4560
        %v4562 = vpop.f32.mrf.mxu0
        %v4563 = vadd.f32 %v4348, %v4562
        %4564 = vdwg.mxu0
        %4565 = vmatpush.bf16.msra.mxu0 %v4481
        %4566 = vmatpush.bf16.msra.mxu0 %v4477
        %4567 = vmatpush.bf16.msra.mxu0 %v4473
        %4568 = vmatpush.bf16.msra.mxu0 %v4469
        %4569 = vmatpush.bf16.msra.mxu0 %v4465
        %4570 = vmatpush.bf16.msra.mxu0 %v4461
        %4571 = vmatpush.bf16.msra.mxu0 %v4457
        %4572 = vmatpush.bf16.msra.mxu0 %v4453
        %4573 = vmatmul.bf16.gmra.mxu0 %v4306
        %v4574 = vpop.f32.mrf.mxu0
        %v4575 = vadd.f32 %v4349, %v4574
        %v4576 = vpop.f32.mrf.mxu0
        %v4577 = vadd.f32 %v4349, %v4576
        %4578 = vmatmul.bf16.gmra.mxu0 %v4307
        %v4579 = vpop.f32.mrf.mxu0
        %v4580 = vadd.f32 %v4349, %v4579
        %v4581 = vpop.f32.mrf.mxu0
        %v4582 = vadd.f32 %v4349, %v4581
        %4583 = vmatmul.bf16.gmra.mxu0 %v4308
        %v4584 = vpop.f32.mrf.mxu0
        %v4585 = vadd.f32 %v4349, %v4584
        %v4586 = vpop.f32.mrf.mxu0
        %v4587 = vadd.f32 %v4349, %v4586
        %4588 = vmatmul.bf16.gmra.mxu0 %v4309
        %v4589 = vpop.f32.mrf.mxu0
        %v4590 = vadd.f32 %v4349, %v4589
        %v4591 = vpop.f32.mrf.mxu0
        %v4592 = vadd.f32 %v4349, %v4591
        %4593 = vmatmul.bf16.gmra.mxu0 %v4310
        %v4594 = vpop.f32.mrf.mxu0
        %v4595 = vadd.f32 %v4349, %v4594
        %v4596 = vpop.f32.mrf.mxu0
        %v4597 = vadd.f32 %v4349, %v4596
        %4598 = vmatmul.bf16.gmra.mxu0 %v4311
        %v4599 = vpop.f32.mrf.mxu0
        %v4600 = vadd.f32 %v4349, %v4599
        %v4601 = vpop.f32.mrf.mxu0
        %v4602 = vadd.f32 %v4349, %v4601
        %4603 = vmatmul.bf16.gmra.mxu0 %v4312
        %v4604 = vpop.f32.mrf.mxu0
        %v4605 = vadd.f32 %v4349, %v4604
        %v4606 = vpop.f32.mrf.mxu0
        %v4607 = vadd.f32 %v4349, %v4606
        %4608 = vmatmul.bf16.gmra.mxu0 %v4313
        %v4609 = vpop.f32.mrf.mxu0
        %v4610 = vadd.f32 %v4349, %v4609
        %v4611 = vpop.f32.mrf.mxu0
        %v4612 = vadd.f32 %v4349, %v4611
        %4613 = vdwg.mxu0
        %4614 = vmatpush.bf16.msra.mxu0 %v4482
        %4615 = vmatpush.bf16.msra.mxu0 %v4478
        %4616 = vmatpush.bf16.msra.mxu0 %v4474
        %4617 = vmatpush.bf16.msra.mxu0 %v4470
        %4618 = vmatpush.bf16.msra.mxu0 %v4466
        %4619 = vmatpush.bf16.msra.mxu0 %v4462
        %4620 = vmatpush.bf16.msra.mxu0 %v4458
        %4621 = vmatpush.bf16.msra.mxu0 %v4454
        %4622 = vmatmul.bf16.gmra.mxu0 %v4306
        %v4623 = vpop.f32.mrf.mxu0
        %v4624 = vadd.f32 %v4350, %v4623
        %v4625 = vpop.f32.mrf.mxu0
        %v4626 = vadd.f32 %v4350, %v4625
        %4627 = vmatmul.bf16.gmra.mxu0 %v4307
        %v4628 = vpop.f32.mrf.mxu0
        %v4629 = vadd.f32 %v4350, %v4628
        %v4630 = vpop.f32.mrf.mxu0
        %v4631 = vadd.f32 %v4350, %v4630
        %4632 = vmatmul.bf16.gmra.mxu0 %v4308
        %v4633 = vpop.f32.mrf.mxu0
        %v4634 = vadd.f32 %v4350, %v4633
        %v4635 = vpop.f32.mrf.mxu0
        %v4636 = vadd.f32 %v4350, %v4635
        %4637 = vmatmul.bf16.gmra.mxu0 %v4309
        %v4638 = vpop.f32.mrf.mxu0
        %v4639 = vadd.f32 %v4350, %v4638
        %v4640 = vpop.f32.mrf.mxu0
        %v4641 = vadd.f32 %v4350, %v4640
        %4642 = vmatmul.bf16.gmra.mxu0 %v4310
        %v4643 = vpop.f32.mrf.mxu0
        %v4644 = vadd.f32 %v4350, %v4643
        %v4645 = vpop.f32.mrf.mxu0
        %v4646 = vadd.f32 %v4350, %v4645
        %4647 = vmatmul.bf16.gmra.mxu0 %v4311
        %v4648 = vpop.f32.mrf.mxu0
        %v4649 = vadd.f32 %v4350, %v4648
        %v4650 = vpop.f32.mrf.mxu0
        %v4651 = vadd.f32 %v4350, %v4650
        %4652 = vmatmul.bf16.gmra.mxu0 %v4312
        %v4653 = vpop.f32.mrf.mxu0
        %v4654 = vadd.f32 %v4350, %v4653
        %v4655 = vpop.f32.mrf.mxu0
        %v4656 = vadd.f32 %v4350, %v4655
        %4657 = vmatmul.bf16.gmra.mxu0 %v4313
        %v4658 = vpop.f32.mrf.mxu0
        %v4659 = vadd.f32 %v4350, %v4658
        %v4660 = vpop.f32.mrf.mxu0
        %v4661 = vadd.f32 %v4350, %v4660
        %4662 = vdwg.mxu0
        %4663 = vmatpush.bf16.msra.mxu0 %v4483
        %4664 = vmatpush.bf16.msra.mxu0 %v4479
        %4665 = vmatpush.bf16.msra.mxu0 %v4475
        %4666 = vmatpush.bf16.msra.mxu0 %v4471
        %4667 = vmatpush.bf16.msra.mxu0 %v4467
        %4668 = vmatpush.bf16.msra.mxu0 %v4463
        %4669 = vmatpush.bf16.msra.mxu0 %v4459
        %4670 = vmatpush.bf16.msra.mxu0 %v4455
        %4671 = vmatmul.bf16.gmra.mxu0 %v4306
        %v4672 = vpop.f32.mrf.mxu0
        %v4673 = vadd.f32 %v4351, %v4672
        %v4674 = vpop.f32.mrf.mxu0
        %v4675 = vadd.f32 %v4351, %v4674
        %4676 = vmatmul.bf16.gmra.mxu0 %v4307
        %v4677 = vpop.f32.mrf.mxu0
        %v4678 = vadd.f32 %v4351, %v4677
        %v4679 = vpop.f32.mrf.mxu0
        %v4680 = vadd.f32 %v4351, %v4679
        %4681 = vmatmul.bf16.gmra.mxu0 %v4308
        %v4682 = vpop.f32.mrf.mxu0
        %v4683 = vadd.f32 %v4351, %v4682
        %v4684 = vpop.f32.mrf.mxu0
        %v4685 = vadd.f32 %v4351, %v4684
        %4686 = vmatmul.bf16.gmra.mxu0 %v4309
        %v4687 = vpop.f32.mrf.mxu0
        %v4688 = vadd.f32 %v4351, %v4687
        %v4689 = vpop.f32.mrf.mxu0
        %v4690 = vadd.f32 %v4351, %v4689
        %4691 = vmatmul.bf16.gmra.mxu0 %v4310
        %v4692 = vpop.f32.mrf.mxu0
        %v4693 = vadd.f32 %v4351, %v4692
        %v4694 = vpop.f32.mrf.mxu0
        %v4695 = vadd.f32 %v4351, %v4694
        %4696 = vmatmul.bf16.gmra.mxu0 %v4311
        %v4697 = vpop.f32.mrf.mxu0
        %v4698 = vadd.f32 %v4351, %v4697
        %v4699 = vpop.f32.mrf.mxu0
        %v4700 = vadd.f32 %v4351, %v4699
        %4701 = vmatmul.bf16.gmra.mxu0 %v4312
        %v4702 = vpop.f32.mrf.mxu0
        %v4703 = vadd.f32 %v4351, %v4702
        %v4704 = vpop.f32.mrf.mxu0
        %v4705 = vadd.f32 %v4351, %v4704
        %4706 = vmatmul.bf16.gmra.mxu0 %v4313
        %v4707 = vpop.f32.mrf.mxu0
        %v4708 = vadd.f32 %v4351, %v4707
        %v4709 = vpop.f32.mrf.mxu0
        %v4710 = vadd.f32 %v4351, %v4709
        %4711 = vdwg.mxu0
        %v4712 = vmul.f32 %v4526, 0.5
        %v4713 = vmul.f32 %v4575, 0.5
        %v4714 = vmul.f32 %v4624, 0.5
        %v4715 = vmul.f32 %v4673, 0.5
        %v4716 = vmul.f32 %v4528, 0.5
        %v4717 = vmul.f32 %v4577, 0.5
        %v4718 = vmul.f32 %v4626, 0.5
        %v4719 = vmul.f32 %v4675, 0.5
        %v4720 = vmul.f32 %v4531, 0.5
        %v4721 = vmul.f32 %v4580, 0.5
        %v4722 = vmul.f32 %v4629, 0.5
        %v4723 = vmul.f32 %v4678, 0.5
        %v4724 = vmul.f32 %v4533, 0.5
        %v4725 = vmul.f32 %v4582, 0.5
        %v4726 = vmul.f32 %v4631, 0.5
        %v4727 = vmul.f32 %v4680, 0.5
        %v4728 = vmul.f32 %v4536, 0.5
        %v4729 = vmul.f32 %v4585, 0.5
        %v4730 = vmul.f32 %v4634, 0.5
        %v4731 = vmul.f32 %v4683, 0.5
        %v4732 = vmul.f32 %v4538, 0.5
        %v4733 = vmul.f32 %v4587, 0.5
        %v4734 = vmul.f32 %v4636, 0.5
        %v4735 = vmul.f32 %v4685, 0.5
        %v4736 = vmul.f32 %v4541, 0.5
        %v4737 = vmul.f32 %v4590, 0.5
        %v4738 = vmul.f32 %v4639, 0.5
        %v4739 = vmul.f32 %v4688, 0.5
        %v4740 = vmul.f32 %v4543, 0.5
        %v4741 = vmul.f32 %v4592, 0.5
        %v4742 = vmul.f32 %v4641, 0.5
        %v4743 = vmul.f32 %v4690, 0.5
        %v4744 = vmul.f32 %v4546, 0.5
        %v4745 = vmul.f32 %v4595, 0.5
        %v4746 = vmul.f32 %v4644, 0.5
        %v4747 = vmul.f32 %v4693, 0.5
        %v4748 = vmul.f32 %v4548, 0.5
        %v4749 = vmul.f32 %v4597, 0.5
        %v4750 = vmul.f32 %v4646, 0.5
        %v4751 = vmul.f32 %v4695, 0.5
        %v4752 = vmul.f32 %v4551, 0.5
        %v4753 = vmul.f32 %v4600, 0.5
        %v4754 = vmul.f32 %v4649, 0.5
        %v4755 = vmul.f32 %v4698, 0.5
        %v4756 = vmul.f32 %v4553, 0.5
        %v4757 = vmul.f32 %v4602, 0.5
        %v4758 = vmul.f32 %v4651, 0.5
        %v4759 = vmul.f32 %v4700, 0.5
        %v4760 = vmul.f32 %v4556, 0.5
        %v4761 = vmul.f32 %v4605, 0.5
        %v4762 = vmul.f32 %v4654, 0.5
        %v4763 = vmul.f32 %v4703, 0.5
        %v4764 = vmul.f32 %v4558, 0.5
        %v4765 = vmul.f32 %v4607, 0.5
        %v4766 = vmul.f32 %v4656, 0.5
        %v4767 = vmul.f32 %v4705, 0.5
        %v4768 = vmul.f32 %v4561, 0.5
        %v4769 = vmul.f32 %v4610, 0.5
        %v4770 = vmul.f32 %v4659, 0.5
        %v4771 = vmul.f32 %v4708, 0.5
        %v4772 = vmul.f32 %v4563, 0.5
        %v4773 = vmul.f32 %v4612, 0.5
        %v4774 = vmul.f32 %v4661, 0.5
        %v4775 = vmul.f32 %v4710, 0.5
        %v4776 = vmul.f32 %v4526, 0.70710677
        %v4777 = vmul.f32 %v4575, 0.70710677
        %v4778 = vmul.f32 %v4624, 0.70710677
        %v4779 = vmul.f32 %v4673, 0.70710677
        %v4780 = vmul.f32 %v4528, 0.70710677
        %v4781 = vmul.f32 %v4577, 0.70710677
        %v4782 = vmul.f32 %v4626, 0.70710677
        %v4783 = vmul.f32 %v4675, 0.70710677
        %v4784 = vmul.f32 %v4531, 0.70710677
        %v4785 = vmul.f32 %v4580, 0.70710677
        %v4786 = vmul.f32 %v4629, 0.70710677
        %v4787 = vmul.f32 %v4678, 0.70710677
        %v4788 = vmul.f32 %v4533, 0.70710677
        %v4789 = vmul.f32 %v4582, 0.70710677
        %v4790 = vmul.f32 %v4631, 0.70710677
        %v4791 = vmul.f32 %v4680, 0.70710677
        %v4792 = vmul.f32 %v4536, 0.70710677
        %v4793 = vmul.f32 %v4585, 0.70710677
        %v4794 = vmul.f32 %v4634, 0.70710677
        %v4795 = vmul.f32 %v4683, 0.70710677
        %v4796 = vmul.f32 %v4538, 0.70710677
        %v4797 = vmul.f32 %v4587, 0.70710677
        %v4798 = vmul.f32 %v4636, 0.70710677
        %v4799 = vmul.f32 %v4685, 0.70710677
        %v4800 = vmul.f32 %v4541, 0.70710677
        %v4801 = vmul.f32 %v4590, 0.70710677
        %v4802 = vmul.f32 %v4639, 0.70710677
        %v4803 = vmul.f32 %v4688, 0.70710677
        %v4804 = vmul.f32 %v4543, 0.70710677
        %v4805 = vmul.f32 %v4592, 0.70710677
        %v4806 = vmul.f32 %v4641, 0.70710677
        %v4807 = vmul.f32 %v4690, 0.70710677
        %v4808 = vmul.f32 %v4546, 0.70710677
        %v4809 = vmul.f32 %v4595, 0.70710677
        %v4810 = vmul.f32 %v4644, 0.70710677
        %v4811 = vmul.f32 %v4693, 0.70710677
        %v4812 = vmul.f32 %v4548, 0.70710677
        %v4813 = vmul.f32 %v4597, 0.70710677
        %v4814 = vmul.f32 %v4646, 0.70710677
        %v4815 = vmul.f32 %v4695, 0.70710677
        %v4816 = vmul.f32 %v4551, 0.70710677
        %v4817 = vmul.f32 %v4600, 0.70710677
        %v4818 = vmul.f32 %v4649, 0.70710677
        %v4819 = vmul.f32 %v4698, 0.70710677
        %v4820 = vmul.f32 %v4553, 0.70710677
        %v4821 = vmul.f32 %v4602, 0.70710677
        %v4822 = vmul.f32 %v4651, 0.70710677
        %v4823 = vmul.f32 %v4700, 0.70710677
        %v4824 = vmul.f32 %v4556, 0.70710677
        %v4825 = vmul.f32 %v4605, 0.70710677
        %v4826 = vmul.f32 %v4654, 0.70710677
        %v4827 = vmul.f32 %v4703, 0.70710677
        %v4828 = vmul.f32 %v4558, 0.70710677
        %v4829 = vmul.f32 %v4607, 0.70710677
        %v4830 = vmul.f32 %v4656, 0.70710677
        %v4831 = vmul.f32 %v4705, 0.70710677
        %v4832 = vmul.f32 %v4561, 0.70710677
        %v4833 = vmul.f32 %v4610, 0.70710677
        %v4834 = vmul.f32 %v4659, 0.70710677
        %v4835 = vmul.f32 %v4708, 0.70710677
        %v4836 = vmul.f32 %v4563, 0.70710677
        %v4837 = vmul.f32 %v4612, 0.70710677
        %v4838 = vmul.f32 %v4661, 0.70710677
        %v4839 = vmul.f32 %v4710, 0.70710677
        %v4840 = vmul.f32 %v4776, %v4776
        %v4841 = vmin.f32 16.0, %v4840
        %v4842 = vmul.f32 %v4841, 2.1237322e-06
        %v4843 = vadd.f32 %v4842, 0.00028619796
        %v4844 = vmul.f32 %v4841, %v4843
        %v4845 = vadd.f32 %v4844, 0.0036580483
        %v4846 = vmul.f32 %v4841, %v4845
        %v4847 = vadd.f32 %v4846, 0.05243302
        %v4848 = vmul.f32 %v4841, %v4847
        %v4849 = vadd.f32 %v4848, 0.18741608
        %v4850 = vmul.f32 %v4841, %v4849
        %v4851 = vadd.f32 %v4850, 1.1283791
        %v4852 = vmul.f32 %v4776, %v4851
        %v4853 = vmul.f32 %v4841, 3.8918573e-05
        %v4854 = vadd.f32 %v4853, 0.001143296
        %v4855 = vmul.f32 %v4841, %v4854
        %v4856 = vadd.f32 %v4855, 0.014752088
        %v4857 = vmul.f32 %v4841, %v4856
        %v4858 = vadd.f32 %v4857, 0.112945676
        %v4859 = vmul.f32 %v4841, %v4858
        %v4860 = vadd.f32 %v4859, 0.4994258
        %v4861 = vmul.f32 %v4841, %v4860
        %v4862 = vadd.f32 %v4861, 1.0
        %v4863 = vrcp.pop %v4862
        %v4864 = vmul.f32 %v4862, %v4863
        %v4865 = vsub.f32 1.0, %v4864
        %v4866 = vmul.f32 %v4863, %v4865
        %v4867 = vadd.f32 %v4863, %v4866
        %vm4868 = vweird.f32 %v4862
        %vm4869 = vweird.f32 %v4863
        %vm4870 = vmor %vm4868, %vm4869
        %v4871 = vsel %vm4870, %v4863, %v4867
        %v4872 = vand.u32 2147483647, %v4862
        %vm4873 = vcmp.eq.f32.partialorder %v4872, 8.507059e+37
        %v4874 = vand.u32 %v4862, 2147483648
        %v4875 = vor.u32 1.1754944e-38, %v4874
        %v4876 = vsel %vm4873, %v4875, %v4871
        %v4877 = vmul.f32 %v4852, %v4876
        %v4878 = vmin.f32 %v4877, 1.0
        %v4879 = vmax.f32 %v4878, -1.0
        %v4880 = vmul.f32 %v4777, %v4777
        %v4881 = vmin.f32 16.0, %v4880
        %v4882 = vmul.f32 %v4881, 2.1237322e-06
        %v4883 = vadd.f32 %v4882, 0.00028619796
        %v4884 = vmul.f32 %v4881, %v4883
        %v4885 = vadd.f32 %v4884, 0.0036580483
        %v4886 = vmul.f32 %v4881, %v4885
        %v4887 = vadd.f32 %v4886, 0.05243302
        %v4888 = vmul.f32 %v4881, %v4887
        %v4889 = vadd.f32 %v4888, 0.18741608
        %v4890 = vmul.f32 %v4881, %v4889
        %v4891 = vadd.f32 %v4890, 1.1283791
        %v4892 = vmul.f32 %v4777, %v4891
        %v4893 = vmul.f32 %v4881, 3.8918573e-05
        %v4894 = vadd.f32 %v4893, 0.001143296
        %v4895 = vmul.f32 %v4881, %v4894
        %v4896 = vadd.f32 %v4895, 0.014752088
        %v4897 = vmul.f32 %v4881, %v4896
        %v4898 = vadd.f32 %v4897, 0.112945676
        %v4899 = vmul.f32 %v4881, %v4898
        %v4900 = vadd.f32 %v4899, 0.4994258
        %v4901 = vmul.f32 %v4881, %v4900
        %v4902 = vadd.f32 %v4901, 1.0
        %v4903 = vrcp.pop %v4902
        %v4904 = vmul.f32 %v4902, %v4903
        %v4905 = vsub.f32 1.0, %v4904
        %v4906 = vmul.f32 %v4903, %v4905
        %v4907 = vadd.f32 %v4903, %v4906
        %vm4908 = vweird.f32 %v4902
        %vm4909 = vweird.f32 %v4903
        %vm4910 = vmor %vm4908, %vm4909
        %v4911 = vsel %vm4910, %v4903, %v4907
        %v4912 = vand.u32 2147483647, %v4902
        %vm4913 = vcmp.eq.f32.partialorder %v4912, 8.507059e+37
        %v4914 = vand.u32 %v4902, 2147483648
        %v4915 = vor.u32 1.1754944e-38, %v4914
        %v4916 = vsel %vm4913, %v4915, %v4911
        %v4917 = vmul.f32 %v4892, %v4916
        %v4918 = vmin.f32 %v4917, 1.0
        %v4919 = vmax.f32 %v4918, -1.0
        %v4920 = vmul.f32 %v4778, %v4778
        %v4921 = vmin.f32 16.0, %v4920
        %v4922 = vmul.f32 %v4921, 2.1237322e-06
        %v4923 = vadd.f32 %v4922, 0.00028619796
        %v4924 = vmul.f32 %v4921, %v4923
        %v4925 = vadd.f32 %v4924, 0.0036580483
        %v4926 = vmul.f32 %v4921, %v4925
        %v4927 = vadd.f32 %v4926, 0.05243302
        %v4928 = vmul.f32 %v4921, %v4927
        %v4929 = vadd.f32 %v4928, 0.18741608
        %v4930 = vmul.f32 %v4921, %v4929
        %v4931 = vadd.f32 %v4930, 1.1283791
        %v4932 = vmul.f32 %v4778, %v4931
        %v4933 = vmul.f32 %v4921, 3.8918573e-05
        %v4934 = vadd.f32 %v4933, 0.001143296
        %v4935 = vmul.f32 %v4921, %v4934
        %v4936 = vadd.f32 %v4935, 0.014752088
        %v4937 = vmul.f32 %v4921, %v4936
        %v4938 = vadd.f32 %v4937, 0.112945676
        %v4939 = vmul.f32 %v4921, %v4938
        %v4940 = vadd.f32 %v4939, 0.4994258
        %v4941 = vmul.f32 %v4921, %v4940
        %v4942 = vadd.f32 %v4941, 1.0
        %v4943 = vrcp.pop %v4942
        %v4944 = vmul.f32 %v4942, %v4943
        %v4945 = vsub.f32 1.0, %v4944
        %v4946 = vmul.f32 %v4943, %v4945
        %v4947 = vadd.f32 %v4943, %v4946
        %vm4948 = vweird.f32 %v4942
        %vm4949 = vweird.f32 %v4943
        %vm4950 = vmor %vm4948, %vm4949
        %v4951 = vsel %vm4950, %v4943, %v4947
        %v4952 = vand.u32 2147483647, %v4942
        %vm4953 = vcmp.eq.f32.partialorder %v4952, 8.507059e+37
        %v4954 = vand.u32 %v4942, 2147483648
        %v4955 = vor.u32 1.1754944e-38, %v4954
        %v4956 = vsel %vm4953, %v4955, %v4951
        %v4957 = vmul.f32 %v4932, %v4956
        %v4958 = vmin.f32 %v4957, 1.0
        %v4959 = vmax.f32 %v4958, -1.0
        %v4960 = vmul.f32 %v4779, %v4779
        %v4961 = vmin.f32 16.0, %v4960
        %v4962 = vmul.f32 %v4961, 2.1237322e-06
        %v4963 = vadd.f32 %v4962, 0.00028619796
        %v4964 = vmul.f32 %v4961, %v4963
        %v4965 = vadd.f32 %v4964, 0.0036580483
        %v4966 = vmul.f32 %v4961, %v4965
        %v4967 = vadd.f32 %v4966, 0.05243302
        %v4968 = vmul.f32 %v4961, %v4967
        %v4969 = vadd.f32 %v4968, 0.18741608
        %v4970 = vmul.f32 %v4961, %v4969
        %v4971 = vadd.f32 %v4970, 1.1283791
        %v4972 = vmul.f32 %v4779, %v4971
        %v4973 = vmul.f32 %v4961, 3.8918573e-05
        %v4974 = vadd.f32 %v4973, 0.001143296
        %v4975 = vmul.f32 %v4961, %v4974
        %v4976 = vadd.f32 %v4975, 0.014752088
        %v4977 = vmul.f32 %v4961, %v4976
        %v4978 = vadd.f32 %v4977, 0.112945676
        %v4979 = vmul.f32 %v4961, %v4978
        %v4980 = vadd.f32 %v4979, 0.4994258
        %v4981 = vmul.f32 %v4961, %v4980
        %v4982 = vadd.f32 %v4981, 1.0
        %v4983 = vrcp.pop %v4982
        %v4984 = vmul.f32 %v4982, %v4983
        %v4985 = vsub.f32 1.0, %v4984
        %v4986 = vmul.f32 %v4983, %v4985
        %v4987 = vadd.f32 %v4983, %v4986
        %vm4988 = vweird.f32 %v4982
        %vm4989 = vweird.f32 %v4983
        %vm4990 = vmor %vm4988, %vm4989
        %v4991 = vsel %vm4990, %v4983, %v4987
        %v4992 = vand.u32 2147483647, %v4982
        %vm4993 = vcmp.eq.f32.partialorder %v4992, 8.507059e+37
        %v4994 = vand.u32 %v4982, 2147483648
        %v4995 = vor.u32 1.1754944e-38, %v4994
        %v4996 = vsel %vm4993, %v4995, %v4991
        %v4997 = vmul.f32 %v4972, %v4996
        %v4998 = vmin.f32 %v4997, 1.0
        %v4999 = vmax.f32 %v4998, -1.0
        %v5000 = vmul.f32 %v4780, %v4780
        %v5001 = vmin.f32 16.0, %v5000
        %v5002 = vmul.f32 %v5001, 2.1237322e-06
        %v5003 = vadd.f32 %v5002, 0.00028619796
        %v5004 = vmul.f32 %v5001, %v5003
        %v5005 = vadd.f32 %v5004, 0.0036580483
        %v5006 = vmul.f32 %v5001, %v5005
        %v5007 = vadd.f32 %v5006, 0.05243302
        %v5008 = vmul.f32 %v5001, %v5007
        %v5009 = vadd.f32 %v5008, 0.18741608
        %v5010 = vmul.f32 %v5001, %v5009
        %v5011 = vadd.f32 %v5010, 1.1283791
        %v5012 = vmul.f32 %v4780, %v5011
        %v5013 = vmul.f32 %v5001, 3.8918573e-05
        %v5014 = vadd.f32 %v5013, 0.001143296
        %v5015 = vmul.f32 %v5001, %v5014
        %v5016 = vadd.f32 %v5015, 0.014752088
        %v5017 = vmul.f32 %v5001, %v5016
        %v5018 = vadd.f32 %v5017, 0.112945676
        %v5019 = vmul.f32 %v5001, %v5018
        %v5020 = vadd.f32 %v5019, 0.4994258
        %v5021 = vmul.f32 %v5001, %v5020
        %v5022 = vadd.f32 %v5021, 1.0
        %v5023 = vrcp.pop %v5022
        %v5024 = vmul.f32 %v5022, %v5023
        %v5025 = vsub.f32 1.0, %v5024
        %v5026 = vmul.f32 %v5023, %v5025
        %v5027 = vadd.f32 %v5023, %v5026
        %vm5028 = vweird.f32 %v5022
        %vm5029 = vweird.f32 %v5023
        %vm5030 = vmor %vm5028, %vm5029
        %v5031 = vsel %vm5030, %v5023, %v5027
        %v5032 = vand.u32 2147483647, %v5022
        %vm5033 = vcmp.eq.f32.partialorder %v5032, 8.507059e+37
        %v5034 = vand.u32 %v5022, 2147483648
        %v5035 = vor.u32 1.1754944e-38, %v5034
        %v5036 = vsel %vm5033, %v5035, %v5031
        %v5037 = vmul.f32 %v5012, %v5036
        %v5038 = vmin.f32 %v5037, 1.0
        %v5039 = vmax.f32 %v5038, -1.0
        %v5040 = vmul.f32 %v4781, %v4781
        %v5041 = vmin.f32 16.0, %v5040
        %v5042 = vmul.f32 %v5041, 2.1237322e-06
        %v5043 = vadd.f32 %v5042, 0.00028619796
        %v5044 = vmul.f32 %v5041, %v5043
        %v5045 = vadd.f32 %v5044, 0.0036580483
        %v5046 = vmul.f32 %v5041, %v5045
        %v5047 = vadd.f32 %v5046, 0.05243302
        %v5048 = vmul.f32 %v5041, %v5047
        %v5049 = vadd.f32 %v5048, 0.18741608
        %v5050 = vmul.f32 %v5041, %v5049
        %v5051 = vadd.f32 %v5050, 1.1283791
        %v5052 = vmul.f32 %v4781, %v5051
        %v5053 = vmul.f32 %v5041, 3.8918573e-05
        %v5054 = vadd.f32 %v5053, 0.001143296
        %v5055 = vmul.f32 %v5041, %v5054
        %v5056 = vadd.f32 %v5055, 0.014752088
        %v5057 = vmul.f32 %v5041, %v5056
        %v5058 = vadd.f32 %v5057, 0.112945676
        %v5059 = vmul.f32 %v5041, %v5058
        %v5060 = vadd.f32 %v5059, 0.4994258
        %v5061 = vmul.f32 %v5041, %v5060
        %v5062 = vadd.f32 %v5061, 1.0
        %v5063 = vrcp.pop %v5062
        %v5064 = vmul.f32 %v5062, %v5063
        %v5065 = vsub.f32 1.0, %v5064
        %v5066 = vmul.f32 %v5063, %v5065
        %v5067 = vadd.f32 %v5063, %v5066
        %vm5068 = vweird.f32 %v5062
        %vm5069 = vweird.f32 %v5063
        %vm5070 = vmor %vm5068, %vm5069
        %v5071 = vsel %vm5070, %v5063, %v5067
        %v5072 = vand.u32 2147483647, %v5062
        %vm5073 = vcmp.eq.f32.partialorder %v5072, 8.507059e+37
        %v5074 = vand.u32 %v5062, 2147483648
        %v5075 = vor.u32 1.1754944e-38, %v5074
        %v5076 = vsel %vm5073, %v5075, %v5071
        %v5077 = vmul.f32 %v5052, %v5076
        %v5078 = vmin.f32 %v5077, 1.0
        %v5079 = vmax.f32 %v5078, -1.0
        %v5080 = vmul.f32 %v4782, %v4782
        %v5081 = vmin.f32 16.0, %v5080
        %v5082 = vmul.f32 %v5081, 2.1237322e-06
        %v5083 = vadd.f32 %v5082, 0.00028619796
        %v5084 = vmul.f32 %v5081, %v5083
        %v5085 = vadd.f32 %v5084, 0.0036580483
        %v5086 = vmul.f32 %v5081, %v5085
        %v5087 = vadd.f32 %v5086, 0.05243302
        %v5088 = vmul.f32 %v5081, %v5087
        %v5089 = vadd.f32 %v5088, 0.18741608
        %v5090 = vmul.f32 %v5081, %v5089
        %v5091 = vadd.f32 %v5090, 1.1283791
        %v5092 = vmul.f32 %v4782, %v5091
        %v5093 = vmul.f32 %v5081, 3.8918573e-05
        %v5094 = vadd.f32 %v5093, 0.001143296
        %v5095 = vmul.f32 %v5081, %v5094
        %v5096 = vadd.f32 %v5095, 0.014752088
        %v5097 = vmul.f32 %v5081, %v5096
        %v5098 = vadd.f32 %v5097, 0.112945676
        %v5099 = vmul.f32 %v5081, %v5098
        %v5100 = vadd.f32 %v5099, 0.4994258
        %v5101 = vmul.f32 %v5081, %v5100
        %v5102 = vadd.f32 %v5101, 1.0
        %v5103 = vrcp.pop %v5102
        %v5104 = vmul.f32 %v5102, %v5103
        %v5105 = vsub.f32 1.0, %v5104
        %v5106 = vmul.f32 %v5103, %v5105
        %v5107 = vadd.f32 %v5103, %v5106
        %vm5108 = vweird.f32 %v5102
        %vm5109 = vweird.f32 %v5103
        %vm5110 = vmor %vm5108, %vm5109
        %v5111 = vsel %vm5110, %v5103, %v5107
        %v5112 = vand.u32 2147483647, %v5102
        %vm5113 = vcmp.eq.f32.partialorder %v5112, 8.507059e+37
        %v5114 = vand.u32 %v5102, 2147483648
        %v5115 = vor.u32 1.1754944e-38, %v5114
        %v5116 = vsel %vm5113, %v5115, %v5111
        %v5117 = vmul.f32 %v5092, %v5116
        %v5118 = vmin.f32 %v5117, 1.0
        %v5119 = vmax.f32 %v5118, -1.0
        %v5120 = vmul.f32 %v4783, %v4783
        %v5121 = vmin.f32 16.0, %v5120
        %v5122 = vmul.f32 %v5121, 2.1237322e-06
        %v5123 = vadd.f32 %v5122, 0.00028619796
        %v5124 = vmul.f32 %v5121, %v5123
        %v5125 = vadd.f32 %v5124, 0.0036580483
        %v5126 = vmul.f32 %v5121, %v5125
        %v5127 = vadd.f32 %v5126, 0.05243302
        %v5128 = vmul.f32 %v5121, %v5127
        %v5129 = vadd.f32 %v5128, 0.18741608
        %v5130 = vmul.f32 %v5121, %v5129
        %v5131 = vadd.f32 %v5130, 1.1283791
        %v5132 = vmul.f32 %v4783, %v5131
        %v5133 = vmul.f32 %v5121, 3.8918573e-05
        %v5134 = vadd.f32 %v5133, 0.001143296
        %v5135 = vmul.f32 %v5121, %v5134
        %v5136 = vadd.f32 %v5135, 0.014752088
        %v5137 = vmul.f32 %v5121, %v5136
        %v5138 = vadd.f32 %v5137, 0.112945676
        %v5139 = vmul.f32 %v5121, %v5138
        %v5140 = vadd.f32 %v5139, 0.4994258
        %v5141 = vmul.f32 %v5121, %v5140
        %v5142 = vadd.f32 %v5141, 1.0
        %v5143 = vrcp.pop %v5142
        %v5144 = vmul.f32 %v5142, %v5143
        %v5145 = vsub.f32 1.0, %v5144
        %v5146 = vmul.f32 %v5143, %v5145
        %v5147 = vadd.f32 %v5143, %v5146
        %vm5148 = vweird.f32 %v5142
        %vm5149 = vweird.f32 %v5143
        %vm5150 = vmor %vm5148, %vm5149
        %v5151 = vsel %vm5150, %v5143, %v5147
        %v5152 = vand.u32 2147483647, %v5142
        %vm5153 = vcmp.eq.f32.partialorder %v5152, 8.507059e+37
        %v5154 = vand.u32 %v5142, 2147483648
        %v5155 = vor.u32 1.1754944e-38, %v5154
        %v5156 = vsel %vm5153, %v5155, %v5151
        %v5157 = vmul.f32 %v5132, %v5156
        %v5158 = vmin.f32 %v5157, 1.0
        %v5159 = vmax.f32 %v5158, -1.0
        %v5160 = vmul.f32 %v4784, %v4784
        %v5161 = vmin.f32 16.0, %v5160
        %v5162 = vmul.f32 %v5161, 2.1237322e-06
        %v5163 = vadd.f32 %v5162, 0.00028619796
        %v5164 = vmul.f32 %v5161, %v5163
        %v5165 = vadd.f32 %v5164, 0.0036580483
        %v5166 = vmul.f32 %v5161, %v5165
        %v5167 = vadd.f32 %v5166, 0.05243302
        %v5168 = vmul.f32 %v5161, %v5167
        %v5169 = vadd.f32 %v5168, 0.18741608
        %v5170 = vmul.f32 %v5161, %v5169
        %v5171 = vadd.f32 %v5170, 1.1283791
        %v5172 = vmul.f32 %v4784, %v5171
        %v5173 = vmul.f32 %v5161, 3.8918573e-05
        %v5174 = vadd.f32 %v5173, 0.001143296
        %v5175 = vmul.f32 %v5161, %v5174
        %v5176 = vadd.f32 %v5175, 0.014752088
        %v5177 = vmul.f32 %v5161, %v5176
        %v5178 = vadd.f32 %v5177, 0.112945676
        %v5179 = vmul.f32 %v5161, %v5178
        %v5180 = vadd.f32 %v5179, 0.4994258
        %v5181 = vmul.f32 %v5161, %v5180
        %v5182 = vadd.f32 %v5181, 1.0
        %v5183 = vrcp.pop %v5182
        %v5184 = vmul.f32 %v5182, %v5183
        %v5185 = vsub.f32 1.0, %v5184
        %v5186 = vmul.f32 %v5183, %v5185
        %v5187 = vadd.f32 %v5183, %v5186
        %vm5188 = vweird.f32 %v5182
        %vm5189 = vweird.f32 %v5183
        %vm5190 = vmor %vm5188, %vm5189
        %v5191 = vsel %vm5190, %v5183, %v5187
        %v5192 = vand.u32 2147483647, %v5182
        %vm5193 = vcmp.eq.f32.partialorder %v5192, 8.507059e+37
        %v5194 = vand.u32 %v5182, 2147483648
        %v5195 = vor.u32 1.1754944e-38, %v5194
        %v5196 = vsel %vm5193, %v5195, %v5191
        %v5197 = vmul.f32 %v5172, %v5196
        %v5198 = vmin.f32 %v5197, 1.0
        %v5199 = vmax.f32 %v5198, -1.0
        %v5200 = vmul.f32 %v4785, %v4785
        %v5201 = vmin.f32 16.0, %v5200
        %v5202 = vmul.f32 %v5201, 2.1237322e-06
        %v5203 = vadd.f32 %v5202, 0.00028619796
        %v5204 = vmul.f32 %v5201, %v5203
        %v5205 = vadd.f32 %v5204, 0.0036580483
        %v5206 = vmul.f32 %v5201, %v5205
        %v5207 = vadd.f32 %v5206, 0.05243302
        %v5208 = vmul.f32 %v5201, %v5207
        %v5209 = vadd.f32 %v5208, 0.18741608
        %v5210 = vmul.f32 %v5201, %v5209
        %v5211 = vadd.f32 %v5210, 1.1283791
        %v5212 = vmul.f32 %v4785, %v5211
        %v5213 = vmul.f32 %v5201, 3.8918573e-05
        %v5214 = vadd.f32 %v5213, 0.001143296
        %v5215 = vmul.f32 %v5201, %v5214
        %v5216 = vadd.f32 %v5215, 0.014752088
        %v5217 = vmul.f32 %v5201, %v5216
        %v5218 = vadd.f32 %v5217, 0.112945676
        %v5219 = vmul.f32 %v5201, %v5218
        %v5220 = vadd.f32 %v5219, 0.4994258
        %v5221 = vmul.f32 %v5201, %v5220
        %v5222 = vadd.f32 %v5221, 1.0
        %v5223 = vrcp.pop %v5222
        %v5224 = vmul.f32 %v5222, %v5223
        %v5225 = vsub.f32 1.0, %v5224
        %v5226 = vmul.f32 %v5223, %v5225
        %v5227 = vadd.f32 %v5223, %v5226
        %vm5228 = vweird.f32 %v5222
        %vm5229 = vweird.f32 %v5223
        %vm5230 = vmor %vm5228, %vm5229
        %v5231 = vsel %vm5230, %v5223, %v5227
        %v5232 = vand.u32 2147483647, %v5222
        %vm5233 = vcmp.eq.f32.partialorder %v5232, 8.507059e+37
        %v5234 = vand.u32 %v5222, 2147483648
        %v5235 = vor.u32 1.1754944e-38, %v5234
        %v5236 = vsel %vm5233, %v5235, %v5231
        %v5237 = vmul.f32 %v5212, %v5236
        %v5238 = vmin.f32 %v5237, 1.0
        %v5239 = vmax.f32 %v5238, -1.0
        %v5240 = vmul.f32 %v4786, %v4786
        %v5241 = vmin.f32 16.0, %v5240
        %v5242 = vmul.f32 %v5241, 2.1237322e-06
        %v5243 = vadd.f32 %v5242, 0.00028619796
        %v5244 = vmul.f32 %v5241, %v5243
        %v5245 = vadd.f32 %v5244, 0.0036580483
        %v5246 = vmul.f32 %v5241, %v5245
        %v5247 = vadd.f32 %v5246, 0.05243302
        %v5248 = vmul.f32 %v5241, %v5247
        %v5249 = vadd.f32 %v5248, 0.18741608
        %v5250 = vmul.f32 %v5241, %v5249
        %v5251 = vadd.f32 %v5250, 1.1283791
        %v5252 = vmul.f32 %v4786, %v5251
        %v5253 = vmul.f32 %v5241, 3.8918573e-05
        %v5254 = vadd.f32 %v5253, 0.001143296
        %v5255 = vmul.f32 %v5241, %v5254
        %v5256 = vadd.f32 %v5255, 0.014752088
        %v5257 = vmul.f32 %v5241, %v5256
        %v5258 = vadd.f32 %v5257, 0.112945676
        %v5259 = vmul.f32 %v5241, %v5258
        %v5260 = vadd.f32 %v5259, 0.4994258
        %v5261 = vmul.f32 %v5241, %v5260
        %v5262 = vadd.f32 %v5261, 1.0
        %v5263 = vrcp.pop %v5262
        %v5264 = vmul.f32 %v5262, %v5263
        %v5265 = vsub.f32 1.0, %v5264
        %v5266 = vmul.f32 %v5263, %v5265
        %v5267 = vadd.f32 %v5263, %v5266
        %vm5268 = vweird.f32 %v5262
        %vm5269 = vweird.f32 %v5263
        %vm5270 = vmor %vm5268, %vm5269
        %v5271 = vsel %vm5270, %v5263, %v5267
        %v5272 = vand.u32 2147483647, %v5262
        %vm5273 = vcmp.eq.f32.partialorder %v5272, 8.507059e+37
        %v5274 = vand.u32 %v5262, 2147483648
        %v5275 = vor.u32 1.1754944e-38, %v5274
        %v5276 = vsel %vm5273, %v5275, %v5271
        %v5277 = vmul.f32 %v5252, %v5276
        %v5278 = vmin.f32 %v5277, 1.0
        %v5279 = vmax.f32 %v5278, -1.0
        %v5280 = vmul.f32 %v4787, %v4787
        %v5281 = vmin.f32 16.0, %v5280
        %v5282 = vmul.f32 %v5281, 2.1237322e-06
        %v5283 = vadd.f32 %v5282, 0.00028619796
        %v5284 = vmul.f32 %v5281, %v5283
        %v5285 = vadd.f32 %v5284, 0.0036580483
        %v5286 = vmul.f32 %v5281, %v5285
        %v5287 = vadd.f32 %v5286, 0.05243302
        %v5288 = vmul.f32 %v5281, %v5287
        %v5289 = vadd.f32 %v5288, 0.18741608
        %v5290 = vmul.f32 %v5281, %v5289
        %v5291 = vadd.f32 %v5290, 1.1283791
        %v5292 = vmul.f32 %v4787, %v5291
        %v5293 = vmul.f32 %v5281, 3.8918573e-05
        %v5294 = vadd.f32 %v5293, 0.001143296
        %v5295 = vmul.f32 %v5281, %v5294
        %v5296 = vadd.f32 %v5295, 0.014752088
        %v5297 = vmul.f32 %v5281, %v5296
        %v5298 = vadd.f32 %v5297, 0.112945676
        %v5299 = vmul.f32 %v5281, %v5298
        %v5300 = vadd.f32 %v5299, 0.4994258
        %v5301 = vmul.f32 %v5281, %v5300
        %v5302 = vadd.f32 %v5301, 1.0
        %v5303 = vrcp.pop %v5302
        %v5304 = vmul.f32 %v5302, %v5303
        %v5305 = vsub.f32 1.0, %v5304
        %v5306 = vmul.f32 %v5303, %v5305
        %v5307 = vadd.f32 %v5303, %v5306
        %vm5308 = vweird.f32 %v5302
        %vm5309 = vweird.f32 %v5303
        %vm5310 = vmor %vm5308, %vm5309
        %v5311 = vsel %vm5310, %v5303, %v5307
        %v5312 = vand.u32 2147483647, %v5302
        %vm5313 = vcmp.eq.f32.partialorder %v5312, 8.507059e+37
        %v5314 = vand.u32 %v5302, 2147483648
        %v5315 = vor.u32 1.1754944e-38, %v5314
        %v5316 = vsel %vm5313, %v5315, %v5311
        %v5317 = vmul.f32 %v5292, %v5316
        %v5318 = vmin.f32 %v5317, 1.0
        %v5319 = vmax.f32 %v5318, -1.0
        %v5320 = vmul.f32 %v4788, %v4788
        %v5321 = vmin.f32 16.0, %v5320
        %v5322 = vmul.f32 %v5321, 2.1237322e-06
        %v5323 = vadd.f32 %v5322, 0.00028619796
        %v5324 = vmul.f32 %v5321, %v5323
        %v5325 = vadd.f32 %v5324, 0.0036580483
        %v5326 = vmul.f32 %v5321, %v5325
        %v5327 = vadd.f32 %v5326, 0.05243302
        %v5328 = vmul.f32 %v5321, %v5327
        %v5329 = vadd.f32 %v5328, 0.18741608
        %v5330 = vmul.f32 %v5321, %v5329
        %v5331 = vadd.f32 %v5330, 1.1283791
        %v5332 = vmul.f32 %v4788, %v5331
        %v5333 = vmul.f32 %v5321, 3.8918573e-05
        %v5334 = vadd.f32 %v5333, 0.001143296
        %v5335 = vmul.f32 %v5321, %v5334
        %v5336 = vadd.f32 %v5335, 0.014752088
        %v5337 = vmul.f32 %v5321, %v5336
        %v5338 = vadd.f32 %v5337, 0.112945676
        %v5339 = vmul.f32 %v5321, %v5338
        %v5340 = vadd.f32 %v5339, 0.4994258
        %v5341 = vmul.f32 %v5321, %v5340
        %v5342 = vadd.f32 %v5341, 1.0
        %v5343 = vrcp.pop %v5342
        %v5344 = vmul.f32 %v5342, %v5343
        %v5345 = vsub.f32 1.0, %v5344
        %v5346 = vmul.f32 %v5343, %v5345
        %v5347 = vadd.f32 %v5343, %v5346
        %vm5348 = vweird.f32 %v5342
        %vm5349 = vweird.f32 %v5343
        %vm5350 = vmor %vm5348, %vm5349
        %v5351 = vsel %vm5350, %v5343, %v5347
        %v5352 = vand.u32 2147483647, %v5342
        %vm5353 = vcmp.eq.f32.partialorder %v5352, 8.507059e+37
        %v5354 = vand.u32 %v5342, 2147483648
        %v5355 = vor.u32 1.1754944e-38, %v5354
        %v5356 = vsel %vm5353, %v5355, %v5351
        %v5357 = vmul.f32 %v5332, %v5356
        %v5358 = vmin.f32 %v5357, 1.0
        %v5359 = vmax.f32 %v5358, -1.0
        %v5360 = vmul.f32 %v4789, %v4789
        %v5361 = vmin.f32 16.0, %v5360
        %v5362 = vmul.f32 %v5361, 2.1237322e-06
        %v5363 = vadd.f32 %v5362, 0.00028619796
        %v5364 = vmul.f32 %v5361, %v5363
        %v5365 = vadd.f32 %v5364, 0.0036580483
        %v5366 = vmul.f32 %v5361, %v5365
        %v5367 = vadd.f32 %v5366, 0.05243302
        %v5368 = vmul.f32 %v5361, %v5367
        %v5369 = vadd.f32 %v5368, 0.18741608
        %v5370 = vmul.f32 %v5361, %v5369
        %v5371 = vadd.f32 %v5370, 1.1283791
        %v5372 = vmul.f32 %v4789, %v5371
        %v5373 = vmul.f32 %v5361, 3.8918573e-05
        %v5374 = vadd.f32 %v5373, 0.001143296
        %v5375 = vmul.f32 %v5361, %v5374
        %v5376 = vadd.f32 %v5375, 0.014752088
        %v5377 = vmul.f32 %v5361, %v5376
        %v5378 = vadd.f32 %v5377, 0.112945676
        %v5379 = vmul.f32 %v5361, %v5378
        %v5380 = vadd.f32 %v5379, 0.4994258
        %v5381 = vmul.f32 %v5361, %v5380
        %v5382 = vadd.f32 %v5381, 1.0
        %v5383 = vrcp.pop %v5382
        %v5384 = vmul.f32 %v5382, %v5383
        %v5385 = vsub.f32 1.0, %v5384
        %v5386 = vmul.f32 %v5383, %v5385
        %v5387 = vadd.f32 %v5383, %v5386
        %vm5388 = vweird.f32 %v5382
        %vm5389 = vweird.f32 %v5383
        %vm5390 = vmor %vm5388, %vm5389
        %v5391 = vsel %vm5390, %v5383, %v5387
        %v5392 = vand.u32 2147483647, %v5382
        %vm5393 = vcmp.eq.f32.partialorder %v5392, 8.507059e+37
        %v5394 = vand.u32 %v5382, 2147483648
        %v5395 = vor.u32 1.1754944e-38, %v5394
        %v5396 = vsel %vm5393, %v5395, %v5391
        %v5397 = vmul.f32 %v5372, %v5396
        %v5398 = vmin.f32 %v5397, 1.0
        %v5399 = vmax.f32 %v5398, -1.0
        %v5400 = vmul.f32 %v4790, %v4790
        %v5401 = vmin.f32 16.0, %v5400
        %v5402 = vmul.f32 %v5401, 2.1237322e-06
        %v5403 = vadd.f32 %v5402, 0.00028619796
        %v5404 = vmul.f32 %v5401, %v5403
        %v5405 = vadd.f32 %v5404, 0.0036580483
        %v5406 = vmul.f32 %v5401, %v5405
        %v5407 = vadd.f32 %v5406, 0.05243302
        %v5408 = vmul.f32 %v5401, %v5407
        %v5409 = vadd.f32 %v5408, 0.18741608
        %v5410 = vmul.f32 %v5401, %v5409
        %v5411 = vadd.f32 %v5410, 1.1283791
        %v5412 = vmul.f32 %v4790, %v5411
        %v5413 = vmul.f32 %v5401, 3.8918573e-05
        %v5414 = vadd.f32 %v5413, 0.001143296
        %v5415 = vmul.f32 %v5401, %v5414
        %v5416 = vadd.f32 %v5415, 0.014752088
        %v5417 = vmul.f32 %v5401, %v5416
        %v5418 = vadd.f32 %v5417, 0.112945676
        %v5419 = vmul.f32 %v5401, %v5418
        %v5420 = vadd.f32 %v5419, 0.4994258
        %v5421 = vmul.f32 %v5401, %v5420
        %v5422 = vadd.f32 %v5421, 1.0
        %v5423 = vrcp.pop %v5422
        %v5424 = vmul.f32 %v5422, %v5423
        %v5425 = vsub.f32 1.0, %v5424
        %v5426 = vmul.f32 %v5423, %v5425
        %v5427 = vadd.f32 %v5423, %v5426
        %vm5428 = vweird.f32 %v5422
        %vm5429 = vweird.f32 %v5423
        %vm5430 = vmor %vm5428, %vm5429
        %v5431 = vsel %vm5430, %v5423, %v5427
        %v5432 = vand.u32 2147483647, %v5422
        %vm5433 = vcmp.eq.f32.partialorder %v5432, 8.507059e+37
        %v5434 = vand.u32 %v5422, 2147483648
        %v5435 = vor.u32 1.1754944e-38, %v5434
        %v5436 = vsel %vm5433, %v5435, %v5431
        %v5437 = vmul.f32 %v5412, %v5436
        %v5438 = vmin.f32 %v5437, 1.0
        %v5439 = vmax.f32 %v5438, -1.0
        %v5440 = vmul.f32 %v4791, %v4791
        %v5441 = vmin.f32 16.0, %v5440
        %v5442 = vmul.f32 %v5441, 2.1237322e-06
        %v5443 = vadd.f32 %v5442, 0.00028619796
        %v5444 = vmul.f32 %v5441, %v5443
        %v5445 = vadd.f32 %v5444, 0.0036580483
        %v5446 = vmul.f32 %v5441, %v5445
        %v5447 = vadd.f32 %v5446, 0.05243302
        %v5448 = vmul.f32 %v5441, %v5447
        %v5449 = vadd.f32 %v5448, 0.18741608
        %v5450 = vmul.f32 %v5441, %v5449
        %v5451 = vadd.f32 %v5450, 1.1283791
        %v5452 = vmul.f32 %v4791, %v5451
        %v5453 = vmul.f32 %v5441, 3.8918573e-05
        %v5454 = vadd.f32 %v5453, 0.001143296
        %v5455 = vmul.f32 %v5441, %v5454
        %v5456 = vadd.f32 %v5455, 0.014752088
        %v5457 = vmul.f32 %v5441, %v5456
        %v5458 = vadd.f32 %v5457, 0.112945676
        %v5459 = vmul.f32 %v5441, %v5458
        %v5460 = vadd.f32 %v5459, 0.4994258
        %v5461 = vmul.f32 %v5441, %v5460
        %v5462 = vadd.f32 %v5461, 1.0
        %v5463 = vrcp.pop %v5462
        %v5464 = vmul.f32 %v5462, %v5463
        %v5465 = vsub.f32 1.0, %v5464
        %v5466 = vmul.f32 %v5463, %v5465
        %v5467 = vadd.f32 %v5463, %v5466
        %vm5468 = vweird.f32 %v5462
        %vm5469 = vweird.f32 %v5463
        %vm5470 = vmor %vm5468, %vm5469
        %v5471 = vsel %vm5470, %v5463, %v5467
        %v5472 = vand.u32 2147483647, %v5462
        %vm5473 = vcmp.eq.f32.partialorder %v5472, 8.507059e+37
        %v5474 = vand.u32 %v5462, 2147483648
        %v5475 = vor.u32 1.1754944e-38, %v5474
        %v5476 = vsel %vm5473, %v5475, %v5471
        %v5477 = vmul.f32 %v5452, %v5476
        %v5478 = vmin.f32 %v5477, 1.0
        %v5479 = vmax.f32 %v5478, -1.0
        %v5480 = vmul.f32 %v4792, %v4792
        %v5481 = vmin.f32 16.0, %v5480
        %v5482 = vmul.f32 %v5481, 2.1237322e-06
        %v5483 = vadd.f32 %v5482, 0.00028619796
        %v5484 = vmul.f32 %v5481, %v5483
        %v5485 = vadd.f32 %v5484, 0.0036580483
        %v5486 = vmul.f32 %v5481, %v5485
        %v5487 = vadd.f32 %v5486, 0.05243302
        %v5488 = vmul.f32 %v5481, %v5487
        %v5489 = vadd.f32 %v5488, 0.18741608
        %v5490 = vmul.f32 %v5481, %v5489
        %v5491 = vadd.f32 %v5490, 1.1283791
        %v5492 = vmul.f32 %v4792, %v5491
        %v5493 = vmul.f32 %v5481, 3.8918573e-05
        %v5494 = vadd.f32 %v5493, 0.001143296
        %v5495 = vmul.f32 %v5481, %v5494
        %v5496 = vadd.f32 %v5495, 0.014752088
        %v5497 = vmul.f32 %v5481, %v5496
        %v5498 = vadd.f32 %v5497, 0.112945676
        %v5499 = vmul.f32 %v5481, %v5498
        %v5500 = vadd.f32 %v5499, 0.4994258
        %v5501 = vmul.f32 %v5481, %v5500
        %v5502 = vadd.f32 %v5501, 1.0
        %v5503 = vrcp.pop %v5502
        %v5504 = vmul.f32 %v5502, %v5503
        %v5505 = vsub.f32 1.0, %v5504
        %v5506 = vmul.f32 %v5503, %v5505
        %v5507 = vadd.f32 %v5503, %v5506
        %vm5508 = vweird.f32 %v5502
        %vm5509 = vweird.f32 %v5503
        %vm5510 = vmor %vm5508, %vm5509
        %v5511 = vsel %vm5510, %v5503, %v5507
        %v5512 = vand.u32 2147483647, %v5502
        %vm5513 = vcmp.eq.f32.partialorder %v5512, 8.507059e+37
        %v5514 = vand.u32 %v5502, 2147483648
        %v5515 = vor.u32 1.1754944e-38, %v5514
        %v5516 = vsel %vm5513, %v5515, %v5511
        %v5517 = vmul.f32 %v5492, %v5516
        %v5518 = vmin.f32 %v5517, 1.0
        %v5519 = vmax.f32 %v5518, -1.0
        %v5520 = vmul.f32 %v4793, %v4793
        %v5521 = vmin.f32 16.0, %v5520
        %v5522 = vmul.f32 %v5521, 2.1237322e-06
        %v5523 = vadd.f32 %v5522, 0.00028619796
        %v5524 = vmul.f32 %v5521, %v5523
        %v5525 = vadd.f32 %v5524, 0.0036580483
        %v5526 = vmul.f32 %v5521, %v5525
        %v5527 = vadd.f32 %v5526, 0.05243302
        %v5528 = vmul.f32 %v5521, %v5527
        %v5529 = vadd.f32 %v5528, 0.18741608
        %v5530 = vmul.f32 %v5521, %v5529
        %v5531 = vadd.f32 %v5530, 1.1283791
        %v5532 = vmul.f32 %v4793, %v5531
        %v5533 = vmul.f32 %v5521, 3.8918573e-05
        %v5534 = vadd.f32 %v5533, 0.001143296
        %v5535 = vmul.f32 %v5521, %v5534
        %v5536 = vadd.f32 %v5535, 0.014752088
        %v5537 = vmul.f32 %v5521, %v5536
        %v5538 = vadd.f32 %v5537, 0.112945676
        %v5539 = vmul.f32 %v5521, %v5538
        %v5540 = vadd.f32 %v5539, 0.4994258
        %v5541 = vmul.f32 %v5521, %v5540
        %v5542 = vadd.f32 %v5541, 1.0
        %v5543 = vrcp.pop %v5542
        %v5544 = vmul.f32 %v5542, %v5543
        %v5545 = vsub.f32 1.0, %v5544
        %v5546 = vmul.f32 %v5543, %v5545
        %v5547 = vadd.f32 %v5543, %v5546
        %vm5548 = vweird.f32 %v5542
        %vm5549 = vweird.f32 %v5543
        %vm5550 = vmor %vm5548, %vm5549
        %v5551 = vsel %vm5550, %v5543, %v5547
        %v5552 = vand.u32 2147483647, %v5542
        %vm5553 = vcmp.eq.f32.partialorder %v5552, 8.507059e+37
        %v5554 = vand.u32 %v5542, 2147483648
        %v5555 = vor.u32 1.1754944e-38, %v5554
        %v5556 = vsel %vm5553, %v5555, %v5551
        %v5557 = vmul.f32 %v5532, %v5556
        %v5558 = vmin.f32 %v5557, 1.0
        %v5559 = vmax.f32 %v5558, -1.0
        %v5560 = vmul.f32 %v4794, %v4794
        %v5561 = vmin.f32 16.0, %v5560
        %v5562 = vmul.f32 %v5561, 2.1237322e-06
        %v5563 = vadd.f32 %v5562, 0.00028619796
        %v5564 = vmul.f32 %v5561, %v5563
        %v5565 = vadd.f32 %v5564, 0.0036580483
        %v5566 = vmul.f32 %v5561, %v5565
        %v5567 = vadd.f32 %v5566, 0.05243302
        %v5568 = vmul.f32 %v5561, %v5567
        %v5569 = vadd.f32 %v5568, 0.18741608
        %v5570 = vmul.f32 %v5561, %v5569
        %v5571 = vadd.f32 %v5570, 1.1283791
        %v5572 = vmul.f32 %v4794, %v5571
        %v5573 = vmul.f32 %v5561, 3.8918573e-05
        %v5574 = vadd.f32 %v5573, 0.001143296
        %v5575 = vmul.f32 %v5561, %v5574
        %v5576 = vadd.f32 %v5575, 0.014752088
        %v5577 = vmul.f32 %v5561, %v5576
        %v5578 = vadd.f32 %v5577, 0.112945676
        %v5579 = vmul.f32 %v5561, %v5578
        %v5580 = vadd.f32 %v5579, 0.4994258
        %v5581 = vmul.f32 %v5561, %v5580
        %v5582 = vadd.f32 %v5581, 1.0
        %v5583 = vrcp.pop %v5582
        %v5584 = vmul.f32 %v5582, %v5583
        %v5585 = vsub.f32 1.0, %v5584
        %v5586 = vmul.f32 %v5583, %v5585
        %v5587 = vadd.f32 %v5583, %v5586
        %vm5588 = vweird.f32 %v5582
        %vm5589 = vweird.f32 %v5583
        %vm5590 = vmor %vm5588, %vm5589
        %v5591 = vsel %vm5590, %v5583, %v5587
        %v5592 = vand.u32 2147483647, %v5582
        %vm5593 = vcmp.eq.f32.partialorder %v5592, 8.507059e+37
        %v5594 = vand.u32 %v5582, 2147483648
        %v5595 = vor.u32 1.1754944e-38, %v5594
        %v5596 = vsel %vm5593, %v5595, %v5591
        %v5597 = vmul.f32 %v5572, %v5596
        %v5598 = vmin.f32 %v5597, 1.0
        %v5599 = vmax.f32 %v5598, -1.0
        %v5600 = vmul.f32 %v4795, %v4795
        %v5601 = vmin.f32 16.0, %v5600
        %v5602 = vmul.f32 %v5601, 2.1237322e-06
        %v5603 = vadd.f32 %v5602, 0.00028619796
        %v5604 = vmul.f32 %v5601, %v5603
        %v5605 = vadd.f32 %v5604, 0.0036580483
        %v5606 = vmul.f32 %v5601, %v5605
        %v5607 = vadd.f32 %v5606, 0.05243302
        %v5608 = vmul.f32 %v5601, %v5607
        %v5609 = vadd.f32 %v5608, 0.18741608
        %v5610 = vmul.f32 %v5601, %v5609
        %v5611 = vadd.f32 %v5610, 1.1283791
        %v5612 = vmul.f32 %v4795, %v5611
        %v5613 = vmul.f32 %v5601, 3.8918573e-05
        %v5614 = vadd.f32 %v5613, 0.001143296
        %v5615 = vmul.f32 %v5601, %v5614
        %v5616 = vadd.f32 %v5615, 0.014752088
        %v5617 = vmul.f32 %v5601, %v5616
        %v5618 = vadd.f32 %v5617, 0.112945676
        %v5619 = vmul.f32 %v5601, %v5618
        %v5620 = vadd.f32 %v5619, 0.4994258
        %v5621 = vmul.f32 %v5601, %v5620
        %v5622 = vadd.f32 %v5621, 1.0
        %v5623 = vrcp.pop %v5622
        %v5624 = vmul.f32 %v5622, %v5623
        %v5625 = vsub.f32 1.0, %v5624
        %v5626 = vmul.f32 %v5623, %v5625
        %v5627 = vadd.f32 %v5623, %v5626
        %vm5628 = vweird.f32 %v5622
        %vm5629 = vweird.f32 %v5623
        %vm5630 = vmor %vm5628, %vm5629
        %v5631 = vsel %vm5630, %v5623, %v5627
        %v5632 = vand.u32 2147483647, %v5622
        %vm5633 = vcmp.eq.f32.partialorder %v5632, 8.507059e+37
        %v5634 = vand.u32 %v5622, 2147483648
        %v5635 = vor.u32 1.1754944e-38, %v5634
        %v5636 = vsel %vm5633, %v5635, %v5631
        %v5637 = vmul.f32 %v5612, %v5636
        %v5638 = vmin.f32 %v5637, 1.0
        %v5639 = vmax.f32 %v5638, -1.0
        %v5640 = vmul.f32 %v4796, %v4796
        %v5641 = vmin.f32 16.0, %v5640
        %v5642 = vmul.f32 %v5641, 2.1237322e-06
        %v5643 = vadd.f32 %v5642, 0.00028619796
        %v5644 = vmul.f32 %v5641, %v5643
        %v5645 = vadd.f32 %v5644, 0.0036580483
        %v5646 = vmul.f32 %v5641, %v5645
        %v5647 = vadd.f32 %v5646, 0.05243302
        %v5648 = vmul.f32 %v5641, %v5647
        %v5649 = vadd.f32 %v5648, 0.18741608
        %v5650 = vmul.f32 %v5641, %v5649
        %v5651 = vadd.f32 %v5650, 1.1283791
        %v5652 = vmul.f32 %v4796, %v5651
        %v5653 = vmul.f32 %v5641, 3.8918573e-05
        %v5654 = vadd.f32 %v5653, 0.001143296
        %v5655 = vmul.f32 %v5641, %v5654
        %v5656 = vadd.f32 %v5655, 0.014752088
        %v5657 = vmul.f32 %v5641, %v5656
        %v5658 = vadd.f32 %v5657, 0.112945676
        %v5659 = vmul.f32 %v5641, %v5658
        %v5660 = vadd.f32 %v5659, 0.4994258
        %v5661 = vmul.f32 %v5641, %v5660
        %v5662 = vadd.f32 %v5661, 1.0
        %v5663 = vrcp.pop %v5662
        %v5664 = vmul.f32 %v5662, %v5663
        %v5665 = vsub.f32 1.0, %v5664
        %v5666 = vmul.f32 %v5663, %v5665
        %v5667 = vadd.f32 %v5663, %v5666
        %vm5668 = vweird.f32 %v5662
        %vm5669 = vweird.f32 %v5663
        %vm5670 = vmor %vm5668, %vm5669
        %v5671 = vsel %vm5670, %v5663, %v5667
        %v5672 = vand.u32 2147483647, %v5662
        %vm5673 = vcmp.eq.f32.partialorder %v5672, 8.507059e+37
        %v5674 = vand.u32 %v5662, 2147483648
        %v5675 = vor.u32 1.1754944e-38, %v5674
        %v5676 = vsel %vm5673, %v5675, %v5671
        %v5677 = vmul.f32 %v5652, %v5676
        %v5678 = vmin.f32 %v5677, 1.0
        %v5679 = vmax.f32 %v5678, -1.0
        %v5680 = vmul.f32 %v4797, %v4797
        %v5681 = vmin.f32 16.0, %v5680
        %v5682 = vmul.f32 %v5681, 2.1237322e-06
        %v5683 = vadd.f32 %v5682, 0.00028619796
        %v5684 = vmul.f32 %v5681, %v5683
        %v5685 = vadd.f32 %v5684, 0.0036580483
        %v5686 = vmul.f32 %v5681, %v5685
        %v5687 = vadd.f32 %v5686, 0.05243302
        %v5688 = vmul.f32 %v5681, %v5687
        %v5689 = vadd.f32 %v5688, 0.18741608
        %v5690 = vmul.f32 %v5681, %v5689
        %v5691 = vadd.f32 %v5690, 1.1283791
        %v5692 = vmul.f32 %v4797, %v5691
        %v5693 = vmul.f32 %v5681, 3.8918573e-05
        %v5694 = vadd.f32 %v5693, 0.001143296
        %v5695 = vmul.f32 %v5681, %v5694
        %v5696 = vadd.f32 %v5695, 0.014752088
        %v5697 = vmul.f32 %v5681, %v5696
        %v5698 = vadd.f32 %v5697, 0.112945676
        %v5699 = vmul.f32 %v5681, %v5698
        %v5700 = vadd.f32 %v5699, 0.4994258
        %v5701 = vmul.f32 %v5681, %v5700
        %v5702 = vadd.f32 %v5701, 1.0
        %v5703 = vrcp.pop %v5702
        %v5704 = vmul.f32 %v5702, %v5703
        %v5705 = vsub.f32 1.0, %v5704
        %v5706 = vmul.f32 %v5703, %v5705
        %v5707 = vadd.f32 %v5703, %v5706
        %vm5708 = vweird.f32 %v5702
        %vm5709 = vweird.f32 %v5703
        %vm5710 = vmor %vm5708, %vm5709
        %v5711 = vsel %vm5710, %v5703, %v5707
        %v5712 = vand.u32 2147483647, %v5702
        %vm5713 = vcmp.eq.f32.partialorder %v5712, 8.507059e+37
        %v5714 = vand.u32 %v5702, 2147483648
        %v5715 = vor.u32 1.1754944e-38, %v5714
        %v5716 = vsel %vm5713, %v5715, %v5711
        %v5717 = vmul.f32 %v5692, %v5716
        %v5718 = vmin.f32 %v5717, 1.0
        %v5719 = vmax.f32 %v5718, -1.0
        %v5720 = vmul.f32 %v4798, %v4798
        %v5721 = vmin.f32 16.0, %v5720
        %v5722 = vmul.f32 %v5721, 2.1237322e-06
        %v5723 = vadd.f32 %v5722, 0.00028619796
        %v5724 = vmul.f32 %v5721, %v5723
        %v5725 = vadd.f32 %v5724, 0.0036580483
        %v5726 = vmul.f32 %v5721, %v5725
        %v5727 = vadd.f32 %v5726, 0.05243302
        %v5728 = vmul.f32 %v5721, %v5727
        %v5729 = vadd.f32 %v5728, 0.18741608
        %v5730 = vmul.f32 %v5721, %v5729
        %v5731 = vadd.f32 %v5730, 1.1283791
        %v5732 = vmul.f32 %v4798, %v5731
        %v5733 = vmul.f32 %v5721, 3.8918573e-05
        %v5734 = vadd.f32 %v5733, 0.001143296
        %v5735 = vmul.f32 %v5721, %v5734
        %v5736 = vadd.f32 %v5735, 0.014752088
        %v5737 = vmul.f32 %v5721, %v5736
        %v5738 = vadd.f32 %v5737, 0.112945676
        %v5739 = vmul.f32 %v5721, %v5738
        %v5740 = vadd.f32 %v5739, 0.4994258
        %v5741 = vmul.f32 %v5721, %v5740
        %v5742 = vadd.f32 %v5741, 1.0
        %v5743 = vrcp.pop %v5742
        %v5744 = vmul.f32 %v5742, %v5743
        %v5745 = vsub.f32 1.0, %v5744
        %v5746 = vmul.f32 %v5743, %v5745
        %v5747 = vadd.f32 %v5743, %v5746
        %vm5748 = vweird.f32 %v5742
        %vm5749 = vweird.f32 %v5743
        %vm5750 = vmor %vm5748, %vm5749
        %v5751 = vsel %vm5750, %v5743, %v5747
        %v5752 = vand.u32 2147483647, %v5742
        %vm5753 = vcmp.eq.f32.partialorder %v5752, 8.507059e+37
        %v5754 = vand.u32 %v5742, 2147483648
        %v5755 = vor.u32 1.1754944e-38, %v5754
        %v5756 = vsel %vm5753, %v5755, %v5751
        %v5757 = vmul.f32 %v5732, %v5756
        %v5758 = vmin.f32 %v5757, 1.0
        %v5759 = vmax.f32 %v5758, -1.0
        %v5760 = vmul.f32 %v4799, %v4799
        %v5761 = vmin.f32 16.0, %v5760
        %v5762 = vmul.f32 %v5761, 2.1237322e-06
        %v5763 = vadd.f32 %v5762, 0.00028619796
        %v5764 = vmul.f32 %v5761, %v5763
        %v5765 = vadd.f32 %v5764, 0.0036580483
        %v5766 = vmul.f32 %v5761, %v5765
        %v5767 = vadd.f32 %v5766, 0.05243302
        %v5768 = vmul.f32 %v5761, %v5767
        %v5769 = vadd.f32 %v5768, 0.18741608
        %v5770 = vmul.f32 %v5761, %v5769
        %v5771 = vadd.f32 %v5770, 1.1283791
        %v5772 = vmul.f32 %v4799, %v5771
        %v5773 = vmul.f32 %v5761, 3.8918573e-05
        %v5774 = vadd.f32 %v5773, 0.001143296
        %v5775 = vmul.f32 %v5761, %v5774
        %v5776 = vadd.f32 %v5775, 0.014752088
        %v5777 = vmul.f32 %v5761, %v5776
        %v5778 = vadd.f32 %v5777, 0.112945676
        %v5779 = vmul.f32 %v5761, %v5778
        %v5780 = vadd.f32 %v5779, 0.4994258
        %v5781 = vmul.f32 %v5761, %v5780
        %v5782 = vadd.f32 %v5781, 1.0
        %v5783 = vrcp.pop %v5782
        %v5784 = vmul.f32 %v5782, %v5783
        %v5785 = vsub.f32 1.0, %v5784
        %v5786 = vmul.f32 %v5783, %v5785
        %v5787 = vadd.f32 %v5783, %v5786
        %vm5788 = vweird.f32 %v5782
        %vm5789 = vweird.f32 %v5783
        %vm5790 = vmor %vm5788, %vm5789
        %v5791 = vsel %vm5790, %v5783, %v5787
        %v5792 = vand.u32 2147483647, %v5782
        %vm5793 = vcmp.eq.f32.partialorder %v5792, 8.507059e+37
        %v5794 = vand.u32 %v5782, 2147483648
        %v5795 = vor.u32 1.1754944e-38, %v5794
        %v5796 = vsel %vm5793, %v5795, %v5791
        %v5797 = vmul.f32 %v5772, %v5796
        %v5798 = vmin.f32 %v5797, 1.0
        %v5799 = vmax.f32 %v5798, -1.0
        %v5800 = vmul.f32 %v4800, %v4800
        %v5801 = vmin.f32 16.0, %v5800
        %v5802 = vmul.f32 %v5801, 2.1237322e-06
        %v5803 = vadd.f32 %v5802, 0.00028619796
        %v5804 = vmul.f32 %v5801, %v5803
        %v5805 = vadd.f32 %v5804, 0.0036580483
        %v5806 = vmul.f32 %v5801, %v5805
        %v5807 = vadd.f32 %v5806, 0.05243302
        %v5808 = vmul.f32 %v5801, %v5807
        %v5809 = vadd.f32 %v5808, 0.18741608
        %v5810 = vmul.f32 %v5801, %v5809
        %v5811 = vadd.f32 %v5810, 1.1283791
        %v5812 = vmul.f32 %v4800, %v5811
        %v5813 = vmul.f32 %v5801, 3.8918573e-05
        %v5814 = vadd.f32 %v5813, 0.001143296
        %v5815 = vmul.f32 %v5801, %v5814
        %v5816 = vadd.f32 %v5815, 0.014752088
        %v5817 = vmul.f32 %v5801, %v5816
        %v5818 = vadd.f32 %v5817, 0.112945676
        %v5819 = vmul.f32 %v5801, %v5818
        %v5820 = vadd.f32 %v5819, 0.4994258
        %v5821 = vmul.f32 %v5801, %v5820
        %v5822 = vadd.f32 %v5821, 1.0
        %v5823 = vrcp.pop %v5822
        %v5824 = vmul.f32 %v5822, %v5823
        %v5825 = vsub.f32 1.0, %v5824
        %v5826 = vmul.f32 %v5823, %v5825
        %v5827 = vadd.f32 %v5823, %v5826
        %vm5828 = vweird.f32 %v5822
        %vm5829 = vweird.f32 %v5823
        %vm5830 = vmor %vm5828, %vm5829
        %v5831 = vsel %vm5830, %v5823, %v5827
        %v5832 = vand.u32 2147483647, %v5822
        %vm5833 = vcmp.eq.f32.partialorder %v5832, 8.507059e+37
        %v5834 = vand.u32 %v5822, 2147483648
        %v5835 = vor.u32 1.1754944e-38, %v5834
        %v5836 = vsel %vm5833, %v5835, %v5831
        %v5837 = vmul.f32 %v5812, %v5836
        %v5838 = vmin.f32 %v5837, 1.0
        %v5839 = vmax.f32 %v5838, -1.0
        %v5840 = vmul.f32 %v4801, %v4801
        %v5841 = vmin.f32 16.0, %v5840
        %v5842 = vmul.f32 %v5841, 2.1237322e-06
        %v5843 = vadd.f32 %v5842, 0.00028619796
        %v5844 = vmul.f32 %v5841, %v5843
        %v5845 = vadd.f32 %v5844, 0.0036580483
        %v5846 = vmul.f32 %v5841, %v5845
        %v5847 = vadd.f32 %v5846, 0.05243302
        %v5848 = vmul.f32 %v5841, %v5847
        %v5849 = vadd.f32 %v5848, 0.18741608
        %v5850 = vmul.f32 %v5841, %v5849
        %v5851 = vadd.f32 %v5850, 1.1283791
        %v5852 = vmul.f32 %v4801, %v5851
        %v5853 = vmul.f32 %v5841, 3.8918573e-05
        %v5854 = vadd.f32 %v5853, 0.001143296
        %v5855 = vmul.f32 %v5841, %v5854
        %v5856 = vadd.f32 %v5855, 0.014752088
        %v5857 = vmul.f32 %v5841, %v5856
        %v5858 = vadd.f32 %v5857, 0.112945676
        %v5859 = vmul.f32 %v5841, %v5858
        %v5860 = vadd.f32 %v5859, 0.4994258
        %v5861 = vmul.f32 %v5841, %v5860
        %v5862 = vadd.f32 %v5861, 1.0
        %v5863 = vrcp.pop %v5862
        %v5864 = vmul.f32 %v5862, %v5863
        %v5865 = vsub.f32 1.0, %v5864
        %v5866 = vmul.f32 %v5863, %v5865
        %v5867 = vadd.f32 %v5863, %v5866
        %vm5868 = vweird.f32 %v5862
        %vm5869 = vweird.f32 %v5863
        %vm5870 = vmor %vm5868, %vm5869
        %v5871 = vsel %vm5870, %v5863, %v5867
        %v5872 = vand.u32 2147483647, %v5862
        %vm5873 = vcmp.eq.f32.partialorder %v5872, 8.507059e+37
        %v5874 = vand.u32 %v5862, 2147483648
        %v5875 = vor.u32 1.1754944e-38, %v5874
        %v5876 = vsel %vm5873, %v5875, %v5871
        %v5877 = vmul.f32 %v5852, %v5876
        %v5878 = vmin.f32 %v5877, 1.0
        %v5879 = vmax.f32 %v5878, -1.0
        %v5880 = vmul.f32 %v4802, %v4802
        %v5881 = vmin.f32 16.0, %v5880
        %v5882 = vmul.f32 %v5881, 2.1237322e-06
        %v5883 = vadd.f32 %v5882, 0.00028619796
        %v5884 = vmul.f32 %v5881, %v5883
        %v5885 = vadd.f32 %v5884, 0.0036580483
        %v5886 = vmul.f32 %v5881, %v5885
        %v5887 = vadd.f32 %v5886, 0.05243302
        %v5888 = vmul.f32 %v5881, %v5887
        %v5889 = vadd.f32 %v5888, 0.18741608
        %v5890 = vmul.f32 %v5881, %v5889
        %v5891 = vadd.f32 %v5890, 1.1283791
        %v5892 = vmul.f32 %v4802, %v5891
        %v5893 = vmul.f32 %v5881, 3.8918573e-05
        %v5894 = vadd.f32 %v5893, 0.001143296
        %v5895 = vmul.f32 %v5881, %v5894
        %v5896 = vadd.f32 %v5895, 0.014752088
        %v5897 = vmul.f32 %v5881, %v5896
        %v5898 = vadd.f32 %v5897, 0.112945676
        %v5899 = vmul.f32 %v5881, %v5898
        %v5900 = vadd.f32 %v5899, 0.4994258
        %v5901 = vmul.f32 %v5881, %v5900
        %v5902 = vadd.f32 %v5901, 1.0
        %v5903 = vrcp.pop %v5902
        %v5904 = vmul.f32 %v5902, %v5903
        %v5905 = vsub.f32 1.0, %v5904
        %v5906 = vmul.f32 %v5903, %v5905
        %v5907 = vadd.f32 %v5903, %v5906
        %vm5908 = vweird.f32 %v5902
        %vm5909 = vweird.f32 %v5903
        %vm5910 = vmor %vm5908, %vm5909
        %v5911 = vsel %vm5910, %v5903, %v5907
        %v5912 = vand.u32 2147483647, %v5902
        %vm5913 = vcmp.eq.f32.partialorder %v5912, 8.507059e+37
        %v5914 = vand.u32 %v5902, 2147483648
        %v5915 = vor.u32 1.1754944e-38, %v5914
        %v5916 = vsel %vm5913, %v5915, %v5911
        %v5917 = vmul.f32 %v5892, %v5916
        %v5918 = vmin.f32 %v5917, 1.0
        %v5919 = vmax.f32 %v5918, -1.0
        %v5920 = vmul.f32 %v4803, %v4803
        %v5921 = vmin.f32 16.0, %v5920
        %v5922 = vmul.f32 %v5921, 2.1237322e-06
        %v5923 = vadd.f32 %v5922, 0.00028619796
        %v5924 = vmul.f32 %v5921, %v5923
        %v5925 = vadd.f32 %v5924, 0.0036580483
        %v5926 = vmul.f32 %v5921, %v5925
        %v5927 = vadd.f32 %v5926, 0.05243302
        %v5928 = vmul.f32 %v5921, %v5927
        %v5929 = vadd.f32 %v5928, 0.18741608
        %v5930 = vmul.f32 %v5921, %v5929
        %v5931 = vadd.f32 %v5930, 1.1283791
        %v5932 = vmul.f32 %v4803, %v5931
        %v5933 = vmul.f32 %v5921, 3.8918573e-05
        %v5934 = vadd.f32 %v5933, 0.001143296
        %v5935 = vmul.f32 %v5921, %v5934
        %v5936 = vadd.f32 %v5935, 0.014752088
        %v5937 = vmul.f32 %v5921, %v5936
        %v5938 = vadd.f32 %v5937, 0.112945676
        %v5939 = vmul.f32 %v5921, %v5938
        %v5940 = vadd.f32 %v5939, 0.4994258
        %v5941 = vmul.f32 %v5921, %v5940
        %v5942 = vadd.f32 %v5941, 1.0
        %v5943 = vrcp.pop %v5942
        %v5944 = vmul.f32 %v5942, %v5943
        %v5945 = vsub.f32 1.0, %v5944
        %v5946 = vmul.f32 %v5943, %v5945
        %v5947 = vadd.f32 %v5943, %v5946
        %vm5948 = vweird.f32 %v5942
        %vm5949 = vweird.f32 %v5943
        %vm5950 = vmor %vm5948, %vm5949
        %v5951 = vsel %vm5950, %v5943, %v5947
        %v5952 = vand.u32 2147483647, %v5942
        %vm5953 = vcmp.eq.f32.partialorder %v5952, 8.507059e+37
        %v5954 = vand.u32 %v5942, 2147483648
        %v5955 = vor.u32 1.1754944e-38, %v5954
        %v5956 = vsel %vm5953, %v5955, %v5951
        %v5957 = vmul.f32 %v5932, %v5956
        %v5958 = vmin.f32 %v5957, 1.0
        %v5959 = vmax.f32 %v5958, -1.0
        %v5960 = vmul.f32 %v4804, %v4804
        %v5961 = vmin.f32 16.0, %v5960
        %v5962 = vmul.f32 %v5961, 2.1237322e-06
        %v5963 = vadd.f32 %v5962, 0.00028619796
        %v5964 = vmul.f32 %v5961, %v5963
        %v5965 = vadd.f32 %v5964, 0.0036580483
        %v5966 = vmul.f32 %v5961, %v5965
        %v5967 = vadd.f32 %v5966, 0.05243302
        %v5968 = vmul.f32 %v5961, %v5967
        %v5969 = vadd.f32 %v5968, 0.18741608
        %v5970 = vmul.f32 %v5961, %v5969
        %v5971 = vadd.f32 %v5970, 1.1283791
        %v5972 = vmul.f32 %v4804, %v5971
        %v5973 = vmul.f32 %v5961, 3.8918573e-05
        %v5974 = vadd.f32 %v5973, 0.001143296
        %v5975 = vmul.f32 %v5961, %v5974
        %v5976 = vadd.f32 %v5975, 0.014752088
        %v5977 = vmul.f32 %v5961, %v5976
        %v5978 = vadd.f32 %v5977, 0.112945676
        %v5979 = vmul.f32 %v5961, %v5978
        %v5980 = vadd.f32 %v5979, 0.4994258
        %v5981 = vmul.f32 %v5961, %v5980
        %v5982 = vadd.f32 %v5981, 1.0
        %v5983 = vrcp.pop %v5982
        %v5984 = vmul.f32 %v5982, %v5983
        %v5985 = vsub.f32 1.0, %v5984
        %v5986 = vmul.f32 %v5983, %v5985
        %v5987 = vadd.f32 %v5983, %v5986
        %vm5988 = vweird.f32 %v5982
        %vm5989 = vweird.f32 %v5983
        %vm5990 = vmor %vm5988, %vm5989
        %v5991 = vsel %vm5990, %v5983, %v5987
        %v5992 = vand.u32 2147483647, %v5982
        %vm5993 = vcmp.eq.f32.partialorder %v5992, 8.507059e+37
        %v5994 = vand.u32 %v5982, 2147483648
        %v5995 = vor.u32 1.1754944e-38, %v5994
        %v5996 = vsel %vm5993, %v5995, %v5991
        %v5997 = vmul.f32 %v5972, %v5996
        %v5998 = vmin.f32 %v5997, 1.0
        %v5999 = vmax.f32 %v5998, -1.0
        %v6000 = vmul.f32 %v4805, %v4805
        %v6001 = vmin.f32 16.0, %v6000
        %v6002 = vmul.f32 %v6001, 2.1237322e-06
        %v6003 = vadd.f32 %v6002, 0.00028619796
        %v6004 = vmul.f32 %v6001, %v6003
        %v6005 = vadd.f32 %v6004, 0.0036580483
        %v6006 = vmul.f32 %v6001, %v6005
        %v6007 = vadd.f32 %v6006, 0.05243302
        %v6008 = vmul.f32 %v6001, %v6007
        %v6009 = vadd.f32 %v6008, 0.18741608
        %v6010 = vmul.f32 %v6001, %v6009
        %v6011 = vadd.f32 %v6010, 1.1283791
        %v6012 = vmul.f32 %v4805, %v6011
        %v6013 = vmul.f32 %v6001, 3.8918573e-05
        %v6014 = vadd.f32 %v6013, 0.001143296
        %v6015 = vmul.f32 %v6001, %v6014
        %v6016 = vadd.f32 %v6015, 0.014752088
        %v6017 = vmul.f32 %v6001, %v6016
        %v6018 = vadd.f32 %v6017, 0.112945676
        %v6019 = vmul.f32 %v6001, %v6018
        %v6020 = vadd.f32 %v6019, 0.4994258
        %v6021 = vmul.f32 %v6001, %v6020
        %v6022 = vadd.f32 %v6021, 1.0
        %v6023 = vrcp.pop %v6022
        %v6024 = vmul.f32 %v6022, %v6023
        %v6025 = vsub.f32 1.0, %v6024
        %v6026 = vmul.f32 %v6023, %v6025
        %v6027 = vadd.f32 %v6023, %v6026
        %vm6028 = vweird.f32 %v6022
        %vm6029 = vweird.f32 %v6023
        %vm6030 = vmor %vm6028, %vm6029
        %v6031 = vsel %vm6030, %v6023, %v6027
        %v6032 = vand.u32 2147483647, %v6022
        %vm6033 = vcmp.eq.f32.partialorder %v6032, 8.507059e+37
        %v6034 = vand.u32 %v6022, 2147483648
        %v6035 = vor.u32 1.1754944e-38, %v6034
        %v6036 = vsel %vm6033, %v6035, %v6031
        %v6037 = vmul.f32 %v6012, %v6036
        %v6038 = vmin.f32 %v6037, 1.0
        %v6039 = vmax.f32 %v6038, -1.0
        %v6040 = vmul.f32 %v4806, %v4806
        %v6041 = vmin.f32 16.0, %v6040
        %v6042 = vmul.f32 %v6041, 2.1237322e-06
        %v6043 = vadd.f32 %v6042, 0.00028619796
        %v6044 = vmul.f32 %v6041, %v6043
        %v6045 = vadd.f32 %v6044, 0.0036580483
        %v6046 = vmul.f32 %v6041, %v6045
        %v6047 = vadd.f32 %v6046, 0.05243302
        %v6048 = vmul.f32 %v6041, %v6047
        %v6049 = vadd.f32 %v6048, 0.18741608
        %v6050 = vmul.f32 %v6041, %v6049
        %v6051 = vadd.f32 %v6050, 1.1283791
        %v6052 = vmul.f32 %v4806, %v6051
        %v6053 = vmul.f32 %v6041, 3.8918573e-05
        %v6054 = vadd.f32 %v6053, 0.001143296
        %v6055 = vmul.f32 %v6041, %v6054
        %v6056 = vadd.f32 %v6055, 0.014752088
        %v6057 = vmul.f32 %v6041, %v6056
        %v6058 = vadd.f32 %v6057, 0.112945676
        %v6059 = vmul.f32 %v6041, %v6058
        %v6060 = vadd.f32 %v6059, 0.4994258
        %v6061 = vmul.f32 %v6041, %v6060
        %v6062 = vadd.f32 %v6061, 1.0
        %v6063 = vrcp.pop %v6062
        %v6064 = vmul.f32 %v6062, %v6063
        %v6065 = vsub.f32 1.0, %v6064
        %v6066 = vmul.f32 %v6063, %v6065
        %v6067 = vadd.f32 %v6063, %v6066
        %vm6068 = vweird.f32 %v6062
        %vm6069 = vweird.f32 %v6063
        %vm6070 = vmor %vm6068, %vm6069
        %v6071 = vsel %vm6070, %v6063, %v6067
        %v6072 = vand.u32 2147483647, %v6062
        %vm6073 = vcmp.eq.f32.partialorder %v6072, 8.507059e+37
        %v6074 = vand.u32 %v6062, 2147483648
        %v6075 = vor.u32 1.1754944e-38, %v6074
        %v6076 = vsel %vm6073, %v6075, %v6071
        %v6077 = vmul.f32 %v6052, %v6076
        %v6078 = vmin.f32 %v6077, 1.0
        %v6079 = vmax.f32 %v6078, -1.0
        %v6080 = vmul.f32 %v4807, %v4807
        %v6081 = vmin.f32 16.0, %v6080
        %v6082 = vmul.f32 %v6081, 2.1237322e-06
        %v6083 = vadd.f32 %v6082, 0.00028619796
        %v6084 = vmul.f32 %v6081, %v6083
        %v6085 = vadd.f32 %v6084, 0.0036580483
        %v6086 = vmul.f32 %v6081, %v6085
        %v6087 = vadd.f32 %v6086, 0.05243302
        %v6088 = vmul.f32 %v6081, %v6087
        %v6089 = vadd.f32 %v6088, 0.18741608
        %v6090 = vmul.f32 %v6081, %v6089
        %v6091 = vadd.f32 %v6090, 1.1283791
        %v6092 = vmul.f32 %v4807, %v6091
        %v6093 = vmul.f32 %v6081, 3.8918573e-05
        %v6094 = vadd.f32 %v6093, 0.001143296
        %v6095 = vmul.f32 %v6081, %v6094
        %v6096 = vadd.f32 %v6095, 0.014752088
        %v6097 = vmul.f32 %v6081, %v6096
        %v6098 = vadd.f32 %v6097, 0.112945676
        %v6099 = vmul.f32 %v6081, %v6098
        %v6100 = vadd.f32 %v6099, 0.4994258
        %v6101 = vmul.f32 %v6081, %v6100
        %v6102 = vadd.f32 %v6101, 1.0
        %v6103 = vrcp.pop %v6102
        %v6104 = vmul.f32 %v6102, %v6103
        %v6105 = vsub.f32 1.0, %v6104
        %v6106 = vmul.f32 %v6103, %v6105
        %v6107 = vadd.f32 %v6103, %v6106
        %vm6108 = vweird.f32 %v6102
        %vm6109 = vweird.f32 %v6103
        %vm6110 = vmor %vm6108, %vm6109
        %v6111 = vsel %vm6110, %v6103, %v6107
        %v6112 = vand.u32 2147483647, %v6102
        %vm6113 = vcmp.eq.f32.partialorder %v6112, 8.507059e+37
        %v6114 = vand.u32 %v6102, 2147483648
        %v6115 = vor.u32 1.1754944e-38, %v6114
        %v6116 = vsel %vm6113, %v6115, %v6111
        %v6117 = vmul.f32 %v6092, %v6116
        %v6118 = vmin.f32 %v6117, 1.0
        %v6119 = vmax.f32 %v6118, -1.0
        %v6120 = vmul.f32 %v4808, %v4808
        %v6121 = vmin.f32 16.0, %v6120
        %v6122 = vmul.f32 %v6121, 2.1237322e-06
        %v6123 = vadd.f32 %v6122, 0.00028619796
        %v6124 = vmul.f32 %v6121, %v6123
        %v6125 = vadd.f32 %v6124, 0.0036580483
        %v6126 = vmul.f32 %v6121, %v6125
        %v6127 = vadd.f32 %v6126, 0.05243302
        %v6128 = vmul.f32 %v6121, %v6127
        %v6129 = vadd.f32 %v6128, 0.18741608
        %v6130 = vmul.f32 %v6121, %v6129
        %v6131 = vadd.f32 %v6130, 1.1283791
        %v6132 = vmul.f32 %v4808, %v6131
        %v6133 = vmul.f32 %v6121, 3.8918573e-05
        %v6134 = vadd.f32 %v6133, 0.001143296
        %v6135 = vmul.f32 %v6121, %v6134
        %v6136 = vadd.f32 %v6135, 0.014752088
        %v6137 = vmul.f32 %v6121, %v6136
        %v6138 = vadd.f32 %v6137, 0.112945676
        %v6139 = vmul.f32 %v6121, %v6138
        %v6140 = vadd.f32 %v6139, 0.4994258
        %v6141 = vmul.f32 %v6121, %v6140
        %v6142 = vadd.f32 %v6141, 1.0
        %v6143 = vrcp.pop %v6142
        %v6144 = vmul.f32 %v6142, %v6143
        %v6145 = vsub.f32 1.0, %v6144
        %v6146 = vmul.f32 %v6143, %v6145
        %v6147 = vadd.f32 %v6143, %v6146
        %vm6148 = vweird.f32 %v6142
        %vm6149 = vweird.f32 %v6143
        %vm6150 = vmor %vm6148, %vm6149
        %v6151 = vsel %vm6150, %v6143, %v6147
        %v6152 = vand.u32 2147483647, %v6142
        %vm6153 = vcmp.eq.f32.partialorder %v6152, 8.507059e+37
        %v6154 = vand.u32 %v6142, 2147483648
        %v6155 = vor.u32 1.1754944e-38, %v6154
        %v6156 = vsel %vm6153, %v6155, %v6151
        %v6157 = vmul.f32 %v6132, %v6156
        %v6158 = vmin.f32 %v6157, 1.0
        %v6159 = vmax.f32 %v6158, -1.0
        %v6160 = vmul.f32 %v4809, %v4809
        %v6161 = vmin.f32 16.0, %v6160
        %v6162 = vmul.f32 %v6161, 2.1237322e-06
        %v6163 = vadd.f32 %v6162, 0.00028619796
        %v6164 = vmul.f32 %v6161, %v6163
        %v6165 = vadd.f32 %v6164, 0.0036580483
        %v6166 = vmul.f32 %v6161, %v6165
        %v6167 = vadd.f32 %v6166, 0.05243302
        %v6168 = vmul.f32 %v6161, %v6167
        %v6169 = vadd.f32 %v6168, 0.18741608
        %v6170 = vmul.f32 %v6161, %v6169
        %v6171 = vadd.f32 %v6170, 1.1283791
        %v6172 = vmul.f32 %v4809, %v6171
        %v6173 = vmul.f32 %v6161, 3.8918573e-05
        %v6174 = vadd.f32 %v6173, 0.001143296
        %v6175 = vmul.f32 %v6161, %v6174
        %v6176 = vadd.f32 %v6175, 0.014752088
        %v6177 = vmul.f32 %v6161, %v6176
        %v6178 = vadd.f32 %v6177, 0.112945676
        %v6179 = vmul.f32 %v6161, %v6178
        %v6180 = vadd.f32 %v6179, 0.4994258
        %v6181 = vmul.f32 %v6161, %v6180
        %v6182 = vadd.f32 %v6181, 1.0
        %v6183 = vrcp.pop %v6182
        %v6184 = vmul.f32 %v6182, %v6183
        %v6185 = vsub.f32 1.0, %v6184
        %v6186 = vmul.f32 %v6183, %v6185
        %v6187 = vadd.f32 %v6183, %v6186
        %vm6188 = vweird.f32 %v6182
        %vm6189 = vweird.f32 %v6183
        %vm6190 = vmor %vm6188, %vm6189
        %v6191 = vsel %vm6190, %v6183, %v6187
        %v6192 = vand.u32 2147483647, %v6182
        %vm6193 = vcmp.eq.f32.partialorder %v6192, 8.507059e+37
        %v6194 = vand.u32 %v6182, 2147483648
        %v6195 = vor.u32 1.1754944e-38, %v6194
        %v6196 = vsel %vm6193, %v6195, %v6191
        %v6197 = vmul.f32 %v6172, %v6196
        %v6198 = vmin.f32 %v6197, 1.0
        %v6199 = vmax.f32 %v6198, -1.0
        %v6200 = vmul.f32 %v4810, %v4810
        %v6201 = vmin.f32 16.0, %v6200
        %v6202 = vmul.f32 %v6201, 2.1237322e-06
        %v6203 = vadd.f32 %v6202, 0.00028619796
        %v6204 = vmul.f32 %v6201, %v6203
        %v6205 = vadd.f32 %v6204, 0.0036580483
        %v6206 = vmul.f32 %v6201, %v6205
        %v6207 = vadd.f32 %v6206, 0.05243302
        %v6208 = vmul.f32 %v6201, %v6207
        %v6209 = vadd.f32 %v6208, 0.18741608
        %v6210 = vmul.f32 %v6201, %v6209
        %v6211 = vadd.f32 %v6210, 1.1283791
        %v6212 = vmul.f32 %v4810, %v6211
        %v6213 = vmul.f32 %v6201, 3.8918573e-05
        %v6214 = vadd.f32 %v6213, 0.001143296
        %v6215 = vmul.f32 %v6201, %v6214
        %v6216 = vadd.f32 %v6215, 0.014752088
        %v6217 = vmul.f32 %v6201, %v6216
        %v6218 = vadd.f32 %v6217, 0.112945676
        %v6219 = vmul.f32 %v6201, %v6218
        %v6220 = vadd.f32 %v6219, 0.4994258
        %v6221 = vmul.f32 %v6201, %v6220
        %v6222 = vadd.f32 %v6221, 1.0
        %v6223 = vrcp.pop %v6222
        %v6224 = vmul.f32 %v6222, %v6223
        %v6225 = vsub.f32 1.0, %v6224
        %v6226 = vmul.f32 %v6223, %v6225
        %v6227 = vadd.f32 %v6223, %v6226
        %vm6228 = vweird.f32 %v6222
        %vm6229 = vweird.f32 %v6223
        %vm6230 = vmor %vm6228, %vm6229
        %v6231 = vsel %vm6230, %v6223, %v6227
        %v6232 = vand.u32 2147483647, %v6222
        %vm6233 = vcmp.eq.f32.partialorder %v6232, 8.507059e+37
        %v6234 = vand.u32 %v6222, 2147483648
        %v6235 = vor.u32 1.1754944e-38, %v6234
        %v6236 = vsel %vm6233, %v6235, %v6231
        %v6237 = vmul.f32 %v6212, %v6236
        %v6238 = vmin.f32 %v6237, 1.0
        %v6239 = vmax.f32 %v6238, -1.0
        %v6240 = vmul.f32 %v4811, %v4811
        %v6241 = vmin.f32 16.0, %v6240
        %v6242 = vmul.f32 %v6241, 2.1237322e-06
        %v6243 = vadd.f32 %v6242, 0.00028619796
        %v6244 = vmul.f32 %v6241, %v6243
        %v6245 = vadd.f32 %v6244, 0.0036580483
        %v6246 = vmul.f32 %v6241, %v6245
        %v6247 = vadd.f32 %v6246, 0.05243302
        %v6248 = vmul.f32 %v6241, %v6247
        %v6249 = vadd.f32 %v6248, 0.18741608
        %v6250 = vmul.f32 %v6241, %v6249
        %v6251 = vadd.f32 %v6250, 1.1283791
        %v6252 = vmul.f32 %v4811, %v6251
        %v6253 = vmul.f32 %v6241, 3.8918573e-05
        %v6254 = vadd.f32 %v6253, 0.001143296
        %v6255 = vmul.f32 %v6241, %v6254
        %v6256 = vadd.f32 %v6255, 0.014752088
        %v6257 = vmul.f32 %v6241, %v6256
        %v6258 = vadd.f32 %v6257, 0.112945676
        %v6259 = vmul.f32 %v6241, %v6258
        %v6260 = vadd.f32 %v6259, 0.4994258
        %v6261 = vmul.f32 %v6241, %v6260
        %v6262 = vadd.f32 %v6261, 1.0
        %v6263 = vrcp.pop %v6262
        %v6264 = vmul.f32 %v6262, %v6263
        %v6265 = vsub.f32 1.0, %v6264
        %v6266 = vmul.f32 %v6263, %v6265
        %v6267 = vadd.f32 %v6263, %v6266
        %vm6268 = vweird.f32 %v6262
        %vm6269 = vweird.f32 %v6263
        %vm6270 = vmor %vm6268, %vm6269
        %v6271 = vsel %vm6270, %v6263, %v6267
        %v6272 = vand.u32 2147483647, %v6262
        %vm6273 = vcmp.eq.f32.partialorder %v6272, 8.507059e+37
        %v6274 = vand.u32 %v6262, 2147483648
        %v6275 = vor.u32 1.1754944e-38, %v6274
        %v6276 = vsel %vm6273, %v6275, %v6271
        %v6277 = vmul.f32 %v6252, %v6276
        %v6278 = vmin.f32 %v6277, 1.0
        %v6279 = vmax.f32 %v6278, -1.0
        %v6280 = vmul.f32 %v4812, %v4812
        %v6281 = vmin.f32 16.0, %v6280
        %v6282 = vmul.f32 %v6281, 2.1237322e-06
        %v6283 = vadd.f32 %v6282, 0.00028619796
        %v6284 = vmul.f32 %v6281, %v6283
        %v6285 = vadd.f32 %v6284, 0.0036580483
        %v6286 = vmul.f32 %v6281, %v6285
        %v6287 = vadd.f32 %v6286, 0.05243302
        %v6288 = vmul.f32 %v6281, %v6287
        %v6289 = vadd.f32 %v6288, 0.18741608
        %v6290 = vmul.f32 %v6281, %v6289
        %v6291 = vadd.f32 %v6290, 1.1283791
        %v6292 = vmul.f32 %v4812, %v6291
        %v6293 = vmul.f32 %v6281, 3.8918573e-05
        %v6294 = vadd.f32 %v6293, 0.001143296
        %v6295 = vmul.f32 %v6281, %v6294
        %v6296 = vadd.f32 %v6295, 0.014752088
        %v6297 = vmul.f32 %v6281, %v6296
        %v6298 = vadd.f32 %v6297, 0.112945676
        %v6299 = vmul.f32 %v6281, %v6298
        %v6300 = vadd.f32 %v6299, 0.4994258
        %v6301 = vmul.f32 %v6281, %v6300
        %v6302 = vadd.f32 %v6301, 1.0
        %v6303 = vrcp.pop %v6302
        %v6304 = vmul.f32 %v6302, %v6303
        %v6305 = vsub.f32 1.0, %v6304
        %v6306 = vmul.f32 %v6303, %v6305
        %v6307 = vadd.f32 %v6303, %v6306
        %vm6308 = vweird.f32 %v6302
        %vm6309 = vweird.f32 %v6303
        %vm6310 = vmor %vm6308, %vm6309
        %v6311 = vsel %vm6310, %v6303, %v6307
        %v6312 = vand.u32 2147483647, %v6302
        %vm6313 = vcmp.eq.f32.partialorder %v6312, 8.507059e+37
        %v6314 = vand.u32 %v6302, 2147483648
        %v6315 = vor.u32 1.1754944e-38, %v6314
        %v6316 = vsel %vm6313, %v6315, %v6311
        %v6317 = vmul.f32 %v6292, %v6316
        %v6318 = vmin.f32 %v6317, 1.0
        %v6319 = vmax.f32 %v6318, -1.0
        %v6320 = vmul.f32 %v4813, %v4813
        %v6321 = vmin.f32 16.0, %v6320
        %v6322 = vmul.f32 %v6321, 2.1237322e-06
        %v6323 = vadd.f32 %v6322, 0.00028619796
        %v6324 = vmul.f32 %v6321, %v6323
        %v6325 = vadd.f32 %v6324, 0.0036580483
        %v6326 = vmul.f32 %v6321, %v6325
        %v6327 = vadd.f32 %v6326, 0.05243302
        %v6328 = vmul.f32 %v6321, %v6327
        %v6329 = vadd.f32 %v6328, 0.18741608
        %v6330 = vmul.f32 %v6321, %v6329
        %v6331 = vadd.f32 %v6330, 1.1283791
        %v6332 = vmul.f32 %v4813, %v6331
        %v6333 = vmul.f32 %v6321, 3.8918573e-05
        %v6334 = vadd.f32 %v6333, 0.001143296
        %v6335 = vmul.f32 %v6321, %v6334
        %v6336 = vadd.f32 %v6335, 0.014752088
        %v6337 = vmul.f32 %v6321, %v6336
        %v6338 = vadd.f32 %v6337, 0.112945676
        %v6339 = vmul.f32 %v6321, %v6338
        %v6340 = vadd.f32 %v6339, 0.4994258
        %v6341 = vmul.f32 %v6321, %v6340
        %v6342 = vadd.f32 %v6341, 1.0
        %v6343 = vrcp.pop %v6342
        %v6344 = vmul.f32 %v6342, %v6343
        %v6345 = vsub.f32 1.0, %v6344
        %v6346 = vmul.f32 %v6343, %v6345
        %v6347 = vadd.f32 %v6343, %v6346
        %vm6348 = vweird.f32 %v6342
        %vm6349 = vweird.f32 %v6343
        %vm6350 = vmor %vm6348, %vm6349
        %v6351 = vsel %vm6350, %v6343, %v6347
        %v6352 = vand.u32 2147483647, %v6342
        %vm6353 = vcmp.eq.f32.partialorder %v6352, 8.507059e+37
        %v6354 = vand.u32 %v6342, 2147483648
        %v6355 = vor.u32 1.1754944e-38, %v6354
        %v6356 = vsel %vm6353, %v6355, %v6351
        %v6357 = vmul.f32 %v6332, %v6356
        %v6358 = vmin.f32 %v6357, 1.0
        %v6359 = vmax.f32 %v6358, -1.0
        %v6360 = vmul.f32 %v4814, %v4814
        %v6361 = vmin.f32 16.0, %v6360
        %v6362 = vmul.f32 %v6361, 2.1237322e-06
        %v6363 = vadd.f32 %v6362, 0.00028619796
        %v6364 = vmul.f32 %v6361, %v6363
        %v6365 = vadd.f32 %v6364, 0.0036580483
        %v6366 = vmul.f32 %v6361, %v6365
        %v6367 = vadd.f32 %v6366, 0.05243302
        %v6368 = vmul.f32 %v6361, %v6367
        %v6369 = vadd.f32 %v6368, 0.18741608
        %v6370 = vmul.f32 %v6361, %v6369
        %v6371 = vadd.f32 %v6370, 1.1283791
        %v6372 = vmul.f32 %v4814, %v6371
        %v6373 = vmul.f32 %v6361, 3.8918573e-05
        %v6374 = vadd.f32 %v6373, 0.001143296
        %v6375 = vmul.f32 %v6361, %v6374
        %v6376 = vadd.f32 %v6375, 0.014752088
        %v6377 = vmul.f32 %v6361, %v6376
        %v6378 = vadd.f32 %v6377, 0.112945676
        %v6379 = vmul.f32 %v6361, %v6378
        %v6380 = vadd.f32 %v6379, 0.4994258
        %v6381 = vmul.f32 %v6361, %v6380
        %v6382 = vadd.f32 %v6381, 1.0
        %v6383 = vrcp.pop %v6382
        %v6384 = vmul.f32 %v6382, %v6383
        %v6385 = vsub.f32 1.0, %v6384
        %v6386 = vmul.f32 %v6383, %v6385
        %v6387 = vadd.f32 %v6383, %v6386
        %vm6388 = vweird.f32 %v6382
        %vm6389 = vweird.f32 %v6383
        %vm6390 = vmor %vm6388, %vm6389
        %v6391 = vsel %vm6390, %v6383, %v6387
        %v6392 = vand.u32 2147483647, %v6382
        %vm6393 = vcmp.eq.f32.partialorder %v6392, 8.507059e+37
        %v6394 = vand.u32 %v6382, 2147483648
        %v6395 = vor.u32 1.1754944e-38, %v6394
        %v6396 = vsel %vm6393, %v6395, %v6391
        %v6397 = vmul.f32 %v6372, %v6396
        %v6398 = vmin.f32 %v6397, 1.0
        %v6399 = vmax.f32 %v6398, -1.0
        %v6400 = vmul.f32 %v4815, %v4815
        %v6401 = vmin.f32 16.0, %v6400
        %v6402 = vmul.f32 %v6401, 2.1237322e-06
        %v6403 = vadd.f32 %v6402, 0.00028619796
        %v6404 = vmul.f32 %v6401, %v6403
        %v6405 = vadd.f32 %v6404, 0.0036580483
        %v6406 = vmul.f32 %v6401, %v6405
        %v6407 = vadd.f32 %v6406, 0.05243302
        %v6408 = vmul.f32 %v6401, %v6407
        %v6409 = vadd.f32 %v6408, 0.18741608
        %v6410 = vmul.f32 %v6401, %v6409
        %v6411 = vadd.f32 %v6410, 1.1283791
        %v6412 = vmul.f32 %v4815, %v6411
        %v6413 = vmul.f32 %v6401, 3.8918573e-05
        %v6414 = vadd.f32 %v6413, 0.001143296
        %v6415 = vmul.f32 %v6401, %v6414
        %v6416 = vadd.f32 %v6415, 0.014752088
        %v6417 = vmul.f32 %v6401, %v6416
        %v6418 = vadd.f32 %v6417, 0.112945676
        %v6419 = vmul.f32 %v6401, %v6418
        %v6420 = vadd.f32 %v6419, 0.4994258
        %v6421 = vmul.f32 %v6401, %v6420
        %v6422 = vadd.f32 %v6421, 1.0
        %v6423 = vrcp.pop %v6422
        %v6424 = vmul.f32 %v6422, %v6423
        %v6425 = vsub.f32 1.0, %v6424
        %v6426 = vmul.f32 %v6423, %v6425
        %v6427 = vadd.f32 %v6423, %v6426
        %vm6428 = vweird.f32 %v6422
        %vm6429 = vweird.f32 %v6423
        %vm6430 = vmor %vm6428, %vm6429
        %v6431 = vsel %vm6430, %v6423, %v6427
        %v6432 = vand.u32 2147483647, %v6422
        %vm6433 = vcmp.eq.f32.partialorder %v6432, 8.507059e+37
        %v6434 = vand.u32 %v6422, 2147483648
        %v6435 = vor.u32 1.1754944e-38, %v6434
        %v6436 = vsel %vm6433, %v6435, %v6431
        %v6437 = vmul.f32 %v6412, %v6436
        %v6438 = vmin.f32 %v6437, 1.0
        %v6439 = vmax.f32 %v6438, -1.0
        %v6440 = vmul.f32 %v4816, %v4816
        %v6441 = vmin.f32 16.0, %v6440
        %v6442 = vmul.f32 %v6441, 2.1237322e-06
        %v6443 = vadd.f32 %v6442, 0.00028619796
        %v6444 = vmul.f32 %v6441, %v6443
        %v6445 = vadd.f32 %v6444, 0.0036580483
        %v6446 = vmul.f32 %v6441, %v6445
        %v6447 = vadd.f32 %v6446, 0.05243302
        %v6448 = vmul.f32 %v6441, %v6447
        %v6449 = vadd.f32 %v6448, 0.18741608
        %v6450 = vmul.f32 %v6441, %v6449
        %v6451 = vadd.f32 %v6450, 1.1283791
        %v6452 = vmul.f32 %v4816, %v6451
        %v6453 = vmul.f32 %v6441, 3.8918573e-05
        %v6454 = vadd.f32 %v6453, 0.001143296
        %v6455 = vmul.f32 %v6441, %v6454
        %v6456 = vadd.f32 %v6455, 0.014752088
        %v6457 = vmul.f32 %v6441, %v6456
        %v6458 = vadd.f32 %v6457, 0.112945676
        %v6459 = vmul.f32 %v6441, %v6458
        %v6460 = vadd.f32 %v6459, 0.4994258
        %v6461 = vmul.f32 %v6441, %v6460
        %v6462 = vadd.f32 %v6461, 1.0
        %v6463 = vrcp.pop %v6462
        %v6464 = vmul.f32 %v6462, %v6463
        %v6465 = vsub.f32 1.0, %v6464
        %v6466 = vmul.f32 %v6463, %v6465
        %v6467 = vadd.f32 %v6463, %v6466
        %vm6468 = vweird.f32 %v6462
        %vm6469 = vweird.f32 %v6463
        %vm6470 = vmor %vm6468, %vm6469
        %v6471 = vsel %vm6470, %v6463, %v6467
        %v6472 = vand.u32 2147483647, %v6462
        %vm6473 = vcmp.eq.f32.partialorder %v6472, 8.507059e+37
        %v6474 = vand.u32 %v6462, 2147483648
        %v6475 = vor.u32 1.1754944e-38, %v6474
        %v6476 = vsel %vm6473, %v6475, %v6471
        %v6477 = vmul.f32 %v6452, %v6476
        %v6478 = vmin.f32 %v6477, 1.0
        %v6479 = vmax.f32 %v6478, -1.0
        %v6480 = vmul.f32 %v4817, %v4817
        %v6481 = vmin.f32 16.0, %v6480
        %v6482 = vmul.f32 %v6481, 2.1237322e-06
        %v6483 = vadd.f32 %v6482, 0.00028619796
        %v6484 = vmul.f32 %v6481, %v6483
        %v6485 = vadd.f32 %v6484, 0.0036580483
        %v6486 = vmul.f32 %v6481, %v6485
        %v6487 = vadd.f32 %v6486, 0.05243302
        %v6488 = vmul.f32 %v6481, %v6487
        %v6489 = vadd.f32 %v6488, 0.18741608
        %v6490 = vmul.f32 %v6481, %v6489
        %v6491 = vadd.f32 %v6490, 1.1283791
        %v6492 = vmul.f32 %v4817, %v6491
        %v6493 = vmul.f32 %v6481, 3.8918573e-05
        %v6494 = vadd.f32 %v6493, 0.001143296
        %v6495 = vmul.f32 %v6481, %v6494
        %v6496 = vadd.f32 %v6495, 0.014752088
        %v6497 = vmul.f32 %v6481, %v6496
        %v6498 = vadd.f32 %v6497, 0.112945676
        %v6499 = vmul.f32 %v6481, %v6498
        %v6500 = vadd.f32 %v6499, 0.4994258
        %v6501 = vmul.f32 %v6481, %v6500
        %v6502 = vadd.f32 %v6501, 1.0
        %v6503 = vrcp.pop %v6502
        %v6504 = vmul.f32 %v6502, %v6503
        %v6505 = vsub.f32 1.0, %v6504
        %v6506 = vmul.f32 %v6503, %v6505
        %v6507 = vadd.f32 %v6503, %v6506
        %vm6508 = vweird.f32 %v6502
        %vm6509 = vweird.f32 %v6503
        %vm6510 = vmor %vm6508, %vm6509
        %v6511 = vsel %vm6510, %v6503, %v6507
        %v6512 = vand.u32 2147483647, %v6502
        %vm6513 = vcmp.eq.f32.partialorder %v6512, 8.507059e+37
        %v6514 = vand.u32 %v6502, 2147483648
        %v6515 = vor.u32 1.1754944e-38, %v6514
        %v6516 = vsel %vm6513, %v6515, %v6511
        %v6517 = vmul.f32 %v6492, %v6516
        %v6518 = vmin.f32 %v6517, 1.0
        %v6519 = vmax.f32 %v6518, -1.0
        %v6520 = vmul.f32 %v4818, %v4818
        %v6521 = vmin.f32 16.0, %v6520
        %v6522 = vmul.f32 %v6521, 2.1237322e-06
        %v6523 = vadd.f32 %v6522, 0.00028619796
        %v6524 = vmul.f32 %v6521, %v6523
        %v6525 = vadd.f32 %v6524, 0.0036580483
        %v6526 = vmul.f32 %v6521, %v6525
        %v6527 = vadd.f32 %v6526, 0.05243302
        %v6528 = vmul.f32 %v6521, %v6527
        %v6529 = vadd.f32 %v6528, 0.18741608
        %v6530 = vmul.f32 %v6521, %v6529
        %v6531 = vadd.f32 %v6530, 1.1283791
        %v6532 = vmul.f32 %v4818, %v6531
        %v6533 = vmul.f32 %v6521, 3.8918573e-05
        %v6534 = vadd.f32 %v6533, 0.001143296
        %v6535 = vmul.f32 %v6521, %v6534
        %v6536 = vadd.f32 %v6535, 0.014752088
        %v6537 = vmul.f32 %v6521, %v6536
        %v6538 = vadd.f32 %v6537, 0.112945676
        %v6539 = vmul.f32 %v6521, %v6538
        %v6540 = vadd.f32 %v6539, 0.4994258
        %v6541 = vmul.f32 %v6521, %v6540
        %v6542 = vadd.f32 %v6541, 1.0
        %v6543 = vrcp.pop %v6542
        %v6544 = vmul.f32 %v6542, %v6543
        %v6545 = vsub.f32 1.0, %v6544
        %v6546 = vmul.f32 %v6543, %v6545
        %v6547 = vadd.f32 %v6543, %v6546
        %vm6548 = vweird.f32 %v6542
        %vm6549 = vweird.f32 %v6543
        %vm6550 = vmor %vm6548, %vm6549
        %v6551 = vsel %vm6550, %v6543, %v6547
        %v6552 = vand.u32 2147483647, %v6542
        %vm6553 = vcmp.eq.f32.partialorder %v6552, 8.507059e+37
        %v6554 = vand.u32 %v6542, 2147483648
        %v6555 = vor.u32 1.1754944e-38, %v6554
        %v6556 = vsel %vm6553, %v6555, %v6551
        %v6557 = vmul.f32 %v6532, %v6556
        %v6558 = vmin.f32 %v6557, 1.0
        %v6559 = vmax.f32 %v6558, -1.0
        %v6560 = vmul.f32 %v4819, %v4819
        %v6561 = vmin.f32 16.0, %v6560
        %v6562 = vmul.f32 %v6561, 2.1237322e-06
        %v6563 = vadd.f32 %v6562, 0.00028619796
        %v6564 = vmul.f32 %v6561, %v6563
        %v6565 = vadd.f32 %v6564, 0.0036580483
        %v6566 = vmul.f32 %v6561, %v6565
        %v6567 = vadd.f32 %v6566, 0.05243302
        %v6568 = vmul.f32 %v6561, %v6567
        %v6569 = vadd.f32 %v6568, 0.18741608
        %v6570 = vmul.f32 %v6561, %v6569
        %v6571 = vadd.f32 %v6570, 1.1283791
        %v6572 = vmul.f32 %v4819, %v6571
        %v6573 = vmul.f32 %v6561, 3.8918573e-05
        %v6574 = vadd.f32 %v6573, 0.001143296
        %v6575 = vmul.f32 %v6561, %v6574
        %v6576 = vadd.f32 %v6575, 0.014752088
        %v6577 = vmul.f32 %v6561, %v6576
        %v6578 = vadd.f32 %v6577, 0.112945676
        %v6579 = vmul.f32 %v6561, %v6578
        %v6580 = vadd.f32 %v6579, 0.4994258
        %v6581 = vmul.f32 %v6561, %v6580
        %v6582 = vadd.f32 %v6581, 1.0
        %v6583 = vrcp.pop %v6582
        %v6584 = vmul.f32 %v6582, %v6583
        %v6585 = vsub.f32 1.0, %v6584
        %v6586 = vmul.f32 %v6583, %v6585
        %v6587 = vadd.f32 %v6583, %v6586
        %vm6588 = vweird.f32 %v6582
        %vm6589 = vweird.f32 %v6583
        %vm6590 = vmor %vm6588, %vm6589
        %v6591 = vsel %vm6590, %v6583, %v6587
        %v6592 = vand.u32 2147483647, %v6582
        %vm6593 = vcmp.eq.f32.partialorder %v6592, 8.507059e+37
        %v6594 = vand.u32 %v6582, 2147483648
        %v6595 = vor.u32 1.1754944e-38, %v6594
        %v6596 = vsel %vm6593, %v6595, %v6591
        %v6597 = vmul.f32 %v6572, %v6596
        %v6598 = vmin.f32 %v6597, 1.0
        %v6599 = vmax.f32 %v6598, -1.0
        %v6600 = vmul.f32 %v4820, %v4820
        %v6601 = vmin.f32 16.0, %v6600
        %v6602 = vmul.f32 %v6601, 2.1237322e-06
        %v6603 = vadd.f32 %v6602, 0.00028619796
        %v6604 = vmul.f32 %v6601, %v6603
        %v6605 = vadd.f32 %v6604, 0.0036580483
        %v6606 = vmul.f32 %v6601, %v6605
        %v6607 = vadd.f32 %v6606, 0.05243302
        %v6608 = vmul.f32 %v6601, %v6607
        %v6609 = vadd.f32 %v6608, 0.18741608
        %v6610 = vmul.f32 %v6601, %v6609
        %v6611 = vadd.f32 %v6610, 1.1283791
        %v6612 = vmul.f32 %v4820, %v6611
        %v6613 = vmul.f32 %v6601, 3.8918573e-05
        %v6614 = vadd.f32 %v6613, 0.001143296
        %v6615 = vmul.f32 %v6601, %v6614
        %v6616 = vadd.f32 %v6615, 0.014752088
        %v6617 = vmul.f32 %v6601, %v6616
        %v6618 = vadd.f32 %v6617, 0.112945676
        %v6619 = vmul.f32 %v6601, %v6618
        %v6620 = vadd.f32 %v6619, 0.4994258
        %v6621 = vmul.f32 %v6601, %v6620
        %v6622 = vadd.f32 %v6621, 1.0
        %v6623 = vrcp.pop %v6622
        %v6624 = vmul.f32 %v6622, %v6623
        %v6625 = vsub.f32 1.0, %v6624
        %v6626 = vmul.f32 %v6623, %v6625
        %v6627 = vadd.f32 %v6623, %v6626
        %vm6628 = vweird.f32 %v6622
        %vm6629 = vweird.f32 %v6623
        %vm6630 = vmor %vm6628, %vm6629
        %v6631 = vsel %vm6630, %v6623, %v6627
        %v6632 = vand.u32 2147483647, %v6622
        %vm6633 = vcmp.eq.f32.partialorder %v6632, 8.507059e+37
        %v6634 = vand.u32 %v6622, 2147483648
        %v6635 = vor.u32 1.1754944e-38, %v6634
        %v6636 = vsel %vm6633, %v6635, %v6631
        %v6637 = vmul.f32 %v6612, %v6636
        %v6638 = vmin.f32 %v6637, 1.0
        %v6639 = vmax.f32 %v6638, -1.0
        %v6640 = vmul.f32 %v4821, %v4821
        %v6641 = vmin.f32 16.0, %v6640
        %v6642 = vmul.f32 %v6641, 2.1237322e-06
        %v6643 = vadd.f32 %v6642, 0.00028619796
        %v6644 = vmul.f32 %v6641, %v6643
        %v6645 = vadd.f32 %v6644, 0.0036580483
        %v6646 = vmul.f32 %v6641, %v6645
        %v6647 = vadd.f32 %v6646, 0.05243302
        %v6648 = vmul.f32 %v6641, %v6647
        %v6649 = vadd.f32 %v6648, 0.18741608
        %v6650 = vmul.f32 %v6641, %v6649
        %v6651 = vadd.f32 %v6650, 1.1283791
        %v6652 = vmul.f32 %v4821, %v6651
        %v6653 = vmul.f32 %v6641, 3.8918573e-05
        %v6654 = vadd.f32 %v6653, 0.001143296
        %v6655 = vmul.f32 %v6641, %v6654
        %v6656 = vadd.f32 %v6655, 0.014752088
        %v6657 = vmul.f32 %v6641, %v6656
        %v6658 = vadd.f32 %v6657, 0.112945676
        %v6659 = vmul.f32 %v6641, %v6658
        %v6660 = vadd.f32 %v6659, 0.4994258
        %v6661 = vmul.f32 %v6641, %v6660
        %v6662 = vadd.f32 %v6661, 1.0
        %v6663 = vrcp.pop %v6662
        %v6664 = vmul.f32 %v6662, %v6663
        %v6665 = vsub.f32 1.0, %v6664
        %v6666 = vmul.f32 %v6663, %v6665
        %v6667 = vadd.f32 %v6663, %v6666
        %vm6668 = vweird.f32 %v6662
        %vm6669 = vweird.f32 %v6663
        %vm6670 = vmor %vm6668, %vm6669
        %v6671 = vsel %vm6670, %v6663, %v6667
        %v6672 = vand.u32 2147483647, %v6662
        %vm6673 = vcmp.eq.f32.partialorder %v6672, 8.507059e+37
        %v6674 = vand.u32 %v6662, 2147483648
        %v6675 = vor.u32 1.1754944e-38, %v6674
        %v6676 = vsel %vm6673, %v6675, %v6671
        %v6677 = vmul.f32 %v6652, %v6676
        %v6678 = vmin.f32 %v6677, 1.0
        %v6679 = vmax.f32 %v6678, -1.0
        %v6680 = vmul.f32 %v4822, %v4822
        %v6681 = vmin.f32 16.0, %v6680
        %v6682 = vmul.f32 %v6681, 2.1237322e-06
        %v6683 = vadd.f32 %v6682, 0.00028619796
        %v6684 = vmul.f32 %v6681, %v6683
        %v6685 = vadd.f32 %v6684, 0.0036580483
        %v6686 = vmul.f32 %v6681, %v6685
        %v6687 = vadd.f32 %v6686, 0.05243302
        %v6688 = vmul.f32 %v6681, %v6687
        %v6689 = vadd.f32 %v6688, 0.18741608
        %v6690 = vmul.f32 %v6681, %v6689
        %v6691 = vadd.f32 %v6690, 1.1283791
        %v6692 = vmul.f32 %v4822, %v6691
        %v6693 = vmul.f32 %v6681, 3.8918573e-05
        %v6694 = vadd.f32 %v6693, 0.001143296
        %v6695 = vmul.f32 %v6681, %v6694
        %v6696 = vadd.f32 %v6695, 0.014752088
        %v6697 = vmul.f32 %v6681, %v6696
        %v6698 = vadd.f32 %v6697, 0.112945676
        %v6699 = vmul.f32 %v6681, %v6698
        %v6700 = vadd.f32 %v6699, 0.4994258
        %v6701 = vmul.f32 %v6681, %v6700
        %v6702 = vadd.f32 %v6701, 1.0
        %v6703 = vrcp.pop %v6702
        %v6704 = vmul.f32 %v6702, %v6703
        %v6705 = vsub.f32 1.0, %v6704
        %v6706 = vmul.f32 %v6703, %v6705
        %v6707 = vadd.f32 %v6703, %v6706
        %vm6708 = vweird.f32 %v6702
        %vm6709 = vweird.f32 %v6703
        %vm6710 = vmor %vm6708, %vm6709
        %v6711 = vsel %vm6710, %v6703, %v6707
        %v6712 = vand.u32 2147483647, %v6702
        %vm6713 = vcmp.eq.f32.partialorder %v6712, 8.507059e+37
        %v6714 = vand.u32 %v6702, 2147483648
        %v6715 = vor.u32 1.1754944e-38, %v6714
        %v6716 = vsel %vm6713, %v6715, %v6711
        %v6717 = vmul.f32 %v6692, %v6716
        %v6718 = vmin.f32 %v6717, 1.0
        %v6719 = vmax.f32 %v6718, -1.0
        %v6720 = vmul.f32 %v4823, %v4823
        %v6721 = vmin.f32 16.0, %v6720
        %v6722 = vmul.f32 %v6721, 2.1237322e-06
        %v6723 = vadd.f32 %v6722, 0.00028619796
        %v6724 = vmul.f32 %v6721, %v6723
        %v6725 = vadd.f32 %v6724, 0.0036580483
        %v6726 = vmul.f32 %v6721, %v6725
        %v6727 = vadd.f32 %v6726, 0.05243302
        %v6728 = vmul.f32 %v6721, %v6727
        %v6729 = vadd.f32 %v6728, 0.18741608
        %v6730 = vmul.f32 %v6721, %v6729
        %v6731 = vadd.f32 %v6730, 1.1283791
        %v6732 = vmul.f32 %v4823, %v6731
        %v6733 = vmul.f32 %v6721, 3.8918573e-05
        %v6734 = vadd.f32 %v6733, 0.001143296
        %v6735 = vmul.f32 %v6721, %v6734
        %v6736 = vadd.f32 %v6735, 0.014752088
        %v6737 = vmul.f32 %v6721, %v6736
        %v6738 = vadd.f32 %v6737, 0.112945676
        %v6739 = vmul.f32 %v6721, %v6738
        %v6740 = vadd.f32 %v6739, 0.4994258
        %v6741 = vmul.f32 %v6721, %v6740
        %v6742 = vadd.f32 %v6741, 1.0
        %v6743 = vrcp.pop %v6742
        %v6744 = vmul.f32 %v6742, %v6743
        %v6745 = vsub.f32 1.0, %v6744
        %v6746 = vmul.f32 %v6743, %v6745
        %v6747 = vadd.f32 %v6743, %v6746
        %vm6748 = vweird.f32 %v6742
        %vm6749 = vweird.f32 %v6743
        %vm6750 = vmor %vm6748, %vm6749
        %v6751 = vsel %vm6750, %v6743, %v6747
        %v6752 = vand.u32 2147483647, %v6742
        %vm6753 = vcmp.eq.f32.partialorder %v6752, 8.507059e+37
        %v6754 = vand.u32 %v6742, 2147483648
        %v6755 = vor.u32 1.1754944e-38, %v6754
        %v6756 = vsel %vm6753, %v6755, %v6751
        %v6757 = vmul.f32 %v6732, %v6756
        %v6758 = vmin.f32 %v6757, 1.0
        %v6759 = vmax.f32 %v6758, -1.0
        %v6760 = vmul.f32 %v4824, %v4824
        %v6761 = vmin.f32 16.0, %v6760
        %v6762 = vmul.f32 %v6761, 2.1237322e-06
        %v6763 = vadd.f32 %v6762, 0.00028619796
        %v6764 = vmul.f32 %v6761, %v6763
        %v6765 = vadd.f32 %v6764, 0.0036580483
        %v6766 = vmul.f32 %v6761, %v6765
        %v6767 = vadd.f32 %v6766, 0.05243302
        %v6768 = vmul.f32 %v6761, %v6767
        %v6769 = vadd.f32 %v6768, 0.18741608
        %v6770 = vmul.f32 %v6761, %v6769
        %v6771 = vadd.f32 %v6770, 1.1283791
        %v6772 = vmul.f32 %v4824, %v6771
        %v6773 = vmul.f32 %v6761, 3.8918573e-05
        %v6774 = vadd.f32 %v6773, 0.001143296
        %v6775 = vmul.f32 %v6761, %v6774
        %v6776 = vadd.f32 %v6775, 0.014752088
        %v6777 = vmul.f32 %v6761, %v6776
        %v6778 = vadd.f32 %v6777, 0.112945676
        %v6779 = vmul.f32 %v6761, %v6778
        %v6780 = vadd.f32 %v6779, 0.4994258
        %v6781 = vmul.f32 %v6761, %v6780
        %v6782 = vadd.f32 %v6781, 1.0
        %v6783 = vrcp.pop %v6782
        %v6784 = vmul.f32 %v6782, %v6783
        %v6785 = vsub.f32 1.0, %v6784
        %v6786 = vmul.f32 %v6783, %v6785
        %v6787 = vadd.f32 %v6783, %v6786
        %vm6788 = vweird.f32 %v6782
        %vm6789 = vweird.f32 %v6783
        %vm6790 = vmor %vm6788, %vm6789
        %v6791 = vsel %vm6790, %v6783, %v6787
        %v6792 = vand.u32 2147483647, %v6782
        %vm6793 = vcmp.eq.f32.partialorder %v6792, 8.507059e+37
        %v6794 = vand.u32 %v6782, 2147483648
        %v6795 = vor.u32 1.1754944e-38, %v6794
        %v6796 = vsel %vm6793, %v6795, %v6791
        %v6797 = vmul.f32 %v6772, %v6796
        %v6798 = vmin.f32 %v6797, 1.0
        %v6799 = vmax.f32 %v6798, -1.0
        %v6800 = vmul.f32 %v4825, %v4825
        %v6801 = vmin.f32 16.0, %v6800
        %v6802 = vmul.f32 %v6801, 2.1237322e-06
        %v6803 = vadd.f32 %v6802, 0.00028619796
        %v6804 = vmul.f32 %v6801, %v6803
        %v6805 = vadd.f32 %v6804, 0.0036580483
        %v6806 = vmul.f32 %v6801, %v6805
        %v6807 = vadd.f32 %v6806, 0.05243302
        %v6808 = vmul.f32 %v6801, %v6807
        %v6809 = vadd.f32 %v6808, 0.18741608
        %v6810 = vmul.f32 %v6801, %v6809
        %v6811 = vadd.f32 %v6810, 1.1283791
        %v6812 = vmul.f32 %v4825, %v6811
        %v6813 = vmul.f32 %v6801, 3.8918573e-05
        %v6814 = vadd.f32 %v6813, 0.001143296
        %v6815 = vmul.f32 %v6801, %v6814
        %v6816 = vadd.f32 %v6815, 0.014752088
        %v6817 = vmul.f32 %v6801, %v6816
        %v6818 = vadd.f32 %v6817, 0.112945676
        %v6819 = vmul.f32 %v6801, %v6818
        %v6820 = vadd.f32 %v6819, 0.4994258
        %v6821 = vmul.f32 %v6801, %v6820
        %v6822 = vadd.f32 %v6821, 1.0
        %v6823 = vrcp.pop %v6822
        %v6824 = vmul.f32 %v6822, %v6823
        %v6825 = vsub.f32 1.0, %v6824
        %v6826 = vmul.f32 %v6823, %v6825
        %v6827 = vadd.f32 %v6823, %v6826
        %vm6828 = vweird.f32 %v6822
        %vm6829 = vweird.f32 %v6823
        %vm6830 = vmor %vm6828, %vm6829
        %v6831 = vsel %vm6830, %v6823, %v6827
        %v6832 = vand.u32 2147483647, %v6822
        %vm6833 = vcmp.eq.f32.partialorder %v6832, 8.507059e+37
        %v6834 = vand.u32 %v6822, 2147483648
        %v6835 = vor.u32 1.1754944e-38, %v6834
        %v6836 = vsel %vm6833, %v6835, %v6831
        %v6837 = vmul.f32 %v6812, %v6836
        %v6838 = vmin.f32 %v6837, 1.0
        %v6839 = vmax.f32 %v6838, -1.0
        %v6840 = vmul.f32 %v4826, %v4826
        %v6841 = vmin.f32 16.0, %v6840
        %v6842 = vmul.f32 %v6841, 2.1237322e-06
        %v6843 = vadd.f32 %v6842, 0.00028619796
        %v6844 = vmul.f32 %v6841, %v6843
        %v6845 = vadd.f32 %v6844, 0.0036580483
        %v6846 = vmul.f32 %v6841, %v6845
        %v6847 = vadd.f32 %v6846, 0.05243302
        %v6848 = vmul.f32 %v6841, %v6847
        %v6849 = vadd.f32 %v6848, 0.18741608
        %v6850 = vmul.f32 %v6841, %v6849
        %v6851 = vadd.f32 %v6850, 1.1283791
        %v6852 = vmul.f32 %v4826, %v6851
        %v6853 = vmul.f32 %v6841, 3.8918573e-05
        %v6854 = vadd.f32 %v6853, 0.001143296
        %v6855 = vmul.f32 %v6841, %v6854
        %v6856 = vadd.f32 %v6855, 0.014752088
        %v6857 = vmul.f32 %v6841, %v6856
        %v6858 = vadd.f32 %v6857, 0.112945676
        %v6859 = vmul.f32 %v6841, %v6858
        %v6860 = vadd.f32 %v6859, 0.4994258
        %v6861 = vmul.f32 %v6841, %v6860
        %v6862 = vadd.f32 %v6861, 1.0
        %v6863 = vrcp.pop %v6862
        %v6864 = vmul.f32 %v6862, %v6863
        %v6865 = vsub.f32 1.0, %v6864
        %v6866 = vmul.f32 %v6863, %v6865
        %v6867 = vadd.f32 %v6863, %v6866
        %vm6868 = vweird.f32 %v6862
        %vm6869 = vweird.f32 %v6863
        %vm6870 = vmor %vm6868, %vm6869
        %v6871 = vsel %vm6870, %v6863, %v6867
        %v6872 = vand.u32 2147483647, %v6862
        %vm6873 = vcmp.eq.f32.partialorder %v6872, 8.507059e+37
        %v6874 = vand.u32 %v6862, 2147483648
        %v6875 = vor.u32 1.1754944e-38, %v6874
        %v6876 = vsel %vm6873, %v6875, %v6871
        %v6877 = vmul.f32 %v6852, %v6876
        %v6878 = vmin.f32 %v6877, 1.0
        %v6879 = vmax.f32 %v6878, -1.0
        %v6880 = vmul.f32 %v4827, %v4827
        %v6881 = vmin.f32 16.0, %v6880
        %v6882 = vmul.f32 %v6881, 2.1237322e-06
        %v6883 = vadd.f32 %v6882, 0.00028619796
        %v6884 = vmul.f32 %v6881, %v6883
        %v6885 = vadd.f32 %v6884, 0.0036580483
        %v6886 = vmul.f32 %v6881, %v6885
        %v6887 = vadd.f32 %v6886, 0.05243302
        %v6888 = vmul.f32 %v6881, %v6887
        %v6889 = vadd.f32 %v6888, 0.18741608
        %v6890 = vmul.f32 %v6881, %v6889
        %v6891 = vadd.f32 %v6890, 1.1283791
        %v6892 = vmul.f32 %v4827, %v6891
        %v6893 = vmul.f32 %v6881, 3.8918573e-05
        %v6894 = vadd.f32 %v6893, 0.001143296
        %v6895 = vmul.f32 %v6881, %v6894
        %v6896 = vadd.f32 %v6895, 0.014752088
        %v6897 = vmul.f32 %v6881, %v6896
        %v6898 = vadd.f32 %v6897, 0.112945676
        %v6899 = vmul.f32 %v6881, %v6898
        %v6900 = vadd.f32 %v6899, 0.4994258
        %v6901 = vmul.f32 %v6881, %v6900
        %v6902 = vadd.f32 %v6901, 1.0
        %v6903 = vrcp.pop %v6902
        %v6904 = vmul.f32 %v6902, %v6903
        %v6905 = vsub.f32 1.0, %v6904
        %v6906 = vmul.f32 %v6903, %v6905
        %v6907 = vadd.f32 %v6903, %v6906
        %vm6908 = vweird.f32 %v6902
        %vm6909 = vweird.f32 %v6903
        %vm6910 = vmor %vm6908, %vm6909
        %v6911 = vsel %vm6910, %v6903, %v6907
        %v6912 = vand.u32 2147483647, %v6902
        %vm6913 = vcmp.eq.f32.partialorder %v6912, 8.507059e+37
        %v6914 = vand.u32 %v6902, 2147483648
        %v6915 = vor.u32 1.1754944e-38, %v6914
        %v6916 = vsel %vm6913, %v6915, %v6911
        %v6917 = vmul.f32 %v6892, %v6916
        %v6918 = vmin.f32 %v6917, 1.0
        %v6919 = vmax.f32 %v6918, -1.0
        %v6920 = vmul.f32 %v4828, %v4828
        %v6921 = vmin.f32 16.0, %v6920
        %v6922 = vmul.f32 %v6921, 2.1237322e-06
        %v6923 = vadd.f32 %v6922, 0.00028619796
        %v6924 = vmul.f32 %v6921, %v6923
        %v6925 = vadd.f32 %v6924, 0.0036580483
        %v6926 = vmul.f32 %v6921, %v6925
        %v6927 = vadd.f32 %v6926, 0.05243302
        %v6928 = vmul.f32 %v6921, %v6927
        %v6929 = vadd.f32 %v6928, 0.18741608
        %v6930 = vmul.f32 %v6921, %v6929
        %v6931 = vadd.f32 %v6930, 1.1283791
        %v6932 = vmul.f32 %v4828, %v6931
        %v6933 = vmul.f32 %v6921, 3.8918573e-05
        %v6934 = vadd.f32 %v6933, 0.001143296
        %v6935 = vmul.f32 %v6921, %v6934
        %v6936 = vadd.f32 %v6935, 0.014752088
        %v6937 = vmul.f32 %v6921, %v6936
        %v6938 = vadd.f32 %v6937, 0.112945676
        %v6939 = vmul.f32 %v6921, %v6938
        %v6940 = vadd.f32 %v6939, 0.4994258
        %v6941 = vmul.f32 %v6921, %v6940
        %v6942 = vadd.f32 %v6941, 1.0
        %v6943 = vrcp.pop %v6942
        %v6944 = vmul.f32 %v6942, %v6943
        %v6945 = vsub.f32 1.0, %v6944
        %v6946 = vmul.f32 %v6943, %v6945
        %v6947 = vadd.f32 %v6943, %v6946
        %vm6948 = vweird.f32 %v6942
        %vm6949 = vweird.f32 %v6943
        %vm6950 = vmor %vm6948, %vm6949
        %v6951 = vsel %vm6950, %v6943, %v6947
        %v6952 = vand.u32 2147483647, %v6942
        %vm6953 = vcmp.eq.f32.partialorder %v6952, 8.507059e+37
        %v6954 = vand.u32 %v6942, 2147483648
        %v6955 = vor.u32 1.1754944e-38, %v6954
        %v6956 = vsel %vm6953, %v6955, %v6951
        %v6957 = vmul.f32 %v6932, %v6956
        %v6958 = vmin.f32 %v6957, 1.0
        %v6959 = vmax.f32 %v6958, -1.0
        %v6960 = vmul.f32 %v4829, %v4829
        %v6961 = vmin.f32 16.0, %v6960
        %v6962 = vmul.f32 %v6961, 2.1237322e-06
        %v6963 = vadd.f32 %v6962, 0.00028619796
        %v6964 = vmul.f32 %v6961, %v6963
        %v6965 = vadd.f32 %v6964, 0.0036580483
        %v6966 = vmul.f32 %v6961, %v6965
        %v6967 = vadd.f32 %v6966, 0.05243302
        %v6968 = vmul.f32 %v6961, %v6967
        %v6969 = vadd.f32 %v6968, 0.18741608
        %v6970 = vmul.f32 %v6961, %v6969
        %v6971 = vadd.f32 %v6970, 1.1283791
        %v6972 = vmul.f32 %v4829, %v6971
        %v6973 = vmul.f32 %v6961, 3.8918573e-05
        %v6974 = vadd.f32 %v6973, 0.001143296
        %v6975 = vmul.f32 %v6961, %v6974
        %v6976 = vadd.f32 %v6975, 0.014752088
        %v6977 = vmul.f32 %v6961, %v6976
        %v6978 = vadd.f32 %v6977, 0.112945676
        %v6979 = vmul.f32 %v6961, %v6978
        %v6980 = vadd.f32 %v6979, 0.4994258
        %v6981 = vmul.f32 %v6961, %v6980
        %v6982 = vadd.f32 %v6981, 1.0
        %v6983 = vrcp.pop %v6982
        %v6984 = vmul.f32 %v6982, %v6983
        %v6985 = vsub.f32 1.0, %v6984
        %v6986 = vmul.f32 %v6983, %v6985
        %v6987 = vadd.f32 %v6983, %v6986
        %vm6988 = vweird.f32 %v6982
        %vm6989 = vweird.f32 %v6983
        %vm6990 = vmor %vm6988, %vm6989
        %v6991 = vsel %vm6990, %v6983, %v6987
        %v6992 = vand.u32 2147483647, %v6982
        %vm6993 = vcmp.eq.f32.partialorder %v6992, 8.507059e+37
        %v6994 = vand.u32 %v6982, 2147483648
        %v6995 = vor.u32 1.1754944e-38, %v6994
        %v6996 = vsel %vm6993, %v6995, %v6991
        %v6997 = vmul.f32 %v6972, %v6996
        %v6998 = vmin.f32 %v6997, 1.0
        %v6999 = vmax.f32 %v6998, -1.0
        %v7000 = vmul.f32 %v4830, %v4830
        %v7001 = vmin.f32 16.0, %v7000
        %v7002 = vmul.f32 %v7001, 2.1237322e-06
        %v7003 = vadd.f32 %v7002, 0.00028619796
        %v7004 = vmul.f32 %v7001, %v7003
        %v7005 = vadd.f32 %v7004, 0.0036580483
        %v7006 = vmul.f32 %v7001, %v7005
        %v7007 = vadd.f32 %v7006, 0.05243302
        %v7008 = vmul.f32 %v7001, %v7007
        %v7009 = vadd.f32 %v7008, 0.18741608
        %v7010 = vmul.f32 %v7001, %v7009
        %v7011 = vadd.f32 %v7010, 1.1283791
        %v7012 = vmul.f32 %v4830, %v7011
        %v7013 = vmul.f32 %v7001, 3.8918573e-05
        %v7014 = vadd.f32 %v7013, 0.001143296
        %v7015 = vmul.f32 %v7001, %v7014
        %v7016 = vadd.f32 %v7015, 0.014752088
        %v7017 = vmul.f32 %v7001, %v7016
        %v7018 = vadd.f32 %v7017, 0.112945676
        %v7019 = vmul.f32 %v7001, %v7018
        %v7020 = vadd.f32 %v7019, 0.4994258
        %v7021 = vmul.f32 %v7001, %v7020
        %v7022 = vadd.f32 %v7021, 1.0
        %v7023 = vrcp.pop %v7022
        %v7024 = vmul.f32 %v7022, %v7023
        %v7025 = vsub.f32 1.0, %v7024
        %v7026 = vmul.f32 %v7023, %v7025
        %v7027 = vadd.f32 %v7023, %v7026
        %vm7028 = vweird.f32 %v7022
        %vm7029 = vweird.f32 %v7023
        %vm7030 = vmor %vm7028, %vm7029
        %v7031 = vsel %vm7030, %v7023, %v7027
        %v7032 = vand.u32 2147483647, %v7022
        %vm7033 = vcmp.eq.f32.partialorder %v7032, 8.507059e+37
        %v7034 = vand.u32 %v7022, 2147483648
        %v7035 = vor.u32 1.1754944e-38, %v7034
        %v7036 = vsel %vm7033, %v7035, %v7031
        %v7037 = vmul.f32 %v7012, %v7036
        %v7038 = vmin.f32 %v7037, 1.0
        %v7039 = vmax.f32 %v7038, -1.0
        %v7040 = vmul.f32 %v4831, %v4831
        %v7041 = vmin.f32 16.0, %v7040
        %v7042 = vmul.f32 %v7041, 2.1237322e-06
        %v7043 = vadd.f32 %v7042, 0.00028619796
        %v7044 = vmul.f32 %v7041, %v7043
        %v7045 = vadd.f32 %v7044, 0.0036580483
        %v7046 = vmul.f32 %v7041, %v7045
        %v7047 = vadd.f32 %v7046, 0.05243302
        %v7048 = vmul.f32 %v7041, %v7047
        %v7049 = vadd.f32 %v7048, 0.18741608
        %v7050 = vmul.f32 %v7041, %v7049
        %v7051 = vadd.f32 %v7050, 1.1283791
        %v7052 = vmul.f32 %v4831, %v7051
        %v7053 = vmul.f32 %v7041, 3.8918573e-05
        %v7054 = vadd.f32 %v7053, 0.001143296
        %v7055 = vmul.f32 %v7041, %v7054
        %v7056 = vadd.f32 %v7055, 0.014752088
        %v7057 = vmul.f32 %v7041, %v7056
        %v7058 = vadd.f32 %v7057, 0.112945676
        %v7059 = vmul.f32 %v7041, %v7058
        %v7060 = vadd.f32 %v7059, 0.4994258
        %v7061 = vmul.f32 %v7041, %v7060
        %v7062 = vadd.f32 %v7061, 1.0
        %v7063 = vrcp.pop %v7062
        %v7064 = vmul.f32 %v7062, %v7063
        %v7065 = vsub.f32 1.0, %v7064
        %v7066 = vmul.f32 %v7063, %v7065
        %v7067 = vadd.f32 %v7063, %v7066
        %vm7068 = vweird.f32 %v7062
        %vm7069 = vweird.f32 %v7063
        %vm7070 = vmor %vm7068, %vm7069
        %v7071 = vsel %vm7070, %v7063, %v7067
        %v7072 = vand.u32 2147483647, %v7062
        %vm7073 = vcmp.eq.f32.partialorder %v7072, 8.507059e+37
        %v7074 = vand.u32 %v7062, 2147483648
        %v7075 = vor.u32 1.1754944e-38, %v7074
        %v7076 = vsel %vm7073, %v7075, %v7071
        %v7077 = vmul.f32 %v7052, %v7076
        %v7078 = vmin.f32 %v7077, 1.0
        %v7079 = vmax.f32 %v7078, -1.0
        %v7080 = vmul.f32 %v4832, %v4832
        %v7081 = vmin.f32 16.0, %v7080
        %v7082 = vmul.f32 %v7081, 2.1237322e-06
        %v7083 = vadd.f32 %v7082, 0.00028619796
        %v7084 = vmul.f32 %v7081, %v7083
        %v7085 = vadd.f32 %v7084, 0.0036580483
        %v7086 = vmul.f32 %v7081, %v7085
        %v7087 = vadd.f32 %v7086, 0.05243302
        %v7088 = vmul.f32 %v7081, %v7087
        %v7089 = vadd.f32 %v7088, 0.18741608
        %v7090 = vmul.f32 %v7081, %v7089
        %v7091 = vadd.f32 %v7090, 1.1283791
        %v7092 = vmul.f32 %v4832, %v7091
        %v7093 = vmul.f32 %v7081, 3.8918573e-05
        %v7094 = vadd.f32 %v7093, 0.001143296
        %v7095 = vmul.f32 %v7081, %v7094
        %v7096 = vadd.f32 %v7095, 0.014752088
        %v7097 = vmul.f32 %v7081, %v7096
        %v7098 = vadd.f32 %v7097, 0.112945676
        %v7099 = vmul.f32 %v7081, %v7098
        %v7100 = vadd.f32 %v7099, 0.4994258
        %v7101 = vmul.f32 %v7081, %v7100
        %v7102 = vadd.f32 %v7101, 1.0
        %v7103 = vrcp.pop %v7102
        %v7104 = vmul.f32 %v7102, %v7103
        %v7105 = vsub.f32 1.0, %v7104
        %v7106 = vmul.f32 %v7103, %v7105
        %v7107 = vadd.f32 %v7103, %v7106
        %vm7108 = vweird.f32 %v7102
        %vm7109 = vweird.f32 %v7103
        %vm7110 = vmor %vm7108, %vm7109
        %v7111 = vsel %vm7110, %v7103, %v7107
        %v7112 = vand.u32 2147483647, %v7102
        %vm7113 = vcmp.eq.f32.partialorder %v7112, 8.507059e+37
        %v7114 = vand.u32 %v7102, 2147483648
        %v7115 = vor.u32 1.1754944e-38, %v7114
        %v7116 = vsel %vm7113, %v7115, %v7111
        %v7117 = vmul.f32 %v7092, %v7116
        %v7118 = vmin.f32 %v7117, 1.0
        %v7119 = vmax.f32 %v7118, -1.0
        %v7120 = vmul.f32 %v4833, %v4833
        %v7121 = vmin.f32 16.0, %v7120
        %v7122 = vmul.f32 %v7121, 2.1237322e-06
        %v7123 = vadd.f32 %v7122, 0.00028619796
        %v7124 = vmul.f32 %v7121, %v7123
        %v7125 = vadd.f32 %v7124, 0.0036580483
        %v7126 = vmul.f32 %v7121, %v7125
        %v7127 = vadd.f32 %v7126, 0.05243302
        %v7128 = vmul.f32 %v7121, %v7127
        %v7129 = vadd.f32 %v7128, 0.18741608
        %v7130 = vmul.f32 %v7121, %v7129
        %v7131 = vadd.f32 %v7130, 1.1283791
        %v7132 = vmul.f32 %v4833, %v7131
        %v7133 = vmul.f32 %v7121, 3.8918573e-05
        %v7134 = vadd.f32 %v7133, 0.001143296
        %v7135 = vmul.f32 %v7121, %v7134
        %v7136 = vadd.f32 %v7135, 0.014752088
        %v7137 = vmul.f32 %v7121, %v7136
        %v7138 = vadd.f32 %v7137, 0.112945676
        %v7139 = vmul.f32 %v7121, %v7138
        %v7140 = vadd.f32 %v7139, 0.4994258
        %v7141 = vmul.f32 %v7121, %v7140
        %v7142 = vadd.f32 %v7141, 1.0
        %v7143 = vrcp.pop %v7142
        %v7144 = vmul.f32 %v7142, %v7143
        %v7145 = vsub.f32 1.0, %v7144
        %v7146 = vmul.f32 %v7143, %v7145
        %v7147 = vadd.f32 %v7143, %v7146
        %vm7148 = vweird.f32 %v7142
        %vm7149 = vweird.f32 %v7143
        %vm7150 = vmor %vm7148, %vm7149
        %v7151 = vsel %vm7150, %v7143, %v7147
        %v7152 = vand.u32 2147483647, %v7142
        %vm7153 = vcmp.eq.f32.partialorder %v7152, 8.507059e+37
        %v7154 = vand.u32 %v7142, 2147483648
        %v7155 = vor.u32 1.1754944e-38, %v7154
        %v7156 = vsel %vm7153, %v7155, %v7151
        %v7157 = vmul.f32 %v7132, %v7156
        %v7158 = vmin.f32 %v7157, 1.0
        %v7159 = vmax.f32 %v7158, -1.0
        %v7160 = vmul.f32 %v4834, %v4834
        %v7161 = vmin.f32 16.0, %v7160
        %v7162 = vmul.f32 %v7161, 2.1237322e-06
        %v7163 = vadd.f32 %v7162, 0.00028619796
        %v7164 = vmul.f32 %v7161, %v7163
        %v7165 = vadd.f32 %v7164, 0.0036580483
        %v7166 = vmul.f32 %v7161, %v7165
        %v7167 = vadd.f32 %v7166, 0.05243302
        %v7168 = vmul.f32 %v7161, %v7167
        %v7169 = vadd.f32 %v7168, 0.18741608
        %v7170 = vmul.f32 %v7161, %v7169
        %v7171 = vadd.f32 %v7170, 1.1283791
        %v7172 = vmul.f32 %v4834, %v7171
        %v7173 = vmul.f32 %v7161, 3.8918573e-05
        %v7174 = vadd.f32 %v7173, 0.001143296
        %v7175 = vmul.f32 %v7161, %v7174
        %v7176 = vadd.f32 %v7175, 0.014752088
        %v7177 = vmul.f32 %v7161, %v7176
        %v7178 = vadd.f32 %v7177, 0.112945676
        %v7179 = vmul.f32 %v7161, %v7178
        %v7180 = vadd.f32 %v7179, 0.4994258
        %v7181 = vmul.f32 %v7161, %v7180
        %v7182 = vadd.f32 %v7181, 1.0
        %v7183 = vrcp.pop %v7182
        %v7184 = vmul.f32 %v7182, %v7183
        %v7185 = vsub.f32 1.0, %v7184
        %v7186 = vmul.f32 %v7183, %v7185
        %v7187 = vadd.f32 %v7183, %v7186
        %vm7188 = vweird.f32 %v7182
        %vm7189 = vweird.f32 %v7183
        %vm7190 = vmor %vm7188, %vm7189
        %v7191 = vsel %vm7190, %v7183, %v7187
        %v7192 = vand.u32 2147483647, %v7182
        %vm7193 = vcmp.eq.f32.partialorder %v7192, 8.507059e+37
        %v7194 = vand.u32 %v7182, 2147483648
        %v7195 = vor.u32 1.1754944e-38, %v7194
        %v7196 = vsel %vm7193, %v7195, %v7191
        %v7197 = vmul.f32 %v7172, %v7196
        %v7198 = vmin.f32 %v7197, 1.0
        %v7199 = vmax.f32 %v7198, -1.0
        %v7200 = vmul.f32 %v4835, %v4835
        %v7201 = vmin.f32 16.0, %v7200
        %v7202 = vmul.f32 %v7201, 2.1237322e-06
        %v7203 = vadd.f32 %v7202, 0.00028619796
        %v7204 = vmul.f32 %v7201, %v7203
        %v7205 = vadd.f32 %v7204, 0.0036580483
        %v7206 = vmul.f32 %v7201, %v7205
        %v7207 = vadd.f32 %v7206, 0.05243302
        %v7208 = vmul.f32 %v7201, %v7207
        %v7209 = vadd.f32 %v7208, 0.18741608
        %v7210 = vmul.f32 %v7201, %v7209
        %v7211 = vadd.f32 %v7210, 1.1283791
        %v7212 = vmul.f32 %v4835, %v7211
        %v7213 = vmul.f32 %v7201, 3.8918573e-05
        %v7214 = vadd.f32 %v7213, 0.001143296
        %v7215 = vmul.f32 %v7201, %v7214
        %v7216 = vadd.f32 %v7215, 0.014752088
        %v7217 = vmul.f32 %v7201, %v7216
        %v7218 = vadd.f32 %v7217, 0.112945676
        %v7219 = vmul.f32 %v7201, %v7218
        %v7220 = vadd.f32 %v7219, 0.4994258
        %v7221 = vmul.f32 %v7201, %v7220
        %v7222 = vadd.f32 %v7221, 1.0
        %v7223 = vrcp.pop %v7222
        %v7224 = vmul.f32 %v7222, %v7223
        %v7225 = vsub.f32 1.0, %v7224
        %v7226 = vmul.f32 %v7223, %v7225
        %v7227 = vadd.f32 %v7223, %v7226
        %vm7228 = vweird.f32 %v7222
        %vm7229 = vweird.f32 %v7223
        %vm7230 = vmor %vm7228, %vm7229
        %v7231 = vsel %vm7230, %v7223, %v7227
        %v7232 = vand.u32 2147483647, %v7222
        %vm7233 = vcmp.eq.f32.partialorder %v7232, 8.507059e+37
        %v7234 = vand.u32 %v7222, 2147483648
        %v7235 = vor.u32 1.1754944e-38, %v7234
        %v7236 = vsel %vm7233, %v7235, %v7231
        %v7237 = vmul.f32 %v7212, %v7236
        %v7238 = vmin.f32 %v7237, 1.0
        %v7239 = vmax.f32 %v7238, -1.0
        %v7240 = vmul.f32 %v4836, %v4836
        %v7241 = vmin.f32 16.0, %v7240
        %v7242 = vmul.f32 %v7241, 2.1237322e-06
        %v7243 = vadd.f32 %v7242, 0.00028619796
        %v7244 = vmul.f32 %v7241, %v7243
        %v7245 = vadd.f32 %v7244, 0.0036580483
        %v7246 = vmul.f32 %v7241, %v7245
        %v7247 = vadd.f32 %v7246, 0.05243302
        %v7248 = vmul.f32 %v7241, %v7247
        %v7249 = vadd.f32 %v7248, 0.18741608
        %v7250 = vmul.f32 %v7241, %v7249
        %v7251 = vadd.f32 %v7250, 1.1283791
        %v7252 = vmul.f32 %v4836, %v7251
        %v7253 = vmul.f32 %v7241, 3.8918573e-05
        %v7254 = vadd.f32 %v7253, 0.001143296
        %v7255 = vmul.f32 %v7241, %v7254
        %v7256 = vadd.f32 %v7255, 0.014752088
        %v7257 = vmul.f32 %v7241, %v7256
        %v7258 = vadd.f32 %v7257, 0.112945676
        %v7259 = vmul.f32 %v7241, %v7258
        %v7260 = vadd.f32 %v7259, 0.4994258
        %v7261 = vmul.f32 %v7241, %v7260
        %v7262 = vadd.f32 %v7261, 1.0
        %v7263 = vrcp.pop %v7262
        %v7264 = vmul.f32 %v7262, %v7263
        %v7265 = vsub.f32 1.0, %v7264
        %v7266 = vmul.f32 %v7263, %v7265
        %v7267 = vadd.f32 %v7263, %v7266
        %vm7268 = vweird.f32 %v7262
        %vm7269 = vweird.f32 %v7263
        %vm7270 = vmor %vm7268, %vm7269
        %v7271 = vsel %vm7270, %v7263, %v7267
        %v7272 = vand.u32 2147483647, %v7262
        %vm7273 = vcmp.eq.f32.partialorder %v7272, 8.507059e+37
        %v7274 = vand.u32 %v7262, 2147483648
        %v7275 = vor.u32 1.1754944e-38, %v7274
        %v7276 = vsel %vm7273, %v7275, %v7271
        %v7277 = vmul.f32 %v7252, %v7276
        %v7278 = vmin.f32 %v7277, 1.0
        %v7279 = vmax.f32 %v7278, -1.0
        %v7280 = vmul.f32 %v4837, %v4837
        %v7281 = vmin.f32 16.0, %v7280
        %v7282 = vmul.f32 %v7281, 2.1237322e-06
        %v7283 = vadd.f32 %v7282, 0.00028619796
        %v7284 = vmul.f32 %v7281, %v7283
        %v7285 = vadd.f32 %v7284, 0.0036580483
        %v7286 = vmul.f32 %v7281, %v7285
        %v7287 = vadd.f32 %v7286, 0.05243302
        %v7288 = vmul.f32 %v7281, %v7287
        %v7289 = vadd.f32 %v7288, 0.18741608
        %v7290 = vmul.f32 %v7281, %v7289
        %v7291 = vadd.f32 %v7290, 1.1283791
        %v7292 = vmul.f32 %v4837, %v7291
        %v7293 = vmul.f32 %v7281, 3.8918573e-05
        %v7294 = vadd.f32 %v7293, 0.001143296
        %v7295 = vmul.f32 %v7281, %v7294
        %v7296 = vadd.f32 %v7295, 0.014752088
        %v7297 = vmul.f32 %v7281, %v7296
        %v7298 = vadd.f32 %v7297, 0.112945676
        %v7299 = vmul.f32 %v7281, %v7298
        %v7300 = vadd.f32 %v7299, 0.4994258
        %v7301 = vmul.f32 %v7281, %v7300
        %v7302 = vadd.f32 %v7301, 1.0
        %v7303 = vrcp.pop %v7302
        %v7304 = vmul.f32 %v7302, %v7303
        %v7305 = vsub.f32 1.0, %v7304
        %v7306 = vmul.f32 %v7303, %v7305
        %v7307 = vadd.f32 %v7303, %v7306
        %vm7308 = vweird.f32 %v7302
        %vm7309 = vweird.f32 %v7303
        %vm7310 = vmor %vm7308, %vm7309
        %v7311 = vsel %vm7310, %v7303, %v7307
        %v7312 = vand.u32 2147483647, %v7302
        %vm7313 = vcmp.eq.f32.partialorder %v7312, 8.507059e+37
        %v7314 = vand.u32 %v7302, 2147483648
        %v7315 = vor.u32 1.1754944e-38, %v7314
        %v7316 = vsel %vm7313, %v7315, %v7311
        %v7317 = vmul.f32 %v7292, %v7316
        %v7318 = vmin.f32 %v7317, 1.0
        %v7319 = vmax.f32 %v7318, -1.0
        %v7320 = vmul.f32 %v4838, %v4838
        %v7321 = vmin.f32 16.0, %v7320
        %v7322 = vmul.f32 %v7321, 2.1237322e-06
        %v7323 = vadd.f32 %v7322, 0.00028619796
        %v7324 = vmul.f32 %v7321, %v7323
        %v7325 = vadd.f32 %v7324, 0.0036580483
        %v7326 = vmul.f32 %v7321, %v7325
        %v7327 = vadd.f32 %v7326, 0.05243302
        %v7328 = vmul.f32 %v7321, %v7327
        %v7329 = vadd.f32 %v7328, 0.18741608
        %v7330 = vmul.f32 %v7321, %v7329
        %v7331 = vadd.f32 %v7330, 1.1283791
        %v7332 = vmul.f32 %v4838, %v7331
        %v7333 = vmul.f32 %v7321, 3.8918573e-05
        %v7334 = vadd.f32 %v7333, 0.001143296
        %v7335 = vmul.f32 %v7321, %v7334
        %v7336 = vadd.f32 %v7335, 0.014752088
        %v7337 = vmul.f32 %v7321, %v7336
        %v7338 = vadd.f32 %v7337, 0.112945676
        %v7339 = vmul.f32 %v7321, %v7338
        %v7340 = vadd.f32 %v7339, 0.4994258
        %v7341 = vmul.f32 %v7321, %v7340
        %v7342 = vadd.f32 %v7341, 1.0
        %v7343 = vrcp.pop %v7342
        %v7344 = vmul.f32 %v7342, %v7343
        %v7345 = vsub.f32 1.0, %v7344
        %v7346 = vmul.f32 %v7343, %v7345
        %v7347 = vadd.f32 %v7343, %v7346
        %vm7348 = vweird.f32 %v7342
        %vm7349 = vweird.f32 %v7343
        %vm7350 = vmor %vm7348, %vm7349
        %v7351 = vsel %vm7350, %v7343, %v7347
        %v7352 = vand.u32 2147483647, %v7342
        %vm7353 = vcmp.eq.f32.partialorder %v7352, 8.507059e+37
        %v7354 = vand.u32 %v7342, 2147483648
        %v7355 = vor.u32 1.1754944e-38, %v7354
        %v7356 = vsel %vm7353, %v7355, %v7351
        %v7357 = vmul.f32 %v7332, %v7356
        %v7358 = vmin.f32 %v7357, 1.0
        %v7359 = vmax.f32 %v7358, -1.0
        %v7360 = vmul.f32 %v4839, %v4839
        %v7361 = vmin.f32 16.0, %v7360
        %v7362 = vmul.f32 %v7361, 2.1237322e-06
        %v7363 = vadd.f32 %v7362, 0.00028619796
        %v7364 = vmul.f32 %v7361, %v7363
        %v7365 = vadd.f32 %v7364, 0.0036580483
        %v7366 = vmul.f32 %v7361, %v7365
        %v7367 = vadd.f32 %v7366, 0.05243302
        %v7368 = vmul.f32 %v7361, %v7367
        %v7369 = vadd.f32 %v7368, 0.18741608
        %v7370 = vmul.f32 %v7361, %v7369
        %v7371 = vadd.f32 %v7370, 1.1283791
        %v7372 = vmul.f32 %v4839, %v7371
        %v7373 = vmul.f32 %v7361, 3.8918573e-05
        %v7374 = vadd.f32 %v7373, 0.001143296
        %v7375 = vmul.f32 %v7361, %v7374
        %v7376 = vadd.f32 %v7375, 0.014752088
        %v7377 = vmul.f32 %v7361, %v7376
        %v7378 = vadd.f32 %v7377, 0.112945676
        %v7379 = vmul.f32 %v7361, %v7378
        %v7380 = vadd.f32 %v7379, 0.4994258
        %v7381 = vmul.f32 %v7361, %v7380
        %v7382 = vadd.f32 %v7381, 1.0
        %v7383 = vrcp.pop %v7382
        %v7384 = vmul.f32 %v7382, %v7383
        %v7385 = vsub.f32 1.0, %v7384
        %v7386 = vmul.f32 %v7383, %v7385
        %v7387 = vadd.f32 %v7383, %v7386
        %vm7388 = vweird.f32 %v7382
        %vm7389 = vweird.f32 %v7383
        %vm7390 = vmor %vm7388, %vm7389
        %v7391 = vsel %vm7390, %v7383, %v7387
        %v7392 = vand.u32 2147483647, %v7382
        %vm7393 = vcmp.eq.f32.partialorder %v7392, 8.507059e+37
        %v7394 = vand.u32 %v7382, 2147483648
        %v7395 = vor.u32 1.1754944e-38, %v7394
        %v7396 = vsel %vm7393, %v7395, %v7391
        %v7397 = vmul.f32 %v7372, %v7396
        %v7398 = vmin.f32 %v7397, 1.0
        %v7399 = vmax.f32 %v7398, -1.0
        %v7400 = vadd.f32 %v4879, 1.0
        %v7401 = vadd.f32 %v4919, 1.0
        %v7402 = vadd.f32 %v4959, 1.0
        %v7403 = vadd.f32 %v4999, 1.0
        %v7404 = vadd.f32 %v5039, 1.0
        %v7405 = vadd.f32 %v5079, 1.0
        %v7406 = vadd.f32 %v5119, 1.0
        %v7407 = vadd.f32 %v5159, 1.0
        %v7408 = vadd.f32 %v5199, 1.0
        %v7409 = vadd.f32 %v5239, 1.0
        %v7410 = vadd.f32 %v5279, 1.0
        %v7411 = vadd.f32 %v5319, 1.0
        %v7412 = vadd.f32 %v5359, 1.0
        %v7413 = vadd.f32 %v5399, 1.0
        %v7414 = vadd.f32 %v5439, 1.0
        %v7415 = vadd.f32 %v5479, 1.0
        %v7416 = vadd.f32 %v5519, 1.0
        %v7417 = vadd.f32 %v5559, 1.0
        %v7418 = vadd.f32 %v5599, 1.0
        %v7419 = vadd.f32 %v5639, 1.0
        %v7420 = vadd.f32 %v5679, 1.0
        %v7421 = vadd.f32 %v5719, 1.0
        %v7422 = vadd.f32 %v5759, 1.0
        %v7423 = vadd.f32 %v5799, 1.0
        %v7424 = vadd.f32 %v5839, 1.0
        %v7425 = vadd.f32 %v5879, 1.0
        %v7426 = vadd.f32 %v5919, 1.0
        %v7427 = vadd.f32 %v5959, 1.0
        %v7428 = vadd.f32 %v5999, 1.0
        %v7429 = vadd.f32 %v6039, 1.0
        %v7430 = vadd.f32 %v6079, 1.0
        %v7431 = vadd.f32 %v6119, 1.0
        %v7432 = vadd.f32 %v6159, 1.0
        %v7433 = vadd.f32 %v6199, 1.0
        %v7434 = vadd.f32 %v6239, 1.0
        %v7435 = vadd.f32 %v6279, 1.0
        %v7436 = vadd.f32 %v6319, 1.0
        %v7437 = vadd.f32 %v6359, 1.0
        %v7438 = vadd.f32 %v6399, 1.0
        %v7439 = vadd.f32 %v6439, 1.0
        %v7440 = vadd.f32 %v6479, 1.0
        %v7441 = vadd.f32 %v6519, 1.0
        %v7442 = vadd.f32 %v6559, 1.0
        %v7443 = vadd.f32 %v6599, 1.0
        %v7444 = vadd.f32 %v6639, 1.0
        %v7445 = vadd.f32 %v6679, 1.0
        %v7446 = vadd.f32 %v6719, 1.0
        %v7447 = vadd.f32 %v6759, 1.0
        %v7448 = vadd.f32 %v6799, 1.0
        %v7449 = vadd.f32 %v6839, 1.0
        %v7450 = vadd.f32 %v6879, 1.0
        %v7451 = vadd.f32 %v6919, 1.0
        %v7452 = vadd.f32 %v6959, 1.0
        %v7453 = vadd.f32 %v6999, 1.0
        %v7454 = vadd.f32 %v7039, 1.0
        %v7455 = vadd.f32 %v7079, 1.0
        %v7456 = vadd.f32 %v7119, 1.0
        %v7457 = vadd.f32 %v7159, 1.0
        %v7458 = vadd.f32 %v7199, 1.0
        %v7459 = vadd.f32 %v7239, 1.0
        %v7460 = vadd.f32 %v7279, 1.0
        %v7461 = vadd.f32 %v7319, 1.0
        %v7462 = vadd.f32 %v7359, 1.0
        %v7463 = vadd.f32 %v7399, 1.0
        %v7464 = vmul.f32 %v4712, %v7400
        %v7465 = vmul.f32 %v4713, %v7401
        %v7466 = vmul.f32 %v4714, %v7402
        %v7467 = vmul.f32 %v4715, %v7403
        %v7468 = vmul.f32 %v4716, %v7404
        %v7469 = vmul.f32 %v4717, %v7405
        %v7470 = vmul.f32 %v4718, %v7406
        %v7471 = vmul.f32 %v4719, %v7407
        %v7472 = vmul.f32 %v4720, %v7408
        %v7473 = vmul.f32 %v4721, %v7409
        %v7474 = vmul.f32 %v4722, %v7410
        %v7475 = vmul.f32 %v4723, %v7411
        %v7476 = vmul.f32 %v4724, %v7412
        %v7477 = vmul.f32 %v4725, %v7413
        %v7478 = vmul.f32 %v4726, %v7414
        %v7479 = vmul.f32 %v4727, %v7415
        %v7480 = vmul.f32 %v4728, %v7416
        %v7481 = vmul.f32 %v4729, %v7417
        %v7482 = vmul.f32 %v4730, %v7418
        %v7483 = vmul.f32 %v4731, %v7419
        %v7484 = vmul.f32 %v4732, %v7420
        %v7485 = vmul.f32 %v4733, %v7421
        %v7486 = vmul.f32 %v4734, %v7422
        %v7487 = vmul.f32 %v4735, %v7423
        %v7488 = vmul.f32 %v4736, %v7424
        %v7489 = vmul.f32 %v4737, %v7425
        %v7490 = vmul.f32 %v4738, %v7426
        %v7491 = vmul.f32 %v4739, %v7427
        %v7492 = vmul.f32 %v4740, %v7428
        %v7493 = vmul.f32 %v4741, %v7429
        %v7494 = vmul.f32 %v4742, %v7430
        %v7495 = vmul.f32 %v4743, %v7431
        %v7496 = vmul.f32 %v4744, %v7432
        %v7497 = vmul.f32 %v4745, %v7433
        %v7498 = vmul.f32 %v4746, %v7434
        %v7499 = vmul.f32 %v4747, %v7435
        %v7500 = vmul.f32 %v4748, %v7436
        %v7501 = vmul.f32 %v4749, %v7437
        %v7502 = vmul.f32 %v4750, %v7438
        %v7503 = vmul.f32 %v4751, %v7439
        %v7504 = vmul.f32 %v4752, %v7440
        %v7505 = vmul.f32 %v4753, %v7441
        %v7506 = vmul.f32 %v4754, %v7442
        %v7507 = vmul.f32 %v4755, %v7443
        %v7508 = vmul.f32 %v4756, %v7444
        %v7509 = vmul.f32 %v4757, %v7445
        %v7510 = vmul.f32 %v4758, %v7446
        %v7511 = vmul.f32 %v4759, %v7447
        %v7512 = vmul.f32 %v4760, %v7448
        %v7513 = vmul.f32 %v4761, %v7449
        %v7514 = vmul.f32 %v4762, %v7450
        %v7515 = vmul.f32 %v4763, %v7451
        %v7516 = vmul.f32 %v4764, %v7452
        %v7517 = vmul.f32 %v4765, %v7453
        %v7518 = vmul.f32 %v4766, %v7454
        %v7519 = vmul.f32 %v4767, %v7455
        %v7520 = vmul.f32 %v4768, %v7456
        %v7521 = vmul.f32 %v4769, %v7457
        %v7522 = vmul.f32 %v4770, %v7458
        %v7523 = vmul.f32 %v4771, %v7459
        %v7524 = vmul.f32 %v4772, %v7460
        %v7525 = vmul.f32 %v4773, %v7461
        %v7526 = vmul.f32 %v4774, %v7462
        %v7527 = vmul.f32 %v4775, %v7463
        %v7528 = vpack.c.bf16 %v7468, %v7464
        %v7529 = vpack.c.bf16 %v7469, %v7465
        %v7530 = vpack.c.bf16 %v7470, %v7466
        %v7531 = vpack.c.bf16 %v7471, %v7467
        %v7532 = vpack.c.bf16 %v7476, %v7472
        %v7533 = vpack.c.bf16 %v7477, %v7473
        %v7534 = vpack.c.bf16 %v7478, %v7474
        %v7535 = vpack.c.bf16 %v7479, %v7475
        %v7536 = vpack.c.bf16 %v7484, %v7480
        %v7537 = vpack.c.bf16 %v7485, %v7481
        %v7538 = vpack.c.bf16 %v7486, %v7482
        %v7539 = vpack.c.bf16 %v7487, %v7483
        %v7540 = vpack.c.bf16 %v7492, %v7488
        %v7541 = vpack.c.bf16 %v7493, %v7489
        %v7542 = vpack.c.bf16 %v7494, %v7490
        %v7543 = vpack.c.bf16 %v7495, %v7491
        %v7544 = vpack.c.bf16 %v7500, %v7496
        %v7545 = vpack.c.bf16 %v7501, %v7497
        %v7546 = vpack.c.bf16 %v7502, %v7498
        %v7547 = vpack.c.bf16 %v7503, %v7499
        %v7548 = vpack.c.bf16 %v7508, %v7504
        %v7549 = vpack.c.bf16 %v7509, %v7505
        %v7550 = vpack.c.bf16 %v7510, %v7506
        %v7551 = vpack.c.bf16 %v7511, %v7507
        %v7552 = vpack.c.bf16 %v7516, %v7512
        %v7553 = vpack.c.bf16 %v7517, %v7513
        %v7554 = vpack.c.bf16 %v7518, %v7514
        %v7555 = vpack.c.bf16 %v7519, %v7515
        %v7556 = vpack.c.bf16 %v7524, %v7520
        %v7557 = vpack.c.bf16 %v7525, %v7521
        %v7558 = vpack.c.bf16 %v7526, %v7522
        %v7559 = vpack.c.bf16 %v7527, %v7523
        %v7560 = vld [vmem:[#allocation14] sm:$0xf]
        %v7561 = vld [vmem:[#allocation14 + $0x4] sm:$0xf]
        %v7562 = vld [vmem:[#allocation14 + $0x8] sm:$0xf]
        %v7563 = vld [vmem:[#allocation14 + $0xc] sm:$0xf]
        %v7564 = vld [vmem:[#allocation14 + $0x10] sm:$0xf]
        %v7565 = vld [vmem:[#allocation14 + $0x14] sm:$0xf]
        %v7566 = vld [vmem:[#allocation14 + $0x18] sm:$0xf]
        %v7567 = vld [vmem:[#allocation14 + $0x1c] sm:$0xf]
        %v7568 = vld [vmem:[#allocation14 + $0x20] sm:$0xf]
        %v7569 = vld [vmem:[#allocation14 + $0x24] sm:$0xf]
        %v7570 = vld [vmem:[#allocation14 + $0x28] sm:$0xf]
        %v7571 = vld [vmem:[#allocation14 + $0x2c] sm:$0xf]
        %v7572 = vld [vmem:[#allocation14 + $0x30] sm:$0xf]
        %v7573 = vld [vmem:[#allocation14 + $0x34] sm:$0xf]
        %v7574 = vld [vmem:[#allocation14 + $0x38] sm:$0xf]
        %v7575 = vld [vmem:[#allocation14 + $0x3c] sm:$0xf]
        %v7576 = vld [vmem:[#allocation14 + $0x40] sm:$0xf]
        %v7577 = vld [vmem:[#allocation14 + $0x44] sm:$0xf]
        %v7578 = vld [vmem:[#allocation14 + $0x48] sm:$0xf]
        %v7579 = vld [vmem:[#allocation14 + $0x4c] sm:$0xf]
        %v7580 = vld [vmem:[#allocation14 + $0x50] sm:$0xf]
        %v7581 = vld [vmem:[#allocation14 + $0x54] sm:$0xf]
        %v7582 = vld [vmem:[#allocation14 + $0x58] sm:$0xf]
        %v7583 = vld [vmem:[#allocation14 + $0x5c] sm:$0xf]
        %v7584 = vld [vmem:[#allocation14 + $0x60] sm:$0xf]
        %v7585 = vld [vmem:[#allocation14 + $0x64] sm:$0xf]
        %v7586 = vld [vmem:[#allocation14 + $0x68] sm:$0xf]
        %v7587 = vld [vmem:[#allocation14 + $0x6c] sm:$0xf]
        %v7588 = vld [vmem:[#allocation14 + $0x70] sm:$0xf]
        %v7589 = vld [vmem:[#allocation14 + $0x74] sm:$0xf]
        %v7590 = vld [vmem:[#allocation14 + $0x78] sm:$0xf]
        %v7591 = vld [vmem:[#allocation14 + $0x7c] sm:$0xf]
        %v7592 = vld [vmem:[#allocation14 + $0x80] sm:$0xf]
        %v7593 = vld [vmem:[#allocation14 + $0x84] sm:$0xf]
        %v7594 = vld [vmem:[#allocation14 + $0x88] sm:$0xf]
        %v7595 = vld [vmem:[#allocation14 + $0x8c] sm:$0xf]
        %v7596 = vld [vmem:[#allocation14 + $0x90] sm:$0xf]
        %v7597 = vld [vmem:[#allocation14 + $0x94] sm:$0xf]
        %v7598 = vld [vmem:[#allocation14 + $0x98] sm:$0xf]
        %v7599 = vld [vmem:[#allocation14 + $0x9c] sm:$0xf]
        %v7600 = vld [vmem:[#allocation14 + $0xa0] sm:$0xf]
        %v7601 = vld [vmem:[#allocation14 + $0xa4] sm:$0xf]
        %v7602 = vld [vmem:[#allocation14 + $0xa8] sm:$0xf]
        %v7603 = vld [vmem:[#allocation14 + $0xac] sm:$0xf]
        %v7604 = vld [vmem:[#allocation14 + $0xb0] sm:$0xf]
        %v7605 = vld [vmem:[#allocation14 + $0xb4] sm:$0xf]
        %v7606 = vld [vmem:[#allocation14 + $0xb8] sm:$0xf]
        %v7607 = vld [vmem:[#allocation14 + $0xbc] sm:$0xf]
        %v7608 = vld [vmem:[#allocation14 + $0xc0] sm:$0xf]
        %v7609 = vld [vmem:[#allocation14 + $0xc4] sm:$0xf]
        %v7610 = vld [vmem:[#allocation14 + $0xc8] sm:$0xf]
        %v7611 = vld [vmem:[#allocation14 + $0xcc] sm:$0xf]
        %v7612 = vld [vmem:[#allocation14 + $0xd0] sm:$0xf]
        %v7613 = vld [vmem:[#allocation14 + $0xd4] sm:$0xf]
        %v7614 = vld [vmem:[#allocation14 + $0xd8] sm:$0xf]
        %v7615 = vld [vmem:[#allocation14 + $0xdc] sm:$0xf]
        %v7616 = vld [vmem:[#allocation14 + $0xe0] sm:$0xf]
        %v7617 = vld [vmem:[#allocation14 + $0xe4] sm:$0xf]
        %v7618 = vld [vmem:[#allocation14 + $0xe8] sm:$0xf]
        %v7619 = vld [vmem:[#allocation14 + $0xec] sm:$0xf]
        %v7620 = vld [vmem:[#allocation14 + $0xf0] sm:$0xf]
        %v7621 = vld [vmem:[#allocation14 + $0xf4] sm:$0xf]
        %v7622 = vld [vmem:[#allocation14 + $0xf8] sm:$0xf]
        %v7623 = vld [vmem:[#allocation14 + $0xfc] sm:$0xf]
        %v7624 = vld [vmem:[#allocation16] sm:$0x1]
        %v7626 = vperm.slane %v7624, 0
        %v7692 = vunpack.c.l.b16 %v7560
        %v7693 = vunpack.c.l.b16 %v7561
        %v7694 = vunpack.c.l.b16 %v7562
        %v7695 = vunpack.c.l.b16 %v7563
        %v7696 = vunpack.c.l.b16 %v7564
        %v7697 = vunpack.c.l.b16 %v7565
        %v7698 = vunpack.c.l.b16 %v7566
        %v7699 = vunpack.c.l.b16 %v7567
        %v7700 = vunpack.c.l.b16 %v7568
        %v7701 = vunpack.c.l.b16 %v7569
        %v7702 = vunpack.c.l.b16 %v7570
        %v7703 = vunpack.c.l.b16 %v7571
        %v7704 = vunpack.c.l.b16 %v7572
        %v7705 = vunpack.c.l.b16 %v7573
        %v7706 = vunpack.c.l.b16 %v7574
        %v7707 = vunpack.c.l.b16 %v7575
        %v7708 = vunpack.c.l.b16 %v7576
        %v7709 = vunpack.c.l.b16 %v7577
        %v7710 = vunpack.c.l.b16 %v7578
        %v7711 = vunpack.c.l.b16 %v7579
        %v7712 = vunpack.c.l.b16 %v7580
        %v7713 = vunpack.c.l.b16 %v7581
        %v7714 = vunpack.c.l.b16 %v7582
        %v7715 = vunpack.c.l.b16 %v7583
        %v7716 = vunpack.c.l.b16 %v7584
        %v7717 = vunpack.c.l.b16 %v7585
        %v7718 = vunpack.c.l.b16 %v7586
        %v7719 = vunpack.c.l.b16 %v7587
        %v7720 = vunpack.c.l.b16 %v7588
        %v7721 = vunpack.c.l.b16 %v7589
        %v7722 = vunpack.c.l.b16 %v7590
        %v7723 = vunpack.c.l.b16 %v7591
        %v7724 = vunpack.c.l.b16 %v7592
        %v7725 = vunpack.c.l.b16 %v7593
        %v7726 = vunpack.c.l.b16 %v7594
        %v7727 = vunpack.c.l.b16 %v7595
        %v7728 = vunpack.c.l.b16 %v7596
        %v7729 = vunpack.c.l.b16 %v7597
        %v7730 = vunpack.c.l.b16 %v7598
        %v7731 = vunpack.c.l.b16 %v7599
        %v7732 = vunpack.c.l.b16 %v7600
        %v7733 = vunpack.c.l.b16 %v7601
        %v7734 = vunpack.c.l.b16 %v7602
        %v7735 = vunpack.c.l.b16 %v7603
        %v7736 = vunpack.c.l.b16 %v7604
        %v7737 = vunpack.c.l.b16 %v7605
        %v7738 = vunpack.c.l.b16 %v7606
        %v7739 = vunpack.c.l.b16 %v7607
        %v7740 = vunpack.c.l.b16 %v7608
        %v7741 = vunpack.c.l.b16 %v7609
        %v7742 = vunpack.c.l.b16 %v7610
        %v7743 = vunpack.c.l.b16 %v7611
        %v7744 = vunpack.c.l.b16 %v7612
        %v7745 = vunpack.c.l.b16 %v7613
        %v7746 = vunpack.c.l.b16 %v7614
        %v7747 = vunpack.c.l.b16 %v7615
        %v7748 = vunpack.c.l.b16 %v7616
        %v7749 = vunpack.c.l.b16 %v7617
        %v7750 = vunpack.c.l.b16 %v7618
        %v7751 = vunpack.c.l.b16 %v7619
        %v7752 = vunpack.c.l.b16 %v7620
        %v7753 = vunpack.c.l.b16 %v7621
        %v7754 = vunpack.c.l.b16 %v7622
        %v7755 = vunpack.c.l.b16 %v7623
        %v7756 = vpack.c.b16 %v7693, %v7692
        %v7757 = vpack.c.b16 %v7695, %v7694
        %v7758 = vpack.c.b16 %v7697, %v7696
        %v7759 = vpack.c.b16 %v7699, %v7698
        %v7760 = vpack.c.b16 %v7701, %v7700
        %v7761 = vpack.c.b16 %v7703, %v7702
        %v7762 = vpack.c.b16 %v7705, %v7704
        %v7763 = vpack.c.b16 %v7707, %v7706
        %v7764 = vpack.c.b16 %v7709, %v7708
        %v7765 = vpack.c.b16 %v7711, %v7710
        %v7766 = vpack.c.b16 %v7713, %v7712
        %v7767 = vpack.c.b16 %v7715, %v7714
        %v7768 = vpack.c.b16 %v7717, %v7716
        %v7769 = vpack.c.b16 %v7719, %v7718
        %v7770 = vpack.c.b16 %v7721, %v7720
        %v7771 = vpack.c.b16 %v7723, %v7722
        %v7772 = vpack.c.b16 %v7725, %v7724
        %v7773 = vpack.c.b16 %v7727, %v7726
        %v7774 = vpack.c.b16 %v7729, %v7728
        %v7775 = vpack.c.b16 %v7731, %v7730
        %v7776 = vpack.c.b16 %v7733, %v7732
        %v7777 = vpack.c.b16 %v7735, %v7734
        %v7778 = vpack.c.b16 %v7737, %v7736
        %v7779 = vpack.c.b16 %v7739, %v7738
        %v7780 = vpack.c.b16 %v7741, %v7740
        %v7781 = vpack.c.b16 %v7743, %v7742
        %v7782 = vpack.c.b16 %v7745, %v7744
        %v7783 = vpack.c.b16 %v7747, %v7746
        %v7784 = vpack.c.b16 %v7749, %v7748
        %v7785 = vpack.c.b16 %v7751, %v7750
        %v7786 = vpack.c.b16 %v7753, %v7752
        %v7787 = vpack.c.b16 %v7755, %v7754
        %7820 = vmatpush.bf16.msra.mxu0 %v7763
        %7821 = vmatpush.bf16.msra.mxu0 %v7762
        %7822 = vmatpush.bf16.msra.mxu0 %v7761
        %7823 = vmatpush.bf16.msra.mxu0 %v7760
        %7824 = vmatpush.bf16.msra.mxu0 %v7759
        %7825 = vmatpush.bf16.msra.mxu0 %v7758
        %7826 = vmatpush.bf16.msra.mxu0 %v7757
        %7827 = vmatpush.bf16.msra.mxu0 %v7756
        %7828 = vmatmul.bf16.gmra.mxu0 %v7528
        %v7829 = vpop.f32.mrf.mxu0
        %v7830 = vadd.f32 %v7626, %v7829
        %v7831 = vpop.f32.mrf.mxu0
        %v7832 = vadd.f32 %v7626, %v7831
        %7833 = vmatmul.bf16.gmra.mxu0 %v7532
        %v7834 = vpop.f32.mrf.mxu0
        %v7835 = vadd.f32 %v7626, %v7834
        %v7836 = vpop.f32.mrf.mxu0
        %v7837 = vadd.f32 %v7626, %v7836
        %7838 = vmatmul.bf16.gmra.mxu0 %v7536
        %v7839 = vpop.f32.mrf.mxu0
        %v7840 = vadd.f32 %v7626, %v7839
        %v7841 = vpop.f32.mrf.mxu0
        %v7842 = vadd.f32 %v7626, %v7841
        %7843 = vmatmul.bf16.gmra.mxu0 %v7540
        %v7844 = vpop.f32.mrf.mxu0
        %v7845 = vadd.f32 %v7626, %v7844
        %v7846 = vpop.f32.mrf.mxu0
        %v7847 = vadd.f32 %v7626, %v7846
        %7848 = vmatmul.bf16.gmra.mxu0 %v7544
        %v7849 = vpop.f32.mrf.mxu0
        %v7850 = vadd.f32 %v7626, %v7849
        %v7851 = vpop.f32.mrf.mxu0
        %v7852 = vadd.f32 %v7626, %v7851
        %7853 = vmatmul.bf16.gmra.mxu0 %v7548
        %v7854 = vpop.f32.mrf.mxu0
        %v7855 = vadd.f32 %v7626, %v7854
        %v7856 = vpop.f32.mrf.mxu0
        %v7857 = vadd.f32 %v7626, %v7856
        %7858 = vmatmul.bf16.gmra.mxu0 %v7552
        %v7859 = vpop.f32.mrf.mxu0
        %v7860 = vadd.f32 %v7626, %v7859
        %v7861 = vpop.f32.mrf.mxu0
        %v7862 = vadd.f32 %v7626, %v7861
        %7863 = vmatmul.bf16.gmra.mxu0 %v7556
        %v7864 = vpop.f32.mrf.mxu0
        %v7865 = vadd.f32 %v7626, %v7864
        %v7866 = vpop.f32.mrf.mxu0
        %v7867 = vadd.f32 %v7626, %v7866
        %7868 = vdwg.mxu0
        %7869 = vmatpush.bf16.msra.mxu0 %v7771
        %7870 = vmatpush.bf16.msra.mxu0 %v7770
        %7871 = vmatpush.bf16.msra.mxu0 %v7769
        %7872 = vmatpush.bf16.msra.mxu0 %v7768
        %7873 = vmatpush.bf16.msra.mxu0 %v7767
        %7874 = vmatpush.bf16.msra.mxu0 %v7766
        %7875 = vmatpush.bf16.msra.mxu0 %v7765
        %7876 = vmatpush.bf16.msra.mxu0 %v7764
        %7877 = vmatmul.bf16.gmra.mxu0 %v7529
        %v7878 = vpop.f32.mrf.mxu0
        %v7879 = vadd.f32 %v7830, %v7878
        %v7880 = vpop.f32.mrf.mxu0
        %v7881 = vadd.f32 %v7832, %v7880
        %7882 = vmatmul.bf16.gmra.mxu0 %v7533
        %v7883 = vpop.f32.mrf.mxu0
        %v7884 = vadd.f32 %v7835, %v7883
        %v7885 = vpop.f32.mrf.mxu0
        %v7886 = vadd.f32 %v7837, %v7885
        %7887 = vmatmul.bf16.gmra.mxu0 %v7537
        %v7888 = vpop.f32.mrf.mxu0
        %v7889 = vadd.f32 %v7840, %v7888
        %v7890 = vpop.f32.mrf.mxu0
        %v7891 = vadd.f32 %v7842, %v7890
        %7892 = vmatmul.bf16.gmra.mxu0 %v7541
        %v7893 = vpop.f32.mrf.mxu0
        %v7894 = vadd.f32 %v7845, %v7893
        %v7895 = vpop.f32.mrf.mxu0
        %v7896 = vadd.f32 %v7847, %v7895
        %7897 = vmatmul.bf16.gmra.mxu0 %v7545
        %v7898 = vpop.f32.mrf.mxu0
        %v7899 = vadd.f32 %v7850, %v7898
        %v7900 = vpop.f32.mrf.mxu0
        %v7901 = vadd.f32 %v7852, %v7900
        %7902 = vmatmul.bf16.gmra.mxu0 %v7549
        %v7903 = vpop.f32.mrf.mxu0
        %v7904 = vadd.f32 %v7855, %v7903
        %v7905 = vpop.f32.mrf.mxu0
        %v7906 = vadd.f32 %v7857, %v7905
        %7907 = vmatmul.bf16.gmra.mxu0 %v7553
        %v7908 = vpop.f32.mrf.mxu0
        %v7909 = vadd.f32 %v7860, %v7908
        %v7910 = vpop.f32.mrf.mxu0
        %v7911 = vadd.f32 %v7862, %v7910
        %7912 = vmatmul.bf16.gmra.mxu0 %v7557
        %v7913 = vpop.f32.mrf.mxu0
        %v7914 = vadd.f32 %v7865, %v7913
        %v7915 = vpop.f32.mrf.mxu0
        %v7916 = vadd.f32 %v7867, %v7915
        %7917 = vdwg.mxu0
        %7918 = vmatpush.bf16.msra.mxu0 %v7779
        %7919 = vmatpush.bf16.msra.mxu0 %v7778
        %7920 = vmatpush.bf16.msra.mxu0 %v7777
        %7921 = vmatpush.bf16.msra.mxu0 %v7776
        %7922 = vmatpush.bf16.msra.mxu0 %v7775
        %7923 = vmatpush.bf16.msra.mxu0 %v7774
        %7924 = vmatpush.bf16.msra.mxu0 %v7773
        %7925 = vmatpush.bf16.msra.mxu0 %v7772
        %7926 = vmatmul.bf16.gmra.mxu0 %v7530
        %v7927 = vpop.f32.mrf.mxu0
        %v7928 = vadd.f32 %v7879, %v7927
        %v7929 = vpop.f32.mrf.mxu0
        %v7930 = vadd.f32 %v7881, %v7929
        %7931 = vmatmul.bf16.gmra.mxu0 %v7534
        %v7932 = vpop.f32.mrf.mxu0
        %v7933 = vadd.f32 %v7884, %v7932
        %v7934 = vpop.f32.mrf.mxu0
        %v7935 = vadd.f32 %v7886, %v7934
        %7936 = vmatmul.bf16.gmra.mxu0 %v7538
        %v7937 = vpop.f32.mrf.mxu0
        %v7938 = vadd.f32 %v7889, %v7937
        %v7939 = vpop.f32.mrf.mxu0
        %v7940 = vadd.f32 %v7891, %v7939
        %7941 = vmatmul.bf16.gmra.mxu0 %v7542
        %v7942 = vpop.f32.mrf.mxu0
        %v7943 = vadd.f32 %v7894, %v7942
        %v7944 = vpop.f32.mrf.mxu0
        %v7945 = vadd.f32 %v7896, %v7944
        %7946 = vmatmul.bf16.gmra.mxu0 %v7546
        %v7947 = vpop.f32.mrf.mxu0
        %v7948 = vadd.f32 %v7899, %v7947
        %v7949 = vpop.f32.mrf.mxu0
        %v7950 = vadd.f32 %v7901, %v7949
        %7951 = vmatmul.bf16.gmra.mxu0 %v7550
        %v7952 = vpop.f32.mrf.mxu0
        %v7953 = vadd.f32 %v7904, %v7952
        %v7954 = vpop.f32.mrf.mxu0
        %v7955 = vadd.f32 %v7906, %v7954
        %7956 = vmatmul.bf16.gmra.mxu0 %v7554
        %v7957 = vpop.f32.mrf.mxu0
        %v7958 = vadd.f32 %v7909, %v7957
        %v7959 = vpop.f32.mrf.mxu0
        %v7960 = vadd.f32 %v7911, %v7959
        %7961 = vmatmul.bf16.gmra.mxu0 %v7558
        %v7962 = vpop.f32.mrf.mxu0
        %v7963 = vadd.f32 %v7914, %v7962
        %v7964 = vpop.f32.mrf.mxu0
        %v7965 = vadd.f32 %v7916, %v7964
        %7966 = vdwg.mxu0
        %7967 = vmatpush.bf16.msra.mxu0 %v7787
        %7968 = vmatpush.bf16.msra.mxu0 %v7786
        %7969 = vmatpush.bf16.msra.mxu0 %v7785
        %7970 = vmatpush.bf16.msra.mxu0 %v7784
        %7971 = vmatpush.bf16.msra.mxu0 %v7783
        %7972 = vmatpush.bf16.msra.mxu0 %v7782
        %7973 = vmatpush.bf16.msra.mxu0 %v7781
        %7974 = vmatpush.bf16.msra.mxu0 %v7780
        %7975 = vmatmul.bf16.gmra.mxu0 %v7531
        %v7976 = vpop.f32.mrf.mxu0
        %v7977 = vadd.f32 %v7928, %v7976
        %v7978 = vpop.f32.mrf.mxu0
        %v7979 = vadd.f32 %v7930, %v7978
        %7980 = vmatmul.bf16.gmra.mxu0 %v7535
        %v7981 = vpop.f32.mrf.mxu0
        %v7982 = vadd.f32 %v7933, %v7981
        %v7983 = vpop.f32.mrf.mxu0
        %v7984 = vadd.f32 %v7935, %v7983
        %7985 = vmatmul.bf16.gmra.mxu0 %v7539
        %v7986 = vpop.f32.mrf.mxu0
        %v7987 = vadd.f32 %v7938, %v7986
        %v7988 = vpop.f32.mrf.mxu0
        %v7989 = vadd.f32 %v7940, %v7988
        %7990 = vmatmul.bf16.gmra.mxu0 %v7543
        %v7991 = vpop.f32.mrf.mxu0
        %v7992 = vadd.f32 %v7943, %v7991
        %v7993 = vpop.f32.mrf.mxu0
        %v7994 = vadd.f32 %v7945, %v7993
        %7995 = vmatmul.bf16.gmra.mxu0 %v7547
        %v7996 = vpop.f32.mrf.mxu0
        %v7997 = vadd.f32 %v7948, %v7996
        %v7998 = vpop.f32.mrf.mxu0
        %v7999 = vadd.f32 %v7950, %v7998
        %8000 = vmatmul.bf16.gmra.mxu0 %v7551
        %v8001 = vpop.f32.mrf.mxu0
        %v8002 = vadd.f32 %v7953, %v8001
        %v8003 = vpop.f32.mrf.mxu0
        %v8004 = vadd.f32 %v7955, %v8003
        %8005 = vmatmul.bf16.gmra.mxu0 %v7555
        %v8006 = vpop.f32.mrf.mxu0
        %v8007 = vadd.f32 %v7958, %v8006
        %v8008 = vpop.f32.mrf.mxu0
        %v8009 = vadd.f32 %v7960, %v8008
        %8010 = vmatmul.bf16.gmra.mxu0 %v7559
        %v8011 = vpop.f32.mrf.mxu0
        %v8012 = vadd.f32 %v7963, %v8011
        %v8013 = vpop.f32.mrf.mxu0
        %v8014 = vadd.f32 %v7965, %v8013
        %8015 = vdwg.mxu0
        %v8016 = vadd.f32 %v3930, %v7977
        %v8017 = vadd.f32 %v3931, %v7979
        %v8018 = vadd.f32 %v3932, %v7982
        %v8019 = vadd.f32 %v3933, %v7984
        %v8020 = vadd.f32 %v3934, %v7987
        %v8021 = vadd.f32 %v3935, %v7989
        %v8022 = vadd.f32 %v3936, %v7992
        %v8023 = vadd.f32 %v3937, %v7994
        %v8024 = vadd.f32 %v3938, %v7997
        %v8025 = vadd.f32 %v3939, %v7999
        %v8026 = vadd.f32 %v3940, %v8002
        %v8027 = vadd.f32 %v3941, %v8004
        %v8028 = vadd.f32 %v3942, %v8007
        %v8029 = vadd.f32 %v3943, %v8009
        %v8030 = vadd.f32 %v3944, %v8012
        %v8031 = vadd.f32 %v3945, %v8014
        %v8032 = vpack.c.bf16 %v8016, %v8016
        %v8033 = vpack.c.bf16 %v8017, %v8017
        %v8034 = vpack.c.bf16 %v8018, %v8018
        %v8035 = vpack.c.bf16 %v8019, %v8019
        %v8036 = vpack.c.bf16 %v8020, %v8020
        %v8037 = vpack.c.bf16 %v8021, %v8021
        %v8038 = vpack.c.bf16 %v8022, %v8022
        %v8039 = vpack.c.bf16 %v8023, %v8023
        %v8040 = vpack.c.bf16 %v8024, %v8024
        %v8041 = vpack.c.bf16 %v8025, %v8025
        %v8042 = vpack.c.bf16 %v8026, %v8026
        %v8043 = vpack.c.bf16 %v8027, %v8027
        %v8044 = vpack.c.bf16 %v8028, %v8028
        %v8045 = vpack.c.bf16 %v8029, %v8029
        %v8046 = vpack.c.bf16 %v8030, %v8030
        %v8047 = vpack.c.bf16 %v8031, %v8031
        %8048 = vst [vmem:[%s585] sm:$0xf] %v8032
        %8049 = vst [vmem:[%s585 + $0x4] sm:$0xf] %v8033
        %8050 = vst [vmem:[%s585 + $0x8] sm:$0xf] %v8034
        %8051 = vst [vmem:[%s585 + $0xc] sm:$0xf] %v8035
        %8052 = vst [vmem:[%s585 + $0x10] sm:$0xf] %v8036
        %8053 = vst [vmem:[%s585 + $0x14] sm:$0xf] %v8037
        %8054 = vst [vmem:[%s585 + $0x18] sm:$0xf] %v8038
        %8055 = vst [vmem:[%s585 + $0x1c] sm:$0xf] %v8039
        %8056 = vst [vmem:[%s585 + $0x20] sm:$0xf] %v8040
        %8057 = vst [vmem:[%s585 + $0x24] sm:$0xf] %v8041
        %8058 = vst [vmem:[%s585 + $0x28] sm:$0xf] %v8042
        %8059 = vst [vmem:[%s585 + $0x2c] sm:$0xf] %v8043
        %8060 = vst [vmem:[%s585 + $0x30] sm:$0xf] %v8044
        %8061 = vst [vmem:[%s585 + $0x34] sm:$0xf] %v8045
        %8062 = vst [vmem:[%s585 + $0x38] sm:$0xf] %v8046
        %8063 = vst [vmem:[%s585 + $0x3c] sm:$0xf] %v8047
        %s8064 = sand.u32 %s320, 1
        %s8065 = scalar_lea.sflag [#allocation4], %s8064
        %s8066 = sand.u32 %s320, 1
        %s8067 = smul.addr %s8066, 64
        %s8068 = scalar_lea.vmem [#allocation17], %s8067
        // Predicated region
        $region109: #{expert_block.1} parent=71 // pred_check
          %p8069 = pneg %p330
        $region110: #{expert_block.1} parent=71 // pred_check_branch
          %8071 = sbr.rel (%p8069) target = $region112
        $region111: #{expert_block.1} parent=71 // pred_region
          %s8072 = smul.u32 4, %s34
          %8074 = vsyncadd %s8065, 0
          %s8075 = smul.addr %s8072, 4
          %s8076 = smul.addr %s8075, 4
          %s8077 = scalar_lea.hbm %s13, %s8076
          %s8078 = sshll.u32 %s8068, 4
          %s8079 = int_to_ptr.vmem [resolvable:$true] %s8078
          %s8080 = sshll.u32 %s8077, 4
          %s8081 = int_to_ptr.hbm [resolvable:$true] %s8080
          %8086 = dma.vmem_to_hbm [thread:$0]  %s8079, 1024, %s8081, %s8065, 64, 64, 4
        $region112: #{expert_block.1} parent=71 // pred_fallthru
          _
      $region72: #{expert_block.1} parent=5 // pred_fallthru
        _
      %p8087 = scmp.le.s32.totalorder 2, %s29
      // Predicated region
      $region113: #{expert_block.1} parent=5 // pred_check
        %p8088 = pneg %p8087
      $region114: #{expert_block.1} parent=5 // pred_check_branch
        %8090 = sbr.rel (%p8088) target = $region116
      $region115: #{expert_block.1} parent=5 // pred_region
        %s8091 = ssub.s32 %s29, 2
        // Predicated region
        $region117: #{expert_block.1} parent=115 // pred_check
          %p8092 = pneg %p336
        $region118: #{expert_block.1} parent=115 // pred_check_branch
          %8094 = sbr.rel (%p8092) target = $region120
        $region119: #{expert_block.1} parent=115 // pred_region
          %s8095 = sand.u32 %s321, 1
          %s8096 = scalar_lea.sflag [#allocation4], %s8095
          %s8097 = sand.u32 %s321, 1
          %s8098 = smul.addr %s8097, 64
          %s8099 = scalar_lea.vmem [#allocation17], %s8098
          %8101 = dma.done %s8096, 1024
        $region120: #{expert_block.1} parent=115 // pred_fallthru
          _
      $region116: #{expert_block.1} parent=5 // pred_fallthru
        _
    $region6: #{expert_block.1} parent=1 // loop_footer
      %s33 = sadd.s32 1, %s29
    $region7: #{expert_block.1} parent=1 // loop_footer_branch
      %28 = sbr.rel target = $region3
    $region8: #{expert_block.1} parent=1 // loop_exit
      _
    %8102 = vsyncpa [#allocation3], 1
    %s8103 = scalar_lea.sflag [#allocation3], 1
    %8104 = vsyncpa %s8103, 1
    %8105 = vsyncpa [#allocation6], 1
    %8106 = vsyncpa [#allocation9], 1
    %8107 = vsyncpa [#allocation12], 1
    %8108 = vsyncpa [#allocation15], 1
    %8109 = vsyncpa [#allocation4], 1
    %s8110 = scalar_lea.sflag [#allocation4], 1
    %8111 = vsyncpa %s8110, 1

</llo_original>
